<compile_context>
chip_gen: v5e
topology: v5e:2x2
jax: 0.10.0
libtpu: 0.0.40
codegen_flags: <defaults>
</compile_context>

<pallas_src>
import functools
import math

import numpy as np
import jax
import jax.numpy as jnp
from jax.experimental import pallas as pl
from jax.experimental.pallas import tpu as pltpu

LANE = 128


def _ceil(x, m):
    return ((x + m - 1) // m) * m


# ----------------------------------------------------------------------------- #
# Pallas kernels
# ----------------------------------------------------------------------------- #
def _patch_embed_kernel(x_ref, w_ref, add_ref, o_ref):
    # fused conv-as-matmul + (bias + positional + type embed) add
    o_ref[...] = (jnp.dot(x_ref[...], w_ref[...], preferred_element_type=jnp.float32)
                  + add_ref[...]).astype(o_ref.dtype)


def pallas_patch_embed(xp, w, add_rows):
    """xp: (B*L, Kin), w: (Kin, Ep), add_rows: (B*L, Ep) -> (B*L, Ep)."""
    M, _ = xp.shape
    Ep = w.shape[1]
    return pl.pallas_call(
        _patch_embed_kernel,
        out_shape=jax.ShapeDtypeStruct((M, Ep), jnp.float32),
    )(xp, w, add_rows)


def _stack_kernel(*refs, n_epi, e_real, n_heads, dh_real, eps):
    """One grid step = one (batch, layer) pair of a full transformer stack.

    Inputs (per grid step): x (Np, Ep); per-layer weights (depth axis squeezed);
    additive key mask (1, Np); final-norm params; `n_epi` (w, b) epilogue heads.
    Scratch x_res keeps the activations resident in VMEM across the depth axis.
    """
    (x_ref, ln1_ref, wqkv_ref, bqkv_ref, wo_ref, bo_ref, ln2_ref,
     w1_ref, b1_ref, w2_ref, b2_ref, kmask_ref, fnorm_ref) = refs[:13]
    epi_refs = refs[13:13 + 2 * n_epi]
    out_refs = refs[13 + 2 * n_epi:13 + 3 * n_epi]
    x_res = refs[13 + 3 * n_epi]

    layer = pl.program_id(1)

    @pl.when(layer == 0)
    def _():
        x_res[...] = x_ref[...]

    npad, epad = x_ref.shape
    scale = dh_real ** -0.5
    inv_e = 1.0 / e_real

    def ln(v, g, bb):
        # LayerNorm over the *real* embedding width; pad lanes are exactly zero so
        # the padded sums are unaffected, and zero-padded gamma/beta keep them zero.
        mu = jnp.sum(v, axis=-1, keepdims=True) * inv_e
        ex2 = jnp.sum(v * v, axis=-1, keepdims=True) * inv_e
        var = jnp.maximum(ex2 - mu * mu, 0.0)
        return (v - mu) * jax.lax.rsqrt(var + eps) * g + bb

    x = x_res[...]
    kmask = kmask_ref[...]                       # (1, Np): 0 real key, -1e30 pad key

    # --- attention: per-head weights are leading-indexed slabs -> aligned slices ---
    h1 = ln(x, ln1_ref[0:1, :], ln1_ref[1:2, :])
    attn = jnp.zeros((npad, epad), jnp.float32)
    for hh in range(n_heads):
        q = jnp.dot(h1, wqkv_ref[hh], preferred_element_type=jnp.float32) + bqkv_ref[hh]
        k = jnp.dot(h1, wqkv_ref[n_heads + hh],
                    preferred_element_type=jnp.float32) + bqkv_ref[n_heads + hh]
        v = jnp.dot(h1, wqkv_ref[2 * n_heads + hh],
                    preferred_element_type=jnp.float32) + bqkv_ref[2 * n_heads + hh]
        s = jnp.einsum("nd,md->nm", q * scale, k,
                       preferred_element_type=jnp.float32) + kmask
        s = s - jnp.max(s, axis=-1, keepdims=True)
        p = jnp.exp(s)
        p = p * pl.reciprocal(jnp.sum(p, axis=-1, keepdims=True), approx=True)
        o = jnp.dot(p, v, preferred_element_type=jnp.float32)
        attn = attn + jnp.dot(o, wo_ref[hh], preferred_element_type=jnp.float32)
    x = x + attn + bo_ref[...]

    # --- MLP ---
    h2 = ln(x, ln2_ref[0:1, :], ln2_ref[1:2, :])
    y = jnp.dot(h2, w1_ref[...], preferred_element_type=jnp.float32) + b1_ref[...]
    # TODO(synk): torch nn.GELU default is erf-exact; tanh approximation used for
    # Mosaic-safe lowering.
    y = jax.nn.gelu(y, approximate=True)
    y = jnp.dot(y, w2_ref[...], preferred_element_type=jnp.float32) + b2_ref[...]
    x = x + y
    x_res[...] = x

    # --- fused epilogue: final LayerNorm + linear head(s), only on the last layer ---
    @pl.when(layer == pl.num_programs(1) - 1)
    def _():
        xf = ln(x, fnorm_ref[0:1, :], fnorm_ref[1:2, :])
        for i in range(n_epi):
            w = epi_refs[2 * i][...]
            bb = epi_refs[2 * i + 1][...]
            out_refs[i][...] = (jnp.dot(xf, w, preferred_element_type=jnp.float32)
                                + bb).astype(out_refs[i].dtype)


def pallas_transformer_stack(x_pad, stack, kmask, fnorm, heads_out, *,
                             e_real, n_heads, dh_real, eps=1e-5):
    """x_pad: (B, Np, Ep) padded tokens.  stack: depth-stacked block weights.
    heads_out: list of (w, b) heads applied after the fused final LayerNorm.
    Returns a tuple of (B, Np, out_dim) arrays."""
    B, Np, Ep = x_pad.shape
    depth = stack["ln1"].shape[0]
    Hp = stack["w1"].shape[-1]
    Dhp = stack["wqkv"].shape[-1]
    n_epi = len(heads_out)

    def const_spec(shape):
        zeros = (0,) * len(shape)
        return pl.BlockSpec(shape, lambda b, d: zeros)

    def layer_spec(shape):
        zeros = (0,) * len(shape)
        return pl.BlockSpec((None,) + shape, lambda b, d: (d,) + zeros)

    in_specs = [
        pl.BlockSpec((None, Np, Ep), lambda b, d: (b, 0, 0)),
        layer_spec((2, Ep)),                     # ln1 gamma/beta
        layer_spec((3 * n_heads, Ep, Dhp)),      # per-head Q|K|V weights
        layer_spec((3 * n_heads, 1, Dhp)),       # per-head Q|K|V biases
        layer_spec((n_heads, Dhp, Ep)),          # per-head proj weights
        layer_spec((1, Ep)),                     # proj bias
        layer_spec((2, Ep)),                     # ln2 gamma/beta
        layer_spec((Ep, Hp)),                    # fc1
        layer_spec((1, Hp)),
        layer_spec((Hp, Ep)),                    # fc2
        layer_spec((1, Ep)),
        const_spec((1, Np)),                     # additive key mask
        const_spec(tuple(fnorm.shape)),          # final norm gamma/beta
    ]
    args = [x_pad, stack["ln1"], stack["wqkv"], stack["bqkv"], stack["wo"], stack["bo"],
            stack["ln2"], stack["w1"], stack["b1"], stack["w2"], stack["b2"],
            kmask, fnorm]

    out_shapes, out_specs = [], []
    for w, bias in heads_out:
        n_out = w.shape[1]
        in_specs += [const_spec(tuple(w.shape)), const_spec((1, n_out))]
        args += [w, bias.reshape(1, n_out)]
        out_shapes.append(jax.ShapeDtypeStruct((B, Np, n_out), jnp.float32))
        out_specs.append(pl.BlockSpec((None, Np, n_out), lambda b, d: (b, 0, 0)))

    kern = functools.partial(_stack_kernel, n_epi=n_epi, e_real=e_real,
                             n_heads=n_heads, dh_real=dh_real, eps=eps)
    outs = pl.pallas_call(
        kern,
        out_shape=tuple(out_shapes),
        grid=(B, depth),
        in_specs=in_specs,
        out_specs=tuple(out_specs),
        scratch_shapes=[pltpu.VMEM((Np, Ep), jnp.float32)],
        compiler_params=pltpu.CompilerParams(
            dimension_semantics=("parallel", "arbitrary")),
    )(*args)
    if not isinstance(outs, (list, tuple)):
        outs = (outs,)
    return tuple(outs)


def _masked_mse_kernel(p_ref, t_ref, m_ref, o_ref):
    diff = p_ref[...] - t_ref[...]
    per_tok = jnp.mean(diff * diff, axis=-1, keepdims=True)   # (M, 1)
    num = jnp.sum(per_tok * m_ref[...])
    den = jnp.sum(m_ref[...])
    # den is an integer-valued count; max(den, 1) avoids 0/0 and is exact for den>0.
    o_ref[...] = jnp.reshape(num / jnp.maximum(den, 1.0), (1, 1))


def pallas_masked_mse(pred, target, mask):
    """pred/target: (B, L, P), mask: (B, L) with 1 = compute loss."""
    B, L, P = pred.shape
    out = pl.pallas_call(
        _masked_mse_kernel,
        out_shape=jax.ShapeDtypeStruct((1, 1), jnp.float32),
    )(pred.reshape(B * L, P), target.reshape(B * L, P),
      mask.reshape(B * L, 1).astype(jnp.float32))
    return out[0, 0]


# ----------------------------------------------------------------------------- #
# Sin-cos positional embeddings (deterministic constants, same as MAE utils)
# ----------------------------------------------------------------------------- #
def _get_1d_sincos(embed_dim, pos):
    assert embed_dim % 2 == 0
    omega = np.arange(embed_dim // 2, dtype=np.float64) / (embed_dim / 2.0)
    omega = 1.0 / 10000 ** omega
    pos = pos.reshape(-1)
    out = np.einsum("m,d->md", pos, omega)
    return np.concatenate([np.sin(out), np.cos(out)], axis=1)


def get_3d_sincos_pos_embed_from_grid(embed_dim, grid):
    assert embed_dim % 3 == 0
    emb_d = _get_1d_sincos(embed_dim // 3, grid[0])
    emb_h = _get_1d_sincos(embed_dim // 3, grid[1])
    emb_w = _get_1d_sincos(embed_dim // 3, grid[2])
    return np.concatenate([emb_d, emb_h, emb_w], axis=1)


# ----------------------------------------------------------------------------- #
# Config / parameter initialization (deterministic, no checkpoint)
# ----------------------------------------------------------------------------- #
def make_config():
    ctx_size = (8, 16, 16)
    roi_size = (4, 8, 8)
    ctx_patch = (2, 8, 8)
    roi_patch = (2, 4, 4)
    in_chans = 2
    embed_dim = 48
    depth = 2
    num_heads = 4
    dec_dim = 24
    dec_depth = 2
    dec_heads = 4
    mlp_ratio = 4.0

    assert all(x % y == 0 for x, y in zip(ctx_size, ctx_patch))
    assert all(x % y == 0 for x, y in zip(roi_size, ctx_patch))
    assert all(x % y == 0 for x, y in zip(ctx_patch, roi_patch))

    ctx_grid = tuple(s // p for s, p in zip(ctx_size, ctx_patch))
    roi_grid = tuple(s // p for s, p in zip(roi_size, roi_patch))
    ctx_num = int(np.prod(ctx_grid))
    roi_num = int(np.prod(roi_grid))

    # foreground / background ctx token ids (ROI-covered ctx patches are fg)
    ctx_tok_id = np.arange(ctx_num).reshape(ctx_grid)
    fg_mask = np.zeros(ctx_grid, dtype=bool)
    roi_off = [(cs - rs) // 2 // cp for cs, rs, cp in zip(ctx_size, roi_size, ctx_patch)]
    sl = tuple(slice(st, st + rs // cp) for st, rs, cp in zip(roi_off, roi_size, ctx_patch))
    fg_mask[sl] = True
    ctx_fg_id = ctx_tok_id[fg_mask]
    ctx_bg_id = ctx_tok_id[~fg_mask]
    roi_fg_id = np.arange(roi_num).reshape(
        roi_size[0] // ctx_patch[0], ctx_patch[0] // roi_patch[0],
        roi_size[1] // ctx_patch[1], ctx_patch[1] // roi_patch[1],
        roi_size[2] // ctx_patch[2], ctx_patch[2] // roi_patch[2],
    ).transpose(0, 2, 4, 1, 3, 5).reshape(ctx_fg_id.shape[0], -1)

    # positional-embedding grids (replicates initialize_weights, incl. meshgrid 'xy')
    ctx_gd, ctx_gh, ctx_gw = [np.arange(g) * p + p / 2 for g, p in zip(ctx_grid, ctx_patch)]
    roi_off_vox = [(cs - rs) // 2 // cp * cp for cs, rs, cp in zip(ctx_size, roi_size, ctx_patch)]
    roi_gd, roi_gh, roi_gw = [
        np.arange(g) * p + p / 2 + o for g, p, o in zip(roi_grid, roi_patch, roi_off_vox)
    ]
    ctx_mesh = np.stack(np.meshgrid(ctx_gd, ctx_gh, ctx_gw), axis=0)
    roi_mesh = np.stack(np.meshgrid(roi_gd, roi_gh, roi_gw), axis=0)

    return dict(
        ctx_size=ctx_size, roi_size=roi_size, ctx_patch=ctx_patch, roi_patch=roi_patch,
        in_chans=in_chans, embed_dim=embed_dim, depth=depth, num_heads=num_heads,
        dec_dim=dec_dim, dec_depth=dec_depth, dec_heads=dec_heads, mlp_ratio=mlp_ratio,
        ctx_grid=ctx_grid, roi_grid=roi_grid, ctx_num=ctx_num, roi_num=roi_num,
        ctx_fg_id=ctx_fg_id, ctx_bg_id=ctx_bg_id, roi_fg_id=roi_fg_id,
        ctx_mesh=ctx_mesh, roi_mesh=roi_mesh,
    )


def _xavier(key, fan_in, fan_out, shape):
    limit = math.sqrt(6.0 / (fan_in + fan_out))
    return jax.random.uniform(key, shape, jnp.float32, -limit, limit)


def _init_block(key, dim, mlp_ratio):
    ks = jax.random.split(key, 4)
    hidden = int(dim * mlp_ratio)
    return dict(
        ln1_g=jnp.ones((dim,), jnp.float32), ln1_b=jnp.zeros((dim,), jnp.float32),
        qkv_w=_xavier(ks[0], dim, 3 * dim, (dim, 3 * dim)), qkv_b=jnp.zeros((3 * dim,), jnp.float32),
        proj_w=_xavier(ks[1], dim, dim, (dim, dim)), proj_b=jnp.zeros((dim,), jnp.float32),
        ln2_g=jnp.ones((dim,), jnp.float32), ln2_b=jnp.zeros((dim,), jnp.float32),
        fc1_w=_xavier(ks[2], dim, hidden, (dim, hidden)), fc1_b=jnp.zeros((hidden,), jnp.float32),
        fc2_w=_xavier(ks[3], hidden, dim, (hidden, dim)), fc2_b=jnp.zeros((dim,), jnp.float32),
    )


def init_params(key, cfg):
    keys = iter(jax.random.split(key, 64))
    E, De = cfg["embed_dim"], cfg["dec_dim"]
    kin_ctx = cfg["in_chans"] * math.prod(cfg["ctx_patch"])
    kin_roi = cfg["in_chans"] * math.prod(cfg["roi_patch"])
    out_ctx = math.prod(cfg["ctx_patch"]) * cfg["in_chans"]
    out_roi = math.prod(cfg["roi_patch"]) * cfg["in_chans"]

    p = {}
    p["patch_ctx_w"] = _xavier(next(keys), kin_ctx, E, (kin_ctx, E))
    p["patch_ctx_b"] = jnp.zeros((E,), jnp.float32)
    p["patch_roi_w"] = _xavier(next(keys), kin_roi, E, (kin_roi, E))
    p["patch_roi_b"] = jnp.zeros((E,), jnp.float32)
    p["cls_token"] = 0.02 * jax.random.normal(next(keys), (1, 1, E), jnp.float32)
    p["ctx_embed"] = jnp.zeros((1, 1, E), jnp.float32)
    p["roi_embed"] = jnp.zeros((1, 1, E), jnp.float32)
    p["ctx_pos_embed"] = jnp.asarray(
        get_3d_sincos_pos_embed_from_grid(E, cfg["ctx_mesh"]), jnp.float32)[None]
    p["roi_pos_embed"] = jnp.asarray(
        get_3d_sincos_pos_embed_from_grid(E, cfg["roi_mesh"]), jnp.float32)[None]
    p["blocks"] = [_init_block(next(keys), E, cfg["mlp_ratio"]) for _ in range(cfg["depth"])]
    p["norm_g"] = jnp.ones((E,), jnp.float32)
    p["norm_b"] = jnp.zeros((E,), jnp.float32)

    p["dec_embed_w"] = _xavier(next(keys), E, De, (E, De))
    p["dec_embed_b"] = jnp.zeros((De,), jnp.float32)
    p["mask_token_ctx"] = 0.02 * jax.random.normal(next(keys), (1, 1, De), jnp.float32)
    p["mask_token_roi"] = 0.02 * jax.random.normal(next(keys), (1, 1, De), jnp.float32)
    p["dec_ctx_pos_embed"] = jnp.asarray(
        get_3d_sincos_pos_embed_from_grid(De, cfg["ctx_mesh"]), jnp.float32)[None]
    p["dec_roi_pos_embed"] = jnp.asarray(
        get_3d_sincos_pos_embed_from_grid(De, cfg["roi_mesh"]), jnp.float32)[None]
    p["dec_blocks"] = [_init_block(next(keys), De, cfg["mlp_ratio"]) for _ in range(cfg["dec_depth"])]
    p["dec_norm_g"] = jnp.ones((De,), jnp.float32)
    p["dec_norm_b"] = jnp.zeros((De,), jnp.float32)
    p["pred_ctx_w"] = _xavier(next(keys), De, out_ctx, (De, out_ctx))
    p["pred_ctx_b"] = jnp.zeros((out_ctx,), jnp.float32)
    p["pred_roi_w"] = _xavier(next(keys), De, out_roi, (De, out_roi))
    p["pred_roi_b"] = jnp.zeros((out_roi,), jnp.float32)
    return p


# ----------------------------------------------------------------------------- #
# Parameter repacking: lane-padded, depth-stacked, per-head-split
# ----------------------------------------------------------------------------- #
def _pad1(a, n):
    return jnp.zeros((n,), jnp.float32).at[:a.shape[0]].set(a)


def _pad2(a, rows, cols):
    return jnp.zeros((rows, cols), jnp.float32).at[:a.shape[0], :a.shape[1]].set(a)


def _pack_block(bp, e, h, ep, dhp, hp):
    dh = e // h
    wqkv = jnp.zeros((3 * h, ep, dhp), jnp.float32)
    bqkv = jnp.zeros((3 * h, 1, dhp), jnp.float32)
    for qi in range(3):
        for hh in range(h):
            c0 = qi * e + hh * dh
            wqkv = wqkv.at[qi * h + hh, :e, :dh].set(bp["qkv_w"][:, c0:c0 + dh])
            bqkv = bqkv.at[qi * h + hh, 0, :dh].set(bp["qkv_b"][c0:c0 + dh])
    wo = jnp.zeros((h, dhp, ep), jnp.float32)
    for hh in range(h):
        wo = wo.at[hh, :dh, :e].set(bp["proj_w"][hh * dh:(hh + 1) * dh, :])
    return dict(
        ln1=jnp.stack([_pad1(bp["ln1_g"], ep), _pad1(bp["ln1_b"], ep)]),
        wqkv=wqkv, bqkv=bqkv, wo=wo,
        bo=_pad1(bp["proj_b"], ep).reshape(1, ep),
        ln2=jnp.stack([_pad1(bp["ln2_g"], ep), _pad1(bp["ln2_b"], ep)]),
        w1=_pad2(bp["fc1_w"], ep, hp),
        b1=_pad1(bp["fc1_b"], hp).reshape(1, hp),
        w2=_pad2(bp["fc2_w"], hp, ep),
        b2=_pad1(bp["fc2_b"], ep).reshape(1, ep),
    )


def _pack_stack(blocks, e, h, ep, dhp, hp):
    per = [_pack_block(bp, e, h, ep, dhp, hp) for bp in blocks]
    return {k: jnp.stack([pb[k] for pb in per]) for k in per[0]}


def pack_params(p, cfg):
    """Zero-pad the lane dimension to 128 (gamma/beta padded with zeros, LayerNorm uses
    the real-width divisor), stack per-layer weights along a depth axis, and split the
    QKV / proj weights into per-head slabs so all in-kernel slices are tile-aligned."""
    E, De = cfg["embed_dim"], cfg["dec_dim"]
    H, Hd = cfg["num_heads"], cfg["dec_heads"]
    Ep = Dep = LANE
    hp_e = _ceil(int(E * cfg["mlp_ratio"]), LANE)
    hp_d = _ceil(int(De * cfg["mlp_ratio"]), LANE)

    pp = {}
    pp["patch_ctx_w"] = _pad2(p["patch_ctx_w"], p["patch_ctx_w"].shape[0], Ep)
    pp["patch_roi_w"] = _pad2(p["patch_roi_w"], p["patch_roi_w"].shape[0], Ep)
    add_ctx = p["patch_ctx_b"][None, :] + p["ctx_pos_embed"][0] + p["ctx_embed"][0]
    add_roi = p["patch_roi_b"][None, :] + p["roi_pos_embed"][0] + p["roi_embed"][0]
    pp["ctx_add"] = _pad2(add_ctx, add_ctx.shape[0], Ep)
    pp["roi_add"] = _pad2(add_roi, add_roi.shape[0], Ep)
    pp["cls_token"] = _pad2(p["cls_token"][0], 1, Ep)

    pp["enc_stack"] = _pack_stack(p["blocks"], E, H, Ep, Ep // H, hp_e)
    pp["enc_fnorm"] = jnp.stack([_pad1(p["norm_g"], Ep), _pad1(p["norm_b"], Ep)])
    pp["dec_embed_w"] = _pad2(p["dec_embed_w"], Ep, Dep)
    pp["dec_embed_b"] = _pad1(p["dec_embed_b"], Dep)

    pp["mask_token_ctx"] = _pad2(p["mask_token_ctx"][0], 1, Dep)
    pp["mask_token_roi"] = _pad2(p["mask_token_roi"][0], 1, Dep)
    pp["dec_ctx_pos"] = _pad2(p["dec_ctx_pos_embed"][0], cfg["ctx_num"], Dep)
    pp["dec_roi_pos"] = _pad2(p["dec_roi_pos_embed"][0], cfg["roi_num"], Dep)

    pp["dec_stack"] = _pack_stack(p["dec_blocks"], De, Hd, Dep, Dep // Hd, hp_d)
    pp["dec_fnorm"] = jnp.stack([_pad1(p["dec_norm_g"], Dep), _pad1(p["dec_norm_b"], Dep)])
    pp["pred_ctx_w"] = _pad2(p["pred_ctx_w"], Dep, p["pred_ctx_w"].shape[1])
    pp["pred_ctx_b"] = p["pred_ctx_b"]
    pp["pred_roi_w"] = _pad2(p["pred_roi_w"], Dep, p["pred_roi_w"].shape[1])
    pp["pred_roi_b"] = p["pred_roi_b"]
    return pp


# ----------------------------------------------------------------------------- #
# Model forward (glue in JAX, compute in Pallas)
# ----------------------------------------------------------------------------- #
def _im2col(x, patch):
    """x: (B, C, D, H, W) -> (B*L, C*pD*pH*pW).  Conv3d(stride=kernel) == im2col."""
    B, C, D, H, W = x.shape
    pD, pH, pW = patch
    Gd, Gh, Gw = D // pD, H // pH, W // pW
    xp = x.reshape(B, C, Gd, pD, Gh, pH, Gw, pW)
    xp = xp.transpose(0, 2, 4, 6, 1, 3, 5, 7)
    return xp.reshape(B * Gd * Gh * Gw, C * pD * pH * pW)


def patchify(imgs, patch):
    B, C, D, H, W = imgs.shape
    pD, pH, pW = patch
    x = imgs.reshape(B, C, D // pD, pD, H // pH, pH, W // pW, pW)
    x = x.transpose(0, 2, 4, 6, 3, 5, 7, 1)
    return x.reshape(B, (D // pD) * (H // pH) * (W // pW), pD * pH * pW * C)


def crop_roi(imgs, cfg):
    offs = [(cs - rs) // 2 // cp * cp
            for cs, rs, cp in zip(cfg["ctx_size"], cfg["roi_size"], cfg["ctx_patch"])]
    od, oh, ow = offs
    rD, rH, rW = cfg["roi_size"]
    return imgs[:, :, od:od + rD, oh:oh + rH, ow:ow + rW]


def sync_random_masking(key, cfg, x_ctx, x_roi, mask_ratio):
    B = x_ctx.shape[0]
    ctx_fg_id = jnp.asarray(cfg["ctx_fg_id"])
    ctx_bg_id = jnp.asarray(cfg["ctx_bg_id"])
    roi_fg_id = jnp.asarray(cfg["roi_fg_id"])

    k1, k2 = jax.random.split(key)
    ids_shuffle_fg = jnp.argsort(jax.random.uniform(k1, (B, ctx_fg_id.shape[0])), axis=1)
    ids_shuffle_bg = jnp.argsort(jax.random.uniform(k2, (B, ctx_bg_id.shape[0])), axis=1)
    ids_shuffle_fg_ctx = ctx_fg_id[ids_shuffle_fg]
    ids_shuffle_fg_roi = roi_fg_id[ids_shuffle_fg].reshape(B, -1)
    ids_shuffle_bg_ctx = ctx_bg_id[ids_shuffle_bg]
    len_keep_fg = round(ctx_fg_id.shape[0] * (1.0 - mask_ratio))
    len_keep_bg = round(ctx_bg_id.shape[0] * (1.0 - mask_ratio))
    ids_shuffle_ctx = jnp.concatenate(
        [ids_shuffle_fg_ctx[:, :len_keep_fg], ids_shuffle_bg_ctx[:, :len_keep_bg],
         ids_shuffle_fg_ctx[:, len_keep_fg:], ids_shuffle_bg_ctx[:, len_keep_bg:]], axis=1)

    def postprocess(x, ids_shuffle, len_keep):
        x_masked = jnp.take_along_axis(x, ids_shuffle[:, :len_keep, None], axis=1)
        ids_restore = jnp.argsort(ids_shuffle, axis=1)
        mask = jnp.ones((B, ids_shuffle.shape[1]), jnp.float32)
        mask = mask.at[:, :len_keep].set(0.0)
        mask = jnp.take_along_axis(mask, ids_restore, axis=1)
        return x_masked, mask, ids_restore

    x_ctx_m, mask_ctx, ids_restore_ctx = postprocess(x_ctx, ids_shuffle_ctx,
                                                     len_keep_fg + len_keep_bg)
    len_keep_roi = len_keep_fg * roi_fg_id.shape[-1]
    x_roi_m, mask_roi, ids_restore_roi = postprocess(x_roi, ids_shuffle_fg_roi, len_keep_roi)
    return x_ctx_m, x_roi_m, mask_ctx, mask_roi, ids_restore_ctx, ids_restore_roi


def _key_mask(n_tok, np_tok):
    idx = jnp.arange(np_tok)
    return jnp.where(idx < n_tok, 0.0, -1e30).astype(jnp.float32).reshape(1, np_tok)


def forward(pp, cfg, imgs, key, mask_ratio=0.5):
    B = imgs.shape[0]
    E, De = cfg["embed_dim"], cfg["dec_dim"]
    Ep = pp["patch_ctx_w"].shape[1]
    Dep = pp["dec_embed_w"].shape[1]
    L_ctx, L_roi = cfg["ctx_num"], cfg["roi_num"]

    # ---- patch embedding (fused matmul + bias + positional + type embed) ---------- #
    xp_ctx = _im2col(imgs, cfg["ctx_patch"])
    xp_roi = _im2col(crop_roi(imgs, cfg), cfg["roi_patch"])
    x_ctx = pallas_patch_embed(xp_ctx, pp["patch_ctx_w"],
                               jnp.tile(pp["ctx_add"], (B, 1))).reshape(B, L_ctx, Ep)
    x_roi = pallas_patch_embed(xp_roi, pp["patch_roi_w"],
                               jnp.tile(pp["roi_add"], (B, 1))).reshape(B, L_roi, Ep)

    # ---- synchronized random masking (JAX glue) ----------------------------------- #
    (x_ctx_m, x_roi_m, mask_ctx, mask_roi,
     ids_restore_ctx, ids_restore_roi) = sync_random_masking(key, cfg, x_ctx, x_roi,
                                                             mask_ratio)
    keep_ctx, keep_roi = x_ctx_m.shape[1], x_roi_m.shape[1]

    # ---- encoder stack (blocks + final norm + decoder_embed, one pallas_call) ----- #
    n_tok_e = 1 + keep_ctx + keep_roi
    np_e = _ceil(n_tok_e, 8)
    cls = jnp.broadcast_to(pp["cls_token"][None], (B, 1, Ep))
    xe = jnp.concatenate([cls, x_ctx_m, x_roi_m], axis=1)
    xe = jnp.pad(xe, ((0, 0), (0, np_e - n_tok_e), (0, 0)))
    (dec_in,) = pallas_transformer_stack(
        xe, pp["enc_stack"], _key_mask(n_tok_e, np_e), pp["enc_fnorm"],
        [(pp["dec_embed_w"], pp["dec_embed_b"])],
        e_real=E, n_heads=cfg["num_heads"], dh_real=E // cfg["num_heads"])
    dec_in = dec_in[:, :n_tok_e]

    # ---- decoder token assembly (JAX glue) ----------------------------------------- #
    x_cls = dec_in[:, :1]
    x_ctx_d = dec_in[:, 1:1 + keep_ctx]
    x_roi_d = dec_in[:, 1 + keep_ctx:]
    mt_ctx = jnp.broadcast_to(pp["mask_token_ctx"][None], (B, L_ctx - keep_ctx, Dep))
    mt_roi = jnp.broadcast_to(pp["mask_token_roi"][None], (B, L_roi - keep_roi, Dep))
    x_ctx_d = jnp.concatenate([x_ctx_d, mt_ctx], axis=1)
    x_roi_d = jnp.concatenate([x_roi_d, mt_roi], axis=1)
    x_ctx_d = jnp.take_along_axis(x_ctx_d, ids_restore_ctx[:, :, None], axis=1) \
        + pp["dec_ctx_pos"][None]
    x_roi_d = jnp.take_along_axis(x_roi_d, ids_restore_roi[:, :, None], axis=1) \
        + pp["dec_roi_pos"][None]

    n_tok_d = 1 + L_ctx + L_roi
    np_d = _ceil(n_tok_d, 8)
    xd = jnp.concatenate([x_cls, x_ctx_d, x_roi_d], axis=1)
    xd = jnp.pad(xd, ((0, 0), (0, np_d - n_tok_d), (0, 0)))

    # ---- decoder stack (blocks + decoder norm + both prediction heads) ------------- #
    pred_ctx_full, pred_roi_full = pallas_transformer_stack(
        xd, pp["dec_stack"], _key_mask(n_tok_d, np_d), pp["dec_fnorm"],
        [(pp["pred_ctx_w"], pp["pred_ctx_b"]), (pp["pred_roi_w"], pp["pred_roi_b"])],
        e_real=De, n_heads=cfg["dec_heads"], dh_real=De // cfg["dec_heads"])
    pred_ctx = pred_ctx_full[:, 1:1 + L_ctx]
    pred_roi = pred_roi_full[:, 1 + L_ctx:1 + L_ctx + L_roi]

    # ---- reconstruction losses (norm_pix_loss=False) -------------------------------- #
    tgt_ctx = patchify(imgs, cfg["ctx_patch"])
    tgt_roi = patchify(crop_roi(imgs, cfg), cfg["roi_patch"])
    loss_ctx = pallas_masked_mse(pred_ctx, tgt_ctx, mask_ctx)
    loss_roi = pallas_masked_mse(pred_roi, tgt_roi, mask_roi)
    return loss_ctx, loss_roi, pred_ctx, pred_roi, mask_ctx, mask_roi


# ----------------------------------------------------------------------------- #
if __name__ == "__main__":
    cfg = make_config()
    root = jax.random.PRNGKey(0)
    k_param, k_img, k_mask = jax.random.split(root, 3)

    params = init_params(k_param, cfg)
    packed = pack_params(params, cfg)

    B = 2
    imgs = jax.random.normal(
        k_img, (B, cfg["in_chans"]) + cfg["ctx_size"], jnp.float32)  # (2, 2, 8, 16, 16)

    fwd = jax.jit(lambda pp_, imgs_, key_: forward(pp_, cfg, imgs_, key_, 0.5))
    out = fwd(packed, imgs, k_mask)
    jax.block_until_ready(out)

    loss_ctx, loss_roi, pred_ctx, pred_roi, mask_ctx, mask_roi = out
    assert pred_ctx.shape == (B, cfg["ctx_num"], math.prod(cfg["ctx_patch"]) * cfg["in_chans"])
    assert pred_roi.shape == (B, cfg["roi_num"], math.prod(cfg["roi_patch"]) * cfg["in_chans"])
    assert mask_ctx.shape == (B, cfg["ctx_num"]) and mask_roi.shape == (B, cfg["roi_num"])
    assert bool(jnp.isfinite(loss_ctx)) and bool(jnp.isfinite(loss_roi))
    print("KERNEL_OK")
</pallas_src>

<mosaic_0001>
module attributes {stable_mosaic.version = 11 : i64} {
  func.func @_patch_embed_kernel(%arg0: memref<16x64xf32, #tpu.memory_space<vmem>>, %arg1: memref<64x128xf32, #tpu.memory_space<vmem>>, %arg2: memref<16x128xf32, #tpu.memory_space<vmem>>, %arg3: memref<16x128xf32, #tpu.memory_space<vmem>>) attributes {dimension_semantics = [], scalar_prefetch = 0 : i64, scratch_operands = 0 : i64, tpu.core_type = #tpu.core_type<tc>} {
    %c0 = arith.constant 0 : index
    %c0_0 = arith.constant 0 : index
    %0 = vector.load %arg0[%c0, %c0_0] : memref<16x64xf32, #tpu.memory_space<vmem>>, vector<16x64xf32>
    %c0_1 = arith.constant 0 : index
    %c0_2 = arith.constant 0 : index
    %1 = vector.load %arg1[%c0_1, %c0_2] : memref<64x128xf32, #tpu.memory_space<vmem>>, vector<64x128xf32>
    %cst = arith.constant dense<0.000000e+00> : vector<16x128xf32>
    %2 = tpu.matmul %0, %1, %cst {dimension_numbers = #tpu.dot_dimension_numbers<[1], [0], [0], [1], [0, 0, 1, 1], [], []>} : vector<16x64xf32>, vector<64x128xf32>, vector<16x128xf32> -> vector<16x128xf32>
    %c0_3 = arith.constant 0 : index
    %c0_4 = arith.constant 0 : index
    %3 = vector.load %arg2[%c0_3, %c0_4] : memref<16x128xf32, #tpu.memory_space<vmem>>, vector<16x128xf32>
    %4 = arith.addf %2, %3 : vector<16x128xf32>
    %c0_5 = arith.constant 0 : index
    %c0_6 = arith.constant 0 : index
    %5 = vector.load %arg3[%c0_5, %c0_6] : memref<16x128xf32, #tpu.memory_space<vmem>>, vector<16x128xf32>
    tpu.vector_store %arg3[%c0_5, %c0_6], %4 {strides = array<i32>} : memref<16x128xf32, #tpu.memory_space<vmem>>, vector<16x128xf32>,
    return
  }
}

module attributes {stable_mosaic.version = 11 : i64} {
  func.func @_patch_embed_kernel(%arg0: memref<32x256xf32, #tpu.memory_space<vmem>>, %arg1: memref<256x128xf32, #tpu.memory_space<vmem>>, %arg2: memref<32x128xf32, #tpu.memory_space<vmem>>, %arg3: memref<32x128xf32, #tpu.memory_space<vmem>>) attributes {dimension_semantics = [], scalar_prefetch = 0 : i64, scratch_operands = 0 : i64, tpu.core_type = #tpu.core_type<tc>} {
    %c0 = arith.constant 0 : index
    %c0_0 = arith.constant 0 : index
    %0 = vector.load %arg0[%c0, %c0_0] : memref<32x256xf32, #tpu.memory_space<vmem>>, vector<32x256xf32>
    %c0_1 = arith.constant 0 : index
    %c0_2 = arith.constant 0 : index
    %1 = vector.load %arg1[%c0_1, %c0_2] : memref<256x128xf32, #tpu.memory_space<vmem>>, vector<256x128xf32>
    %cst = arith.constant dense<0.000000e+00> : vector<32x128xf32>
    %2 = tpu.matmul %0, %1, %cst {dimension_numbers = #tpu.dot_dimension_numbers<[1], [0], [0], [1], [0, 0, 1, 1], [], []>} : vector<32x256xf32>, vector<256x128xf32>, vector<32x128xf32> -> vector<32x128xf32>
    %c0_3 = arith.constant 0 : index
    %c0_4 = arith.constant 0 : index
    %3 = vector.load %arg2[%c0_3, %c0_4] : memref<32x128xf32, #tpu.memory_space<vmem>>, vector<32x128xf32>
    %4 = arith.addf %2, %3 : vector<32x128xf32>
    %c0_5 = arith.constant 0 : index
    %c0_6 = arith.constant 0 : index
    %5 = vector.load %arg3[%c0_5, %c0_6] : memref<32x128xf32, #tpu.memory_space<vmem>>, vector<32x128xf32>
    tpu.vector_store %arg3[%c0_5, %c0_6], %4 {strides = array<i32>} : memref<32x128xf32, #tpu.memory_space<vmem>>, vector<32x128xf32>,
    return
  }
}

module attributes {stable_mosaic.version = 11 : i64} {
  func.func @_stack_kernel(%arg0: i32, %arg1: i32, %arg2: memref<1x16x128xf32, #tpu.memory_space<vmem>>, %arg3: memref<1x2x128xf32, #tpu.memory_space<vmem>>, %arg4: memref<1x12x128x32xf32, #tpu.memory_space<vmem>>, %arg5: memref<1x12x1x32xf32, #tpu.memory_space<vmem>>, %arg6: memref<1x4x32x128xf32, #tpu.memory_space<vmem>>, %arg7: memref<1x1x128xf32, #tpu.memory_space<vmem>>, %arg8: memref<1x2x128xf32, #tpu.memory_space<vmem>>, %arg9: memref<1x128x256xf32, #tpu.memory_space<vmem>>, %arg10: memref<1x1x256xf32, #tpu.memory_space<vmem>>, %arg11: memref<1x256x128xf32, #tpu.memory_space<vmem>>, %arg12: memref<1x1x128xf32, #tpu.memory_space<vmem>>, %arg13: memref<1x16xf32, #tpu.memory_space<vmem>>, %arg14: memref<2x128xf32, #tpu.memory_space<vmem>>, %arg15: memref<128x128xf32, #tpu.memory_space<vmem>>, %arg16: memref<1x128xf32, #tpu.memory_space<vmem>>, %arg17: memref<1x16x128xf32, #tpu.memory_space<vmem>>, %arg18: memref<16x128xf32, #tpu.memory_space<vmem>>) attributes {dimension_semantics = [#tpu.dimension_semantics<parallel>, #tpu.dimension_semantics<arbitrary>], iteration_bounds = array<i64: 2, 2>, scalar_prefetch = 0 : i64, scratch_operands = 1 : i64, tpu.core_type = #tpu.core_type<tc>, window_params = [{transform_indices = @transform_0, window_bounds = array<i64: 1, 16, 128>}, {transform_indices = @transform_1, window_bounds = array<i64: 1, 2, 128>}, {transform_indices = @transform_2, window_bounds = array<i64: 1, 12, 128, 32>}, {transform_indices = @transform_3, window_bounds = array<i64: 1, 12, 1, 32>}, {transform_indices = @transform_4, window_bounds = array<i64: 1, 4, 32, 128>}, {transform_indices = @transform_5, window_bounds = array<i64: 1, 1, 128>}, {transform_indices = @transform_6, window_bounds = array<i64: 1, 2, 128>}, {transform_indices = @transform_7, window_bounds = array<i64: 1, 128, 256>}, {transform_indices = @transform_8, window_bounds = array<i64: 1, 1, 256>}, {transform_indices = @transform_9, window_bounds = array<i64: 1, 256, 128>}, {transform_indices = @transform_10, window_bounds = array<i64: 1, 1, 128>}, {pipeline_mode = #tpu.pipeline_mode<synchronous>, transform_indices = @transform_11, window_bounds = array<i64: 1, 16>}, {pipeline_mode = #tpu.pipeline_mode<synchronous>, transform_indices = @transform_12, window_bounds = array<i64: 2, 128>}, {pipeline_mode = #tpu.pipeline_mode<synchronous>, transform_indices = @transform_13, window_bounds = array<i64: 128, 128>}, {pipeline_mode = #tpu.pipeline_mode<synchronous>, transform_indices = @transform_14, window_bounds = array<i64: 1, 128>}, {transform_indices = @transform_15, window_bounds = array<i64: 1, 16, 128>}]} {
    %c0_i32 = arith.constant 0 : i32
    %0 = arith.cmpi eq, %arg1, %c0_i32 : i32
    %1 = arith.extui %0 : i1 to i32
    %c0_i32_0 = arith.constant 0 : i32
    %2 = arith.cmpi ne, %1, %c0_i32_0 : i32
    scf.if %2 {
      %c0_189 = arith.constant 0 : index
      %c0_190 = arith.constant 0 : index
      %c0_191 = arith.constant 0 : index
      %263 = vector.load %arg2[%c0_189, %c0_190, %c0_191] : memref<1x16x128xf32, #tpu.memory_space<vmem>>, vector<1x16x128xf32>
      %264 = vector.shape_cast %263 : vector<1x16x128xf32> to vector<16x128xf32>
      %c0_192 = arith.constant 0 : index
      %c0_193 = arith.constant 0 : index
      %265 = vector.load %arg18[%c0_192, %c0_193] : memref<16x128xf32, #tpu.memory_space<vmem>>, vector<16x128xf32>
      tpu.vector_store %arg18[%c0_192, %c0_193], %264 {strides = array<i32>} : memref<16x128xf32, #tpu.memory_space<vmem>>, vector<16x128xf32>,
    } else {
    }
    %c0 = arith.constant 0 : index
    %c0_1 = arith.constant 0 : index
    %3 = vector.load %arg18[%c0, %c0_1] : memref<16x128xf32, #tpu.memory_space<vmem>>, vector<16x128xf32>
    %c0_2 = arith.constant 0 : index
    %c0_3 = arith.constant 0 : index
    %4 = vector.load %arg13[%c0_2, %c0_3] : memref<1x16xf32, #tpu.memory_space<vmem>>, vector<1x16xf32>
    %c0_4 = arith.constant 0 : index
    %c0_5 = arith.constant 0 : index
    %c0_6 = arith.constant 0 : index
    %5 = vector.load %arg3[%c0_4, %c0_5, %c0_6] : memref<1x2x128xf32, #tpu.memory_space<vmem>>, vector<1x1x128xf32>
    %6 = vector.shape_cast %5 : vector<1x1x128xf32> to vector<1x128xf32>
    %c0_7 = arith.constant 0 : index
    %c1 = arith.constant 1 : index
    %c0_8 = arith.constant 0 : index
    %7 = vector.load %arg3[%c0_7, %c1, %c0_8] : memref<1x2x128xf32, #tpu.memory_space<vmem>>, vector<1x1x128xf32>
    %8 = vector.shape_cast %7 : vector<1x1x128xf32> to vector<1x128xf32>
    %cst = arith.constant dense<0.000000e+00> : vector<16xf32>
    %9 = vector.multi_reduction <add>, %3, %cst [1] : vector<16x128xf32> to vector<16xf32>
    %10 = vector.shape_cast %9 : vector<16xf32> to vector<16x1xf32>
    %cst_9 = arith.constant 0.020833334 : f32
    %11 = vector.broadcast %cst_9 : f32 to vector<16x1xf32>
    %12 = arith.mulf %10, %11 : vector<16x1xf32>
    %13 = arith.mulf %3, %3 : vector<16x128xf32>
    %cst_10 = arith.constant dense<0.000000e+00> : vector<16xf32>
    %14 = vector.multi_reduction <add>, %13, %cst_10 [1] : vector<16x128xf32> to vector<16xf32>
    %15 = vector.shape_cast %14 : vector<16xf32> to vector<16x1xf32>
    %cst_11 = arith.constant 0.020833334 : f32
    %16 = vector.broadcast %cst_11 : f32 to vector<16x1xf32>
    %17 = arith.mulf %15, %16 : vector<16x1xf32>
    %18 = arith.mulf %12, %12 : vector<16x1xf32>
    %19 = arith.subf %17, %18 : vector<16x1xf32>
    %cst_12 = arith.constant 0.000000e+00 : f32
    %20 = vector.broadcast %cst_12 : f32 to vector<16x1xf32>
    %21 = arith.maximumf %19, %20 : vector<16x1xf32>
    %22 = vector.broadcast %12 : vector<16x1xf32> to vector<16x128xf32>
    %23 = arith.subf %3, %22 : vector<16x128xf32>
    %cst_13 = arith.constant 9.99999974E-6 : f32
    %24 = vector.broadcast %cst_13 : f32 to vector<16x1xf32>
    %25 = arith.addf %21, %24 : vector<16x1xf32>
    %26 = math.rsqrt %25 : vector<16x1xf32>
    %27 = vector.broadcast %26 : vector<16x1xf32> to vector<16x128xf32>
    %28 = arith.mulf %23, %27 : vector<16x128xf32>
    %29 = vector.broadcast %6 : vector<1x128xf32> to vector<16x128xf32>
    %30 = arith.mulf %28, %29 : vector<16x128xf32>
    %31 = vector.broadcast %8 : vector<1x128xf32> to vector<16x128xf32>
    %32 = arith.addf %30, %31 : vector<16x128xf32>
    %cst_14 = arith.constant 0.000000e+00 : f32
    %33 = vector.broadcast %cst_14 : f32 to vector<16x128xf32>
    %c0_15 = arith.constant 0 : index
    %c0_16 = arith.constant 0 : index
    %c0_17 = arith.constant 0 : index
    %c0_18 = arith.constant 0 : index
    %34 = vector.load %arg4[%c0_15, %c0_16, %c0_17, %c0_18] : memref<1x12x128x32xf32, #tpu.memory_space<vmem>>, vector<1x1x128x32xf32>
    %35 = vector.shape_cast %34 : vector<1x1x128x32xf32> to vector<128x32xf32>
    %cst_19 = arith.constant dense<0.000000e+00> : vector<16x32xf32>
    %36 = tpu.matmul %32, %35, %cst_19 {dimension_numbers = #tpu.dot_dimension_numbers<[1], [0], [0], [1], [0, 0, 1, 1], [], []>} : vector<16x128xf32>, vector<128x32xf32>, vector<16x32xf32> -> vector<16x32xf32>
    %c0_20 = arith.constant 0 : index
    %c0_21 = arith.constant 0 : index
    %c0_22 = arith.constant 0 : index
    %c0_23 = arith.constant 0 : index
    %37 = vector.load %arg5[%c0_20, %c0_21, %c0_22, %c0_23] : memref<1x12x1x32xf32, #tpu.memory_space<vmem>>, vector<1x1x1x32xf32>
    %38 = vector.shape_cast %37 : vector<1x1x1x32xf32> to vector<1x32xf32>
    %39 = vector.broadcast %38 : vector<1x32xf32> to vector<16x32xf32>
    %40 = arith.addf %36, %39 : vector<16x32xf32>
    %c0_24 = arith.constant 0 : index
    %c4 = arith.constant 4 : index
    %c0_25 = arith.constant 0 : index
    %c0_26 = arith.constant 0 : index
    %41 = vector.load %arg4[%c0_24, %c4, %c0_25, %c0_26] : memref<1x12x128x32xf32, #tpu.memory_space<vmem>>, vector<1x1x128x32xf32>
    %42 = vector.shape_cast %41 : vector<1x1x128x32xf32> to vector<128x32xf32>
    %cst_27 = arith.constant dense<0.000000e+00> : vector<16x32xf32>
    %43 = tpu.matmul %32, %42, %cst_27 {dimension_numbers = #tpu.dot_dimension_numbers<[1], [0], [0], [1], [0, 0, 1, 1], [], []>} : vector<16x128xf32>, vector<128x32xf32>, vector<16x32xf32> -> vector<16x32xf32>
    %c0_28 = arith.constant 0 : index
    %c4_29 = arith.constant 4 : index
    %c0_30 = arith.constant 0 : index
    %c0_31 = arith.constant 0 : index
    %44 = vector.load %arg5[%c0_28, %c4_29, %c0_30, %c0_31] : memref<1x12x1x32xf32, #tpu.memory_space<vmem>>, vector<1x1x1x32xf32>
    %45 = vector.shape_cast %44 : vector<1x1x1x32xf32> to vector<1x32xf32>
    %46 = vector.broadcast %45 : vector<1x32xf32> to vector<16x32xf32>
    %47 = arith.addf %43, %46 : vector<16x32xf32>
    %c0_32 = arith.constant 0 : index
    %c8 = arith.constant 8 : index
    %c0_33 = arith.constant 0 : index
    %c0_34 = arith.constant 0 : index
    %48 = vector.load %arg4[%c0_32, %c8, %c0_33, %c0_34] : memref<1x12x128x32xf32, #tpu.memory_space<vmem>>, vector<1x1x128x32xf32>
    %49 = vector.shape_cast %48 : vector<1x1x128x32xf32> to vector<128x32xf32>
    %cst_35 = arith.constant dense<0.000000e+00> : vector<16x32xf32>
    %50 = tpu.matmul %32, %49, %cst_35 {dimension_numbers = #tpu.dot_dimension_numbers<[1], [0], [0], [1], [0, 0, 1, 1], [], []>} : vector<16x128xf32>, vector<128x32xf32>, vector<16x32xf32> -> vector<16x32xf32>
    %c0_36 = arith.constant 0 : index
    %c8_37 = arith.constant 8 : index
    %c0_38 = arith.constant 0 : index
    %c0_39 = arith.constant 0 : index
    %51 = vector.load %arg5[%c0_36, %c8_37, %c0_38, %c0_39] : memref<1x12x1x32xf32, #tpu.memory_space<vmem>>, vector<1x1x1x32xf32>
    %52 = vector.shape_cast %51 : vector<1x1x1x32xf32> to vector<1x32xf32>
    %53 = vector.broadcast %52 : vector<1x32xf32> to vector<16x32xf32>
    %54 = arith.addf %50, %53 : vector<16x32xf32>
    %cst_40 = arith.constant 0.288675129 : f32
    %55 = vector.broadcast %cst_40 : f32 to vector<16x32xf32>
    %56 = arith.mulf %40, %55 : vector<16x32xf32>
    "tpu.trace_start"() <{level = 10 : i32, message = "nd,md->nm"}> : () -> ()
    %cst_41 = arith.constant dense<0.000000e+00> : vector<16x16xf32>
    %57 = tpu.matmul %56, %47, %cst_41 {dimension_numbers = #tpu.dot_dimension_numbers<[1], [1], [0], [0], [0, 0, 1, 0], [], []>} : vector<16x32xf32>, vector<16x32xf32>, vector<16x16xf32> -> vector<16x16xf32>
    "tpu.trace_stop"() : () -> ()
    %58 = vector.broadcast %4 : vector<1x16xf32> to vector<16x16xf32>
    %59 = arith.addf %57, %58 : vector<16x16xf32>
    %cst_42 = arith.constant dense<0xFF800000> : vector<16xf32>
    %60 = vector.multi_reduction <maximumf>, %59, %cst_42 [1] : vector<16x16xf32> to vector<16xf32>
    %61 = vector.shape_cast %60 : vector<16xf32> to vector<16x1xf32>
    %62 = vector.broadcast %61 : vector<16x1xf32> to vector<16x16xf32>
    %63 = arith.subf %59, %62 : vector<16x16xf32>
    %64 = math.exp %63 : vector<16x16xf32>
    %cst_43 = arith.constant dense<0.000000e+00> : vector<16xf32>
    %65 = vector.multi_reduction <add>, %64, %cst_43 [1] : vector<16x16xf32> to vector<16xf32>
    %66 = vector.shape_cast %65 : vector<16xf32> to vector<16x1xf32>
    %67 = tpu.reciprocal %66 {approx = true} : vector<16x1xf32> -> vector<16x1xf32>
    %68 = vector.broadcast %67 : vector<16x1xf32> to vector<16x16xf32>
    %69 = arith.mulf %64, %68 : vector<16x16xf32>
    %cst_44 = arith.constant dense<0.000000e+00> : vector<16x32xf32>
    %70 = tpu.matmul %69, %54, %cst_44 {dimension_numbers = #tpu.dot_dimension_numbers<[1], [0], [0], [1], [0, 0, 1, 1], [], []>} : vector<16x16xf32>, vector<16x32xf32>, vector<16x32xf32> -> vector<16x32xf32>
    %c0_45 = arith.constant 0 : index
    %c0_46 = arith.constant 0 : index
    %c0_47 = arith.constant 0 : index
    %c0_48 = arith.constant 0 : index
    %71 = vector.load %arg6[%c0_45, %c0_46, %c0_47, %c0_48] : memref<1x4x32x128xf32, #tpu.memory_space<vmem>>, vector<1x1x32x128xf32>
    %72 = vector.shape_cast %71 : vector<1x1x32x128xf32> to vector<32x128xf32>
    %cst_49 = arith.constant dense<0.000000e+00> : vector<16x128xf32>
    %73 = tpu.matmul %70, %72, %cst_49 {dimension_numbers = #tpu.dot_dimension_numbers<[1], [0], [0], [1], [0, 0, 1, 1], [], []>} : vector<16x32xf32>, vector<32x128xf32>, vector<16x128xf32> -> vector<16x128xf32>
    %74 = arith.addf %33, %73 : vector<16x128xf32>
    %c0_50 = arith.constant 0 : index
    %c1_51 = arith.constant 1 : index
    %c0_52 = arith.constant 0 : index
    %c0_53 = arith.constant 0 : index
    %75 = vector.load %arg4[%c0_50, %c1_51, %c0_52, %c0_53] : memref<1x12x128x32xf32, #tpu.memory_space<vmem>>, vector<1x1x128x32xf32>
    %76 = vector.shape_cast %75 : vector<1x1x128x32xf32> to vector<128x32xf32>
    %cst_54 = arith.constant dense<0.000000e+00> : vector<16x32xf32>
    %77 = tpu.matmul %32, %76, %cst_54 {dimension_numbers = #tpu.dot_dimension_numbers<[1], [0], [0], [1], [0, 0, 1, 1], [], []>} : vector<16x128xf32>, vector<128x32xf32>, vector<16x32xf32> -> vector<16x32xf32>
    %c0_55 = arith.constant 0 : index
    %c1_56 = arith.constant 1 : index
    %c0_57 = arith.constant 0 : index
    %c0_58 = arith.constant 0 : index
    %78 = vector.load %arg5[%c0_55, %c1_56, %c0_57, %c0_58] : memref<1x12x1x32xf32, #tpu.memory_space<vmem>>, vector<1x1x1x32xf32>
    %79 = vector.shape_cast %78 : vector<1x1x1x32xf32> to vector<1x32xf32>
    %80 = vector.broadcast %79 : vector<1x32xf32> to vector<16x32xf32>
    %81 = arith.addf %77, %80 : vector<16x32xf32>
    %c0_59 = arith.constant 0 : index
    %c5 = arith.constant 5 : index
    %c0_60 = arith.constant 0 : index
    %c0_61 = arith.constant 0 : index
    %82 = vector.load %arg4[%c0_59, %c5, %c0_60, %c0_61] : memref<1x12x128x32xf32, #tpu.memory_space<vmem>>, vector<1x1x128x32xf32>
    %83 = vector.shape_cast %82 : vector<1x1x128x32xf32> to vector<128x32xf32>
    %cst_62 = arith.constant dense<0.000000e+00> : vector<16x32xf32>
    %84 = tpu.matmul %32, %83, %cst_62 {dimension_numbers = #tpu.dot_dimension_numbers<[1], [0], [0], [1], [0, 0, 1, 1], [], []>} : vector<16x128xf32>, vector<128x32xf32>, vector<16x32xf32> -> vector<16x32xf32>
    %c0_63 = arith.constant 0 : index
    %c5_64 = arith.constant 5 : index
    %c0_65 = arith.constant 0 : index
    %c0_66 = arith.constant 0 : index
    %85 = vector.load %arg5[%c0_63, %c5_64, %c0_65, %c0_66] : memref<1x12x1x32xf32, #tpu.memory_space<vmem>>, vector<1x1x1x32xf32>
    %86 = vector.shape_cast %85 : vector<1x1x1x32xf32> to vector<1x32xf32>
    %87 = vector.broadcast %86 : vector<1x32xf32> to vector<16x32xf32>
    %88 = arith.addf %84, %87 : vector<16x32xf32>
    %c0_67 = arith.constant 0 : index
    %c9 = arith.constant 9 : index
    %c0_68 = arith.constant 0 : index
    %c0_69 = arith.constant 0 : index
    %89 = vector.load %arg4[%c0_67, %c9, %c0_68, %c0_69] : memref<1x12x128x32xf32, #tpu.memory_space<vmem>>, vector<1x1x128x32xf32>
    %90 = vector.shape_cast %89 : vector<1x1x128x32xf32> to vector<128x32xf32>
    %cst_70 = arith.constant dense<0.000000e+00> : vector<16x32xf32>
    %91 = tpu.matmul %32, %90, %cst_70 {dimension_numbers = #tpu.dot_dimension_numbers<[1], [0], [0], [1], [0, 0, 1, 1], [], []>} : vector<16x128xf32>, vector<128x32xf32>, vector<16x32xf32> -> vector<16x32xf32>
    %c0_71 = arith.constant 0 : index
    %c9_72 = arith.constant 9 : index
    %c0_73 = arith.constant 0 : index
    %c0_74 = arith.constant 0 : index
    %92 = vector.load %arg5[%c0_71, %c9_72, %c0_73, %c0_74] : memref<1x12x1x32xf32, #tpu.memory_space<vmem>>, vector<1x1x1x32xf32>
    %93 = vector.shape_cast %92 : vector<1x1x1x32xf32> to vector<1x32xf32>
    %94 = vector.broadcast %93 : vector<1x32xf32> to vector<16x32xf32>
    %95 = arith.addf %91, %94 : vector<16x32xf32>
    %cst_75 = arith.constant 0.288675129 : f32
    %96 = vector.broadcast %cst_75 : f32 to vector<16x32xf32>
    %97 = arith.mulf %81, %96 : vector<16x32xf32>
    "tpu.trace_start"() <{level = 10 : i32, message = "nd,md->nm"}> : () -> ()
    %cst_76 = arith.constant dense<0.000000e+00> : vector<16x16xf32>
    %98 = tpu.matmul %97, %88, %cst_76 {dimension_numbers = #tpu.dot_dimension_numbers<[1], [1], [0], [0], [0, 0, 1, 0], [], []>} : vector<16x32xf32>, vector<16x32xf32>, vector<16x16xf32> -> vector<16x16xf32>
    "tpu.trace_stop"() : () -> ()
    %99 = vector.broadcast %4 : vector<1x16xf32> to vector<16x16xf32>
    %100 = arith.addf %98, %99 : vector<16x16xf32>
    %cst_77 = arith.constant dense<0xFF800000> : vector<16xf32>
    %101 = vector.multi_reduction <maximumf>, %100, %cst_77 [1] : vector<16x16xf32> to vector<16xf32>
    %102 = vector.shape_cast %101 : vector<16xf32> to vector<16x1xf32>
    %103 = vector.broadcast %102 : vector<16x1xf32> to vector<16x16xf32>
    %104 = arith.subf %100, %103 : vector<16x16xf32>
    %105 = math.exp %104 : vector<16x16xf32>
    %cst_78 = arith.constant dense<0.000000e+00> : vector<16xf32>
    %106 = vector.multi_reduction <add>, %105, %cst_78 [1] : vector<16x16xf32> to vector<16xf32>
    %107 = vector.shape_cast %106 : vector<16xf32> to vector<16x1xf32>
    %108 = tpu.reciprocal %107 {approx = true} : vector<16x1xf32> -> vector<16x1xf32>
    %109 = vector.broadcast %108 : vector<16x1xf32> to vector<16x16xf32>
    %110 = arith.mulf %105, %109 : vector<16x16xf32>
    %cst_79 = arith.constant dense<0.000000e+00> : vector<16x32xf32>
    %111 = tpu.matmul %110, %95, %cst_79 {dimension_numbers = #tpu.dot_dimension_numbers<[1], [0], [0], [1], [0, 0, 1, 1], [], []>} : vector<16x16xf32>, vector<16x32xf32>, vector<16x32xf32> -> vector<16x32xf32>
    %c0_80 = arith.constant 0 : index
    %c1_81 = arith.constant 1 : index
    %c0_82 = arith.constant 0 : index
    %c0_83 = arith.constant 0 : index
    %112 = vector.load %arg6[%c0_80, %c1_81, %c0_82, %c0_83] : memref<1x4x32x128xf32, #tpu.memory_space<vmem>>, vector<1x1x32x128xf32>
    %113 = vector.shape_cast %112 : vector<1x1x32x128xf32> to vector<32x128xf32>
    %cst_84 = arith.constant dense<0.000000e+00> : vector<16x128xf32>
    %114 = tpu.matmul %111, %113, %cst_84 {dimension_numbers = #tpu.dot_dimension_numbers<[1], [0], [0], [1], [0, 0, 1, 1], [], []>} : vector<16x32xf32>, vector<32x128xf32>, vector<16x128xf32> -> vector<16x128xf32>
    %115 = arith.addf %74, %114 : vector<16x128xf32>
    %c0_85 = arith.constant 0 : index
    %c2 = arith.constant 2 : index
    %c0_86 = arith.constant 0 : index
    %c0_87 = arith.constant 0 : index
    %116 = vector.load %arg4[%c0_85, %c2, %c0_86, %c0_87] : memref<1x12x128x32xf32, #tpu.memory_space<vmem>>, vector<1x1x128x32xf32>
    %117 = vector.shape_cast %116 : vector<1x1x128x32xf32> to vector<128x32xf32>
    %cst_88 = arith.constant dense<0.000000e+00> : vector<16x32xf32>
    %118 = tpu.matmul %32, %117, %cst_88 {dimension_numbers = #tpu.dot_dimension_numbers<[1], [0], [0], [1], [0, 0, 1, 1], [], []>} : vector<16x128xf32>, vector<128x32xf32>, vector<16x32xf32> -> vector<16x32xf32>
    %c0_89 = arith.constant 0 : index
    %c2_90 = arith.constant 2 : index
    %c0_91 = arith.constant 0 : index
    %c0_92 = arith.constant 0 : index
    %119 = vector.load %arg5[%c0_89, %c2_90, %c0_91, %c0_92] : memref<1x12x1x32xf32, #tpu.memory_space<vmem>>, vector<1x1x1x32xf32>
    %120 = vector.shape_cast %119 : vector<1x1x1x32xf32> to vector<1x32xf32>
    %121 = vector.broadcast %120 : vector<1x32xf32> to vector<16x32xf32>
    %122 = arith.addf %118, %121 : vector<16x32xf32>
    %c0_93 = arith.constant 0 : index
    %c6 = arith.constant 6 : index
    %c0_94 = arith.constant 0 : index
    %c0_95 = arith.constant 0 : index
    %123 = vector.load %arg4[%c0_93, %c6, %c0_94, %c0_95] : memref<1x12x128x32xf32, #tpu.memory_space<vmem>>, vector<1x1x128x32xf32>
    %124 = vector.shape_cast %123 : vector<1x1x128x32xf32> to vector<128x32xf32>
    %cst_96 = arith.constant dense<0.000000e+00> : vector<16x32xf32>
    %125 = tpu.matmul %32, %124, %cst_96 {dimension_numbers = #tpu.dot_dimension_numbers<[1], [0], [0], [1], [0, 0, 1, 1], [], []>} : vector<16x128xf32>, vector<128x32xf32>, vector<16x32xf32> -> vector<16x32xf32>
    %c0_97 = arith.constant 0 : index
    %c6_98 = arith.constant 6 : index
    %c0_99 = arith.constant 0 : index
    %c0_100 = arith.constant 0 : index
    %126 = vector.load %arg5[%c0_97, %c6_98, %c0_99, %c0_100] : memref<1x12x1x32xf32, #tpu.memory_space<vmem>>, vector<1x1x1x32xf32>
    %127 = vector.shape_cast %126 : vector<1x1x1x32xf32> to vector<1x32xf32>
    %128 = vector.broadcast %127 : vector<1x32xf32> to vector<16x32xf32>
    %129 = arith.addf %125, %128 : vector<16x32xf32>
    %c0_101 = arith.constant 0 : index
    %c10 = arith.constant 10 : index
    %c0_102 = arith.constant 0 : index
    %c0_103 = arith.constant 0 : index
    %130 = vector.load %arg4[%c0_101, %c10, %c0_102, %c0_103] : memref<1x12x128x32xf32, #tpu.memory_space<vmem>>, vector<1x1x128x32xf32>
    %131 = vector.shape_cast %130 : vector<1x1x128x32xf32> to vector<128x32xf32>
    %cst_104 = arith.constant dense<0.000000e+00> : vector<16x32xf32>
    %132 = tpu.matmul %32, %131, %cst_104 {dimension_numbers = #tpu.dot_dimension_numbers<[1], [0], [0], [1], [0, 0, 1, 1], [], []>} : vector<16x128xf32>, vector<128x32xf32>, vector<16x32xf32> -> vector<16x32xf32>
    %c0_105 = arith.constant 0 : index
    %c10_106 = arith.constant 10 : index
    %c0_107 = arith.constant 0 : index
    %c0_108 = arith.constant 0 : index
    %133 = vector.load %arg5[%c0_105, %c10_106, %c0_107, %c0_108] : memref<1x12x1x32xf32, #tpu.memory_space<vmem>>, vector<1x1x1x32xf32>
    %134 = vector.shape_cast %133 : vector<1x1x1x32xf32> to vector<1x32xf32>
    %135 = vector.broadcast %134 : vector<1x32xf32> to vector<16x32xf32>
    %136 = arith.addf %132, %135 : vector<16x32xf32>
    %cst_109 = arith.constant 0.288675129 : f32
    %137 = vector.broadcast %cst_109 : f32 to vector<16x32xf32>
    %138 = arith.mulf %122, %137 : vector<16x32xf32>
    "tpu.trace_start"() <{level = 10 : i32, message = "nd,md->nm"}> : () -> ()
    %cst_110 = arith.constant dense<0.000000e+00> : vector<16x16xf32>
    %139 = tpu.matmul %138, %129, %cst_110 {dimension_numbers = #tpu.dot_dimension_numbers<[1], [1], [0], [0], [0, 0, 1, 0], [], []>} : vector<16x32xf32>, vector<16x32xf32>, vector<16x16xf32> -> vector<16x16xf32>
    "tpu.trace_stop"() : () -> ()
    %140 = vector.broadcast %4 : vector<1x16xf32> to vector<16x16xf32>
    %141 = arith.addf %139, %140 : vector<16x16xf32>
    %cst_111 = arith.constant dense<0xFF800000> : vector<16xf32>
    %142 = vector.multi_reduction <maximumf>, %141, %cst_111 [1] : vector<16x16xf32> to vector<16xf32>
    %143 = vector.shape_cast %142 : vector<16xf32> to vector<16x1xf32>
    %144 = vector.broadcast %143 : vector<16x1xf32> to vector<16x16xf32>
    %145 = arith.subf %141, %144 : vector<16x16xf32>
    %146 = math.exp %145 : vector<16x16xf32>
    %cst_112 = arith.constant dense<0.000000e+00> : vector<16xf32>
    %147 = vector.multi_reduction <add>, %146, %cst_112 [1] : vector<16x16xf32> to vector<16xf32>
    %148 = vector.shape_cast %147 : vector<16xf32> to vector<16x1xf32>
    %149 = tpu.reciprocal %148 {approx = true} : vector<16x1xf32> -> vector<16x1xf32>
    %150 = vector.broadcast %149 : vector<16x1xf32> to vector<16x16xf32>
    %151 = arith.mulf %146, %150 : vector<16x16xf32>
    %cst_113 = arith.constant dense<0.000000e+00> : vector<16x32xf32>
    %152 = tpu.matmul %151, %136, %cst_113 {dimension_numbers = #tpu.dot_dimension_numbers<[1], [0], [0], [1], [0, 0, 1, 1], [], []>} : vector<16x16xf32>, vector<16x32xf32>, vector<16x32xf32> -> vector<16x32xf32>
    %c0_114 = arith.constant 0 : index
    %c2_115 = arith.constant 2 : index
    %c0_116 = arith.constant 0 : index
    %c0_117 = arith.constant 0 : index
    %153 = vector.load %arg6[%c0_114, %c2_115, %c0_116, %c0_117] : memref<1x4x32x128xf32, #tpu.memory_space<vmem>>, vector<1x1x32x128xf32>
    %154 = vector.shape_cast %153 : vector<1x1x32x128xf32> to vector<32x128xf32>
    %cst_118 = arith.constant dense<0.000000e+00> : vector<16x128xf32>
    %155 = tpu.matmul %152, %154, %cst_118 {dimension_numbers = #tpu.dot_dimension_numbers<[1], [0], [0], [1], [0, 0, 1, 1], [], []>} : vector<16x32xf32>, vector<32x128xf32>, vector<16x128xf32> -> vector<16x128xf32>
    %156 = arith.addf %115, %155 : vector<16x128xf32>
    %c0_119 = arith.constant 0 : index
    %c3 = arith.constant 3 : index
    %c0_120 = arith.constant 0 : index
    %c0_121 = arith.constant 0 : index
    %157 = vector.load %arg4[%c0_119, %c3, %c0_120, %c0_121] : memref<1x12x128x32xf32, #tpu.memory_space<vmem>>, vector<1x1x128x32xf32>
    %158 = vector.shape_cast %157 : vector<1x1x128x32xf32> to vector<128x32xf32>
    %cst_122 = arith.constant dense<0.000000e+00> : vector<16x32xf32>
    %159 = tpu.matmul %32, %158, %cst_122 {dimension_numbers = #tpu.dot_dimension_numbers<[1], [0], [0], [1], [0, 0, 1, 1], [], []>} : vector<16x128xf32>, vector<128x32xf32>, vector<16x32xf32> -> vector<16x32xf32>
    %c0_123 = arith.constant 0 : index
    %c3_124 = arith.constant 3 : index
    %c0_125 = arith.constant 0 : index
    %c0_126 = arith.constant 0 : index
    %160 = vector.load %arg5[%c0_123, %c3_124, %c0_125, %c0_126] : memref<1x12x1x32xf32, #tpu.memory_space<vmem>>, vector<1x1x1x32xf32>
    %161 = vector.shape_cast %160 : vector<1x1x1x32xf32> to vector<1x32xf32>
    %162 = vector.broadcast %161 : vector<1x32xf32> to vector<16x32xf32>
    %163 = arith.addf %159, %162 : vector<16x32xf32>
    %c0_127 = arith.constant 0 : index
    %c7 = arith.constant 7 : index
    %c0_128 = arith.constant 0 : index
    %c0_129 = arith.constant 0 : index
    %164 = vector.load %arg4[%c0_127, %c7, %c0_128, %c0_129] : memref<1x12x128x32xf32, #tpu.memory_space<vmem>>, vector<1x1x128x32xf32>
    %165 = vector.shape_cast %164 : vector<1x1x128x32xf32> to vector<128x32xf32>
    %cst_130 = arith.constant dense<0.000000e+00> : vector<16x32xf32>
    %166 = tpu.matmul %32, %165, %cst_130 {dimension_numbers = #tpu.dot_dimension_numbers<[1], [0], [0], [1], [0, 0, 1, 1], [], []>} : vector<16x128xf32>, vector<128x32xf32>, vector<16x32xf32> -> vector<16x32xf32>
    %c0_131 = arith.constant 0 : index
    %c7_132 = arith.constant 7 : index
    %c0_133 = arith.constant 0 : index
    %c0_134 = arith.constant 0 : index
    %167 = vector.load %arg5[%c0_131, %c7_132, %c0_133, %c0_134] : memref<1x12x1x32xf32, #tpu.memory_space<vmem>>, vector<1x1x1x32xf32>
    %168 = vector.shape_cast %167 : vector<1x1x1x32xf32> to vector<1x32xf32>
    %169 = vector.broadcast %168 : vector<1x32xf32> to vector<16x32xf32>
    %170 = arith.addf %166, %169 : vector<16x32xf32>
    %c0_135 = arith.constant 0 : index
    %c11 = arith.constant 11 : index
    %c0_136 = arith.constant 0 : index
    %c0_137 = arith.constant 0 : index
    %171 = vector.load %arg4[%c0_135, %c11, %c0_136, %c0_137] : memref<1x12x128x32xf32, #tpu.memory_space<vmem>>, vector<1x1x128x32xf32>
    %172 = vector.shape_cast %171 : vector<1x1x128x32xf32> to vector<128x32xf32>
    %cst_138 = arith.constant dense<0.000000e+00> : vector<16x32xf32>
    %173 = tpu.matmul %32, %172, %cst_138 {dimension_numbers = #tpu.dot_dimension_numbers<[1], [0], [0], [1], [0, 0, 1, 1], [], []>} : vector<16x128xf32>, vector<128x32xf32>, vector<16x32xf32> -> vector<16x32xf32>
    %c0_139 = arith.constant 0 : index
    %c11_140 = arith.constant 11 : index
    %c0_141 = arith.constant 0 : index
    %c0_142 = arith.constant 0 : index
    %174 = vector.load %arg5[%c0_139, %c11_140, %c0_141, %c0_142] : memref<1x12x1x32xf32, #tpu.memory_space<vmem>>, vector<1x1x1x32xf32>
    %175 = vector.shape_cast %174 : vector<1x1x1x32xf32> to vector<1x32xf32>
    %176 = vector.broadcast %175 : vector<1x32xf32> to vector<16x32xf32>
    %177 = arith.addf %173, %176 : vector<16x32xf32>
    %cst_143 = arith.constant 0.288675129 : f32
    %178 = vector.broadcast %cst_143 : f32 to vector<16x32xf32>
    %179 = arith.mulf %163, %178 : vector<16x32xf32>
    "tpu.trace_start"() <{level = 10 : i32, message = "nd,md->nm"}> : () -> ()
    %cst_144 = arith.constant dense<0.000000e+00> : vector<16x16xf32>
    %180 = tpu.matmul %179, %170, %cst_144 {dimension_numbers = #tpu.dot_dimension_numbers<[1], [1], [0], [0], [0, 0, 1, 0], [], []>} : vector<16x32xf32>, vector<16x32xf32>, vector<16x16xf32> -> vector<16x16xf32>
    "tpu.trace_stop"() : () -> ()
    %181 = vector.broadcast %4 : vector<1x16xf32> to vector<16x16xf32>
    %182 = arith.addf %180, %181 : vector<16x16xf32>
    %cst_145 = arith.constant dense<0xFF800000> : vector<16xf32>
    %183 = vector.multi_reduction <maximumf>, %182, %cst_145 [1] : vector<16x16xf32> to vector<16xf32>
    %184 = vector.shape_cast %183 : vector<16xf32> to vector<16x1xf32>
    %185 = vector.broadcast %184 : vector<16x1xf32> to vector<16x16xf32>
    %186 = arith.subf %182, %185 : vector<16x16xf32>
    %187 = math.exp %186 : vector<16x16xf32>
    %cst_146 = arith.constant dense<0.000000e+00> : vector<16xf32>
    %188 = vector.multi_reduction <add>, %187, %cst_146 [1] : vector<16x16xf32> to vector<16xf32>
    %189 = vector.shape_cast %188 : vector<16xf32> to vector<16x1xf32>
    %190 = tpu.reciprocal %189 {approx = true} : vector<16x1xf32> -> vector<16x1xf32>
    %191 = vector.broadcast %190 : vector<16x1xf32> to vector<16x16xf32>
    %192 = arith.mulf %187, %191 : vector<16x16xf32>
    %cst_147 = arith.constant dense<0.000000e+00> : vector<16x32xf32>
    %193 = tpu.matmul %192, %177, %cst_147 {dimension_numbers = #tpu.dot_dimension_numbers<[1], [0], [0], [1], [0, 0, 1, 1], [], []>} : vector<16x16xf32>, vector<16x32xf32>, vector<16x32xf32> -> vector<16x32xf32>
    %c0_148 = arith.constant 0 : index
    %c3_149 = arith.constant 3 : index
    %c0_150 = arith.constant 0 : index
    %c0_151 = arith.constant 0 : index
    %194 = vector.load %arg6[%c0_148, %c3_149, %c0_150, %c0_151] : memref<1x4x32x128xf32, #tpu.memory_space<vmem>>, vector<1x1x32x128xf32>
    %195 = vector.shape_cast %194 : vector<1x1x32x128xf32> to vector<32x128xf32>
    %cst_152 = arith.constant dense<0.000000e+00> : vector<16x128xf32>
    %196 = tpu.matmul %193, %195, %cst_152 {dimension_numbers = #tpu.dot_dimension_numbers<[1], [0], [0], [1], [0, 0, 1, 1], [], []>} : vector<16x32xf32>, vector<32x128xf32>, vector<16x128xf32> -> vector<16x128xf32>
    %197 = arith.addf %156, %196 : vector<16x128xf32>
    %198 = arith.addf %3, %197 : vector<16x128xf32>
    %c0_153 = arith.constant 0 : index
    %c0_154 = arith.constant 0 : index
    %c0_155 = arith.constant 0 : index
    %199 = vector.load %arg7[%c0_153, %c0_154, %c0_155] : memref<1x1x128xf32, #tpu.memory_space<vmem>>, vector<1x1x128xf32>
    %200 = vector.shape_cast %199 : vector<1x1x128xf32> to vector<1x128xf32>
    %201 = vector.broadcast %200 : vector<1x128xf32> to vector<16x128xf32>
    %202 = arith.addf %198, %201 : vector<16x128xf32>
    %c0_156 = arith.constant 0 : index
    %c0_157 = arith.constant 0 : index
    %c0_158 = arith.constant 0 : index
    %203 = vector.load %arg8[%c0_156, %c0_157, %c0_158] : memref<1x2x128xf32, #tpu.memory_space<vmem>>, vector<1x1x128xf32>
    %204 = vector.shape_cast %203 : vector<1x1x128xf32> to vector<1x128xf32>
    %c0_159 = arith.constant 0 : index
    %c1_160 = arith.constant 1 : index
    %c0_161 = arith.constant 0 : index
    %205 = vector.load %arg8[%c0_159, %c1_160, %c0_161] : memref<1x2x128xf32, #tpu.memory_space<vmem>>, vector<1x1x128xf32>
    %206 = vector.shape_cast %205 : vector<1x1x128xf32> to vector<1x128xf32>
    %cst_162 = arith.constant dense<0.000000e+00> : vector<16xf32>
    %207 = vector.multi_reduction <add>, %202, %cst_162 [1] : vector<16x128xf32> to vector<16xf32>
    %208 = vector.shape_cast %207 : vector<16xf32> to vector<16x1xf32>
    %cst_163 = arith.constant 0.020833334 : f32
    %209 = vector.broadcast %cst_163 : f32 to vector<16x1xf32>
    %210 = arith.mulf %208, %209 : vector<16x1xf32>
    %211 = arith.mulf %202, %202 : vector<16x128xf32>
    %cst_164 = arith.constant dense<0.000000e+00> : vector<16xf32>
    %212 = vector.multi_reduction <add>, %211, %cst_164 [1] : vector<16x128xf32> to vector<16xf32>
    %213 = vector.shape_cast %212 : vector<16xf32> to vector<16x1xf32>
    %cst_165 = arith.constant 0.020833334 : f32
    %214 = vector.broadcast %cst_165 : f32 to vector<16x1xf32>
    %215 = arith.mulf %213, %214 : vector<16x1xf32>
    %216 = arith.mulf %210, %210 : vector<16x1xf32>
    %217 = arith.subf %215, %216 : vector<16x1xf32>
    %cst_166 = arith.constant 0.000000e+00 : f32
    %218 = vector.broadcast %cst_166 : f32 to vector<16x1xf32>
    %219 = arith.maximumf %217, %218 : vector<16x1xf32>
    %220 = vector.broadcast %210 : vector<16x1xf32> to vector<16x128xf32>
    %221 = arith.subf %202, %220 : vector<16x128xf32>
    %cst_167 = arith.constant 9.99999974E-6 : f32
    %222 = vector.broadcast %cst_167 : f32 to vector<16x1xf32>
    %223 = arith.addf %219, %222 : vector<16x1xf32>
    %224 = math.rsqrt %223 : vector<16x1xf32>
    %225 = vector.broadcast %224 : vector<16x1xf32> to vector<16x128xf32>
    %226 = arith.mulf %221, %225 : vector<16x128xf32>
    %227 = vector.broadcast %204 : vector<1x128xf32> to vector<16x128xf32>
    %228 = arith.mulf %226, %227 : vector<16x128xf32>
    %229 = vector.broadcast %206 : vector<1x128xf32> to vector<16x128xf32>
    %230 = arith.addf %228, %229 : vector<16x128xf32>
    %c0_168 = arith.constant 0 : index
    %c0_169 = arith.constant 0 : index
    %c0_170 = arith.constant 0 : index
    %231 = vector.load %arg9[%c0_168, %c0_169, %c0_170] : memref<1x128x256xf32, #tpu.memory_space<vmem>>, vector<1x128x256xf32>
    %232 = vector.shape_cast %231 : vector<1x128x256xf32> to vector<128x256xf32>
    %cst_171 = arith.constant dense<0.000000e+00> : vector<16x256xf32>
    %233 = tpu.matmul %230, %232, %cst_171 {dimension_numbers = #tpu.dot_dimension_numbers<[1], [0], [0], [1], [0, 0, 1, 1], [], []>} : vector<16x128xf32>, vector<128x256xf32>, vector<16x256xf32> -> vector<16x256xf32>
    %c0_172 = arith.constant 0 : index
    %c0_173 = arith.constant 0 : index
    %c0_174 = arith.constant 0 : index
    %234 = vector.load %arg10[%c0_172, %c0_173, %c0_174] : memref<1x1x256xf32, #tpu.memory_space<vmem>>, vector<1x1x256xf32>
    %235 = vector.shape_cast %234 : vector<1x1x256xf32> to vector<1x256xf32>
    %236 = vector.broadcast %235 : vector<1x256xf32> to vector<16x256xf32>
    %237 = arith.addf %233, %236 : vector<16x256xf32>
    %238 = arith.mulf %237, %237 : vector<16x256xf32>
    %239 = arith.mulf %237, %238 : vector<16x256xf32>
    %cst_175 = arith.constant 4.471500e-02 : f32
    %240 = vector.broadcast %cst_175 : f32 to vector<16x256xf32>
    %241 = arith.mulf %240, %239 : vector<16x256xf32>
    %242 = arith.addf %237, %241 : vector<16x256xf32>
    %cst_176 = arith.constant 0.797884583 : f32
    %243 = vector.broadcast %cst_176 : f32 to vector<16x256xf32>
    %244 = arith.mulf %243, %242 : vector<16x256xf32>
    %245 = math.tanh %244 : vector<16x256xf32>
    %cst_177 = arith.constant 1.000000e+00 : f32
    %246 = vector.broadcast %cst_177 : f32 to vector<16x256xf32>
    %247 = arith.addf %246, %245 : vector<16x256xf32>
    %cst_178 = arith.constant 5.000000e-01 : f32
    %248 = vector.broadcast %cst_178 : f32 to vector<16x256xf32>
    %249 = arith.mulf %248, %247 : vector<16x256xf32>
    %250 = arith.mulf %237, %249 : vector<16x256xf32>
    %c0_179 = arith.constant 0 : index
    %c0_180 = arith.constant 0 : index
    %c0_181 = arith.constant 0 : index
    %251 = vector.load %arg11[%c0_179, %c0_180, %c0_181] : memref<1x256x128xf32, #tpu.memory_space<vmem>>, vector<1x256x128xf32>
    %252 = vector.shape_cast %251 : vector<1x256x128xf32> to vector<256x128xf32>
    %cst_182 = arith.constant dense<0.000000e+00> : vector<16x128xf32>
    %253 = tpu.matmul %250, %252, %cst_182 {dimension_numbers = #tpu.dot_dimension_numbers<[1], [0], [0], [1], [0, 0, 1, 1], [], []>} : vector<16x256xf32>, vector<256x128xf32>, vector<16x128xf32> -> vector<16x128xf32>
    %c0_183 = arith.constant 0 : index
    %c0_184 = arith.constant 0 : index
    %c0_185 = arith.constant 0 : index
    %254 = vector.load %arg12[%c0_183, %c0_184, %c0_185] : memref<1x1x128xf32, #tpu.memory_space<vmem>>, vector<1x1x128xf32>
    %255 = vector.shape_cast %254 : vector<1x1x128xf32> to vector<1x128xf32>
    %256 = vector.broadcast %255 : vector<1x128xf32> to vector<16x128xf32>
    %257 = arith.addf %253, %256 : vector<16x128xf32>
    %258 = arith.addf %202, %257 : vector<16x128xf32>
    %c0_186 = arith.constant 0 : index
    %c0_187 = arith.constant 0 : index
    %259 = vector.load %arg18[%c0_186, %c0_187] : memref<16x128xf32, #tpu.memory_space<vmem>>, vector<16x128xf32>
    tpu.vector_store %arg18[%c0_186, %c0_187], %258 {strides = array<i32>} : memref<16x128xf32, #tpu.memory_space<vmem>>, vector<16x128xf32>,
    %c1_i32 = arith.constant 1 : i32
    %260 = arith.cmpi eq, %arg1, %c1_i32 : i32
    %261 = arith.extui %260 : i1 to i32
    %c0_i32_188 = arith.constant 0 : i32
    %262 = arith.cmpi ne, %261, %c0_i32_188 : i32
    scf.if %262 {
      %c0_189 = arith.constant 0 : index
      %c0_190 = arith.constant 0 : index
      %263 = vector.load %arg14[%c0_189, %c0_190] : memref<2x128xf32, #tpu.memory_space<vmem>>, vector<1x128xf32>
      %c1_191 = arith.constant 1 : index
      %c0_192 = arith.constant 0 : index
      %264 = vector.load %arg14[%c1_191, %c0_192] : memref<2x128xf32, #tpu.memory_space<vmem>>, vector<1x128xf32>
      %cst_193 = arith.constant dense<0.000000e+00> : vector<16xf32>
      %265 = vector.multi_reduction <add>, %258, %cst_193 [1] : vector<16x128xf32> to vector<16xf32>
      %266 = vector.shape_cast %265 : vector<16xf32> to vector<16x1xf32>
      %cst_194 = arith.constant 0.020833334 : f32
      %267 = vector.broadcast %cst_194 : f32 to vector<16x1xf32>
      %268 = arith.mulf %266, %267 : vector<16x1xf32>
      %269 = arith.mulf %258, %258 : vector<16x128xf32>
      %cst_195 = arith.constant dense<0.000000e+00> : vector<16xf32>
      %270 = vector.multi_reduction <add>, %269, %cst_195 [1] : vector<16x128xf32> to vector<16xf32>
      %271 = vector.shape_cast %270 : vector<16xf32> to vector<16x1xf32>
      %cst_196 = arith.constant 0.020833334 : f32
      %272 = vector.broadcast %cst_196 : f32 to vector<16x1xf32>
      %273 = arith.mulf %271, %272 : vector<16x1xf32>
      %274 = arith.mulf %268, %268 : vector<16x1xf32>
      %275 = arith.subf %273, %274 : vector<16x1xf32>
      %cst_197 = arith.constant 0.000000e+00 : f32
      %276 = vector.broadcast %cst_197 : f32 to vector<16x1xf32>
      %277 = arith.maximumf %275, %276 : vector<16x1xf32>
      %278 = vector.broadcast %268 : vector<16x1xf32> to vector<16x128xf32>
      %279 = arith.subf %258, %278 : vector<16x128xf32>
      %cst_198 = arith.constant 9.99999974E-6 : f32
      %280 = vector.broadcast %cst_198 : f32 to vector<16x1xf32>
      %281 = arith.addf %277, %280 : vector<16x1xf32>
      %282 = math.rsqrt %281 : vector<16x1xf32>
      %283 = vector.broadcast %282 : vector<16x1xf32> to vector<16x128xf32>
      %284 = arith.mulf %279, %283 : vector<16x128xf32>
      %285 = vector.broadcast %263 : vector<1x128xf32> to vector<16x128xf32>
      %286 = arith.mulf %284, %285 : vector<16x128xf32>
      %287 = vector.broadcast %264 : vector<1x128xf32> to vector<16x128xf32>
      %288 = arith.addf %286, %287 : vector<16x128xf32>
      %c0_199 = arith.constant 0 : index
      %c0_200 = arith.constant 0 : index
      %289 = vector.load %arg15[%c0_199, %c0_200] : memref<128x128xf32, #tpu.memory_space<vmem>>, vector<128x128xf32>
      %c0_201 = arith.constant 0 : index
      %c0_202 = arith.constant 0 : index
      %290 = vector.load %arg16[%c0_201, %c0_202] : memref<1x128xf32, #tpu.memory_space<vmem>>, vector<1x128xf32>
      %cst_203 = arith.constant dense<0.000000e+00> : vector<16x128xf32>
      %291 = tpu.matmul %288, %289, %cst_203 {dimension_numbers = #tpu.dot_dimension_numbers<[1], [0], [0], [1], [0, 0, 1, 1], [], []>} : vector<16x128xf32>, vector<128x128xf32>, vector<16x128xf32> -> vector<16x128xf32>
      %292 = vector.broadcast %290 : vector<1x128xf32> to vector<16x128xf32>
      %293 = arith.addf %291, %292 : vector<16x128xf32>
      %c0_204 = arith.constant 0 : index
      %c0_205 = arith.constant 0 : index
      %c0_206 = arith.constant 0 : index
      %294 = vector.load %arg17[%c0_204, %c0_205, %c0_206] : memref<1x16x128xf32, #tpu.memory_space<vmem>>, vector<1x16x128xf32>
      %295 = vector.shape_cast %294 : vector<1x16x128xf32> to vector<16x128xf32>
      %296 = vector.shape_cast %293 : vector<16x128xf32> to vector<1x16x128xf32>
      tpu.vector_store %arg17[%c0_204, %c0_205, %c0_206], %296 {strides = array<i32>} : memref<1x16x128xf32, #tpu.memory_space<vmem>>, vector<1x16x128xf32>,
    } else {
    }
    return
  }
  func.func @transform_0(%arg0: i32, %arg1: i32) -> (i32, i32, i32) {
    %c0_i32 = arith.constant 0 : i32
    %c0_i32_0 = arith.constant 0 : i32
    %c0_i32_1 = arith.constant 0 : i32
    return %arg0, %c0_i32, %c0_i32_0 : i32, i32, i32
  }
  func.func @transform_1(%arg0: i32, %arg1: i32) -> (i32, i32, i32) {
    %c0_i32 = arith.constant 0 : i32
    %c0_i32_0 = arith.constant 0 : i32
    %c0_i32_1 = arith.constant 0 : i32
    return %arg1, %c0_i32, %c0_i32_0 : i32, i32, i32
  }
  func.func @transform_2(%arg0: i32, %arg1: i32) -> (i32, i32, i32, i32) {
    %c0_i32 = arith.constant 0 : i32
    %c0_i32_0 = arith.constant 0 : i32
    %c0_i32_1 = arith.constant 0 : i32
    %c0_i32_2 = arith.constant 0 : i32
    return %arg1, %c0_i32, %c0_i32_0, %c0_i32_1 : i32, i32, i32, i32
  }
  func.func @transform_3(%arg0: i32, %arg1: i32) -> (i32, i32, i32, i32) {
    %c0_i32 = arith.constant 0 : i32
    %c0_i32_0 = arith.constant 0 : i32
    %c0_i32_1 = arith.constant 0 : i32
    %c0_i32_2 = arith.constant 0 : i32
    return %arg1, %c0_i32, %c0_i32_0, %c0_i32_1 : i32, i32, i32, i32
  }
  func.func @transform_4(%arg0: i32, %arg1: i32) -> (i32, i32, i32, i32) {
    %c0_i32 = arith.constant 0 : i32
    %c0_i32_0 = arith.constant 0 : i32
    %c0_i32_1 = arith.constant 0 : i32
    %c0_i32_2 = arith.constant 0 : i32
    return %arg1, %c0_i32, %c0_i32_0, %c0_i32_1 : i32, i32, i32, i32
  }
  func.func @transform_5(%arg0: i32, %arg1: i32) -> (i32, i32, i32) {
    %c0_i32 = arith.constant 0 : i32
    %c0_i32_0 = arith.constant 0 : i32
    %c0_i32_1 = arith.constant 0 : i32
    return %arg1, %c0_i32, %c0_i32_0 : i32, i32, i32
  }
  func.func @transform_6(%arg0: i32, %arg1: i32) -> (i32, i32, i32) {
    %c0_i32 = arith.constant 0 : i32
    %c0_i32_0 = arith.constant 0 : i32
    %c0_i32_1 = arith.constant 0 : i32
    return %arg1, %c0_i32, %c0_i32_0 : i32, i32, i32
  }
  func.func @transform_7(%arg0: i32, %arg1: i32) -> (i32, i32, i32) {
    %c0_i32 = arith.constant 0 : i32
    %c0_i32_0 = arith.constant 0 : i32
    %c0_i32_1 = arith.constant 0 : i32
    return %arg1, %c0_i32, %c0_i32_0 : i32, i32, i32
  }
  func.func @transform_8(%arg0: i32, %arg1: i32) -> (i32, i32, i32) {
    %c0_i32 = arith.constant 0 : i32
    %c0_i32_0 = arith.constant 0 : i32
    %c0_i32_1 = arith.constant 0 : i32
    return %arg1, %c0_i32, %c0_i32_0 : i32, i32, i32
  }
  func.func @transform_9(%arg0: i32, %arg1: i32) -> (i32, i32, i32) {
    %c0_i32 = arith.constant 0 : i32
    %c0_i32_0 = arith.constant 0 : i32
    %c0_i32_1 = arith.constant 0 : i32
    return %arg1, %c0_i32, %c0_i32_0 : i32, i32, i32
  }
  func.func @transform_10(%arg0: i32, %arg1: i32) -> (i32, i32, i32) {
    %c0_i32 = arith.constant 0 : i32
    %c0_i32_0 = arith.constant 0 : i32
    %c0_i32_1 = arith.constant 0 : i32
    return %arg1, %c0_i32, %c0_i32_0 : i32, i32, i32
  }
  func.func @transform_11(%arg0: i32, %arg1: i32) -> (i32, i32) {
    %c0_i32 = arith.constant 0 : i32
    %c0_i32_0 = arith.constant 0 : i32
    %c0_i32_1 = arith.constant 0 : i32
    return %c0_i32, %c0_i32_0 : i32, i32
  }
  func.func @transform_12(%arg0: i32, %arg1: i32) -> (i32, i32) {
    %c0_i32 = arith.constant 0 : i32
    %c0_i32_0 = arith.constant 0 : i32
    %c0_i32_1 = arith.constant 0 : i32
    return %c0_i32, %c0_i32_0 : i32, i32
  }
  func.func @transform_13(%arg0: i32, %arg1: i32) -> (i32, i32) {
    %c0_i32 = arith.constant 0 : i32
    %c0_i32_0 = arith.constant 0 : i32
    %c0_i32_1 = arith.constant 0 : i32
    return %c0_i32, %c0_i32_0 : i32, i32
  }
  func.func @transform_14(%arg0: i32, %arg1: i32) -> (i32, i32) {
    %c0_i32 = arith.constant 0 : i32
    %c0_i32_0 = arith.constant 0 : i32
    %c0_i32_1 = arith.constant 0 : i32
    return %c0_i32, %c0_i32_0 : i32, i32
  }
  func.func @transform_15(%arg0: i32, %arg1: i32) -> (i32, i32, i32) {
    %c0_i32 = arith.constant 0 : i32
    %c0_i32_0 = arith.constant 0 : i32
    %c0_i32_1 = arith.constant 0 : i32
    return %arg0, %c0_i32, %c0_i32_0 : i32, i32, i32
  }
}

module attributes {stable_mosaic.version = 11 : i64} {
  func.func @_stack_kernel(%arg0: i32, %arg1: i32, %arg2: memref<1x32x128xf32, #tpu.memory_space<vmem>>, %arg3: memref<1x2x128xf32, #tpu.memory_space<vmem>>, %arg4: memref<1x12x128x32xf32, #tpu.memory_space<vmem>>, %arg5: memref<1x12x1x32xf32, #tpu.memory_space<vmem>>, %arg6: memref<1x4x32x128xf32, #tpu.memory_space<vmem>>, %arg7: memref<1x1x128xf32, #tpu.memory_space<vmem>>, %arg8: memref<1x2x128xf32, #tpu.memory_space<vmem>>, %arg9: memref<1x128x128xf32, #tpu.memory_space<vmem>>, %arg10: memref<1x1x128xf32, #tpu.memory_space<vmem>>, %arg11: memref<1x128x128xf32, #tpu.memory_space<vmem>>, %arg12: memref<1x1x128xf32, #tpu.memory_space<vmem>>, %arg13: memref<1x32xf32, #tpu.memory_space<vmem>>, %arg14: memref<2x128xf32, #tpu.memory_space<vmem>>, %arg15: memref<128x256xf32, #tpu.memory_space<vmem>>, %arg16: memref<1x256xf32, #tpu.memory_space<vmem>>, %arg17: memref<128x64xf32, #tpu.memory_space<vmem>>, %arg18: memref<1x64xf32, #tpu.memory_space<vmem>>, %arg19: memref<1x32x256xf32, #tpu.memory_space<vmem>>, %arg20: memref<1x32x64xf32, #tpu.memory_space<vmem>>, %arg21: memref<32x128xf32, #tpu.memory_space<vmem>>) attributes {dimension_semantics = [#tpu.dimension_semantics<parallel>, #tpu.dimension_semantics<arbitrary>], iteration_bounds = array<i64: 2, 2>, scalar_prefetch = 0 : i64, scratch_operands = 1 : i64, tpu.core_type = #tpu.core_type<tc>, window_params = [{transform_indices = @transform_0, window_bounds = array<i64: 1, 32, 128>}, {transform_indices = @transform_1, window_bounds = array<i64: 1, 2, 128>}, {transform_indices = @transform_2, window_bounds = array<i64: 1, 12, 128, 32>}, {transform_indices = @transform_3, window_bounds = array<i64: 1, 12, 1, 32>}, {transform_indices = @transform_4, window_bounds = array<i64: 1, 4, 32, 128>}, {transform_indices = @transform_5, window_bounds = array<i64: 1, 1, 128>}, {transform_indices = @transform_6, window_bounds = array<i64: 1, 2, 128>}, {transform_indices = @transform_7, window_bounds = array<i64: 1, 128, 128>}, {transform_indices = @transform_8, window_bounds = array<i64: 1, 1, 128>}, {transform_indices = @transform_9, window_bounds = array<i64: 1, 128, 128>}, {transform_indices = @transform_10, window_bounds = array<i64: 1, 1, 128>}, {pipeline_mode = #tpu.pipeline_mode<synchronous>, transform_indices = @transform_11, window_bounds = array<i64: 1, 32>}, {pipeline_mode = #tpu.pipeline_mode<synchronous>, transform_indices = @transform_12, window_bounds = array<i64: 2, 128>}, {pipeline_mode = #tpu.pipeline_mode<synchronous>, transform_indices = @transform_13, window_bounds = array<i64: 128, 256>}, {pipeline_mode = #tpu.pipeline_mode<synchronous>, transform_indices = @transform_14, window_bounds = array<i64: 1, 256>}, {pipeline_mode = #tpu.pipeline_mode<synchronous>, transform_indices = @transform_15, window_bounds = array<i64: 128, 64>}, {pipeline_mode = #tpu.pipeline_mode<synchronous>, transform_indices = @transform_16, window_bounds = array<i64: 1, 64>}, {transform_indices = @transform_17, window_bounds = array<i64: 1, 32, 256>}, {transform_indices = @transform_18, window_bounds = array<i64: 1, 32, 64>}]} {
    %c0_i32 = arith.constant 0 : i32
    %0 = arith.cmpi eq, %arg1, %c0_i32 : i32
    %1 = arith.extui %0 : i1 to i32
    %c0_i32_0 = arith.constant 0 : i32
    %2 = arith.cmpi ne, %1, %c0_i32_0 : i32
    scf.if %2 {
      %c0_189 = arith.constant 0 : index
      %c0_190 = arith.constant 0 : index
      %c0_191 = arith.constant 0 : index
      %263 = vector.load %arg2[%c0_189, %c0_190, %c0_191] : memref<1x32x128xf32, #tpu.memory_space<vmem>>, vector<1x32x128xf32>
      %264 = vector.shape_cast %263 : vector<1x32x128xf32> to vector<32x128xf32>
      %c0_192 = arith.constant 0 : index
      %c0_193 = arith.constant 0 : index
      %265 = vector.load %arg21[%c0_192, %c0_193] : memref<32x128xf32, #tpu.memory_space<vmem>>, vector<32x128xf32>
      tpu.vector_store %arg21[%c0_192, %c0_193], %264 {strides = array<i32>} : memref<32x128xf32, #tpu.memory_space<vmem>>, vector<32x128xf32>,
    } else {
    }
    %c0 = arith.constant 0 : index
    %c0_1 = arith.constant 0 : index
    %3 = vector.load %arg21[%c0, %c0_1] : memref<32x128xf32, #tpu.memory_space<vmem>>, vector<32x128xf32>
    %c0_2 = arith.constant 0 : index
    %c0_3 = arith.constant 0 : index
    %4 = vector.load %arg13[%c0_2, %c0_3] : memref<1x32xf32, #tpu.memory_space<vmem>>, vector<1x32xf32>
    %c0_4 = arith.constant 0 : index
    %c0_5 = arith.constant 0 : index
    %c0_6 = arith.constant 0 : index
    %5 = vector.load %arg3[%c0_4, %c0_5, %c0_6] : memref<1x2x128xf32, #tpu.memory_space<vmem>>, vector<1x1x128xf32>
    %6 = vector.shape_cast %5 : vector<1x1x128xf32> to vector<1x128xf32>
    %c0_7 = arith.constant 0 : index
    %c1 = arith.constant 1 : index
    %c0_8 = arith.constant 0 : index
    %7 = vector.load %arg3[%c0_7, %c1, %c0_8] : memref<1x2x128xf32, #tpu.memory_space<vmem>>, vector<1x1x128xf32>
    %8 = vector.shape_cast %7 : vector<1x1x128xf32> to vector<1x128xf32>
    %cst = arith.constant dense<0.000000e+00> : vector<32xf32>
    %9 = vector.multi_reduction <add>, %3, %cst [1] : vector<32x128xf32> to vector<32xf32>
    %10 = vector.shape_cast %9 : vector<32xf32> to vector<32x1xf32>
    %cst_9 = arith.constant 0.0416666679 : f32
    %11 = vector.broadcast %cst_9 : f32 to vector<32x1xf32>
    %12 = arith.mulf %10, %11 : vector<32x1xf32>
    %13 = arith.mulf %3, %3 : vector<32x128xf32>
    %cst_10 = arith.constant dense<0.000000e+00> : vector<32xf32>
    %14 = vector.multi_reduction <add>, %13, %cst_10 [1] : vector<32x128xf32> to vector<32xf32>
    %15 = vector.shape_cast %14 : vector<32xf32> to vector<32x1xf32>
    %cst_11 = arith.constant 0.0416666679 : f32
    %16 = vector.broadcast %cst_11 : f32 to vector<32x1xf32>
    %17 = arith.mulf %15, %16 : vector<32x1xf32>
    %18 = arith.mulf %12, %12 : vector<32x1xf32>
    %19 = arith.subf %17, %18 : vector<32x1xf32>
    %cst_12 = arith.constant 0.000000e+00 : f32
    %20 = vector.broadcast %cst_12 : f32 to vector<32x1xf32>
    %21 = arith.maximumf %19, %20 : vector<32x1xf32>
    %22 = vector.broadcast %12 : vector<32x1xf32> to vector<32x128xf32>
    %23 = arith.subf %3, %22 : vector<32x128xf32>
    %cst_13 = arith.constant 9.99999974E-6 : f32
    %24 = vector.broadcast %cst_13 : f32 to vector<32x1xf32>
    %25 = arith.addf %21, %24 : vector<32x1xf32>
    %26 = math.rsqrt %25 : vector<32x1xf32>
    %27 = vector.broadcast %26 : vector<32x1xf32> to vector<32x128xf32>
    %28 = arith.mulf %23, %27 : vector<32x128xf32>
    %29 = vector.broadcast %6 : vector<1x128xf32> to vector<32x128xf32>
    %30 = arith.mulf %28, %29 : vector<32x128xf32>
    %31 = vector.broadcast %8 : vector<1x128xf32> to vector<32x128xf32>
    %32 = arith.addf %30, %31 : vector<32x128xf32>
    %cst_14 = arith.constant 0.000000e+00 : f32
    %33 = vector.broadcast %cst_14 : f32 to vector<32x128xf32>
    %c0_15 = arith.constant 0 : index
    %c0_16 = arith.constant 0 : index
    %c0_17 = arith.constant 0 : index
    %c0_18 = arith.constant 0 : index
    %34 = vector.load %arg4[%c0_15, %c0_16, %c0_17, %c0_18] : memref<1x12x128x32xf32, #tpu.memory_space<vmem>>, vector<1x1x128x32xf32>
    %35 = vector.shape_cast %34 : vector<1x1x128x32xf32> to vector<128x32xf32>
    %cst_19 = arith.constant dense<0.000000e+00> : vector<32x32xf32>
    %36 = tpu.matmul %32, %35, %cst_19 {dimension_numbers = #tpu.dot_dimension_numbers<[1], [0], [0], [1], [0, 0, 1, 1], [], []>} : vector<32x128xf32>, vector<128x32xf32>, vector<32x32xf32> -> vector<32x32xf32>
    %c0_20 = arith.constant 0 : index
    %c0_21 = arith.constant 0 : index
    %c0_22 = arith.constant 0 : index
    %c0_23 = arith.constant 0 : index
    %37 = vector.load %arg5[%c0_20, %c0_21, %c0_22, %c0_23] : memref<1x12x1x32xf32, #tpu.memory_space<vmem>>, vector<1x1x1x32xf32>
    %38 = vector.shape_cast %37 : vector<1x1x1x32xf32> to vector<1x32xf32>
    %39 = vector.broadcast %38 : vector<1x32xf32> to vector<32x32xf32>
    %40 = arith.addf %36, %39 : vector<32x32xf32>
    %c0_24 = arith.constant 0 : index
    %c4 = arith.constant 4 : index
    %c0_25 = arith.constant 0 : index
    %c0_26 = arith.constant 0 : index
    %41 = vector.load %arg4[%c0_24, %c4, %c0_25, %c0_26] : memref<1x12x128x32xf32, #tpu.memory_space<vmem>>, vector<1x1x128x32xf32>
    %42 = vector.shape_cast %41 : vector<1x1x128x32xf32> to vector<128x32xf32>
    %cst_27 = arith.constant dense<0.000000e+00> : vector<32x32xf32>
    %43 = tpu.matmul %32, %42, %cst_27 {dimension_numbers = #tpu.dot_dimension_numbers<[1], [0], [0], [1], [0, 0, 1, 1], [], []>} : vector<32x128xf32>, vector<128x32xf32>, vector<32x32xf32> -> vector<32x32xf32>
    %c0_28 = arith.constant 0 : index
    %c4_29 = arith.constant 4 : index
    %c0_30 = arith.constant 0 : index
    %c0_31 = arith.constant 0 : index
    %44 = vector.load %arg5[%c0_28, %c4_29, %c0_30, %c0_31] : memref<1x12x1x32xf32, #tpu.memory_space<vmem>>, vector<1x1x1x32xf32>
    %45 = vector.shape_cast %44 : vector<1x1x1x32xf32> to vector<1x32xf32>
    %46 = vector.broadcast %45 : vector<1x32xf32> to vector<32x32xf32>
    %47 = arith.addf %43, %46 : vector<32x32xf32>
    %c0_32 = arith.constant 0 : index
    %c8 = arith.constant 8 : index
    %c0_33 = arith.constant 0 : index
    %c0_34 = arith.constant 0 : index
    %48 = vector.load %arg4[%c0_32, %c8, %c0_33, %c0_34] : memref<1x12x128x32xf32, #tpu.memory_space<vmem>>, vector<1x1x128x32xf32>
    %49 = vector.shape_cast %48 : vector<1x1x128x32xf32> to vector<128x32xf32>
    %cst_35 = arith.constant dense<0.000000e+00> : vector<32x32xf32>
    %50 = tpu.matmul %32, %49, %cst_35 {dimension_numbers = #tpu.dot_dimension_numbers<[1], [0], [0], [1], [0, 0, 1, 1], [], []>} : vector<32x128xf32>, vector<128x32xf32>, vector<32x32xf32> -> vector<32x32xf32>
    %c0_36 = arith.constant 0 : index
    %c8_37 = arith.constant 8 : index
    %c0_38 = arith.constant 0 : index
    %c0_39 = arith.constant 0 : index
    %51 = vector.load %arg5[%c0_36, %c8_37, %c0_38, %c0_39] : memref<1x12x1x32xf32, #tpu.memory_space<vmem>>, vector<1x1x1x32xf32>
    %52 = vector.shape_cast %51 : vector<1x1x1x32xf32> to vector<1x32xf32>
    %53 = vector.broadcast %52 : vector<1x32xf32> to vector<32x32xf32>
    %54 = arith.addf %50, %53 : vector<32x32xf32>
    %cst_40 = arith.constant 0.408248305 : f32
    %55 = vector.broadcast %cst_40 : f32 to vector<32x32xf32>
    %56 = arith.mulf %40, %55 : vector<32x32xf32>
    "tpu.trace_start"() <{level = 10 : i32, message = "nd,md->nm"}> : () -> ()
    %cst_41 = arith.constant dense<0.000000e+00> : vector<32x32xf32>
    %57 = tpu.matmul %56, %47, %cst_41 {dimension_numbers = #tpu.dot_dimension_numbers<[1], [1], [0], [0], [0, 0, 1, 0], [], []>} : vector<32x32xf32>, vector<32x32xf32>, vector<32x32xf32> -> vector<32x32xf32>
    "tpu.trace_stop"() : () -> ()
    %58 = vector.broadcast %4 : vector<1x32xf32> to vector<32x32xf32>
    %59 = arith.addf %57, %58 : vector<32x32xf32>
    %cst_42 = arith.constant dense<0xFF800000> : vector<32xf32>
    %60 = vector.multi_reduction <maximumf>, %59, %cst_42 [1] : vector<32x32xf32> to vector<32xf32>
    %61 = vector.shape_cast %60 : vector<32xf32> to vector<32x1xf32>
    %62 = vector.broadcast %61 : vector<32x1xf32> to vector<32x32xf32>
    %63 = arith.subf %59, %62 : vector<32x32xf32>
    %64 = math.exp %63 : vector<32x32xf32>
    %cst_43 = arith.constant dense<0.000000e+00> : vector<32xf32>
    %65 = vector.multi_reduction <add>, %64, %cst_43 [1] : vector<32x32xf32> to vector<32xf32>
    %66 = vector.shape_cast %65 : vector<32xf32> to vector<32x1xf32>
    %67 = tpu.reciprocal %66 {approx = true} : vector<32x1xf32> -> vector<32x1xf32>
    %68 = vector.broadcast %67 : vector<32x1xf32> to vector<32x32xf32>
    %69 = arith.mulf %64, %68 : vector<32x32xf32>
    %cst_44 = arith.constant dense<0.000000e+00> : vector<32x32xf32>
    %70 = tpu.matmul %69, %54, %cst_44 {dimension_numbers = #tpu.dot_dimension_numbers<[1], [0], [0], [1], [0, 0, 1, 1], [], []>} : vector<32x32xf32>, vector<32x32xf32>, vector<32x32xf32> -> vector<32x32xf32>
    %c0_45 = arith.constant 0 : index
    %c0_46 = arith.constant 0 : index
    %c0_47 = arith.constant 0 : index
    %c0_48 = arith.constant 0 : index
    %71 = vector.load %arg6[%c0_45, %c0_46, %c0_47, %c0_48] : memref<1x4x32x128xf32, #tpu.memory_space<vmem>>, vector<1x1x32x128xf32>
    %72 = vector.shape_cast %71 : vector<1x1x32x128xf32> to vector<32x128xf32>
    %cst_49 = arith.constant dense<0.000000e+00> : vector<32x128xf32>
    %73 = tpu.matmul %70, %72, %cst_49 {dimension_numbers = #tpu.dot_dimension_numbers<[1], [0], [0], [1], [0, 0, 1, 1], [], []>} : vector<32x32xf32>, vector<32x128xf32>, vector<32x128xf32> -> vector<32x128xf32>
    %74 = arith.addf %33, %73 : vector<32x128xf32>
    %c0_50 = arith.constant 0 : index
    %c1_51 = arith.constant 1 : index
    %c0_52 = arith.constant 0 : index
    %c0_53 = arith.constant 0 : index
    %75 = vector.load %arg4[%c0_50, %c1_51, %c0_52, %c0_53] : memref<1x12x128x32xf32, #tpu.memory_space<vmem>>, vector<1x1x128x32xf32>
    %76 = vector.shape_cast %75 : vector<1x1x128x32xf32> to vector<128x32xf32>
    %cst_54 = arith.constant dense<0.000000e+00> : vector<32x32xf32>
    %77 = tpu.matmul %32, %76, %cst_54 {dimension_numbers = #tpu.dot_dimension_numbers<[1], [0], [0], [1], [0, 0, 1, 1], [], []>} : vector<32x128xf32>, vector<128x32xf32>, vector<32x32xf32> -> vector<32x32xf32>
    %c0_55 = arith.constant 0 : index
    %c1_56 = arith.constant 1 : index
    %c0_57 = arith.constant 0 : index
    %c0_58 = arith.constant 0 : index
    %78 = vector.load %arg5[%c0_55, %c1_56, %c0_57, %c0_58] : memref<1x12x1x32xf32, #tpu.memory_space<vmem>>, vector<1x1x1x32xf32>
    %79 = vector.shape_cast %78 : vector<1x1x1x32xf32> to vector<1x32xf32>
    %80 = vector.broadcast %79 : vector<1x32xf32> to vector<32x32xf32>
    %81 = arith.addf %77, %80 : vector<32x32xf32>
    %c0_59 = arith.constant 0 : index
    %c5 = arith.constant 5 : index
    %c0_60 = arith.constant 0 : index
    %c0_61 = arith.constant 0 : index
    %82 = vector.load %arg4[%c0_59, %c5, %c0_60, %c0_61] : memref<1x12x128x32xf32, #tpu.memory_space<vmem>>, vector<1x1x128x32xf32>
    %83 = vector.shape_cast %82 : vector<1x1x128x32xf32> to vector<128x32xf32>
    %cst_62 = arith.constant dense<0.000000e+00> : vector<32x32xf32>
    %84 = tpu.matmul %32, %83, %cst_62 {dimension_numbers = #tpu.dot_dimension_numbers<[1], [0], [0], [1], [0, 0, 1, 1], [], []>} : vector<32x128xf32>, vector<128x32xf32>, vector<32x32xf32> -> vector<32x32xf32>
    %c0_63 = arith.constant 0 : index
    %c5_64 = arith.constant 5 : index
    %c0_65 = arith.constant 0 : index
    %c0_66 = arith.constant 0 : index
    %85 = vector.load %arg5[%c0_63, %c5_64, %c0_65, %c0_66] : memref<1x12x1x32xf32, #tpu.memory_space<vmem>>, vector<1x1x1x32xf32>
    %86 = vector.shape_cast %85 : vector<1x1x1x32xf32> to vector<1x32xf32>
    %87 = vector.broadcast %86 : vector<1x32xf32> to vector<32x32xf32>
    %88 = arith.addf %84, %87 : vector<32x32xf32>
    %c0_67 = arith.constant 0 : index
    %c9 = arith.constant 9 : index
    %c0_68 = arith.constant 0 : index
    %c0_69 = arith.constant 0 : index
    %89 = vector.load %arg4[%c0_67, %c9, %c0_68, %c0_69] : memref<1x12x128x32xf32, #tpu.memory_space<vmem>>, vector<1x1x128x32xf32>
    %90 = vector.shape_cast %89 : vector<1x1x128x32xf32> to vector<128x32xf32>
    %cst_70 = arith.constant dense<0.000000e+00> : vector<32x32xf32>
    %91 = tpu.matmul %32, %90, %cst_70 {dimension_numbers = #tpu.dot_dimension_numbers<[1], [0], [0], [1], [0, 0, 1, 1], [], []>} : vector<32x128xf32>, vector<128x32xf32>, vector<32x32xf32> -> vector<32x32xf32>
    %c0_71 = arith.constant 0 : index
    %c9_72 = arith.constant 9 : index
    %c0_73 = arith.constant 0 : index
    %c0_74 = arith.constant 0 : index
    %92 = vector.load %arg5[%c0_71, %c9_72, %c0_73, %c0_74] : memref<1x12x1x32xf32, #tpu.memory_space<vmem>>, vector<1x1x1x32xf32>
    %93 = vector.shape_cast %92 : vector<1x1x1x32xf32> to vector<1x32xf32>
    %94 = vector.broadcast %93 : vector<1x32xf32> to vector<32x32xf32>
    %95 = arith.addf %91, %94 : vector<32x32xf32>
    %cst_75 = arith.constant 0.408248305 : f32
    %96 = vector.broadcast %cst_75 : f32 to vector<32x32xf32>
    %97 = arith.mulf %81, %96 : vector<32x32xf32>
    "tpu.trace_start"() <{level = 10 : i32, message = "nd,md->nm"}> : () -> ()
    %cst_76 = arith.constant dense<0.000000e+00> : vector<32x32xf32>
    %98 = tpu.matmul %97, %88, %cst_76 {dimension_numbers = #tpu.dot_dimension_numbers<[1], [1], [0], [0], [0, 0, 1, 0], [], []>} : vector<32x32xf32>, vector<32x32xf32>, vector<32x32xf32> -> vector<32x32xf32>
    "tpu.trace_stop"() : () -> ()
    %99 = vector.broadcast %4 : vector<1x32xf32> to vector<32x32xf32>
    %100 = arith.addf %98, %99 : vector<32x32xf32>
    %cst_77 = arith.constant dense<0xFF800000> : vector<32xf32>
    %101 = vector.multi_reduction <maximumf>, %100, %cst_77 [1] : vector<32x32xf32> to vector<32xf32>
    %102 = vector.shape_cast %101 : vector<32xf32> to vector<32x1xf32>
    %103 = vector.broadcast %102 : vector<32x1xf32> to vector<32x32xf32>
    %104 = arith.subf %100, %103 : vector<32x32xf32>
    %105 = math.exp %104 : vector<32x32xf32>
    %cst_78 = arith.constant dense<0.000000e+00> : vector<32xf32>
    %106 = vector.multi_reduction <add>, %105, %cst_78 [1] : vector<32x32xf32> to vector<32xf32>
    %107 = vector.shape_cast %106 : vector<32xf32> to vector<32x1xf32>
    %108 = tpu.reciprocal %107 {approx = true} : vector<32x1xf32> -> vector<32x1xf32>
    %109 = vector.broadcast %108 : vector<32x1xf32> to vector<32x32xf32>
    %110 = arith.mulf %105, %109 : vector<32x32xf32>
    %cst_79 = arith.constant dense<0.000000e+00> : vector<32x32xf32>
    %111 = tpu.matmul %110, %95, %cst_79 {dimension_numbers = #tpu.dot_dimension_numbers<[1], [0], [0], [1], [0, 0, 1, 1], [], []>} : vector<32x32xf32>, vector<32x32xf32>, vector<32x32xf32> -> vector<32x32xf32>
    %c0_80 = arith.constant 0 : index
    %c1_81 = arith.constant 1 : index
    %c0_82 = arith.constant 0 : index
    %c0_83 = arith.constant 0 : index
    %112 = vector.load %arg6[%c0_80, %c1_81, %c0_82, %c0_83] : memref<1x4x32x128xf32, #tpu.memory_space<vmem>>, vector<1x1x32x128xf32>
    %113 = vector.shape_cast %112 : vector<1x1x32x128xf32> to vector<32x128xf32>
    %cst_84 = arith.constant dense<0.000000e+00> : vector<32x128xf32>
    %114 = tpu.matmul %111, %113, %cst_84 {dimension_numbers = #tpu.dot_dimension_numbers<[1], [0], [0], [1], [0, 0, 1, 1], [], []>} : vector<32x32xf32>, vector<32x128xf32>, vector<32x128xf32> -> vector<32x128xf32>
    %115 = arith.addf %74, %114 : vector<32x128xf32>
    %c0_85 = arith.constant 0 : index
    %c2 = arith.constant 2 : index
    %c0_86 = arith.constant 0 : index
    %c0_87 = arith.constant 0 : index
    %116 = vector.load %arg4[%c0_85, %c2, %c0_86, %c0_87] : memref<1x12x128x32xf32, #tpu.memory_space<vmem>>, vector<1x1x128x32xf32>
    %117 = vector.shape_cast %116 : vector<1x1x128x32xf32> to vector<128x32xf32>
    %cst_88 = arith.constant dense<0.000000e+00> : vector<32x32xf32>
    %118 = tpu.matmul %32, %117, %cst_88 {dimension_numbers = #tpu.dot_dimension_numbers<[1], [0], [0], [1], [0, 0, 1, 1], [], []>} : vector<32x128xf32>, vector<128x32xf32>, vector<32x32xf32> -> vector<32x32xf32>
    %c0_89 = arith.constant 0 : index
    %c2_90 = arith.constant 2 : index
    %c0_91 = arith.constant 0 : index
    %c0_92 = arith.constant 0 : index
    %119 = vector.load %arg5[%c0_89, %c2_90, %c0_91, %c0_92] : memref<1x12x1x32xf32, #tpu.memory_space<vmem>>, vector<1x1x1x32xf32>
    %120 = vector.shape_cast %119 : vector<1x1x1x32xf32> to vector<1x32xf32>
    %121 = vector.broadcast %120 : vector<1x32xf32> to vector<32x32xf32>
    %122 = arith.addf %118, %121 : vector<32x32xf32>
    %c0_93 = arith.constant 0 : index
    %c6 = arith.constant 6 : index
    %c0_94 = arith.constant 0 : index
    %c0_95 = arith.constant 0 : index
    %123 = vector.load %arg4[%c0_93, %c6, %c0_94, %c0_95] : memref<1x12x128x32xf32, #tpu.memory_space<vmem>>, vector<1x1x128x32xf32>
    %124 = vector.shape_cast %123 : vector<1x1x128x32xf32> to vector<128x32xf32>
    %cst_96 = arith.constant dense<0.000000e+00> : vector<32x32xf32>
    %125 = tpu.matmul %32, %124, %cst_96 {dimension_numbers = #tpu.dot_dimension_numbers<[1], [0], [0], [1], [0, 0, 1, 1], [], []>} : vector<32x128xf32>, vector<128x32xf32>, vector<32x32xf32> -> vector<32x32xf32>
    %c0_97 = arith.constant 0 : index
    %c6_98 = arith.constant 6 : index
    %c0_99 = arith.constant 0 : index
    %c0_100 = arith.constant 0 : index
    %126 = vector.load %arg5[%c0_97, %c6_98, %c0_99, %c0_100] : memref<1x12x1x32xf32, #tpu.memory_space<vmem>>, vector<1x1x1x32xf32>
    %127 = vector.shape_cast %126 : vector<1x1x1x32xf32> to vector<1x32xf32>
    %128 = vector.broadcast %127 : vector<1x32xf32> to vector<32x32xf32>
    %129 = arith.addf %125, %128 : vector<32x32xf32>
    %c0_101 = arith.constant 0 : index
    %c10 = arith.constant 10 : index
    %c0_102 = arith.constant 0 : index
    %c0_103 = arith.constant 0 : index
    %130 = vector.load %arg4[%c0_101, %c10, %c0_102, %c0_103] : memref<1x12x128x32xf32, #tpu.memory_space<vmem>>, vector<1x1x128x32xf32>
    %131 = vector.shape_cast %130 : vector<1x1x128x32xf32> to vector<128x32xf32>
    %cst_104 = arith.constant dense<0.000000e+00> : vector<32x32xf32>
    %132 = tpu.matmul %32, %131, %cst_104 {dimension_numbers = #tpu.dot_dimension_numbers<[1], [0], [0], [1], [0, 0, 1, 1], [], []>} : vector<32x128xf32>, vector<128x32xf32>, vector<32x32xf32> -> vector<32x32xf32>
    %c0_105 = arith.constant 0 : index
    %c10_106 = arith.constant 10 : index
    %c0_107 = arith.constant 0 : index
    %c0_108 = arith.constant 0 : index
    %133 = vector.load %arg5[%c0_105, %c10_106, %c0_107, %c0_108] : memref<1x12x1x32xf32, #tpu.memory_space<vmem>>, vector<1x1x1x32xf32>
    %134 = vector.shape_cast %133 : vector<1x1x1x32xf32> to vector<1x32xf32>
    %135 = vector.broadcast %134 : vector<1x32xf32> to vector<32x32xf32>
    %136 = arith.addf %132, %135 : vector<32x32xf32>
    %cst_109 = arith.constant 0.408248305 : f32
    %137 = vector.broadcast %cst_109 : f32 to vector<32x32xf32>
    %138 = arith.mulf %122, %137 : vector<32x32xf32>
    "tpu.trace_start"() <{level = 10 : i32, message = "nd,md->nm"}> : () -> ()
    %cst_110 = arith.constant dense<0.000000e+00> : vector<32x32xf32>
    %139 = tpu.matmul %138, %129, %cst_110 {dimension_numbers = #tpu.dot_dimension_numbers<[1], [1], [0], [0], [0, 0, 1, 0], [], []>} : vector<32x32xf32>, vector<32x32xf32>, vector<32x32xf32> -> vector<32x32xf32>
    "tpu.trace_stop"() : () -> ()
    %140 = vector.broadcast %4 : vector<1x32xf32> to vector<32x32xf32>
    %141 = arith.addf %139, %140 : vector<32x32xf32>
    %cst_111 = arith.constant dense<0xFF800000> : vector<32xf32>
    %142 = vector.multi_reduction <maximumf>, %141, %cst_111 [1] : vector<32x32xf32> to vector<32xf32>
    %143 = vector.shape_cast %142 : vector<32xf32> to vector<32x1xf32>
    %144 = vector.broadcast %143 : vector<32x1xf32> to vector<32x32xf32>
    %145 = arith.subf %141, %144 : vector<32x32xf32>
    %146 = math.exp %145 : vector<32x32xf32>
    %cst_112 = arith.constant dense<0.000000e+00> : vector<32xf32>
    %147 = vector.multi_reduction <add>, %146, %cst_112 [1] : vector<32x32xf32> to vector<32xf32>
    %148 = vector.shape_cast %147 : vector<32xf32> to vector<32x1xf32>
    %149 = tpu.reciprocal %148 {approx = true} : vector<32x1xf32> -> vector<32x1xf32>
    %150 = vector.broadcast %149 : vector<32x1xf32> to vector<32x32xf32>
    %151 = arith.mulf %146, %150 : vector<32x32xf32>
    %cst_113 = arith.constant dense<0.000000e+00> : vector<32x32xf32>
    %152 = tpu.matmul %151, %136, %cst_113 {dimension_numbers = #tpu.dot_dimension_numbers<[1], [0], [0], [1], [0, 0, 1, 1], [], []>} : vector<32x32xf32>, vector<32x32xf32>, vector<32x32xf32> -> vector<32x32xf32>
    %c0_114 = arith.constant 0 : index
    %c2_115 = arith.constant 2 : index
    %c0_116 = arith.constant 0 : index
    %c0_117 = arith.constant 0 : index
    %153 = vector.load %arg6[%c0_114, %c2_115, %c0_116, %c0_117] : memref<1x4x32x128xf32, #tpu.memory_space<vmem>>, vector<1x1x32x128xf32>
    %154 = vector.shape_cast %153 : vector<1x1x32x128xf32> to vector<32x128xf32>
    %cst_118 = arith.constant dense<0.000000e+00> : vector<32x128xf32>
    %155 = tpu.matmul %152, %154, %cst_118 {dimension_numbers = #tpu.dot_dimension_numbers<[1], [0], [0], [1], [0, 0, 1, 1], [], []>} : vector<32x32xf32>, vector<32x128xf32>, vector<32x128xf32> -> vector<32x128xf32>
    %156 = arith.addf %115, %155 : vector<32x128xf32>
    %c0_119 = arith.constant 0 : index
    %c3 = arith.constant 3 : index
    %c0_120 = arith.constant 0 : index
    %c0_121 = arith.constant 0 : index
    %157 = vector.load %arg4[%c0_119, %c3, %c0_120, %c0_121] : memref<1x12x128x32xf32, #tpu.memory_space<vmem>>, vector<1x1x128x32xf32>
    %158 = vector.shape_cast %157 : vector<1x1x128x32xf32> to vector<128x32xf32>
    %cst_122 = arith.constant dense<0.000000e+00> : vector<32x32xf32>
    %159 = tpu.matmul %32, %158, %cst_122 {dimension_numbers = #tpu.dot_dimension_numbers<[1], [0], [0], [1], [0, 0, 1, 1], [], []>} : vector<32x128xf32>, vector<128x32xf32>, vector<32x32xf32> -> vector<32x32xf32>
    %c0_123 = arith.constant 0 : index
    %c3_124 = arith.constant 3 : index
    %c0_125 = arith.constant 0 : index
    %c0_126 = arith.constant 0 : index
    %160 = vector.load %arg5[%c0_123, %c3_124, %c0_125, %c0_126] : memref<1x12x1x32xf32, #tpu.memory_space<vmem>>, vector<1x1x1x32xf32>
    %161 = vector.shape_cast %160 : vector<1x1x1x32xf32> to vector<1x32xf32>
    %162 = vector.broadcast %161 : vector<1x32xf32> to vector<32x32xf32>
    %163 = arith.addf %159, %162 : vector<32x32xf32>
    %c0_127 = arith.constant 0 : index
    %c7 = arith.constant 7 : index
    %c0_128 = arith.constant 0 : index
    %c0_129 = arith.constant 0 : index
    %164 = vector.load %arg4[%c0_127, %c7, %c0_128, %c0_129] : memref<1x12x128x32xf32, #tpu.memory_space<vmem>>, vector<1x1x128x32xf32>
    %165 = vector.shape_cast %164 : vector<1x1x128x32xf32> to vector<128x32xf32>
    %cst_130 = arith.constant dense<0.000000e+00> : vector<32x32xf32>
    %166 = tpu.matmul %32, %165, %cst_130 {dimension_numbers = #tpu.dot_dimension_numbers<[1], [0], [0], [1], [0, 0, 1, 1], [], []>} : vector<32x128xf32>, vector<128x32xf32>, vector<32x32xf32> -> vector<32x32xf32>
    %c0_131 = arith.constant 0 : index
    %c7_132 = arith.constant 7 : index
    %c0_133 = arith.constant 0 : index
    %c0_134 = arith.constant 0 : index
    %167 = vector.load %arg5[%c0_131, %c7_132, %c0_133, %c0_134] : memref<1x12x1x32xf32, #tpu.memory_space<vmem>>, vector<1x1x1x32xf32>
    %168 = vector.shape_cast %167 : vector<1x1x1x32xf32> to vector<1x32xf32>
    %169 = vector.broadcast %168 : vector<1x32xf32> to vector<32x32xf32>
    %170 = arith.addf %166, %169 : vector<32x32xf32>
    %c0_135 = arith.constant 0 : index
    %c11 = arith.constant 11 : index
    %c0_136 = arith.constant 0 : index
    %c0_137 = arith.constant 0 : index
    %171 = vector.load %arg4[%c0_135, %c11, %c0_136, %c0_137] : memref<1x12x128x32xf32, #tpu.memory_space<vmem>>, vector<1x1x128x32xf32>
    %172 = vector.shape_cast %171 : vector<1x1x128x32xf32> to vector<128x32xf32>
    %cst_138 = arith.constant dense<0.000000e+00> : vector<32x32xf32>
    %173 = tpu.matmul %32, %172, %cst_138 {dimension_numbers = #tpu.dot_dimension_numbers<[1], [0], [0], [1], [0, 0, 1, 1], [], []>} : vector<32x128xf32>, vector<128x32xf32>, vector<32x32xf32> -> vector<32x32xf32>
    %c0_139 = arith.constant 0 : index
    %c11_140 = arith.constant 11 : index
    %c0_141 = arith.constant 0 : index
    %c0_142 = arith.constant 0 : index
    %174 = vector.load %arg5[%c0_139, %c11_140, %c0_141, %c0_142] : memref<1x12x1x32xf32, #tpu.memory_space<vmem>>, vector<1x1x1x32xf32>
    %175 = vector.shape_cast %174 : vector<1x1x1x32xf32> to vector<1x32xf32>
    %176 = vector.broadcast %175 : vector<1x32xf32> to vector<32x32xf32>
    %177 = arith.addf %173, %176 : vector<32x32xf32>
    %cst_143 = arith.constant 0.408248305 : f32
    %178 = vector.broadcast %cst_143 : f32 to vector<32x32xf32>
    %179 = arith.mulf %163, %178 : vector<32x32xf32>
    "tpu.trace_start"() <{level = 10 : i32, message = "nd,md->nm"}> : () -> ()
    %cst_144 = arith.constant dense<0.000000e+00> : vector<32x32xf32>
    %180 = tpu.matmul %179, %170, %cst_144 {dimension_numbers = #tpu.dot_dimension_numbers<[1], [1], [0], [0], [0, 0, 1, 0], [], []>} : vector<32x32xf32>, vector<32x32xf32>, vector<32x32xf32> -> vector<32x32xf32>
    "tpu.trace_stop"() : () -> ()
    %181 = vector.broadcast %4 : vector<1x32xf32> to vector<32x32xf32>
    %182 = arith.addf %180, %181 : vector<32x32xf32>
    %cst_145 = arith.constant dense<0xFF800000> : vector<32xf32>
    %183 = vector.multi_reduction <maximumf>, %182, %cst_145 [1] : vector<32x32xf32> to vector<32xf32>
    %184 = vector.shape_cast %183 : vector<32xf32> to vector<32x1xf32>
    %185 = vector.broadcast %184 : vector<32x1xf32> to vector<32x32xf32>
    %186 = arith.subf %182, %185 : vector<32x32xf32>
    %187 = math.exp %186 : vector<32x32xf32>
    %cst_146 = arith.constant dense<0.000000e+00> : vector<32xf32>
    %188 = vector.multi_reduction <add>, %187, %cst_146 [1] : vector<32x32xf32> to vector<32xf32>
    %189 = vector.shape_cast %188 : vector<32xf32> to vector<32x1xf32>
    %190 = tpu.reciprocal %189 {approx = true} : vector<32x1xf32> -> vector<32x1xf32>
    %191 = vector.broadcast %190 : vector<32x1xf32> to vector<32x32xf32>
    %192 = arith.mulf %187, %191 : vector<32x32xf32>
    %cst_147 = arith.constant dense<0.000000e+00> : vector<32x32xf32>
    %193 = tpu.matmul %192, %177, %cst_147 {dimension_numbers = #tpu.dot_dimension_numbers<[1], [0], [0], [1], [0, 0, 1, 1], [], []>} : vector<32x32xf32>, vector<32x32xf32>, vector<32x32xf32> -> vector<32x32xf32>
    %c0_148 = arith.constant 0 : index
    %c3_149 = arith.constant 3 : index
    %c0_150 = arith.constant 0 : index
    %c0_151 = arith.constant 0 : index
    %194 = vector.load %arg6[%c0_148, %c3_149, %c0_150, %c0_151] : memref<1x4x32x128xf32, #tpu.memory_space<vmem>>, vector<1x1x32x128xf32>
    %195 = vector.shape_cast %194 : vector<1x1x32x128xf32> to vector<32x128xf32>
    %cst_152 = arith.constant dense<0.000000e+00> : vector<32x128xf32>
    %196 = tpu.matmul %193, %195, %cst_152 {dimension_numbers = #tpu.dot_dimension_numbers<[1], [0], [0], [1], [0, 0, 1, 1], [], []>} : vector<32x32xf32>, vector<32x128xf32>, vector<32x128xf32> -> vector<32x128xf32>
    %197 = arith.addf %156, %196 : vector<32x128xf32>
    %198 = arith.addf %3, %197 : vector<32x128xf32>
    %c0_153 = arith.constant 0 : index
    %c0_154 = arith.constant 0 : index
    %c0_155 = arith.constant 0 : index
    %199 = vector.load %arg7[%c0_153, %c0_154, %c0_155] : memref<1x1x128xf32, #tpu.memory_space<vmem>>, vector<1x1x128xf32>
    %200 = vector.shape_cast %199 : vector<1x1x128xf32> to vector<1x128xf32>
    %201 = vector.broadcast %200 : vector<1x128xf32> to vector<32x128xf32>
    %202 = arith.addf %198, %201 : vector<32x128xf32>
    %c0_156 = arith.constant 0 : index
    %c0_157 = arith.constant 0 : index
    %c0_158 = arith.constant 0 : index
    %203 = vector.load %arg8[%c0_156, %c0_157, %c0_158] : memref<1x2x128xf32, #tpu.memory_space<vmem>>, vector<1x1x128xf32>
    %204 = vector.shape_cast %203 : vector<1x1x128xf32> to vector<1x128xf32>
    %c0_159 = arith.constant 0 : index
    %c1_160 = arith.constant 1 : index
    %c0_161 = arith.constant 0 : index
    %205 = vector.load %arg8[%c0_159, %c1_160, %c0_161] : memref<1x2x128xf32, #tpu.memory_space<vmem>>, vector<1x1x128xf32>
    %206 = vector.shape_cast %205 : vector<1x1x128xf32> to vector<1x128xf32>
    %cst_162 = arith.constant dense<0.000000e+00> : vector<32xf32>
    %207 = vector.multi_reduction <add>, %202, %cst_162 [1] : vector<32x128xf32> to vector<32xf32>
    %208 = vector.shape_cast %207 : vector<32xf32> to vector<32x1xf32>
    %cst_163 = arith.constant 0.0416666679 : f32
    %209 = vector.broadcast %cst_163 : f32 to vector<32x1xf32>
    %210 = arith.mulf %208, %209 : vector<32x1xf32>
    %211 = arith.mulf %202, %202 : vector<32x128xf32>
    %cst_164 = arith.constant dense<0.000000e+00> : vector<32xf32>
    %212 = vector.multi_reduction <add>, %211, %cst_164 [1] : vector<32x128xf32> to vector<32xf32>
    %213 = vector.shape_cast %212 : vector<32xf32> to vector<32x1xf32>
    %cst_165 = arith.constant 0.0416666679 : f32
    %214 = vector.broadcast %cst_165 : f32 to vector<32x1xf32>
    %215 = arith.mulf %213, %214 : vector<32x1xf32>
    %216 = arith.mulf %210, %210 : vector<32x1xf32>
    %217 = arith.subf %215, %216 : vector<32x1xf32>
    %cst_166 = arith.constant 0.000000e+00 : f32
    %218 = vector.broadcast %cst_166 : f32 to vector<32x1xf32>
    %219 = arith.maximumf %217, %218 : vector<32x1xf32>
    %220 = vector.broadcast %210 : vector<32x1xf32> to vector<32x128xf32>
    %221 = arith.subf %202, %220 : vector<32x128xf32>
    %cst_167 = arith.constant 9.99999974E-6 : f32
    %222 = vector.broadcast %cst_167 : f32 to vector<32x1xf32>
    %223 = arith.addf %219, %222 : vector<32x1xf32>
    %224 = math.rsqrt %223 : vector<32x1xf32>
    %225 = vector.broadcast %224 : vector<32x1xf32> to vector<32x128xf32>
    %226 = arith.mulf %221, %225 : vector<32x128xf32>
    %227 = vector.broadcast %204 : vector<1x128xf32> to vector<32x128xf32>
    %228 = arith.mulf %226, %227 : vector<32x128xf32>
    %229 = vector.broadcast %206 : vector<1x128xf32> to vector<32x128xf32>
    %230 = arith.addf %228, %229 : vector<32x128xf32>
    %c0_168 = arith.constant 0 : index
    %c0_169 = arith.constant 0 : index
    %c0_170 = arith.constant 0 : index
    %231 = vector.load %arg9[%c0_168, %c0_169, %c0_170] : memref<1x128x128xf32, #tpu.memory_space<vmem>>, vector<1x128x128xf32>
    %232 = vector.shape_cast %231 : vector<1x128x128xf32> to vector<128x128xf32>
    %cst_171 = arith.constant dense<0.000000e+00> : vector<32x128xf32>
    %233 = tpu.matmul %230, %232, %cst_171 {dimension_numbers = #tpu.dot_dimension_numbers<[1], [0], [0], [1], [0, 0, 1, 1], [], []>} : vector<32x128xf32>, vector<128x128xf32>, vector<32x128xf32> -> vector<32x128xf32>
    %c0_172 = arith.constant 0 : index
    %c0_173 = arith.constant 0 : index
    %c0_174 = arith.constant 0 : index
    %234 = vector.load %arg10[%c0_172, %c0_173, %c0_174] : memref<1x1x128xf32, #tpu.memory_space<vmem>>, vector<1x1x128xf32>
    %235 = vector.shape_cast %234 : vector<1x1x128xf32> to vector<1x128xf32>
    %236 = vector.broadcast %235 : vector<1x128xf32> to vector<32x128xf32>
    %237 = arith.addf %233, %236 : vector<32x128xf32>
    %238 = arith.mulf %237, %237 : vector<32x128xf32>
    %239 = arith.mulf %237, %238 : vector<32x128xf32>
    %cst_175 = arith.constant 4.471500e-02 : f32
    %240 = vector.broadcast %cst_175 : f32 to vector<32x128xf32>
    %241 = arith.mulf %240, %239 : vector<32x128xf32>
    %242 = arith.addf %237, %241 : vector<32x128xf32>
    %cst_176 = arith.constant 0.797884583 : f32
    %243 = vector.broadcast %cst_176 : f32 to vector<32x128xf32>
    %244 = arith.mulf %243, %242 : vector<32x128xf32>
    %245 = math.tanh %244 : vector<32x128xf32>
    %cst_177 = arith.constant 1.000000e+00 : f32
    %246 = vector.broadcast %cst_177 : f32 to vector<32x128xf32>
    %247 = arith.addf %246, %245 : vector<32x128xf32>
    %cst_178 = arith.constant 5.000000e-01 : f32
    %248 = vector.broadcast %cst_178 : f32 to vector<32x128xf32>
    %249 = arith.mulf %248, %247 : vector<32x128xf32>
    %250 = arith.mulf %237, %249 : vector<32x128xf32>
    %c0_179 = arith.constant 0 : index
    %c0_180 = arith.constant 0 : index
    %c0_181 = arith.constant 0 : index
    %251 = vector.load %arg11[%c0_179, %c0_180, %c0_181] : memref<1x128x128xf32, #tpu.memory_space<vmem>>, vector<1x128x128xf32>
    %252 = vector.shape_cast %251 : vector<1x128x128xf32> to vector<128x128xf32>
    %cst_182 = arith.constant dense<0.000000e+00> : vector<32x128xf32>
    %253 = tpu.matmul %250, %252, %cst_182 {dimension_numbers = #tpu.dot_dimension_numbers<[1], [0], [0], [1], [0, 0, 1, 1], [], []>} : vector<32x128xf32>, vector<128x128xf32>, vector<32x128xf32> -> vector<32x128xf32>
    %c0_183 = arith.constant 0 : index
    %c0_184 = arith.constant 0 : index
    %c0_185 = arith.constant 0 : index
    %254 = vector.load %arg12[%c0_183, %c0_184, %c0_185] : memref<1x1x128xf32, #tpu.memory_space<vmem>>, vector<1x1x128xf32>
    %255 = vector.shape_cast %254 : vector<1x1x128xf32> to vector<1x128xf32>
    %256 = vector.broadcast %255 : vector<1x128xf32> to vector<32x128xf32>
    %257 = arith.addf %253, %256 : vector<32x128xf32>
    %258 = arith.addf %202, %257 : vector<32x128xf32>
    %c0_186 = arith.constant 0 : index
    %c0_187 = arith.constant 0 : index
    %259 = vector.load %arg21[%c0_186, %c0_187] : memref<32x128xf32, #tpu.memory_space<vmem>>, vector<32x128xf32>
    tpu.vector_store %arg21[%c0_186, %c0_187], %258 {strides = array<i32>} : memref<32x128xf32, #tpu.memory_space<vmem>>, vector<32x128xf32>,
    %c1_i32 = arith.constant 1 : i32
    %260 = arith.cmpi eq, %arg1, %c1_i32 : i32
    %261 = arith.extui %260 : i1 to i32
    %c0_i32_188 = arith.constant 0 : i32
    %262 = arith.cmpi ne, %261, %c0_i32_188 : i32
    scf.if %262 {
      %c0_189 = arith.constant 0 : index
      %c0_190 = arith.constant 0 : index
      %263 = vector.load %arg14[%c0_189, %c0_190] : memref<2x128xf32, #tpu.memory_space<vmem>>, vector<1x128xf32>
      %c1_191 = arith.constant 1 : index
      %c0_192 = arith.constant 0 : index
      %264 = vector.load %arg14[%c1_191, %c0_192] : memref<2x128xf32, #tpu.memory_space<vmem>>, vector<1x128xf32>
      %cst_193 = arith.constant dense<0.000000e+00> : vector<32xf32>
      %265 = vector.multi_reduction <add>, %258, %cst_193 [1] : vector<32x128xf32> to vector<32xf32>
      %266 = vector.shape_cast %265 : vector<32xf32> to vector<32x1xf32>
      %cst_194 = arith.constant 0.0416666679 : f32
      %267 = vector.broadcast %cst_194 : f32 to vector<32x1xf32>
      %268 = arith.mulf %266, %267 : vector<32x1xf32>
      %269 = arith.mulf %258, %258 : vector<32x128xf32>
      %cst_195 = arith.constant dense<0.000000e+00> : vector<32xf32>
      %270 = vector.multi_reduction <add>, %269, %cst_195 [1] : vector<32x128xf32> to vector<32xf32>
      %271 = vector.shape_cast %270 : vector<32xf32> to vector<32x1xf32>
      %cst_196 = arith.constant 0.0416666679 : f32
      %272 = vector.broadcast %cst_196 : f32 to vector<32x1xf32>
      %273 = arith.mulf %271, %272 : vector<32x1xf32>
      %274 = arith.mulf %268, %268 : vector<32x1xf32>
      %275 = arith.subf %273, %274 : vector<32x1xf32>
      %cst_197 = arith.constant 0.000000e+00 : f32
      %276 = vector.broadcast %cst_197 : f32 to vector<32x1xf32>
      %277 = arith.maximumf %275, %276 : vector<32x1xf32>
      %278 = vector.broadcast %268 : vector<32x1xf32> to vector<32x128xf32>
      %279 = arith.subf %258, %278 : vector<32x128xf32>
      %cst_198 = arith.constant 9.99999974E-6 : f32
      %280 = vector.broadcast %cst_198 : f32 to vector<32x1xf32>
      %281 = arith.addf %277, %280 : vector<32x1xf32>
      %282 = math.rsqrt %281 : vector<32x1xf32>
      %283 = vector.broadcast %282 : vector<32x1xf32> to vector<32x128xf32>
      %284 = arith.mulf %279, %283 : vector<32x128xf32>
      %285 = vector.broadcast %263 : vector<1x128xf32> to vector<32x128xf32>
      %286 = arith.mulf %284, %285 : vector<32x128xf32>
      %287 = vector.broadcast %264 : vector<1x128xf32> to vector<32x128xf32>
      %288 = arith.addf %286, %287 : vector<32x128xf32>
      %c0_199 = arith.constant 0 : index
      %c0_200 = arith.constant 0 : index
      %289 = vector.load %arg15[%c0_199, %c0_200] : memref<128x256xf32, #tpu.memory_space<vmem>>, vector<128x256xf32>
      %c0_201 = arith.constant 0 : index
      %c0_202 = arith.constant 0 : index
      %290 = vector.load %arg16[%c0_201, %c0_202] : memref<1x256xf32, #tpu.memory_space<vmem>>, vector<1x256xf32>
      %cst_203 = arith.constant dense<0.000000e+00> : vector<32x256xf32>
      %291 = tpu.matmul %288, %289, %cst_203 {dimension_numbers = #tpu.dot_dimension_numbers<[1], [0], [0], [1], [0, 0, 1, 1], [], []>} : vector<32x128xf32>, vector<128x256xf32>, vector<32x256xf32> -> vector<32x256xf32>
      %292 = vector.broadcast %290 : vector<1x256xf32> to vector<32x256xf32>
      %293 = arith.addf %291, %292 : vector<32x256xf32>
      %c0_204 = arith.constant 0 : index
      %c0_205 = arith.constant 0 : index
      %c0_206 = arith.constant 0 : index
      %294 = vector.load %arg19[%c0_204, %c0_205, %c0_206] : memref<1x32x256xf32, #tpu.memory_space<vmem>>, vector<1x32x256xf32>
      %295 = vector.shape_cast %294 : vector<1x32x256xf32> to vector<32x256xf32>
      %296 = vector.shape_cast %293 : vector<32x256xf32> to vector<1x32x256xf32>
      tpu.vector_store %arg19[%c0_204, %c0_205, %c0_206], %296 {strides = array<i32>} : memref<1x32x256xf32, #tpu.memory_space<vmem>>, vector<1x32x256xf32>,
      %c0_207 = arith.constant 0 : index
      %c0_208 = arith.constant 0 : index
      %297 = vector.load %arg17[%c0_207, %c0_208] : memref<128x64xf32, #tpu.memory_space<vmem>>, vector<128x64xf32>
      %c0_209 = arith.constant 0 : index
      %c0_210 = arith.constant 0 : index
      %298 = vector.load %arg18[%c0_209, %c0_210] : memref<1x64xf32, #tpu.memory_space<vmem>>, vector<1x64xf32>
      %cst_211 = arith.constant dense<0.000000e+00> : vector<32x64xf32>
      %299 = tpu.matmul %288, %297, %cst_211 {dimension_numbers = #tpu.dot_dimension_numbers<[1], [0], [0], [1], [0, 0, 1, 1], [], []>} : vector<32x128xf32>, vector<128x64xf32>, vector<32x64xf32> -> vector<32x64xf32>
      %300 = vector.broadcast %298 : vector<1x64xf32> to vector<32x64xf32>
      %301 = arith.addf %299, %300 : vector<32x64xf32>
      %c0_212 = arith.constant 0 : index
      %c0_213 = arith.constant 0 : index
      %c0_214 = arith.constant 0 : index
      %302 = vector.load %arg20[%c0_212, %c0_213, %c0_214] : memref<1x32x64xf32, #tpu.memory_space<vmem>>, vector<1x32x64xf32>
      %303 = vector.shape_cast %302 : vector<1x32x64xf32> to vector<32x64xf32>
      %304 = vector.shape_cast %301 : vector<32x64xf32> to vector<1x32x64xf32>
      tpu.vector_store %arg20[%c0_212, %c0_213, %c0_214], %304 {strides = array<i32>} : memref<1x32x64xf32, #tpu.memory_space<vmem>>, vector<1x32x64xf32>,
    } else {
    }
    return
  }
  func.func @transform_0(%arg0: i32, %arg1: i32) -> (i32, i32, i32) {
    %c0_i32 = arith.constant 0 : i32
    %c0_i32_0 = arith.constant 0 : i32
    %c0_i32_1 = arith.constant 0 : i32
    return %arg0, %c0_i32, %c0_i32_0 : i32, i32, i32
  }
  func.func @transform_1(%arg0: i32, %arg1: i32) -> (i32, i32, i32) {
    %c0_i32 = arith.constant 0 : i32
    %c0_i32_0 = arith.constant 0 : i32
    %c0_i32_1 = arith.constant 0 : i32
    return %arg1, %c0_i32, %c0_i32_0 : i32, i32, i32
  }
  func.func @transform_2(%arg0: i32, %arg1: i32) -> (i32, i32, i32, i32) {
    %c0_i32 = arith.constant 0 : i32
    %c0_i32_0 = arith.constant 0 : i32
    %c0_i32_1 = arith.constant 0 : i32
    %c0_i32_2 = arith.constant 0 : i32
    return %arg1, %c0_i32, %c0_i32_0, %c0_i32_1 : i32, i32, i32, i32
  }
  func.func @transform_3(%arg0: i32, %arg1: i32) -> (i32, i32, i32, i32) {
    %c0_i32 = arith.constant 0 : i32
    %c0_i32_0 = arith.constant 0 : i32
    %c0_i32_1 = arith.constant 0 : i32
    %c0_i32_2 = arith.constant 0 : i32
    return %arg1, %c0_i32, %c0_i32_0, %c0_i32_1 : i32, i32, i32, i32
  }
  func.func @transform_4(%arg0: i32, %arg1: i32) -> (i32, i32, i32, i32) {
    %c0_i32 = arith.constant 0 : i32
    %c0_i32_0 = arith.constant 0 : i32
    %c0_i32_1 = arith.constant 0 : i32
    %c0_i32_2 = arith.constant 0 : i32
    return %arg1, %c0_i32, %c0_i32_0, %c0_i32_1 : i32, i32, i32, i32
  }
  func.func @transform_5(%arg0: i32, %arg1: i32) -> (i32, i32, i32) {
    %c0_i32 = arith.constant 0 : i32
    %c0_i32_0 = arith.constant 0 : i32
    %c0_i32_1 = arith.constant 0 : i32
    return %arg1, %c0_i32, %c0_i32_0 : i32, i32, i32
  }
  func.func @transform_6(%arg0: i32, %arg1: i32) -> (i32, i32, i32) {
    %c0_i32 = arith.constant 0 : i32
    %c0_i32_0 = arith.constant 0 : i32
    %c0_i32_1 = arith.constant 0 : i32
    return %arg1, %c0_i32, %c0_i32_0 : i32, i32, i32
  }
  func.func @transform_7(%arg0: i32, %arg1: i32) -> (i32, i32, i32) {
    %c0_i32 = arith.constant 0 : i32
    %c0_i32_0 = arith.constant 0 : i32
    %c0_i32_1 = arith.constant 0 : i32
    return %arg1, %c0_i32, %c0_i32_0 : i32, i32, i32
  }
  func.func @transform_8(%arg0: i32, %arg1: i32) -> (i32, i32, i32) {
    %c0_i32 = arith.constant 0 : i32
    %c0_i32_0 = arith.constant 0 : i32
    %c0_i32_1 = arith.constant 0 : i32
    return %arg1, %c0_i32, %c0_i32_0 : i32, i32, i32
  }
  func.func @transform_9(%arg0: i32, %arg1: i32) -> (i32, i32, i32) {
    %c0_i32 = arith.constant 0 : i32
    %c0_i32_0 = arith.constant 0 : i32
    %c0_i32_1 = arith.constant 0 : i32
    return %arg1, %c0_i32, %c0_i32_0 : i32, i32, i32
  }
  func.func @transform_10(%arg0: i32, %arg1: i32) -> (i32, i32, i32) {
    %c0_i32 = arith.constant 0 : i32
    %c0_i32_0 = arith.constant 0 : i32
    %c0_i32_1 = arith.constant 0 : i32
    return %arg1, %c0_i32, %c0_i32_0 : i32, i32, i32
  }
  func.func @transform_11(%arg0: i32, %arg1: i32) -> (i32, i32) {
    %c0_i32 = arith.constant 0 : i32
    %c0_i32_0 = arith.constant 0 : i32
    %c0_i32_1 = arith.constant 0 : i32
    return %c0_i32, %c0_i32_0 : i32, i32
  }
  func.func @transform_12(%arg0: i32, %arg1: i32) -> (i32, i32) {
    %c0_i32 = arith.constant 0 : i32
    %c0_i32_0 = arith.constant 0 : i32
    %c0_i32_1 = arith.constant 0 : i32
    return %c0_i32, %c0_i32_0 : i32, i32
  }
  func.func @transform_13(%arg0: i32, %arg1: i32) -> (i32, i32) {
    %c0_i32 = arith.constant 0 : i32
    %c0_i32_0 = arith.constant 0 : i32
    %c0_i32_1 = arith.constant 0 : i32
    return %c0_i32, %c0_i32_0 : i32, i32
  }
  func.func @transform_14(%arg0: i32, %arg1: i32) -> (i32, i32) {
    %c0_i32 = arith.constant 0 : i32
    %c0_i32_0 = arith.constant 0 : i32
    %c0_i32_1 = arith.constant 0 : i32
    return %c0_i32, %c0_i32_0 : i32, i32
  }
  func.func @transform_15(%arg0: i32, %arg1: i32) -> (i32, i32) {
    %c0_i32 = arith.constant 0 : i32
    %c0_i32_0 = arith.constant 0 : i32
    %c0_i32_1 = arith.constant 0 : i32
    return %c0_i32, %c0_i32_0 : i32, i32
  }
  func.func @transform_16(%arg0: i32, %arg1: i32) -> (i32, i32) {
    %c0_i32 = arith.constant 0 : i32
    %c0_i32_0 = arith.constant 0 : i32
    %c0_i32_1 = arith.constant 0 : i32
    return %c0_i32, %c0_i32_0 : i32, i32
  }
  func.func @transform_17(%arg0: i32, %arg1: i32) -> (i32, i32, i32) {
    %c0_i32 = arith.constant 0 : i32
    %c0_i32_0 = arith.constant 0 : i32
    %c0_i32_1 = arith.constant 0 : i32
    return %arg0, %c0_i32, %c0_i32_0 : i32, i32, i32
  }
  func.func @transform_18(%arg0: i32, %arg1: i32) -> (i32, i32, i32) {
    %c0_i32 = arith.constant 0 : i32
    %c0_i32_0 = arith.constant 0 : i32
    %c0_i32_1 = arith.constant 0 : i32
    return %arg0, %c0_i32, %c0_i32_0 : i32, i32, i32
  }
}

module attributes {stable_mosaic.version = 11 : i64} {
  func.func @_masked_mse_kernel(%arg0: memref<32x256xf32, #tpu.memory_space<vmem>>, %arg1: memref<32x256xf32, #tpu.memory_space<vmem>>, %arg2: memref<32x1xf32, #tpu.memory_space<vmem>>, %arg3: memref<1x1xf32, #tpu.memory_space<vmem>>) attributes {dimension_semantics = [], scalar_prefetch = 0 : i64, scratch_operands = 0 : i64, tpu.core_type = #tpu.core_type<tc>} {
    %c0 = arith.constant 0 : index
    %c0_0 = arith.constant 0 : index
    %0 = vector.load %arg0[%c0, %c0_0] : memref<32x256xf32, #tpu.memory_space<vmem>>, vector<32x256xf32>
    %c0_1 = arith.constant 0 : index
    %c0_2 = arith.constant 0 : index
    %1 = vector.load %arg1[%c0_1, %c0_2] : memref<32x256xf32, #tpu.memory_space<vmem>>, vector<32x256xf32>
    %2 = arith.subf %0, %1 : vector<32x256xf32>
    %3 = arith.mulf %2, %2 : vector<32x256xf32>
    %cst = arith.constant dense<0.000000e+00> : vector<32xf32>
    %4 = vector.multi_reduction <add>, %3, %cst [1] : vector<32x256xf32> to vector<32xf32>
    %5 = vector.shape_cast %4 : vector<32xf32> to vector<32x1xf32>
    %cst_3 = arith.constant 2.560000e+02 : f32
    %6 = vector.broadcast %cst_3 : f32 to vector<32x1xf32>
    %7 = arith.divf %5, %6 : vector<32x1xf32>
    %c0_4 = arith.constant 0 : index
    %c0_5 = arith.constant 0 : index
    %8 = vector.load %arg2[%c0_4, %c0_5] : memref<32x1xf32, #tpu.memory_space<vmem>>, vector<32x1xf32>
    %9 = arith.mulf %7, %8 : vector<32x1xf32>
    %10 = vector.shape_cast %9 : vector<32x1xf32> to vector<1x32x1xf32>
    %cst_6 = arith.constant dense<0.000000e+00> : vector<1xf32>
    %11 = vector.multi_reduction <add>, %10, %cst_6 [1, 2] : vector<1x32x1xf32> to vector<1xf32>
    %12 = vector.shape_cast %11 : vector<1xf32> to vector<1x1x1xf32>
    %13 = vector.extract %12[0, 0, 0] : f32 from vector<1x1x1xf32>
    %c0_7 = arith.constant 0 : index
    %c0_8 = arith.constant 0 : index
    %14 = vector.load %arg2[%c0_7, %c0_8] : memref<32x1xf32, #tpu.memory_space<vmem>>, vector<32x1xf32>
    %15 = vector.shape_cast %14 : vector<32x1xf32> to vector<1x32x1xf32>
    %cst_9 = arith.constant dense<0.000000e+00> : vector<1xf32>
    %16 = vector.multi_reduction <add>, %15, %cst_9 [1, 2] : vector<1x32x1xf32> to vector<1xf32>
    %17 = vector.shape_cast %16 : vector<1xf32> to vector<1x1x1xf32>
    %18 = vector.extract %17[0, 0, 0] : f32 from vector<1x1x1xf32>
    %cst_10 = arith.constant 1.000000e+00 : f32
    %19 = arith.maximumf %18, %cst_10 : f32
    %20 = arith.divf %13, %19 : f32
    %21 = vector.broadcast %20 : f32 to vector<1x1xf32>
    %c0_11 = arith.constant 0 : index
    %c0_12 = arith.constant 0 : index
    %22 = vector.load %arg3[%c0_11, %c0_12] : memref<1x1xf32, #tpu.memory_space<vmem>>, vector<1x1xf32>
    tpu.vector_store %arg3[%c0_11, %c0_12], %21 {strides = array<i32>} : memref<1x1xf32, #tpu.memory_space<vmem>>, vector<1x1xf32>,
    return
  }
}

module attributes {stable_mosaic.version = 11 : i64} {
  func.func @_masked_mse_kernel(%arg0: memref<16x64xf32, #tpu.memory_space<vmem>>, %arg1: memref<16x64xf32, #tpu.memory_space<vmem>>, %arg2: memref<16x1xf32, #tpu.memory_space<vmem>>, %arg3: memref<1x1xf32, #tpu.memory_space<vmem>>) attributes {dimension_semantics = [], scalar_prefetch = 0 : i64, scratch_operands = 0 : i64, tpu.core_type = #tpu.core_type<tc>} {
    %c0 = arith.constant 0 : index
    %c0_0 = arith.constant 0 : index
    %0 = vector.load %arg0[%c0, %c0_0] : memref<16x64xf32, #tpu.memory_space<vmem>>, vector<16x64xf32>
    %c0_1 = arith.constant 0 : index
    %c0_2 = arith.constant 0 : index
    %1 = vector.load %arg1[%c0_1, %c0_2] : memref<16x64xf32, #tpu.memory_space<vmem>>, vector<16x64xf32>
    %2 = arith.subf %0, %1 : vector<16x64xf32>
    %3 = arith.mulf %2, %2 : vector<16x64xf32>
    %cst = arith.constant dense<0.000000e+00> : vector<16xf32>
    %4 = vector.multi_reduction <add>, %3, %cst [1] : vector<16x64xf32> to vector<16xf32>
    %5 = vector.shape_cast %4 : vector<16xf32> to vector<16x1xf32>
    %cst_3 = arith.constant 6.400000e+01 : f32
    %6 = vector.broadcast %cst_3 : f32 to vector<16x1xf32>
    %7 = arith.divf %5, %6 : vector<16x1xf32>
    %c0_4 = arith.constant 0 : index
    %c0_5 = arith.constant 0 : index
    %8 = vector.load %arg2[%c0_4, %c0_5] : memref<16x1xf32, #tpu.memory_space<vmem>>, vector<16x1xf32>
    %9 = arith.mulf %7, %8 : vector<16x1xf32>
    %10 = vector.shape_cast %9 : vector<16x1xf32> to vector<1x16x1xf32>
    %cst_6 = arith.constant dense<0.000000e+00> : vector<1xf32>
    %11 = vector.multi_reduction <add>, %10, %cst_6 [1, 2] : vector<1x16x1xf32> to vector<1xf32>
    %12 = vector.shape_cast %11 : vector<1xf32> to vector<1x1x1xf32>
    %13 = vector.extract %12[0, 0, 0] : f32 from vector<1x1x1xf32>
    %c0_7 = arith.constant 0 : index
    %c0_8 = arith.constant 0 : index
    %14 = vector.load %arg2[%c0_7, %c0_8] : memref<16x1xf32, #tpu.memory_space<vmem>>, vector<16x1xf32>
    %15 = vector.shape_cast %14 : vector<16x1xf32> to vector<1x16x1xf32>
    %cst_9 = arith.constant dense<0.000000e+00> : vector<1xf32>
    %16 = vector.multi_reduction <add>, %15, %cst_9 [1, 2] : vector<1x16x1xf32> to vector<1xf32>
    %17 = vector.shape_cast %16 : vector<1xf32> to vector<1x1x1xf32>
    %18 = vector.extract %17[0, 0, 0] : f32 from vector<1x1x1xf32>
    %cst_10 = arith.constant 1.000000e+00 : f32
    %19 = arith.maximumf %18, %cst_10 : f32
    %20 = arith.divf %13, %19 : f32
    %21 = vector.broadcast %20 : f32 to vector<1x1xf32>
    %c0_11 = arith.constant 0 : index
    %c0_12 = arith.constant 0 : index
    %22 = vector.load %arg3[%c0_11, %c0_12] : memref<1x1xf32, #tpu.memory_space<vmem>>, vector<1x1xf32>
    tpu.vector_store %arg3[%c0_11, %c0_12], %21 {strides = array<i32>} : memref<1x1xf32, #tpu.memory_space<vmem>>, vector<1x1xf32>,
    return
  }
}

</mosaic_0001>

<llo_original>
// kernel: _lambda_.7
$region0: #{_lambda_.7}
  #allocation0 [shape = 'u32[]', space=smem, size = 0x4, offset = 0x4, fixed_abs, tag = 'smem constant byte address 0x4 - core index']
  #allocation1 [shape = 'u32[72,128]{1,0:T(1,128)}', space=vmem, size = 0x9000, scoped, tag = 'internal scratch']
  %s0 = inlined_call_operand.vmem [shape: f32[16,64], index: 0, kind: input, shape index: {}]
  %s1 = inlined_call_operand.vmem [shape: f32[64,128], index: 1, kind: input, shape index: {}]
  %s2 = inlined_call_operand.vmem [shape: f32[16,128], index: 2, kind: input, shape index: {}]
  %s3 = inlined_call_operand.vmem [shape: f32[16,128], index: 3, kind: output, shape index: {}]
  %s4 = sld [smem:[#allocation0]]
  $region22: #{_lambda_.7} parent=0
    _
  %s6 = ssub.s32 1, %s4
  %s7 = scalar_select 0, %s6, %s4
  // Predicated region
  $region2: #{_lambda_.7} parent=0 // pred_check
    _
  $region3: #{_lambda_.7} parent=0 // pred_check_branch
    %9 = sbr.rel (0) target = $region5
  $region4: #{_lambda_.7} parent=0 // pred_region
    _
  $region5: #{_lambda_.7} parent=0 // pred_fallthru
    _
  // Predicated region
  $region6: #{_lambda_.7} parent=0 // pred_check
    _
  $region7: #{_lambda_.7} parent=0 // pred_check_branch
    %11 = sbr.rel (0) target = $region9
  $region8: #{_lambda_.7} parent=0 // pred_region
    _
  $region9: #{_lambda_.7} parent=0 // pred_fallthru
    _
  // Predicated region
  $region10: #{_lambda_.7} parent=0 // pred_check
    _
  $region11: #{_lambda_.7} parent=0 // pred_check_branch
    %13 = sbr.rel (0) target = $region13
  $region12: #{_lambda_.7} parent=0 // pred_region
    _
  $region13: #{_lambda_.7} parent=0 // pred_fallthru
    _
  %v14 = vld [vmem:[%s0] sm:$0xff]
  %v15 = vld [vmem:[%s0 + $0x8] sm:$0xff]
  %v16 = vld [vmem:[%s1] sm:$0xff]
  %v17 = vld [vmem:[%s1 + $0x8] sm:$0xff]
  %v18 = vld [vmem:[%s1 + $0x10] sm:$0xff]
  %v19 = vld [vmem:[%s1 + $0x18] sm:$0xff]
  %v20 = vld [vmem:[%s1 + $0x20] sm:$0xff]
  %v21 = vld [vmem:[%s1 + $0x28] sm:$0xff]
  %v22 = vld [vmem:[%s1 + $0x30] sm:$0xff]
  %v23 = vld [vmem:[%s1 + $0x38] sm:$0xff]
  %v24 = vld [vmem:[%s2] sm:$0xff]
  %v25 = vld [vmem:[%s2 + $0x8] sm:$0xff]
  %vm26 = vcmask 523264
  %v28 = vsel %vm26, %v14, 0
  %v31 = vsel %vm26, %v15, 0
  %33 = vmatpush.msra.mxu0 0.0
  %34 = vmatpush.msra.mxu0 0.0
  %35 = vmatpush.msra.mxu0 0.0
  %36 = vmatpush.msra.mxu0 0.0
  %37 = vmatpush.msra.mxu0 0.0
  %38 = vmatpush.msra.mxu0 0.0
  %39 = vmatpush.msra.mxu0 0.0
  %40 = vmatpush.msra.mxu0 0.0
  %41 = vmatpush.msra.mxu0 %v23
  %42 = vmatpush.msra.mxu0 %v22
  %43 = vmatpush.msra.mxu0 %v21
  %44 = vmatpush.msra.mxu0 %v20
  %45 = vmatpush.msra.mxu0 %v19
  %46 = vmatpush.msra.mxu0 %v18
  %47 = vmatpush.msra.mxu0 %v17
  %48 = vmatpush.msra.mxu0 %v16
  %49 = vmatmul.f32.gmra.mxu0 %v28
  %v50 = vpop.f32.mrf.mxu0
  %v51 = vadd.f32 %v24, %v50
  %52 = vmatmul.f32.gmra.mxu0 %v31
  %v53 = vpop.f32.mrf.mxu0
  %v54 = vadd.f32 %v25, %v53
  %55 = vdwg.mxu0
  %56 = vst [vmem:[%s3] sm:$0xff] %v51
  %57 = vst [vmem:[%s3 + $0x8] sm:$0xff] %v54
  // Predicated region
  $region14: #{_lambda_.7} parent=0 // pred_check
    _
  $region15: #{_lambda_.7} parent=0 // pred_check_branch
    %59 = sbr.rel (0) target = $region17
  $region16: #{_lambda_.7} parent=0 // pred_region
    _
  $region17: #{_lambda_.7} parent=0 // pred_fallthru
    _
  // Predicated region
  $region18: #{_lambda_.7} parent=0 // pred_check
    _
  $region19: #{_lambda_.7} parent=0 // pred_check_branch
    %61 = sbr.rel (0) target = $region21
  $region20: #{_lambda_.7} parent=0 // pred_region
    _
  $region21: #{_lambda_.7} parent=0 // pred_fallthru
    _

// kernel: _lambda_.6
$region0: #{_lambda_.6}
  #allocation0 [shape = 'u32[]', space=smem, size = 0x4, offset = 0x4, fixed_abs, tag = 'smem constant byte address 0x4 - core index']
  #allocation1 [shape = 'u32[72,128]{1,0:T(1,128)}', space=vmem, size = 0x9000, scoped, tag = 'internal scratch']
  %s0 = inlined_call_operand.vmem [shape: f32[32,256], index: 0, kind: input, shape index: {}]
  %s1 = inlined_call_operand.vmem [shape: f32[256,128], index: 1, kind: input, shape index: {}]
  %s2 = inlined_call_operand.vmem [shape: f32[32,128], index: 2, kind: input, shape index: {}]
  %s3 = inlined_call_operand.vmem [shape: f32[32,128], index: 3, kind: output, shape index: {}]
  %s4 = sld [smem:[#allocation0]]
  $region22: #{_lambda_.6} parent=0
    _
  %s6 = ssub.s32 1, %s4
  %s7 = scalar_select 0, %s6, %s4
  // Predicated region
  $region2: #{_lambda_.6} parent=0 // pred_check
    _
  $region3: #{_lambda_.6} parent=0 // pred_check_branch
    %9 = sbr.rel (0) target = $region5
  $region4: #{_lambda_.6} parent=0 // pred_region
    _
  $region5: #{_lambda_.6} parent=0 // pred_fallthru
    _
  // Predicated region
  $region6: #{_lambda_.6} parent=0 // pred_check
    _
  $region7: #{_lambda_.6} parent=0 // pred_check_branch
    %11 = sbr.rel (0) target = $region9
  $region8: #{_lambda_.6} parent=0 // pred_region
    _
  $region9: #{_lambda_.6} parent=0 // pred_fallthru
    _
  // Predicated region
  $region10: #{_lambda_.6} parent=0 // pred_check
    _
  $region11: #{_lambda_.6} parent=0 // pred_check_branch
    %13 = sbr.rel (0) target = $region13
  $region12: #{_lambda_.6} parent=0 // pred_region
    _
  $region13: #{_lambda_.6} parent=0 // pred_fallthru
    _
  %v14 = vld [vmem:[%s0] sm:$0xff]
  %v15 = vld [vmem:[%s0 + $0x8] sm:$0xff]
  %v16 = vld [vmem:[%s0 + $0x10] sm:$0xff]
  %v17 = vld [vmem:[%s0 + $0x18] sm:$0xff]
  %v18 = vld [vmem:[%s0 + $0x20] sm:$0xff]
  %v19 = vld [vmem:[%s0 + $0x28] sm:$0xff]
  %v20 = vld [vmem:[%s0 + $0x30] sm:$0xff]
  %v21 = vld [vmem:[%s0 + $0x38] sm:$0xff]
  %v22 = vld [vmem:[%s1] sm:$0xff]
  %v23 = vld [vmem:[%s1 + $0x8] sm:$0xff]
  %v24 = vld [vmem:[%s1 + $0x10] sm:$0xff]
  %v25 = vld [vmem:[%s1 + $0x18] sm:$0xff]
  %v26 = vld [vmem:[%s1 + $0x20] sm:$0xff]
  %v27 = vld [vmem:[%s1 + $0x28] sm:$0xff]
  %v28 = vld [vmem:[%s1 + $0x30] sm:$0xff]
  %v29 = vld [vmem:[%s1 + $0x38] sm:$0xff]
  %v30 = vld [vmem:[%s1 + $0x40] sm:$0xff]
  %v31 = vld [vmem:[%s1 + $0x48] sm:$0xff]
  %v32 = vld [vmem:[%s1 + $0x50] sm:$0xff]
  %v33 = vld [vmem:[%s1 + $0x58] sm:$0xff]
  %v34 = vld [vmem:[%s1 + $0x60] sm:$0xff]
  %v35 = vld [vmem:[%s1 + $0x68] sm:$0xff]
  %v36 = vld [vmem:[%s1 + $0x70] sm:$0xff]
  %v37 = vld [vmem:[%s1 + $0x78] sm:$0xff]
  %v38 = vld [vmem:[%s1 + $0x80] sm:$0xff]
  %v39 = vld [vmem:[%s1 + $0x88] sm:$0xff]
  %v40 = vld [vmem:[%s1 + $0x90] sm:$0xff]
  %v41 = vld [vmem:[%s1 + $0x98] sm:$0xff]
  %v42 = vld [vmem:[%s1 + $0xa0] sm:$0xff]
  %v43 = vld [vmem:[%s1 + $0xa8] sm:$0xff]
  %v44 = vld [vmem:[%s1 + $0xb0] sm:$0xff]
  %v45 = vld [vmem:[%s1 + $0xb8] sm:$0xff]
  %v46 = vld [vmem:[%s1 + $0xc0] sm:$0xff]
  %v47 = vld [vmem:[%s1 + $0xc8] sm:$0xff]
  %v48 = vld [vmem:[%s1 + $0xd0] sm:$0xff]
  %v49 = vld [vmem:[%s1 + $0xd8] sm:$0xff]
  %v50 = vld [vmem:[%s1 + $0xe0] sm:$0xff]
  %v51 = vld [vmem:[%s1 + $0xe8] sm:$0xff]
  %v52 = vld [vmem:[%s1 + $0xf0] sm:$0xff]
  %v53 = vld [vmem:[%s1 + $0xf8] sm:$0xff]
  %v54 = vld [vmem:[%s2] sm:$0xff]
  %v55 = vld [vmem:[%s2 + $0x8] sm:$0xff]
  %v56 = vld [vmem:[%s2 + $0x10] sm:$0xff]
  %v57 = vld [vmem:[%s2 + $0x18] sm:$0xff]
  %58 = vmatpush.msra.mxu0 %v37
  %59 = vmatpush.msra.mxu0 %v36
  %60 = vmatpush.msra.mxu0 %v35
  %61 = vmatpush.msra.mxu0 %v34
  %62 = vmatpush.msra.mxu0 %v33
  %63 = vmatpush.msra.mxu0 %v32
  %64 = vmatpush.msra.mxu0 %v31
  %65 = vmatpush.msra.mxu0 %v30
  %66 = vmatpush.msra.mxu0 %v29
  %67 = vmatpush.msra.mxu0 %v28
  %68 = vmatpush.msra.mxu0 %v27
  %69 = vmatpush.msra.mxu0 %v26
  %70 = vmatpush.msra.mxu0 %v25
  %71 = vmatpush.msra.mxu0 %v24
  %72 = vmatpush.msra.mxu0 %v23
  %73 = vmatpush.msra.mxu0 %v22
  %74 = vmatmul.f32.gmra.mxu0 %v14
  %v75 = vpop.f32.mrf.mxu0
  %v76 = vadd.f32 %v54, %v75
  %77 = vmatmul.f32.gmra.mxu0 %v16
  %v78 = vpop.f32.mrf.mxu0
  %v79 = vadd.f32 %v55, %v78
  %80 = vmatmul.f32.gmra.mxu0 %v18
  %v81 = vpop.f32.mrf.mxu0
  %v82 = vadd.f32 %v56, %v81
  %83 = vmatmul.f32.gmra.mxu0 %v20
  %v84 = vpop.f32.mrf.mxu0
  %v85 = vadd.f32 %v57, %v84
  %86 = vdwg.mxu0
  %87 = vmatpush.msra.mxu0 %v53
  %88 = vmatpush.msra.mxu0 %v52
  %89 = vmatpush.msra.mxu0 %v51
  %90 = vmatpush.msra.mxu0 %v50
  %91 = vmatpush.msra.mxu0 %v49
  %92 = vmatpush.msra.mxu0 %v48
  %93 = vmatpush.msra.mxu0 %v47
  %94 = vmatpush.msra.mxu0 %v46
  %95 = vmatpush.msra.mxu0 %v45
  %96 = vmatpush.msra.mxu0 %v44
  %97 = vmatpush.msra.mxu0 %v43
  %98 = vmatpush.msra.mxu0 %v42
  %99 = vmatpush.msra.mxu0 %v41
  %100 = vmatpush.msra.mxu0 %v40
  %101 = vmatpush.msra.mxu0 %v39
  %102 = vmatpush.msra.mxu0 %v38
  %103 = vmatmul.f32.gmra.mxu0 %v15
  %v104 = vpop.f32.mrf.mxu0
  %v105 = vadd.f32 %v76, %v104
  %106 = vmatmul.f32.gmra.mxu0 %v17
  %v107 = vpop.f32.mrf.mxu0
  %v108 = vadd.f32 %v79, %v107
  %109 = vmatmul.f32.gmra.mxu0 %v19
  %v110 = vpop.f32.mrf.mxu0
  %v111 = vadd.f32 %v82, %v110
  %112 = vmatmul.f32.gmra.mxu0 %v21
  %v113 = vpop.f32.mrf.mxu0
  %v114 = vadd.f32 %v85, %v113
  %115 = vdwg.mxu0
  %116 = vst [vmem:[%s3] sm:$0xff] %v105
  %117 = vst [vmem:[%s3 + $0x8] sm:$0xff] %v108
  %118 = vst [vmem:[%s3 + $0x10] sm:$0xff] %v111
  %119 = vst [vmem:[%s3 + $0x18] sm:$0xff] %v114
  // Predicated region
  $region14: #{_lambda_.6} parent=0 // pred_check
    _
  $region15: #{_lambda_.6} parent=0 // pred_check_branch
    %121 = sbr.rel (0) target = $region17
  $region16: #{_lambda_.6} parent=0 // pred_region
    _
  $region17: #{_lambda_.6} parent=0 // pred_fallthru
    _
  // Predicated region
  $region18: #{_lambda_.6} parent=0 // pred_check
    _
  $region19: #{_lambda_.6} parent=0 // pred_check_branch
    %123 = sbr.rel (0) target = $region21
  $region20: #{_lambda_.6} parent=0 // pred_region
    _
  $region21: #{_lambda_.6} parent=0 // pred_fallthru
    _

// kernel: _lambda_.8
$region0: #{_lambda_.8}
  #allocation0 [shape = 'u32[]', space=smem, size = 0x4, offset = 0x4, fixed_abs, tag = 'smem constant byte address 0x4 - core index']
  #allocation1 [shape = 'u32[72,128]{1,0:T(1,128)}', space=vmem, size = 0x9000, scoped, tag = 'internal scratch']
  #allocation2 [shape = 'f32[16,128]{1,0:T(8,128)}', space=vmem, size = 0x2000, scoped, tag = 'scratch operand']
  %s0 = inlined_call_operand.vmem [shape: f32[2,16,128], index: 0, kind: input, shape index: {}]
  %s1 = inlined_call_operand.vmem [shape: f32[2,2,128], index: 1, kind: input, shape index: {}]
  %s2 = inlined_call_operand.vmem [shape: f32[2,12,128,32], index: 2, kind: input, shape index: {}]
  %s3 = inlined_call_operand.vmem [shape: f32[2,12,1,32], index: 3, kind: input, shape index: {}]
  %s4 = inlined_call_operand.vmem [shape: f32[2,4,32,128], index: 4, kind: input, shape index: {}]
  %s5 = inlined_call_operand.vmem [shape: f32[2,1,128], index: 5, kind: input, shape index: {}]
  %s6 = inlined_call_operand.vmem [shape: f32[2,2,128], index: 6, kind: input, shape index: {}]
  %s7 = inlined_call_operand.vmem [shape: f32[2,128,256], index: 7, kind: input, shape index: {}]
  %s8 = inlined_call_operand.vmem [shape: f32[2,1,256], index: 8, kind: input, shape index: {}]
  %s9 = inlined_call_operand.vmem [shape: f32[2,256,128], index: 9, kind: input, shape index: {}]
  %s10 = inlined_call_operand.vmem [shape: f32[2,1,128], index: 10, kind: input, shape index: {}]
  %s11 = inlined_call_operand.vmem [shape: f32[1,16], index: 11, kind: input, shape index: {}]
  %s12 = inlined_call_operand.vmem [shape: f32[2,128], index: 12, kind: input, shape index: {}]
  %s13 = inlined_call_operand.vmem [shape: f32[128,128], index: 13, kind: input, shape index: {}]
  %s14 = inlined_call_operand.vmem [shape: f32[1,128], index: 14, kind: input, shape index: {}]
  %s15 = inlined_call_operand.vmem [shape: f32[2,16,128], index: 15, kind: output, shape index: {}]
  %s16 = sld [smem:[#allocation0]]
  $region101: #{_lambda_.8} parent=0
    _
  %s18 = ssub.s32 1, %s16
  %s19 = scalar_select 0, %s18, %s16
  loop: start=0, step=1, limit=6
  $region2: #{_lambda_.8} parent=0 // loop_pre_header
    _
  $region3: #{_lambda_.8} parent=0 // loop_header
    %s21 = sphi 0, %s25
    %p22 = scmp.ge.s32.totalorder %s21, 6
    %s28 = sphi 0, %s40
    %s29 = sphi 0, %s36
    %s30 = sphi 0, %s28
    %s31 = sphi 0, %s29
    %s32 = sphi 0, %s30
    %s33 = sphi 0, %s31
    %s43 = sphi 0, %s45
    %s46 = sphi 0, %s43
    %s47 = sphi 0, %s46
    %s63 = sphi 0, %s47
    %s69 = sphi 0, %s71
    %s72 = sphi 0, %s69
    %s73 = sphi 0, %s72
    %s89 = sphi 0, %s73
    %s95 = sphi 0, %s97
    %s98 = sphi 0, %s95
    %s99 = sphi 0, %s98
    %s115 = sphi 0, %s99
    %s121 = sphi 0, %s123
    %s124 = sphi 0, %s121
    %s125 = sphi 0, %s124
    %s141 = sphi 0, %s125
    %s147 = sphi 0, %s149
    %s150 = sphi 0, %s147
    %s151 = sphi 0, %s150
    %s167 = sphi 0, %s151
    %s173 = sphi 0, %s175
    %s176 = sphi 0, %s173
    %s177 = sphi 0, %s176
    %s193 = sphi 0, %s177
    %s199 = sphi 0, %s201
    %s202 = sphi 0, %s199
    %s203 = sphi 0, %s202
    %s219 = sphi 0, %s203
    %s225 = sphi 0, %s227
    %s228 = sphi 0, %s225
    %s229 = sphi 0, %s228
    %s245 = sphi 0, %s229
    %s251 = sphi 0, %s253
    %s254 = sphi 0, %s251
    %s255 = sphi 0, %s254
    %s271 = sphi 0, %s255
    %s277 = sphi 0, %s279
    %s280 = sphi 0, %s277
    %s281 = sphi 0, %s280
    %s297 = sphi 0, %s281
    %s303 = sphi 0, %s305
    %s306 = sphi 0, %s303
    %s307 = sphi 0, %s306
    %s323 = sphi 0, %s307
    %s327 = sphi 0, %s327
    %s329 = sphi 0, %s327
    %s330 = sphi 0, %s329
    %s344 = sphi 0, %s330
    %s348 = sphi 0, %s348
    %s350 = sphi 0, %s348
    %s351 = sphi 0, %s350
    %s365 = sphi 0, %s351
    %s369 = sphi 0, %s369
    %s371 = sphi 0, %s369
    %s372 = sphi 0, %s371
    %s386 = sphi 0, %s372
    %s390 = sphi 0, %s390
    %s392 = sphi 0, %s390
    %s393 = sphi 0, %s392
    %s407 = sphi 0, %s393
    %s413 = sphi 0, %s415
    %s416 = sphi 0, %s413
    %s417 = sphi 0, %s416
    %s433 = sphi 0, %s417
  $region4: #{_lambda_.8} parent=0 // loop_header_branch
    %24 = sbr.rel (%p22) target = $region8
  $region5: #{_lambda_.8} parent=0 // loop_body
    %s26 = ssub.s32 %s21, 1
    %s27 = ssub.s32 %s21, 2
    %s34 = sadd.s32 1, %s29
    %p35 = scmp.ge.s32.totalorder %s34, 2
    %s36 = scalar_select %p35, 0, %s34
    %s37 = sadd.s32 1, %s28
    %s38 = scalar_select %p35, %s37, %s28
    %p39 = scmp.ge.s32.totalorder %s38, 2
    %s40 = scalar_select %p39, 0, %s38
    %s41 = ssub.s32 %s28, %s40
    %p42 = scmp.eq.s32.totalorder %s41, 0
    %s44 = sadd.s32 %s43, 1
    %s45 = scalar_select %p42, %s43, %s44
    %p48 = pneg %p42
    %p49 = scmp.eq.s32.totalorder %s21, 3
    %p50 = por %p48, %p49
    %p51 = scmp.ne.s32.totalorder %s43, %s46
    %p52 = scmp.eq.s32.totalorder %s21, 0
    %p53 = por %p51, %p52
    %p54 = scmp.ne.s32.totalorder %s43, %s46
    %p55 = scmp.eq.s32.totalorder %s26, 3
    %p56 = por %p54, %p55
    %p57 = scmp.ne.s32.totalorder %s46, %s47
    %p58 = scmp.eq.s32.totalorder %s26, 0
    %p59 = por %p57, %p58
    %p60 = scmp.ne.s32.totalorder %s46, %s47
    %p61 = scmp.eq.s32.totalorder %s27, 3
    %p62 = por %p60, %p61
    %p64 = scmp.ne.s32.totalorder %s47, %s63
    %p65 = scmp.eq.s32.totalorder %s27, 0
    %p66 = por %p64, %p65
    %s67 = ssub.s32 %s29, %s36
    %p68 = scmp.eq.s32.totalorder %s67, 0
    %s70 = sadd.s32 %s69, 1
    %s71 = scalar_select %p68, %s69, %s70
    %p74 = pneg %p68
    %p75 = scmp.eq.s32.totalorder %s21, 3
    %p76 = por %p74, %p75
    %p77 = scmp.ne.s32.totalorder %s69, %s72
    %p78 = scmp.eq.s32.totalorder %s21, 0
    %p79 = por %p77, %p78
    %p80 = scmp.ne.s32.totalorder %s69, %s72
    %p81 = scmp.eq.s32.totalorder %s26, 3
    %p82 = por %p80, %p81
    %p83 = scmp.ne.s32.totalorder %s72, %s73
    %p84 = scmp.eq.s32.totalorder %s26, 0
    %p85 = por %p83, %p84
    %p86 = scmp.ne.s32.totalorder %s72, %s73
    %p87 = scmp.eq.s32.totalorder %s27, 3
    %p88 = por %p86, %p87
    %p90 = scmp.ne.s32.totalorder %s73, %s89
    %p91 = scmp.eq.s32.totalorder %s27, 0
    %p92 = por %p90, %p91
    %s93 = ssub.s32 %s29, %s36
    %p94 = scmp.eq.s32.totalorder %s93, 0
    %s96 = sadd.s32 %s95, 1
    %s97 = scalar_select %p94, %s95, %s96
    %p100 = pneg %p94
    %p101 = scmp.eq.s32.totalorder %s21, 3
    %p102 = por %p100, %p101
    %p103 = scmp.ne.s32.totalorder %s95, %s98
    %p104 = scmp.eq.s32.totalorder %s21, 0
    %p105 = por %p103, %p104
    %p106 = scmp.ne.s32.totalorder %s95, %s98
    %p107 = scmp.eq.s32.totalorder %s26, 3
    %p108 = por %p106, %p107
    %p109 = scmp.ne.s32.totalorder %s98, %s99
    %p110 = scmp.eq.s32.totalorder %s26, 0
    %p111 = por %p109, %p110
    %p112 = scmp.ne.s32.totalorder %s98, %s99
    %p113 = scmp.eq.s32.totalorder %s27, 3
    %p114 = por %p112, %p113
    %p116 = scmp.ne.s32.totalorder %s99, %s115
    %p117 = scmp.eq.s32.totalorder %s27, 0
    %p118 = por %p116, %p117
    %s119 = ssub.s32 %s29, %s36
    %p120 = scmp.eq.s32.totalorder %s119, 0
    %s122 = sadd.s32 %s121, 1
    %s123 = scalar_select %p120, %s121, %s122
    %p126 = pneg %p120
    %p127 = scmp.eq.s32.totalorder %s21, 3
    %p128 = por %p126, %p127
    %p129 = scmp.ne.s32.totalorder %s121, %s124
    %p130 = scmp.eq.s32.totalorder %s21, 0
    %p131 = por %p129, %p130
    %p132 = scmp.ne.s32.totalorder %s121, %s124
    %p133 = scmp.eq.s32.totalorder %s26, 3
    %p134 = por %p132, %p133
    %p135 = scmp.ne.s32.totalorder %s124, %s125
    %p136 = scmp.eq.s32.totalorder %s26, 0
    %p137 = por %p135, %p136
    %p138 = scmp.ne.s32.totalorder %s124, %s125
    %p139 = scmp.eq.s32.totalorder %s27, 3
    %p140 = por %p138, %p139
    %p142 = scmp.ne.s32.totalorder %s125, %s141
    %p143 = scmp.eq.s32.totalorder %s27, 0
    %p144 = por %p142, %p143
    %s145 = ssub.s32 %s29, %s36
    %p146 = scmp.eq.s32.totalorder %s145, 0
    %s148 = sadd.s32 %s147, 1
    %s149 = scalar_select %p146, %s147, %s148
    %p152 = pneg %p146
    %p153 = scmp.eq.s32.totalorder %s21, 3
    %p154 = por %p152, %p153
    %p155 = scmp.ne.s32.totalorder %s147, %s150
    %p156 = scmp.eq.s32.totalorder %s21, 0
    %p157 = por %p155, %p156
    %p158 = scmp.ne.s32.totalorder %s147, %s150
    %p159 = scmp.eq.s32.totalorder %s26, 3
    %p160 = por %p158, %p159
    %p161 = scmp.ne.s32.totalorder %s150, %s151
    %p162 = scmp.eq.s32.totalorder %s26, 0
    %p163 = por %p161, %p162
    %p164 = scmp.ne.s32.totalorder %s150, %s151
    %p165 = scmp.eq.s32.totalorder %s27, 3
    %p166 = por %p164, %p165
    %p168 = scmp.ne.s32.totalorder %s151, %s167
    %p169 = scmp.eq.s32.totalorder %s27, 0
    %p170 = por %p168, %p169
    %s171 = ssub.s32 %s29, %s36
    %p172 = scmp.eq.s32.totalorder %s171, 0
    %s174 = sadd.s32 %s173, 1
    %s175 = scalar_select %p172, %s173, %s174
    %p178 = pneg %p172
    %p179 = scmp.eq.s32.totalorder %s21, 3
    %p180 = por %p178, %p179
    %p181 = scmp.ne.s32.totalorder %s173, %s176
    %p182 = scmp.eq.s32.totalorder %s21, 0
    %p183 = por %p181, %p182
    %p184 = scmp.ne.s32.totalorder %s173, %s176
    %p185 = scmp.eq.s32.totalorder %s26, 3
    %p186 = por %p184, %p185
    %p187 = scmp.ne.s32.totalorder %s176, %s177
    %p188 = scmp.eq.s32.totalorder %s26, 0
    %p189 = por %p187, %p188
    %p190 = scmp.ne.s32.totalorder %s176, %s177
    %p191 = scmp.eq.s32.totalorder %s27, 3
    %p192 = por %p190, %p191
    %p194 = scmp.ne.s32.totalorder %s177, %s193
    %p195 = scmp.eq.s32.totalorder %s27, 0
    %p196 = por %p194, %p195
    %s197 = ssub.s32 %s29, %s36
    %p198 = scmp.eq.s32.totalorder %s197, 0
    %s200 = sadd.s32 %s199, 1
    %s201 = scalar_select %p198, %s199, %s200
    %p204 = pneg %p198
    %p205 = scmp.eq.s32.totalorder %s21, 3
    %p206 = por %p204, %p205
    %p207 = scmp.ne.s32.totalorder %s199, %s202
    %p208 = scmp.eq.s32.totalorder %s21, 0
    %p209 = por %p207, %p208
    %p210 = scmp.ne.s32.totalorder %s199, %s202
    %p211 = scmp.eq.s32.totalorder %s26, 3
    %p212 = por %p210, %p211
    %p213 = scmp.ne.s32.totalorder %s202, %s203
    %p214 = scmp.eq.s32.totalorder %s26, 0
    %p215 = por %p213, %p214
    %p216 = scmp.ne.s32.totalorder %s202, %s203
    %p217 = scmp.eq.s32.totalorder %s27, 3
    %p218 = por %p216, %p217
    %p220 = scmp.ne.s32.totalorder %s203, %s219
    %p221 = scmp.eq.s32.totalorder %s27, 0
    %p222 = por %p220, %p221
    %s223 = ssub.s32 %s29, %s36
    %p224 = scmp.eq.s32.totalorder %s223, 0
    %s226 = sadd.s32 %s225, 1
    %s227 = scalar_select %p224, %s225, %s226
    %p230 = pneg %p224
    %p231 = scmp.eq.s32.totalorder %s21, 3
    %p232 = por %p230, %p231
    %p233 = scmp.ne.s32.totalorder %s225, %s228
    %p234 = scmp.eq.s32.totalorder %s21, 0
    %p235 = por %p233, %p234
    %p236 = scmp.ne.s32.totalorder %s225, %s228
    %p237 = scmp.eq.s32.totalorder %s26, 3
    %p238 = por %p236, %p237
    %p239 = scmp.ne.s32.totalorder %s228, %s229
    %p240 = scmp.eq.s32.totalorder %s26, 0
    %p241 = por %p239, %p240
    %p242 = scmp.ne.s32.totalorder %s228, %s229
    %p243 = scmp.eq.s32.totalorder %s27, 3
    %p244 = por %p242, %p243
    %p246 = scmp.ne.s32.totalorder %s229, %s245
    %p247 = scmp.eq.s32.totalorder %s27, 0
    %p248 = por %p246, %p247
    %s249 = ssub.s32 %s29, %s36
    %p250 = scmp.eq.s32.totalorder %s249, 0
    %s252 = sadd.s32 %s251, 1
    %s253 = scalar_select %p250, %s251, %s252
    %p256 = pneg %p250
    %p257 = scmp.eq.s32.totalorder %s21, 3
    %p258 = por %p256, %p257
    %p259 = scmp.ne.s32.totalorder %s251, %s254
    %p260 = scmp.eq.s32.totalorder %s21, 0
    %p261 = por %p259, %p260
    %p262 = scmp.ne.s32.totalorder %s251, %s254
    %p263 = scmp.eq.s32.totalorder %s26, 3
    %p264 = por %p262, %p263
    %p265 = scmp.ne.s32.totalorder %s254, %s255
    %p266 = scmp.eq.s32.totalorder %s26, 0
    %p267 = por %p265, %p266
    %p268 = scmp.ne.s32.totalorder %s254, %s255
    %p269 = scmp.eq.s32.totalorder %s27, 3
    %p270 = por %p268, %p269
    %p272 = scmp.ne.s32.totalorder %s255, %s271
    %p273 = scmp.eq.s32.totalorder %s27, 0
    %p274 = por %p272, %p273
    %s275 = ssub.s32 %s29, %s36
    %p276 = scmp.eq.s32.totalorder %s275, 0
    %s278 = sadd.s32 %s277, 1
    %s279 = scalar_select %p276, %s277, %s278
    %p282 = pneg %p276
    %p283 = scmp.eq.s32.totalorder %s21, 3
    %p284 = por %p282, %p283
    %p285 = scmp.ne.s32.totalorder %s277, %s280
    %p286 = scmp.eq.s32.totalorder %s21, 0
    %p287 = por %p285, %p286
    %p288 = scmp.ne.s32.totalorder %s277, %s280
    %p289 = scmp.eq.s32.totalorder %s26, 3
    %p290 = por %p288, %p289
    %p291 = scmp.ne.s32.totalorder %s280, %s281
    %p292 = scmp.eq.s32.totalorder %s26, 0
    %p293 = por %p291, %p292
    %p294 = scmp.ne.s32.totalorder %s280, %s281
    %p295 = scmp.eq.s32.totalorder %s27, 3
    %p296 = por %p294, %p295
    %p298 = scmp.ne.s32.totalorder %s281, %s297
    %p299 = scmp.eq.s32.totalorder %s27, 0
    %p300 = por %p298, %p299
    %s301 = ssub.s32 %s29, %s36
    %p302 = scmp.eq.s32.totalorder %s301, 0
    %s304 = sadd.s32 %s303, 1
    %s305 = scalar_select %p302, %s303, %s304
    %p308 = pneg %p302
    %p309 = scmp.eq.s32.totalorder %s21, 3
    %p310 = por %p308, %p309
    %p311 = scmp.ne.s32.totalorder %s303, %s306
    %p312 = scmp.eq.s32.totalorder %s21, 0
    %p313 = por %p311, %p312
    %p314 = scmp.ne.s32.totalorder %s303, %s306
    %p315 = scmp.eq.s32.totalorder %s26, 3
    %p316 = por %p314, %p315
    %p317 = scmp.ne.s32.totalorder %s306, %s307
    %p318 = scmp.eq.s32.totalorder %s26, 0
    %p319 = por %p317, %p318
    %p320 = scmp.ne.s32.totalorder %s306, %s307
    %p321 = scmp.eq.s32.totalorder %s27, 3
    %p322 = por %p320, %p321
    %p324 = scmp.ne.s32.totalorder %s307, %s323
    %p325 = scmp.eq.s32.totalorder %s27, 0
    %p326 = por %p324, %p325
    %s328 = sadd.s32 %s327, 1
    %p331 = scmp.eq.s32.totalorder %s21, 3
    %p332 = scmp.ne.s32.totalorder %s327, %s329
    %p333 = scmp.eq.s32.totalorder %s21, 0
    %p334 = por %p332, %p333
    %p335 = scmp.ne.s32.totalorder %s327, %s329
    %p336 = scmp.eq.s32.totalorder %s26, 3
    %p337 = por %p335, %p336
    %p338 = scmp.ne.s32.totalorder %s329, %s330
    %p339 = scmp.eq.s32.totalorder %s26, 0
    %p340 = por %p338, %p339
    %p341 = scmp.ne.s32.totalorder %s329, %s330
    %p342 = scmp.eq.s32.totalorder %s27, 3
    %p343 = por %p341, %p342
    %p345 = scmp.ne.s32.totalorder %s330, %s344
    %p346 = scmp.eq.s32.totalorder %s27, 0
    %p347 = por %p345, %p346
    %s349 = sadd.s32 %s348, 1
    %p352 = scmp.eq.s32.totalorder %s21, 3
    %p353 = scmp.ne.s32.totalorder %s348, %s350
    %p354 = scmp.eq.s32.totalorder %s21, 0
    %p355 = por %p353, %p354
    %p356 = scmp.ne.s32.totalorder %s348, %s350
    %p357 = scmp.eq.s32.totalorder %s26, 3
    %p358 = por %p356, %p357
    %p359 = scmp.ne.s32.totalorder %s350, %s351
    %p360 = scmp.eq.s32.totalorder %s26, 0
    %p361 = por %p359, %p360
    %p362 = scmp.ne.s32.totalorder %s350, %s351
    %p363 = scmp.eq.s32.totalorder %s27, 3
    %p364 = por %p362, %p363
    %p366 = scmp.ne.s32.totalorder %s351, %s365
    %p367 = scmp.eq.s32.totalorder %s27, 0
    %p368 = por %p366, %p367
    %s370 = sadd.s32 %s369, 1
    %p373 = scmp.eq.s32.totalorder %s21, 3
    %p374 = scmp.ne.s32.totalorder %s369, %s371
    %p375 = scmp.eq.s32.totalorder %s21, 0
    %p376 = por %p374, %p375
    %p377 = scmp.ne.s32.totalorder %s369, %s371
    %p378 = scmp.eq.s32.totalorder %s26, 3
    %p379 = por %p377, %p378
    %p380 = scmp.ne.s32.totalorder %s371, %s372
    %p381 = scmp.eq.s32.totalorder %s26, 0
    %p382 = por %p380, %p381
    %p383 = scmp.ne.s32.totalorder %s371, %s372
    %p384 = scmp.eq.s32.totalorder %s27, 3
    %p385 = por %p383, %p384
    %p387 = scmp.ne.s32.totalorder %s372, %s386
    %p388 = scmp.eq.s32.totalorder %s27, 0
    %p389 = por %p387, %p388
    %s391 = sadd.s32 %s390, 1
    %p394 = scmp.eq.s32.totalorder %s21, 3
    %p395 = scmp.ne.s32.totalorder %s390, %s392
    %p396 = scmp.eq.s32.totalorder %s21, 0
    %p397 = por %p395, %p396
    %p398 = scmp.ne.s32.totalorder %s390, %s392
    %p399 = scmp.eq.s32.totalorder %s26, 3
    %p400 = por %p398, %p399
    %p401 = scmp.ne.s32.totalorder %s392, %s393
    %p402 = scmp.eq.s32.totalorder %s26, 0
    %p403 = por %p401, %p402
    %p404 = scmp.ne.s32.totalorder %s392, %s393
    %p405 = scmp.eq.s32.totalorder %s27, 3
    %p406 = por %p404, %p405
    %p408 = scmp.ne.s32.totalorder %s393, %s407
    %p409 = scmp.eq.s32.totalorder %s27, 0
    %p410 = por %p408, %p409
    %s411 = ssub.s32 %s28, %s40
    %p412 = scmp.eq.s32.totalorder %s411, 0
    %s414 = sadd.s32 %s413, 1
    %s415 = scalar_select %p412, %s413, %s414
    %p418 = pneg %p412
    %p419 = scmp.eq.s32.totalorder %s21, 3
    %p420 = por %p418, %p419
    %p421 = scmp.ne.s32.totalorder %s413, %s416
    %p422 = scmp.eq.s32.totalorder %s21, 0
    %p423 = por %p421, %p422
    %p424 = scmp.ne.s32.totalorder %s413, %s416
    %p425 = scmp.eq.s32.totalorder %s26, 3
    %p426 = por %p424, %p425
    %p427 = scmp.ne.s32.totalorder %s416, %s417
    %p428 = scmp.eq.s32.totalorder %s26, 0
    %p429 = por %p427, %p428
    %p430 = scmp.ne.s32.totalorder %s416, %s417
    %p431 = scmp.eq.s32.totalorder %s27, 3
    %p432 = por %p430, %p431
    %p434 = scmp.ne.s32.totalorder %s417, %s433
    %p435 = scmp.eq.s32.totalorder %s27, 0
    %p436 = por %p434, %p435
    %p437 = scmp.le.s32.totalorder 1, %s21
    %p438 = scmp.lt.s32.totalorder %s21, 5
    %p439 = pnand %p437, %p438
    %p440 = pneg %p439
    // Predicated region
    $region9: #{_lambda_.8} parent=5 // pred_check
      _
    $region10: #{_lambda_.8} parent=5 // pred_check_branch
      %442 = sbr.rel (%p439) target = $region12
    $region11: #{_lambda_.8} parent=5 // pred_region
      %s443 = ssub.s32 %s21, 1
      // Predicated region
      $region13: #{_lambda_.8} parent=11 // pred_check
        %p444 = pneg %p340
      $region14: #{_lambda_.8} parent=11 // pred_check_branch
        %446 = sbr.rel (%p444) target = $region16
      $region15: #{_lambda_.8} parent=11 // pred_region
        _
      $region16: #{_lambda_.8} parent=11 // pred_fallthru
        _
      // Predicated region
      $region17: #{_lambda_.8} parent=11 // pred_check
        %p447 = pneg %p361
      $region18: #{_lambda_.8} parent=11 // pred_check_branch
        %449 = sbr.rel (%p447) target = $region20
      $region19: #{_lambda_.8} parent=11 // pred_region
        _
      $region20: #{_lambda_.8} parent=11 // pred_fallthru
        _
      // Predicated region
      $region21: #{_lambda_.8} parent=11 // pred_check
        %p450 = pneg %p382
      $region22: #{_lambda_.8} parent=11 // pred_check_branch
        %452 = sbr.rel (%p450) target = $region24
      $region23: #{_lambda_.8} parent=11 // pred_region
        _
      $region24: #{_lambda_.8} parent=11 // pred_fallthru
        _
      // Predicated region
      $region25: #{_lambda_.8} parent=11 // pred_check
        %p453 = pneg %p403
      $region26: #{_lambda_.8} parent=11 // pred_check_branch
        %455 = sbr.rel (%p453) target = $region28
      $region27: #{_lambda_.8} parent=11 // pred_region
        _
      $region28: #{_lambda_.8} parent=11 // pred_fallthru
        _
    $region12: #{_lambda_.8} parent=5 // pred_fallthru
      _
    %p456 = scmp.lt.s32.totalorder %s21, 4
    // Predicated region
    $region29: #{_lambda_.8} parent=5 // pred_check
      %p457 = pneg %p456
    $region30: #{_lambda_.8} parent=5 // pred_check_branch
      %459 = sbr.rel (%p457) target = $region32
    $region31: #{_lambda_.8} parent=5 // pred_region
      // Predicated region
      $region33: #{_lambda_.8} parent=31 // pred_check
        %p460 = pneg %p53
      $region34: #{_lambda_.8} parent=31 // pred_check_branch
        %462 = sbr.rel (%p460) target = $region36
      $region35: #{_lambda_.8} parent=31 // pred_region
        %p463 = scmp.lt.s32.totalorder %s28, 1
        %s464 = scalar_select %p463, %s28, 1
        %s465 = smul.addr %s464, 2
        %s466 = smul.addr %s465, 8
        %s467 = scalar_lea.vmem %s0, %s466
      $region36: #{_lambda_.8} parent=31 // pred_fallthru
        _
      // Predicated region
      $region37: #{_lambda_.8} parent=31 // pred_check
        %p468 = pneg %p79
      $region38: #{_lambda_.8} parent=31 // pred_check_branch
        %470 = sbr.rel (%p468) target = $region40
      $region39: #{_lambda_.8} parent=31 // pred_region
        %p471 = scmp.lt.s32.totalorder %s29, 1
        %s472 = scalar_select %p471, %s29, 1
        %s473 = smul.addr %s472, 2
        %s474 = scalar_lea.vmem %s1, %s473
      $region40: #{_lambda_.8} parent=31 // pred_fallthru
        _
      // Predicated region
      $region41: #{_lambda_.8} parent=31 // pred_check
        %p475 = pneg %p105
      $region42: #{_lambda_.8} parent=31 // pred_check_branch
        %477 = sbr.rel (%p475) target = $region44
      $region43: #{_lambda_.8} parent=31 // pred_region
        %p478 = scmp.lt.s32.totalorder %s29, 1
        %s479 = scalar_select %p478, %s29, 1
        %s480 = smul.addr %s479, 192
        %s481 = smul.addr %s480, 8
        %s482 = scalar_lea.vmem %s2, %s481
      $region44: #{_lambda_.8} parent=31 // pred_fallthru
        _
      // Predicated region
      $region45: #{_lambda_.8} parent=31 // pred_check
        %p483 = pneg %p131
      $region46: #{_lambda_.8} parent=31 // pred_check_branch
        %485 = sbr.rel (%p483) target = $region48
      $region47: #{_lambda_.8} parent=31 // pred_region
        %p486 = scmp.lt.s32.totalorder %s29, 1
        %s487 = scalar_select %p486, %s29, 1
        %s488 = smul.addr %s487, 12
        %s489 = scalar_lea.vmem %s3, %s488
      $region48: #{_lambda_.8} parent=31 // pred_fallthru
        _
      // Predicated region
      $region49: #{_lambda_.8} parent=31 // pred_check
        %p490 = pneg %p157
      $region50: #{_lambda_.8} parent=31 // pred_check_branch
        %492 = sbr.rel (%p490) target = $region52
      $region51: #{_lambda_.8} parent=31 // pred_region
        %p493 = scmp.lt.s32.totalorder %s29, 1
        %s494 = scalar_select %p493, %s29, 1
        %s495 = smul.addr %s494, 16
        %s496 = smul.addr %s495, 8
        %s497 = scalar_lea.vmem %s4, %s496
      $region52: #{_lambda_.8} parent=31 // pred_fallthru
        _
      // Predicated region
      $region53: #{_lambda_.8} parent=31 // pred_check
        %p498 = pneg %p183
      $region54: #{_lambda_.8} parent=31 // pred_check_branch
        %500 = sbr.rel (%p498) target = $region56
      $region55: #{_lambda_.8} parent=31 // pred_region
        %p501 = scmp.lt.s32.totalorder %s29, 1
        %s502 = scalar_select %p501, %s29, 1
        %s503 = scalar_lea.vmem %s5, %s502
      $region56: #{_lambda_.8} parent=31 // pred_fallthru
        _
      // Predicated region
      $region57: #{_lambda_.8} parent=31 // pred_check
        %p504 = pneg %p209
      $region58: #{_lambda_.8} parent=31 // pred_check_branch
        %506 = sbr.rel (%p504) target = $region60
      $region59: #{_lambda_.8} parent=31 // pred_region
        %p507 = scmp.lt.s32.totalorder %s29, 1
        %s508 = scalar_select %p507, %s29, 1
        %s509 = smul.addr %s508, 2
        %s510 = scalar_lea.vmem %s6, %s509
      $region60: #{_lambda_.8} parent=31 // pred_fallthru
        _
      // Predicated region
      $region61: #{_lambda_.8} parent=31 // pred_check
        %p511 = pneg %p235
      $region62: #{_lambda_.8} parent=31 // pred_check_branch
        %513 = sbr.rel (%p511) target = $region64
      $region63: #{_lambda_.8} parent=31 // pred_region
        %p514 = scmp.lt.s32.totalorder %s29, 1
        %s515 = scalar_select %p514, %s29, 1
        %s516 = smul.addr %s515, 32
        %s517 = smul.addr %s516, 8
        %s518 = scalar_lea.vmem %s7, %s517
      $region64: #{_lambda_.8} parent=31 // pred_fallthru
        _
      // Predicated region
      $region65: #{_lambda_.8} parent=31 // pred_check
        %p519 = pneg %p261
      $region66: #{_lambda_.8} parent=31 // pred_check_branch
        %521 = sbr.rel (%p519) target = $region68
      $region67: #{_lambda_.8} parent=31 // pred_region
        %p522 = scmp.lt.s32.totalorder %s29, 1
        %s523 = scalar_select %p522, %s29, 1
        %s524 = smul.addr %s523, 2
        %s525 = scalar_lea.vmem %s8, %s524
      $region68: #{_lambda_.8} parent=31 // pred_fallthru
        _
      // Predicated region
      $region69: #{_lambda_.8} parent=31 // pred_check
        %p526 = pneg %p287
      $region70: #{_lambda_.8} parent=31 // pred_check_branch
        %528 = sbr.rel (%p526) target = $region72
      $region71: #{_lambda_.8} parent=31 // pred_region
        %p529 = scmp.lt.s32.totalorder %s29, 1
        %s530 = scalar_select %p529, %s29, 1
        %s531 = smul.addr %s530, 32
        %s532 = smul.addr %s531, 8
        %s533 = scalar_lea.vmem %s9, %s532
      $region72: #{_lambda_.8} parent=31 // pred_fallthru
        _
      // Predicated region
      $region73: #{_lambda_.8} parent=31 // pred_check
        %p534 = pneg %p313
      $region74: #{_lambda_.8} parent=31 // pred_check_branch
        %536 = sbr.rel (%p534) target = $region76
      $region75: #{_lambda_.8} parent=31 // pred_region
        %p537 = scmp.lt.s32.totalorder %s29, 1
        %s538 = scalar_select %p537, %s29, 1
        %s539 = scalar_lea.vmem %s10, %s538
      $region76: #{_lambda_.8} parent=31 // pred_fallthru
        _
    $region32: #{_lambda_.8} parent=5 // pred_fallthru
      _
    %p540 = scmp.le.s32.totalorder 1, %s21
    %p541 = scmp.lt.s32.totalorder %s21, 5
    %p542 = pnand %p540, %p541
    %p543 = pneg %p542
    // Predicated region
    $region77: #{_lambda_.8} parent=5 // pred_check
      _
    $region78: #{_lambda_.8} parent=5 // pred_check_branch
      %545 = sbr.rel (%p542) target = $region80
    $region79: #{_lambda_.8} parent=5 // pred_region
      %s546 = ssub.s32 %s21, 1
      %p547 = scmp.lt.s32.totalorder %s30, 1
      %s548 = scalar_select %p547, %s30, 1
      %s549 = smul.addr %s548, 2
      %s550 = smul.addr %s549, 8
      %s551 = scalar_lea.vmem %s0, %s550
      %p552 = pneg %p59
      %p553 = pneg %p56
      %p554 = scmp.lt.s32.totalorder %s31, 1
      %s555 = scalar_select %p554, %s31, 1
      %s556 = smul.addr %s555, 2
      %s557 = scalar_lea.vmem %s1, %s556
      %p558 = pneg %p85
      %p559 = pneg %p82
      %p560 = scmp.lt.s32.totalorder %s31, 1
      %s561 = scalar_select %p560, %s31, 1
      %s562 = smul.addr %s561, 192
      %s563 = smul.addr %s562, 8
      %s564 = scalar_lea.vmem %s2, %s563
      %p565 = pneg %p111
      %p566 = pneg %p108
      %p567 = scmp.lt.s32.totalorder %s31, 1
      %s568 = scalar_select %p567, %s31, 1
      %s569 = smul.addr %s568, 12
      %s570 = scalar_lea.vmem %s3, %s569
      %p571 = pneg %p137
      %p572 = pneg %p134
      %p573 = scmp.lt.s32.totalorder %s31, 1
      %s574 = scalar_select %p573, %s31, 1
      %s575 = smul.addr %s574, 16
      %s576 = smul.addr %s575, 8
      %s577 = scalar_lea.vmem %s4, %s576
      %p578 = pneg %p163
      %p579 = pneg %p160
      %p580 = scmp.lt.s32.totalorder %s31, 1
      %s581 = scalar_select %p580, %s31, 1
      %s582 = scalar_lea.vmem %s5, %s581
      %p583 = pneg %p189
      %p584 = pneg %p186
      %p585 = scmp.lt.s32.totalorder %s31, 1
      %s586 = scalar_select %p585, %s31, 1
      %s587 = smul.addr %s586, 2
      %s588 = scalar_lea.vmem %s6, %s587
      %p589 = pneg %p215
      %p590 = pneg %p212
      %p591 = scmp.lt.s32.totalorder %s31, 1
      %s592 = scalar_select %p591, %s31, 1
      %s593 = smul.addr %s592, 32
      %s594 = smul.addr %s593, 8
      %s595 = scalar_lea.vmem %s7, %s594
      %p596 = pneg %p241
      %p597 = pneg %p238
      %p598 = scmp.lt.s32.totalorder %s31, 1
      %s599 = scalar_select %p598, %s31, 1
      %s600 = smul.addr %s599, 2
      %s601 = scalar_lea.vmem %s8, %s600
      %p602 = pneg %p267
      %p603 = pneg %p264
      %p604 = scmp.lt.s32.totalorder %s31, 1
      %s605 = scalar_select %p604, %s31, 1
      %s606 = smul.addr %s605, 32
      %s607 = smul.addr %s606, 8
      %s608 = scalar_lea.vmem %s9, %s607
      %p609 = pneg %p293
      %p610 = pneg %p290
      %p611 = scmp.lt.s32.totalorder %s31, 1
      %s612 = scalar_select %p611, %s31, 1
      %s613 = scalar_lea.vmem %s10, %s612
      %p614 = pneg %p319
      %p615 = pneg %p316
      %p616 = pneg %p340
      %p617 = pneg %p337
      %p618 = pneg %p361
      %p619 = pneg %p358
      %p620 = pneg %p382
      %p621 = pneg %p379
      %p622 = pneg %p403
      %p623 = pneg %p400
      %p624 = pneg %p429
      %p625 = pneg %p426
      %p626 = scmp.lt.s32.totalorder %s30, 1
      %s627 = scalar_select %p626, %s30, 1
      %s628 = smul.addr %s627, 2
      %s629 = smul.addr %s628, 8
      %s630 = scalar_lea.vmem %s15, %s629
      %p631 = scmp.lt.s32.totalorder %s30, 1
      %s632 = scalar_select %p631, %s30, 1
      %s633 = smul.addr %s632, 2
      %s634 = smul.addr %s633, 8
      %s635 = scalar_lea.vmem %s0, %s634
      %p636 = scmp.lt.s32.totalorder %s31, 1
      %s637 = scalar_select %p636, %s31, 1
      %s638 = smul.addr %s637, 2
      %s639 = scalar_lea.vmem %s1, %s638
      %p640 = scmp.lt.s32.totalorder %s31, 1
      %s641 = scalar_select %p640, %s31, 1
      %s642 = smul.addr %s641, 192
      %s643 = smul.addr %s642, 8
      %s644 = scalar_lea.vmem %s2, %s643
      %p645 = scmp.lt.s32.totalorder %s31, 1
      %s646 = scalar_select %p645, %s31, 1
      %s647 = smul.addr %s646, 12
      %s648 = scalar_lea.vmem %s3, %s647
      %p649 = scmp.lt.s32.totalorder %s31, 1
      %s650 = scalar_select %p649, %s31, 1
      %s651 = smul.addr %s650, 16
      %s652 = smul.addr %s651, 8
      %s653 = scalar_lea.vmem %s4, %s652
      %p654 = scmp.lt.s32.totalorder %s31, 1
      %s655 = scalar_select %p654, %s31, 1
      %s656 = scalar_lea.vmem %s5, %s655
      %p657 = scmp.lt.s32.totalorder %s31, 1
      %s658 = scalar_select %p657, %s31, 1
      %s659 = smul.addr %s658, 2
      %s660 = scalar_lea.vmem %s6, %s659
      %p661 = scmp.lt.s32.totalorder %s31, 1
      %s662 = scalar_select %p661, %s31, 1
      %s663 = smul.addr %s662, 32
      %s664 = smul.addr %s663, 8
      %s665 = scalar_lea.vmem %s7, %s664
      %p666 = scmp.lt.s32.totalorder %s31, 1
      %s667 = scalar_select %p666, %s31, 1
      %s668 = smul.addr %s667, 2
      %s669 = scalar_lea.vmem %s8, %s668
      %p670 = scmp.lt.s32.totalorder %s31, 1
      %s671 = scalar_select %p670, %s31, 1
      %s672 = smul.addr %s671, 32
      %s673 = smul.addr %s672, 8
      %s674 = scalar_lea.vmem %s9, %s673
      %p675 = scmp.lt.s32.totalorder %s31, 1
      %s676 = scalar_select %p675, %s31, 1
      %s677 = scalar_lea.vmem %s10, %s676
      %p678 = scmp.lt.s32.totalorder %s30, 1
      %s679 = scalar_select %p678, %s30, 1
      %s680 = smul.addr %s679, 2
      %s681 = smul.addr %s680, 8
      %s682 = scalar_lea.vmem %s15, %s681
      %p683 = scmp.eq.s32.totalorder %s31, 0
      // Predicated region
      $region81: #{_lambda_.8} parent=79 // pred_check
        %p684 = pneg %p683
      $region82: #{_lambda_.8} parent=79 // pred_check_branch
        %686 = sbr.rel (%p684) target = $region84
      $region83: #{_lambda_.8} parent=79 // pred_region
        %v687 = vld [vmem:[%s635] sm:$0xff]
        %v688 = vld [vmem:[%s635 + $0x8] sm:$0xff]
        %689 = vst [vmem:[#allocation2] sm:$0xff] %v687
        %690 = vst [vmem:[#allocation2 + $0x8] sm:$0xff] %v688
      $region84: #{_lambda_.8} parent=79 // pred_fallthru
        _
      %v691 = vld [vmem:[#allocation2] sm:$0xff]
      %v692 = vld [vmem:[#allocation2 + $0x8] sm:$0xff]
      %v693 = vld [vmem:[%s11] sm:$0x1]
      %v694 = vld [vmem:[%s639] sm:$0x1]
      %v695 = vld [vmem:[%s639 + $0x1] sm:$0x1]
      %696 = vadd.xlane.f32.xlu0 %v691
      %v697 = vpop.xlane.xlu0 %696
      %698 = vadd.xlane.f32.xlu0 %v692
      %v699 = vpop.xlane.xlu0 %698
      %v700 = vmul.f32 %v697, 0.020833334
      %v701 = vmul.f32 %v699, 0.020833334
      %v702 = vmul.f32 %v691, %v691
      %v703 = vmul.f32 %v692, %v692
      %704 = vadd.xlane.f32.xlu0 %v702
      %v705 = vpop.xlane.xlu0 %704
      %706 = vadd.xlane.f32.xlu0 %v703
      %v707 = vpop.xlane.xlu0 %706
      %v708 = vmul.f32 %v705, 0.020833334
      %v709 = vmul.f32 %v707, 0.020833334
      %v710 = vmul.f32 %v700, %v700
      %v711 = vmul.f32 %v701, %v701
      %v712 = vsub.f32 %v708, %v710
      %v713 = vsub.f32 %v709, %v711
      %v714 = vmax.f32 %v712, 0.0
      %v715 = vmax.f32 %v713, 0.0
      %v716 = vsub.f32 %v691, %v700
      %v717 = vsub.f32 %v692, %v701
      %v718 = vadd.f32 %v714, 1e-05
      %v719 = vadd.f32 %v715, 1e-05
      %v720 = vrsqrt.pop %v718
      %v721 = vmul.f32 %v720, %v718
      %v722 = vmul.f32 %v721, %v720
      %v723 = vmul.f32 0.5, %v722
      %v724 = vsub.f32 1.5, %v723
      %v725 = vmul.f32 %v720, %v724
      %vm726 = vweird.f32 %v718
      %vm727 = vweird.f32 %v720
      %vm728 = vmor %vm726, %vm727
      %v729 = vsel %vm728, %v720, %v725
      %v730 = vrsqrt.pop %v719
      %v731 = vmul.f32 %v730, %v719
      %v732 = vmul.f32 %v731, %v730
      %v733 = vmul.f32 0.5, %v732
      %v734 = vsub.f32 1.5, %v733
      %v735 = vmul.f32 %v730, %v734
      %vm736 = vweird.f32 %v719
      %vm737 = vweird.f32 %v730
      %vm738 = vmor %vm736, %vm737
      %v739 = vsel %vm738, %v730, %v735
      %v740 = vmul.f32 %v716, %v729
      %v741 = vmul.f32 %v717, %v739
      %v742 = vperm.slane %v694, 0
      %v743 = vmul.f32 %v740, %v742
      %v744 = vmul.f32 %v741, %v742
      %v745 = vperm.slane %v695, 0
      %v746 = vadd.f32 %v743, %v745
      %v747 = vadd.f32 %v744, %v745
      %v748 = vld [vmem:[%s644] sm:$0xff]
      %v749 = vld [vmem:[%s644 + $0x8] sm:$0xff]
      %v750 = vld [vmem:[%s644 + $0x10] sm:$0xff]
      %v751 = vld [vmem:[%s644 + $0x18] sm:$0xff]
      %v752 = vld [vmem:[%s644 + $0x20] sm:$0xff]
      %v753 = vld [vmem:[%s644 + $0x28] sm:$0xff]
      %v754 = vld [vmem:[%s644 + $0x30] sm:$0xff]
      %v755 = vld [vmem:[%s644 + $0x38] sm:$0xff]
      %v756 = vld [vmem:[%s644 + $0x40] sm:$0xff]
      %v757 = vld [vmem:[%s644 + $0x48] sm:$0xff]
      %v758 = vld [vmem:[%s644 + $0x50] sm:$0xff]
      %v759 = vld [vmem:[%s644 + $0x58] sm:$0xff]
      %v760 = vld [vmem:[%s644 + $0x60] sm:$0xff]
      %v761 = vld [vmem:[%s644 + $0x68] sm:$0xff]
      %v762 = vld [vmem:[%s644 + $0x70] sm:$0xff]
      %v763 = vld [vmem:[%s644 + $0x78] sm:$0xff]
      %v764 = vld [vmem:[%s648] sm:$0x1]
      %v766 = vperm.slane %v764, 0
      %768 = vmatpush.msra.mxu0 %v763
      %769 = vmatpush.msra.mxu0 %v762
      %770 = vmatpush.msra.mxu0 %v761
      %771 = vmatpush.msra.mxu0 %v760
      %772 = vmatpush.msra.mxu0 %v759
      %773 = vmatpush.msra.mxu0 %v758
      %774 = vmatpush.msra.mxu0 %v757
      %775 = vmatpush.msra.mxu0 %v756
      %776 = vmatpush.msra.mxu0 %v755
      %777 = vmatpush.msra.mxu0 %v754
      %778 = vmatpush.msra.mxu0 %v753
      %779 = vmatpush.msra.mxu0 %v752
      %780 = vmatpush.msra.mxu0 %v751
      %781 = vmatpush.msra.mxu0 %v750
      %782 = vmatpush.msra.mxu0 %v749
      %783 = vmatpush.msra.mxu0 %v748
      %784 = vmatmul.f32.gmra.mxu0 %v746
      %v785 = vpop.f32.mrf.mxu0
      %v786 = vadd.f32 %v766, %v785
      %787 = vmatmul.f32.gmra.mxu0 %v747
      %v788 = vpop.f32.mrf.mxu0
      %v789 = vadd.f32 %v766, %v788
      %790 = vdwg.mxu0
      %s791 = scalar_lea.vmem %s644, 512
      %v792 = vld [vmem:[%s791] sm:$0xff]
      %v793 = vld [vmem:[%s791 + $0x8] sm:$0xff]
      %v794 = vld [vmem:[%s791 + $0x10] sm:$0xff]
      %v795 = vld [vmem:[%s791 + $0x18] sm:$0xff]
      %v796 = vld [vmem:[%s791 + $0x20] sm:$0xff]
      %v797 = vld [vmem:[%s791 + $0x28] sm:$0xff]
      %v798 = vld [vmem:[%s791 + $0x30] sm:$0xff]
      %v799 = vld [vmem:[%s791 + $0x38] sm:$0xff]
      %v800 = vld [vmem:[%s791 + $0x40] sm:$0xff]
      %v801 = vld [vmem:[%s791 + $0x48] sm:$0xff]
      %v802 = vld [vmem:[%s791 + $0x50] sm:$0xff]
      %v803 = vld [vmem:[%s791 + $0x58] sm:$0xff]
      %v804 = vld [vmem:[%s791 + $0x60] sm:$0xff]
      %v805 = vld [vmem:[%s791 + $0x68] sm:$0xff]
      %v806 = vld [vmem:[%s791 + $0x70] sm:$0xff]
      %v807 = vld [vmem:[%s791 + $0x78] sm:$0xff]
      %s808 = scalar_lea.vmem %s648, 4
      %v809 = vld [vmem:[%s808] sm:$0x1]
      %v811 = vperm.slane %v809, 0
      %813 = vmatpush.msra.mxu0 %v807
      %814 = vmatpush.msra.mxu0 %v806
      %815 = vmatpush.msra.mxu0 %v805
      %816 = vmatpush.msra.mxu0 %v804
      %817 = vmatpush.msra.mxu0 %v803
      %818 = vmatpush.msra.mxu0 %v802
      %819 = vmatpush.msra.mxu0 %v801
      %820 = vmatpush.msra.mxu0 %v800
      %821 = vmatpush.msra.mxu0 %v799
      %822 = vmatpush.msra.mxu0 %v798
      %823 = vmatpush.msra.mxu0 %v797
      %824 = vmatpush.msra.mxu0 %v796
      %825 = vmatpush.msra.mxu0 %v795
      %826 = vmatpush.msra.mxu0 %v794
      %827 = vmatpush.msra.mxu0 %v793
      %828 = vmatpush.msra.mxu0 %v792
      %829 = vmatmul.f32.gmra.mxu0 %v746
      %v830 = vpop.f32.mrf.mxu0
      %v831 = vadd.f32 %v811, %v830
      %832 = vmatmul.f32.gmra.mxu0 %v747
      %v833 = vpop.f32.mrf.mxu0
      %v834 = vadd.f32 %v811, %v833
      %835 = vdwg.mxu0
      %s836 = scalar_lea.vmem %s644, 1024
      %v837 = vld [vmem:[%s836] sm:$0xff]
      %v838 = vld [vmem:[%s836 + $0x8] sm:$0xff]
      %v839 = vld [vmem:[%s836 + $0x10] sm:$0xff]
      %v840 = vld [vmem:[%s836 + $0x18] sm:$0xff]
      %v841 = vld [vmem:[%s836 + $0x20] sm:$0xff]
      %v842 = vld [vmem:[%s836 + $0x28] sm:$0xff]
      %v843 = vld [vmem:[%s836 + $0x30] sm:$0xff]
      %v844 = vld [vmem:[%s836 + $0x38] sm:$0xff]
      %v845 = vld [vmem:[%s836 + $0x40] sm:$0xff]
      %v846 = vld [vmem:[%s836 + $0x48] sm:$0xff]
      %v847 = vld [vmem:[%s836 + $0x50] sm:$0xff]
      %v848 = vld [vmem:[%s836 + $0x58] sm:$0xff]
      %v849 = vld [vmem:[%s836 + $0x60] sm:$0xff]
      %v850 = vld [vmem:[%s836 + $0x68] sm:$0xff]
      %v851 = vld [vmem:[%s836 + $0x70] sm:$0xff]
      %v852 = vld [vmem:[%s836 + $0x78] sm:$0xff]
      %s853 = scalar_lea.vmem %s648, 8
      %v854 = vld [vmem:[%s853] sm:$0x1]
      %v856 = vperm.slane %v854, 0
      %858 = vmatpush.msra.mxu0 %v852
      %859 = vmatpush.msra.mxu0 %v851
      %860 = vmatpush.msra.mxu0 %v850
      %861 = vmatpush.msra.mxu0 %v849
      %862 = vmatpush.msra.mxu0 %v848
      %863 = vmatpush.msra.mxu0 %v847
      %864 = vmatpush.msra.mxu0 %v846
      %865 = vmatpush.msra.mxu0 %v845
      %866 = vmatpush.msra.mxu0 %v844
      %867 = vmatpush.msra.mxu0 %v843
      %868 = vmatpush.msra.mxu0 %v842
      %869 = vmatpush.msra.mxu0 %v841
      %870 = vmatpush.msra.mxu0 %v840
      %871 = vmatpush.msra.mxu0 %v839
      %872 = vmatpush.msra.mxu0 %v838
      %873 = vmatpush.msra.mxu0 %v837
      %874 = vmatmul.f32.gmra.mxu0 %v746
      %v875 = vpop.f32.mrf.mxu0
      %v876 = vadd.f32 %v856, %v875
      %877 = vmatmul.f32.gmra.mxu0 %v747
      %v878 = vpop.f32.mrf.mxu0
      %v879 = vadd.f32 %v856, %v878
      %880 = vdwg.mxu0
      %v881 = vmul.f32 %v786, 0.28867513
      %v882 = vmul.f32 %v789, 0.28867513
      %v884 = vperm.slane %v693, 0
      %vm886 = vcmask 261120
      %v888 = vsel %vm886, %v881, 0
      %v891 = vsel %vm886, %v882, 0
      %v894 = vsel %vm886, %v831, 0
      %v897 = vsel %vm886, %v834, 0
      %899 = vmatpush.xpose.msra.mxu0 0.0
      %900 = vmatpush.xpose.msra.mxu0 0.0
      %901 = vmatpush.xpose.msra.mxu0 0.0
      %902 = vmatpush.xpose.msra.mxu0 0.0
      %903 = vmatpush.xpose.msra.mxu0 0.0
      %904 = vmatpush.xpose.msra.mxu0 0.0
      %905 = vmatpush.xpose.msra.mxu0 0.0
      %906 = vmatpush.xpose.msra.mxu0 0.0
      %907 = vmatpush.xpose.msra.mxu0 0.0
      %908 = vmatpush.xpose.msra.mxu0 0.0
      %909 = vmatpush.xpose.msra.mxu0 0.0
      %910 = vmatpush.xpose.msra.mxu0 0.0
      %911 = vmatpush.xpose.msra.mxu0 0.0
      %912 = vmatpush.xpose.msra.mxu0 0.0
      %913 = vmatpush.xpose.msra.mxu0 %v897
      %914 = vmatpush.xpose.msra.mxu0 %v894
      %915 = vmatmul.f32.gmra.mxu0 %v888
      %v916 = vpop.f32.mrf.mxu0
      %v917 = vadd.f32 %v884, %v916
      %918 = vmatmul.f32.gmra.mxu0 %v891
      %v919 = vpop.f32.mrf.mxu0
      %v920 = vadd.f32 %v884, %v919
      %921 = vdwg.mxu0
      %vm922 = vcmask 130048
      %v923 = vsel %vm922, %v917, -inf
      %924 = vmax.xlane.f32.xlu0 %v923
      %v925 = vpop.xlane.xlu0 %924
      %v926 = vsel %vm922, %v920, -inf
      %927 = vmax.xlane.f32.xlu0 %v926
      %v928 = vpop.xlane.xlu0 %927
      %v929 = vsub.f32 %v917, %v925
      %v930 = vsub.f32 %v920, %v928
      %v931 = vmul.f32 %v929, 1.442695
      %v932 = vpow.pop %v931
      %v933 = vmul.f32 %v930, 1.442695
      %v934 = vpow.pop %v933
      %v935 = vsel %vm922, %v932, 0.0
      %936 = vadd.xlane.f32.xlu0 %v935
      %v937 = vpop.xlane.xlu0 %936
      %v938 = vsel %vm922, %v934, 0.0
      %939 = vadd.xlane.f32.xlu0 %v938
      %v940 = vpop.xlane.xlu0 %939
      %v941 = vrcp.pop %v937
      %v942 = vrcp.pop %v940
      %v943 = vmul.f32 %v932, %v941
      %v944 = vmul.f32 %v934, %v942
      %v946 = vsel %vm922, %v943, 0
      %v949 = vsel %vm922, %v944, 0
      %951 = vmatpush.msra.mxu0 0.0
      %952 = vmatpush.msra.mxu0 0.0
      %953 = vmatpush.msra.mxu0 0.0
      %954 = vmatpush.msra.mxu0 0.0
      %955 = vmatpush.msra.mxu0 0.0
      %956 = vmatpush.msra.mxu0 0.0
      %957 = vmatpush.msra.mxu0 0.0
      %958 = vmatpush.msra.mxu0 0.0
      %959 = vmatpush.msra.mxu0 0.0
      %960 = vmatpush.msra.mxu0 0.0
      %961 = vmatpush.msra.mxu0 0.0
      %962 = vmatpush.msra.mxu0 0.0
      %963 = vmatpush.msra.mxu0 0.0
      %964 = vmatpush.msra.mxu0 0.0
      %965 = vmatpush.msra.mxu0 %v879
      %966 = vmatpush.msra.mxu0 %v876
      %967 = vmatmul.f32.gmra.mxu0 %v946
      %v968 = vpop.f32.mrf.mxu0
      %v969 = vadd.f32 0.0, %v968
      %970 = vmatmul.f32.gmra.mxu0 %v949
      %v971 = vpop.f32.mrf.mxu0
      %v972 = vadd.f32 0.0, %v971
      %973 = vdwg.mxu0
      %v974 = vld [vmem:[%s653] sm:$0xff]
      %v975 = vld [vmem:[%s653 + $0x8] sm:$0xff]
      %v976 = vld [vmem:[%s653 + $0x10] sm:$0xff]
      %v977 = vld [vmem:[%s653 + $0x18] sm:$0xff]
      %s978 = scalar_lea.vmem %s644, 128
      %v979 = vld [vmem:[%s978] sm:$0xff]
      %v980 = vld [vmem:[%s978 + $0x8] sm:$0xff]
      %v981 = vld [vmem:[%s978 + $0x10] sm:$0xff]
      %v982 = vld [vmem:[%s978 + $0x18] sm:$0xff]
      %v983 = vld [vmem:[%s978 + $0x20] sm:$0xff]
      %v984 = vld [vmem:[%s978 + $0x28] sm:$0xff]
      %v985 = vld [vmem:[%s978 + $0x30] sm:$0xff]
      %v986 = vld [vmem:[%s978 + $0x38] sm:$0xff]
      %v987 = vld [vmem:[%s978 + $0x40] sm:$0xff]
      %v988 = vld [vmem:[%s978 + $0x48] sm:$0xff]
      %v989 = vld [vmem:[%s978 + $0x50] sm:$0xff]
      %v990 = vld [vmem:[%s978 + $0x58] sm:$0xff]
      %v991 = vld [vmem:[%s978 + $0x60] sm:$0xff]
      %v992 = vld [vmem:[%s978 + $0x68] sm:$0xff]
      %v993 = vld [vmem:[%s978 + $0x70] sm:$0xff]
      %v994 = vld [vmem:[%s978 + $0x78] sm:$0xff]
      %s995 = scalar_lea.vmem %s648, 1
      %v996 = vld [vmem:[%s995] sm:$0x1]
      %v998 = vperm.slane %v996, 0
      %1000 = vmatpush.msra.mxu0 %v994
      %1001 = vmatpush.msra.mxu0 %v993
      %1002 = vmatpush.msra.mxu0 %v992
      %1003 = vmatpush.msra.mxu0 %v991
      %1004 = vmatpush.msra.mxu0 %v990
      %1005 = vmatpush.msra.mxu0 %v989
      %1006 = vmatpush.msra.mxu0 %v988
      %1007 = vmatpush.msra.mxu0 %v987
      %1008 = vmatpush.msra.mxu0 %v986
      %1009 = vmatpush.msra.mxu0 %v985
      %1010 = vmatpush.msra.mxu0 %v984
      %1011 = vmatpush.msra.mxu0 %v983
      %1012 = vmatpush.msra.mxu0 %v982
      %1013 = vmatpush.msra.mxu0 %v981
      %1014 = vmatpush.msra.mxu0 %v980
      %1015 = vmatpush.msra.mxu0 %v979
      %1016 = vmatmul.f32.gmra.mxu0 %v746
      %v1017 = vpop.f32.mrf.mxu0
      %v1018 = vadd.f32 %v998, %v1017
      %1019 = vmatmul.f32.gmra.mxu0 %v747
      %v1020 = vpop.f32.mrf.mxu0
      %v1021 = vadd.f32 %v998, %v1020
      %1022 = vdwg.mxu0
      %s1023 = scalar_lea.vmem %s644, 640
      %v1024 = vld [vmem:[%s1023] sm:$0xff]
      %v1025 = vld [vmem:[%s1023 + $0x8] sm:$0xff]
      %v1026 = vld [vmem:[%s1023 + $0x10] sm:$0xff]
      %v1027 = vld [vmem:[%s1023 + $0x18] sm:$0xff]
      %v1028 = vld [vmem:[%s1023 + $0x20] sm:$0xff]
      %v1029 = vld [vmem:[%s1023 + $0x28] sm:$0xff]
      %v1030 = vld [vmem:[%s1023 + $0x30] sm:$0xff]
      %v1031 = vld [vmem:[%s1023 + $0x38] sm:$0xff]
      %v1032 = vld [vmem:[%s1023 + $0x40] sm:$0xff]
      %v1033 = vld [vmem:[%s1023 + $0x48] sm:$0xff]
      %v1034 = vld [vmem:[%s1023 + $0x50] sm:$0xff]
      %v1035 = vld [vmem:[%s1023 + $0x58] sm:$0xff]
      %v1036 = vld [vmem:[%s1023 + $0x60] sm:$0xff]
      %v1037 = vld [vmem:[%s1023 + $0x68] sm:$0xff]
      %v1038 = vld [vmem:[%s1023 + $0x70] sm:$0xff]
      %v1039 = vld [vmem:[%s1023 + $0x78] sm:$0xff]
      %s1040 = scalar_lea.vmem %s648, 5
      %v1041 = vld [vmem:[%s1040] sm:$0x1]
      %v1043 = vperm.slane %v1041, 0
      %1045 = vmatpush.msra.mxu0 %v1039
      %1046 = vmatpush.msra.mxu0 %v1038
      %1047 = vmatpush.msra.mxu0 %v1037
      %1048 = vmatpush.msra.mxu0 %v1036
      %1049 = vmatpush.msra.mxu0 %v1035
      %1050 = vmatpush.msra.mxu0 %v1034
      %1051 = vmatpush.msra.mxu0 %v1033
      %1052 = vmatpush.msra.mxu0 %v1032
      %1053 = vmatpush.msra.mxu0 %v1031
      %1054 = vmatpush.msra.mxu0 %v1030
      %1055 = vmatpush.msra.mxu0 %v1029
      %1056 = vmatpush.msra.mxu0 %v1028
      %1057 = vmatpush.msra.mxu0 %v1027
      %1058 = vmatpush.msra.mxu0 %v1026
      %1059 = vmatpush.msra.mxu0 %v1025
      %1060 = vmatpush.msra.mxu0 %v1024
      %1061 = vmatmul.f32.gmra.mxu0 %v746
      %v1062 = vpop.f32.mrf.mxu0
      %v1063 = vadd.f32 %v1043, %v1062
      %1064 = vmatmul.f32.gmra.mxu0 %v747
      %v1065 = vpop.f32.mrf.mxu0
      %v1066 = vadd.f32 %v1043, %v1065
      %1067 = vdwg.mxu0
      %s1068 = scalar_lea.vmem %s644, 1152
      %v1069 = vld [vmem:[%s1068] sm:$0xff]
      %v1070 = vld [vmem:[%s1068 + $0x8] sm:$0xff]
      %v1071 = vld [vmem:[%s1068 + $0x10] sm:$0xff]
      %v1072 = vld [vmem:[%s1068 + $0x18] sm:$0xff]
      %v1073 = vld [vmem:[%s1068 + $0x20] sm:$0xff]
      %v1074 = vld [vmem:[%s1068 + $0x28] sm:$0xff]
      %v1075 = vld [vmem:[%s1068 + $0x30] sm:$0xff]
      %v1076 = vld [vmem:[%s1068 + $0x38] sm:$0xff]
      %v1077 = vld [vmem:[%s1068 + $0x40] sm:$0xff]
      %v1078 = vld [vmem:[%s1068 + $0x48] sm:$0xff]
      %v1079 = vld [vmem:[%s1068 + $0x50] sm:$0xff]
      %v1080 = vld [vmem:[%s1068 + $0x58] sm:$0xff]
      %v1081 = vld [vmem:[%s1068 + $0x60] sm:$0xff]
      %v1082 = vld [vmem:[%s1068 + $0x68] sm:$0xff]
      %v1083 = vld [vmem:[%s1068 + $0x70] sm:$0xff]
      %v1084 = vld [vmem:[%s1068 + $0x78] sm:$0xff]
      %s1085 = scalar_lea.vmem %s648, 9
      %v1086 = vld [vmem:[%s1085] sm:$0x1]
      %v1088 = vperm.slane %v1086, 0
      %1090 = vmatpush.msra.mxu0 %v1084
      %1091 = vmatpush.msra.mxu0 %v1083
      %1092 = vmatpush.msra.mxu0 %v1082
      %1093 = vmatpush.msra.mxu0 %v1081
      %1094 = vmatpush.msra.mxu0 %v1080
      %1095 = vmatpush.msra.mxu0 %v1079
      %1096 = vmatpush.msra.mxu0 %v1078
      %1097 = vmatpush.msra.mxu0 %v1077
      %1098 = vmatpush.msra.mxu0 %v1076
      %1099 = vmatpush.msra.mxu0 %v1075
      %1100 = vmatpush.msra.mxu0 %v1074
      %1101 = vmatpush.msra.mxu0 %v1073
      %1102 = vmatpush.msra.mxu0 %v1072
      %1103 = vmatpush.msra.mxu0 %v1071
      %1104 = vmatpush.msra.mxu0 %v1070
      %1105 = vmatpush.msra.mxu0 %v1069
      %1106 = vmatmul.f32.gmra.mxu0 %v746
      %v1107 = vpop.f32.mrf.mxu0
      %v1108 = vadd.f32 %v1088, %v1107
      %1109 = vmatmul.f32.gmra.mxu0 %v747
      %v1110 = vpop.f32.mrf.mxu0
      %v1111 = vadd.f32 %v1088, %v1110
      %1112 = vdwg.mxu0
      %v1113 = vmul.f32 %v1018, 0.28867513
      %v1114 = vmul.f32 %v1021, 0.28867513
      %v1116 = vsel %vm886, %v1113, 0
      %v1119 = vsel %vm886, %v1114, 0
      %v1122 = vsel %vm886, %v1063, 0
      %v1125 = vsel %vm886, %v1066, 0
      %1127 = vmatpush.xpose.msra.mxu0 0.0
      %1128 = vmatpush.xpose.msra.mxu0 0.0
      %1129 = vmatpush.xpose.msra.mxu0 0.0
      %1130 = vmatpush.xpose.msra.mxu0 0.0
      %1131 = vmatpush.xpose.msra.mxu0 0.0
      %1132 = vmatpush.xpose.msra.mxu0 0.0
      %1133 = vmatpush.xpose.msra.mxu0 0.0
      %1134 = vmatpush.xpose.msra.mxu0 0.0
      %1135 = vmatpush.xpose.msra.mxu0 0.0
      %1136 = vmatpush.xpose.msra.mxu0 0.0
      %1137 = vmatpush.xpose.msra.mxu0 0.0
      %1138 = vmatpush.xpose.msra.mxu0 0.0
      %1139 = vmatpush.xpose.msra.mxu0 0.0
      %1140 = vmatpush.xpose.msra.mxu0 0.0
      %1141 = vmatpush.xpose.msra.mxu0 %v1125
      %1142 = vmatpush.xpose.msra.mxu0 %v1122
      %1143 = vmatmul.f32.gmra.mxu0 %v1116
      %v1144 = vpop.f32.mrf.mxu0
      %v1145 = vadd.f32 %v884, %v1144
      %1146 = vmatmul.f32.gmra.mxu0 %v1119
      %v1147 = vpop.f32.mrf.mxu0
      %v1148 = vadd.f32 %v884, %v1147
      %1149 = vdwg.mxu0
      %v1150 = vsel %vm922, %v1145, -inf
      %1151 = vmax.xlane.f32.xlu0 %v1150
      %v1152 = vpop.xlane.xlu0 %1151
      %v1153 = vsel %vm922, %v1148, -inf
      %1154 = vmax.xlane.f32.xlu0 %v1153
      %v1155 = vpop.xlane.xlu0 %1154
      %v1156 = vsub.f32 %v1145, %v1152
      %v1157 = vsub.f32 %v1148, %v1155
      %v1158 = vmul.f32 %v1156, 1.442695
      %v1159 = vpow.pop %v1158
      %v1160 = vmul.f32 %v1157, 1.442695
      %v1161 = vpow.pop %v1160
      %v1162 = vsel %vm922, %v1159, 0.0
      %1163 = vadd.xlane.f32.xlu0 %v1162
      %v1164 = vpop.xlane.xlu0 %1163
      %v1165 = vsel %vm922, %v1161, 0.0
      %1166 = vadd.xlane.f32.xlu0 %v1165
      %v1167 = vpop.xlane.xlu0 %1166
      %v1168 = vrcp.pop %v1164
      %v1169 = vrcp.pop %v1167
      %v1170 = vmul.f32 %v1159, %v1168
      %v1171 = vmul.f32 %v1161, %v1169
      %v1173 = vsel %vm922, %v1170, 0
      %v1176 = vsel %vm922, %v1171, 0
      %1178 = vmatpush.msra.mxu0 0.0
      %1179 = vmatpush.msra.mxu0 0.0
      %1180 = vmatpush.msra.mxu0 0.0
      %1181 = vmatpush.msra.mxu0 0.0
      %1182 = vmatpush.msra.mxu0 0.0
      %1183 = vmatpush.msra.mxu0 0.0
      %1184 = vmatpush.msra.mxu0 0.0
      %1185 = vmatpush.msra.mxu0 0.0
      %1186 = vmatpush.msra.mxu0 0.0
      %1187 = vmatpush.msra.mxu0 0.0
      %1188 = vmatpush.msra.mxu0 0.0
      %1189 = vmatpush.msra.mxu0 0.0
      %1190 = vmatpush.msra.mxu0 0.0
      %1191 = vmatpush.msra.mxu0 0.0
      %1192 = vmatpush.msra.mxu0 %v1111
      %1193 = vmatpush.msra.mxu0 %v1108
      %1194 = vmatmul.f32.gmra.mxu0 %v1173
      %v1195 = vpop.f32.mrf.mxu0
      %v1196 = vadd.f32 0.0, %v1195
      %1197 = vmatmul.f32.gmra.mxu0 %v1176
      %v1198 = vpop.f32.mrf.mxu0
      %v1199 = vadd.f32 0.0, %v1198
      %1200 = vdwg.mxu0
      %s1201 = scalar_lea.vmem %s653, 32
      %v1202 = vld [vmem:[%s1201] sm:$0xff]
      %v1203 = vld [vmem:[%s1201 + $0x8] sm:$0xff]
      %v1204 = vld [vmem:[%s1201 + $0x10] sm:$0xff]
      %v1205 = vld [vmem:[%s1201 + $0x18] sm:$0xff]
      %v1207 = vsel %vm886, %v1196, 0
      %v1210 = vsel %vm886, %v1199, 0
      %1212 = vmatpush.msra.mxu0 0.0
      %1213 = vmatpush.msra.mxu0 0.0
      %1214 = vmatpush.msra.mxu0 0.0
      %1215 = vmatpush.msra.mxu0 0.0
      %1216 = vmatpush.msra.mxu0 0.0
      %1217 = vmatpush.msra.mxu0 0.0
      %1218 = vmatpush.msra.mxu0 0.0
      %1219 = vmatpush.msra.mxu0 0.0
      %1220 = vmatpush.msra.mxu0 0.0
      %1221 = vmatpush.msra.mxu0 0.0
      %1222 = vmatpush.msra.mxu0 0.0
      %1223 = vmatpush.msra.mxu0 0.0
      %1224 = vmatpush.msra.mxu0 %v1205
      %1225 = vmatpush.msra.mxu0 %v1204
      %1226 = vmatpush.msra.mxu0 %v1203
      %1227 = vmatpush.msra.mxu0 %v1202
      %1228 = vmatmul.f32.gmra.mxu0 %v1207
      %v1229 = vpop.f32.mrf.mxu0
      %v1230 = vadd.f32 0.0, %v1229
      %1231 = vmatmul.f32.gmra.mxu0 %v1210
      %v1232 = vpop.f32.mrf.mxu0
      %v1233 = vadd.f32 0.0, %v1232
      %1234 = vdwg.mxu0
      %v1236 = vsel %vm886, %v969, 0
      %v1239 = vsel %vm886, %v972, 0
      %1241 = vmatpush.msra.mxu0 0.0
      %1242 = vmatpush.msra.mxu0 0.0
      %1243 = vmatpush.msra.mxu0 0.0
      %1244 = vmatpush.msra.mxu0 0.0
      %1245 = vmatpush.msra.mxu0 0.0
      %1246 = vmatpush.msra.mxu0 0.0
      %1247 = vmatpush.msra.mxu0 0.0
      %1248 = vmatpush.msra.mxu0 0.0
      %1249 = vmatpush.msra.mxu0 0.0
      %1250 = vmatpush.msra.mxu0 0.0
      %1251 = vmatpush.msra.mxu0 0.0
      %1252 = vmatpush.msra.mxu0 0.0
      %1253 = vmatpush.msra.mxu0 %v977
      %1254 = vmatpush.msra.mxu0 %v976
      %1255 = vmatpush.msra.mxu0 %v975
      %1256 = vmatpush.msra.mxu0 %v974
      %1257 = vmatmul.f32.gmra.mxu0 %v1236
      %v1258 = vpop.f32.mrf.mxu0
      %v1259 = vadd.f32 %v1230, %v1258
      %1260 = vmatmul.f32.gmra.mxu0 %v1239
      %v1261 = vpop.f32.mrf.mxu0
      %v1262 = vadd.f32 %v1233, %v1261
      %1263 = vdwg.mxu0
      %s1264 = scalar_lea.vmem %s644, 256
      %v1265 = vld [vmem:[%s1264] sm:$0xff]
      %v1266 = vld [vmem:[%s1264 + $0x8] sm:$0xff]
      %v1267 = vld [vmem:[%s1264 + $0x10] sm:$0xff]
      %v1268 = vld [vmem:[%s1264 + $0x18] sm:$0xff]
      %v1269 = vld [vmem:[%s1264 + $0x20] sm:$0xff]
      %v1270 = vld [vmem:[%s1264 + $0x28] sm:$0xff]
      %v1271 = vld [vmem:[%s1264 + $0x30] sm:$0xff]
      %v1272 = vld [vmem:[%s1264 + $0x38] sm:$0xff]
      %v1273 = vld [vmem:[%s1264 + $0x40] sm:$0xff]
      %v1274 = vld [vmem:[%s1264 + $0x48] sm:$0xff]
      %v1275 = vld [vmem:[%s1264 + $0x50] sm:$0xff]
      %v1276 = vld [vmem:[%s1264 + $0x58] sm:$0xff]
      %v1277 = vld [vmem:[%s1264 + $0x60] sm:$0xff]
      %v1278 = vld [vmem:[%s1264 + $0x68] sm:$0xff]
      %v1279 = vld [vmem:[%s1264 + $0x70] sm:$0xff]
      %v1280 = vld [vmem:[%s1264 + $0x78] sm:$0xff]
      %s1281 = scalar_lea.vmem %s648, 2
      %v1282 = vld [vmem:[%s1281] sm:$0x1]
      %v1284 = vperm.slane %v1282, 0
      %1286 = vmatpush.msra.mxu0 %v1280
      %1287 = vmatpush.msra.mxu0 %v1279
      %1288 = vmatpush.msra.mxu0 %v1278
      %1289 = vmatpush.msra.mxu0 %v1277
      %1290 = vmatpush.msra.mxu0 %v1276
      %1291 = vmatpush.msra.mxu0 %v1275
      %1292 = vmatpush.msra.mxu0 %v1274
      %1293 = vmatpush.msra.mxu0 %v1273
      %1294 = vmatpush.msra.mxu0 %v1272
      %1295 = vmatpush.msra.mxu0 %v1271
      %1296 = vmatpush.msra.mxu0 %v1270
      %1297 = vmatpush.msra.mxu0 %v1269
      %1298 = vmatpush.msra.mxu0 %v1268
      %1299 = vmatpush.msra.mxu0 %v1267
      %1300 = vmatpush.msra.mxu0 %v1266
      %1301 = vmatpush.msra.mxu0 %v1265
      %1302 = vmatmul.f32.gmra.mxu0 %v746
      %v1303 = vpop.f32.mrf.mxu0
      %v1304 = vadd.f32 %v1284, %v1303
      %1305 = vmatmul.f32.gmra.mxu0 %v747
      %v1306 = vpop.f32.mrf.mxu0
      %v1307 = vadd.f32 %v1284, %v1306
      %1308 = vdwg.mxu0
      %s1309 = scalar_lea.vmem %s644, 768
      %v1310 = vld [vmem:[%s1309] sm:$0xff]
      %v1311 = vld [vmem:[%s1309 + $0x8] sm:$0xff]
      %v1312 = vld [vmem:[%s1309 + $0x10] sm:$0xff]
      %v1313 = vld [vmem:[%s1309 + $0x18] sm:$0xff]
      %v1314 = vld [vmem:[%s1309 + $0x20] sm:$0xff]
      %v1315 = vld [vmem:[%s1309 + $0x28] sm:$0xff]
      %v1316 = vld [vmem:[%s1309 + $0x30] sm:$0xff]
      %v1317 = vld [vmem:[%s1309 + $0x38] sm:$0xff]
      %v1318 = vld [vmem:[%s1309 + $0x40] sm:$0xff]
      %v1319 = vld [vmem:[%s1309 + $0x48] sm:$0xff]
      %v1320 = vld [vmem:[%s1309 + $0x50] sm:$0xff]
      %v1321 = vld [vmem:[%s1309 + $0x58] sm:$0xff]
      %v1322 = vld [vmem:[%s1309 + $0x60] sm:$0xff]
      %v1323 = vld [vmem:[%s1309 + $0x68] sm:$0xff]
      %v1324 = vld [vmem:[%s1309 + $0x70] sm:$0xff]
      %v1325 = vld [vmem:[%s1309 + $0x78] sm:$0xff]
      %s1326 = scalar_lea.vmem %s648, 6
      %v1327 = vld [vmem:[%s1326] sm:$0x1]
      %v1329 = vperm.slane %v1327, 0
      %1331 = vmatpush.msra.mxu0 %v1325
      %1332 = vmatpush.msra.mxu0 %v1324
      %1333 = vmatpush.msra.mxu0 %v1323
      %1334 = vmatpush.msra.mxu0 %v1322
      %1335 = vmatpush.msra.mxu0 %v1321
      %1336 = vmatpush.msra.mxu0 %v1320
      %1337 = vmatpush.msra.mxu0 %v1319
      %1338 = vmatpush.msra.mxu0 %v1318
      %1339 = vmatpush.msra.mxu0 %v1317
      %1340 = vmatpush.msra.mxu0 %v1316
      %1341 = vmatpush.msra.mxu0 %v1315
      %1342 = vmatpush.msra.mxu0 %v1314
      %1343 = vmatpush.msra.mxu0 %v1313
      %1344 = vmatpush.msra.mxu0 %v1312
      %1345 = vmatpush.msra.mxu0 %v1311
      %1346 = vmatpush.msra.mxu0 %v1310
      %1347 = vmatmul.f32.gmra.mxu0 %v746
      %v1348 = vpop.f32.mrf.mxu0
      %v1349 = vadd.f32 %v1329, %v1348
      %1350 = vmatmul.f32.gmra.mxu0 %v747
      %v1351 = vpop.f32.mrf.mxu0
      %v1352 = vadd.f32 %v1329, %v1351
      %1353 = vdwg.mxu0
      %s1354 = scalar_lea.vmem %s644, 1280
      %v1355 = vld [vmem:[%s1354] sm:$0xff]
      %v1356 = vld [vmem:[%s1354 + $0x8] sm:$0xff]
      %v1357 = vld [vmem:[%s1354 + $0x10] sm:$0xff]
      %v1358 = vld [vmem:[%s1354 + $0x18] sm:$0xff]
      %v1359 = vld [vmem:[%s1354 + $0x20] sm:$0xff]
      %v1360 = vld [vmem:[%s1354 + $0x28] sm:$0xff]
      %v1361 = vld [vmem:[%s1354 + $0x30] sm:$0xff]
      %v1362 = vld [vmem:[%s1354 + $0x38] sm:$0xff]
      %v1363 = vld [vmem:[%s1354 + $0x40] sm:$0xff]
      %v1364 = vld [vmem:[%s1354 + $0x48] sm:$0xff]
      %v1365 = vld [vmem:[%s1354 + $0x50] sm:$0xff]
      %v1366 = vld [vmem:[%s1354 + $0x58] sm:$0xff]
      %v1367 = vld [vmem:[%s1354 + $0x60] sm:$0xff]
      %v1368 = vld [vmem:[%s1354 + $0x68] sm:$0xff]
      %v1369 = vld [vmem:[%s1354 + $0x70] sm:$0xff]
      %v1370 = vld [vmem:[%s1354 + $0x78] sm:$0xff]
      %s1371 = scalar_lea.vmem %s648, 10
      %v1372 = vld [vmem:[%s1371] sm:$0x1]
      %v1374 = vperm.slane %v1372, 0
      %1376 = vmatpush.msra.mxu0 %v1370
      %1377 = vmatpush.msra.mxu0 %v1369
      %1378 = vmatpush.msra.mxu0 %v1368
      %1379 = vmatpush.msra.mxu0 %v1367
      %1380 = vmatpush.msra.mxu0 %v1366
      %1381 = vmatpush.msra.mxu0 %v1365
      %1382 = vmatpush.msra.mxu0 %v1364
      %1383 = vmatpush.msra.mxu0 %v1363
      %1384 = vmatpush.msra.mxu0 %v1362
      %1385 = vmatpush.msra.mxu0 %v1361
      %1386 = vmatpush.msra.mxu0 %v1360
      %1387 = vmatpush.msra.mxu0 %v1359
      %1388 = vmatpush.msra.mxu0 %v1358
      %1389 = vmatpush.msra.mxu0 %v1357
      %1390 = vmatpush.msra.mxu0 %v1356
      %1391 = vmatpush.msra.mxu0 %v1355
      %1392 = vmatmul.f32.gmra.mxu0 %v746
      %v1393 = vpop.f32.mrf.mxu0
      %v1394 = vadd.f32 %v1374, %v1393
      %1395 = vmatmul.f32.gmra.mxu0 %v747
      %v1396 = vpop.f32.mrf.mxu0
      %v1397 = vadd.f32 %v1374, %v1396
      %1398 = vdwg.mxu0
      %v1399 = vmul.f32 %v1304, 0.28867513
      %v1400 = vmul.f32 %v1307, 0.28867513
      %v1402 = vsel %vm886, %v1399, 0
      %v1405 = vsel %vm886, %v1400, 0
      %v1408 = vsel %vm886, %v1349, 0
      %v1411 = vsel %vm886, %v1352, 0
      %1413 = vmatpush.xpose.msra.mxu0 0.0
      %1414 = vmatpush.xpose.msra.mxu0 0.0
      %1415 = vmatpush.xpose.msra.mxu0 0.0
      %1416 = vmatpush.xpose.msra.mxu0 0.0
      %1417 = vmatpush.xpose.msra.mxu0 0.0
      %1418 = vmatpush.xpose.msra.mxu0 0.0
      %1419 = vmatpush.xpose.msra.mxu0 0.0
      %1420 = vmatpush.xpose.msra.mxu0 0.0
      %1421 = vmatpush.xpose.msra.mxu0 0.0
      %1422 = vmatpush.xpose.msra.mxu0 0.0
      %1423 = vmatpush.xpose.msra.mxu0 0.0
      %1424 = vmatpush.xpose.msra.mxu0 0.0
      %1425 = vmatpush.xpose.msra.mxu0 0.0
      %1426 = vmatpush.xpose.msra.mxu0 0.0
      %1427 = vmatpush.xpose.msra.mxu0 %v1411
      %1428 = vmatpush.xpose.msra.mxu0 %v1408
      %1429 = vmatmul.f32.gmra.mxu0 %v1402
      %v1430 = vpop.f32.mrf.mxu0
      %v1431 = vadd.f32 %v884, %v1430
      %1432 = vmatmul.f32.gmra.mxu0 %v1405
      %v1433 = vpop.f32.mrf.mxu0
      %v1434 = vadd.f32 %v884, %v1433
      %1435 = vdwg.mxu0
      %v1436 = vsel %vm922, %v1431, -inf
      %1437 = vmax.xlane.f32.xlu0 %v1436
      %v1438 = vpop.xlane.xlu0 %1437
      %v1439 = vsel %vm922, %v1434, -inf
      %1440 = vmax.xlane.f32.xlu0 %v1439
      %v1441 = vpop.xlane.xlu0 %1440
      %v1442 = vsub.f32 %v1431, %v1438
      %v1443 = vsub.f32 %v1434, %v1441
      %v1444 = vmul.f32 %v1442, 1.442695
      %v1445 = vpow.pop %v1444
      %v1446 = vmul.f32 %v1443, 1.442695
      %v1447 = vpow.pop %v1446
      %v1448 = vsel %vm922, %v1445, 0.0
      %1449 = vadd.xlane.f32.xlu0 %v1448
      %v1450 = vpop.xlane.xlu0 %1449
      %v1451 = vsel %vm922, %v1447, 0.0
      %1452 = vadd.xlane.f32.xlu0 %v1451
      %v1453 = vpop.xlane.xlu0 %1452
      %v1454 = vrcp.pop %v1450
      %v1455 = vrcp.pop %v1453
      %v1456 = vmul.f32 %v1445, %v1454
      %v1457 = vmul.f32 %v1447, %v1455
      %v1459 = vsel %vm922, %v1456, 0
      %v1462 = vsel %vm922, %v1457, 0
      %1464 = vmatpush.msra.mxu0 0.0
      %1465 = vmatpush.msra.mxu0 0.0
      %1466 = vmatpush.msra.mxu0 0.0
      %1467 = vmatpush.msra.mxu0 0.0
      %1468 = vmatpush.msra.mxu0 0.0
      %1469 = vmatpush.msra.mxu0 0.0
      %1470 = vmatpush.msra.mxu0 0.0
      %1471 = vmatpush.msra.mxu0 0.0
      %1472 = vmatpush.msra.mxu0 0.0
      %1473 = vmatpush.msra.mxu0 0.0
      %1474 = vmatpush.msra.mxu0 0.0
      %1475 = vmatpush.msra.mxu0 0.0
      %1476 = vmatpush.msra.mxu0 0.0
      %1477 = vmatpush.msra.mxu0 0.0
      %1478 = vmatpush.msra.mxu0 %v1397
      %1479 = vmatpush.msra.mxu0 %v1394
      %1480 = vmatmul.f32.gmra.mxu0 %v1459
      %v1481 = vpop.f32.mrf.mxu0
      %v1482 = vadd.f32 0.0, %v1481
      %1483 = vmatmul.f32.gmra.mxu0 %v1462
      %v1484 = vpop.f32.mrf.mxu0
      %v1485 = vadd.f32 0.0, %v1484
      %1486 = vdwg.mxu0
      %s1487 = scalar_lea.vmem %s653, 64
      %v1488 = vld [vmem:[%s1487] sm:$0xff]
      %v1489 = vld [vmem:[%s1487 + $0x8] sm:$0xff]
      %v1490 = vld [vmem:[%s1487 + $0x10] sm:$0xff]
      %v1491 = vld [vmem:[%s1487 + $0x18] sm:$0xff]
      %v1493 = vsel %vm886, %v1482, 0
      %v1496 = vsel %vm886, %v1485, 0
      %1498 = vmatpush.msra.mxu0 0.0
      %1499 = vmatpush.msra.mxu0 0.0
      %1500 = vmatpush.msra.mxu0 0.0
      %1501 = vmatpush.msra.mxu0 0.0
      %1502 = vmatpush.msra.mxu0 0.0
      %1503 = vmatpush.msra.mxu0 0.0
      %1504 = vmatpush.msra.mxu0 0.0
      %1505 = vmatpush.msra.mxu0 0.0
      %1506 = vmatpush.msra.mxu0 0.0
      %1507 = vmatpush.msra.mxu0 0.0
      %1508 = vmatpush.msra.mxu0 0.0
      %1509 = vmatpush.msra.mxu0 0.0
      %1510 = vmatpush.msra.mxu0 %v1491
      %1511 = vmatpush.msra.mxu0 %v1490
      %1512 = vmatpush.msra.mxu0 %v1489
      %1513 = vmatpush.msra.mxu0 %v1488
      %1514 = vmatmul.f32.gmra.mxu0 %v1493
      %v1515 = vpop.f32.mrf.mxu0
      %v1516 = vadd.f32 0.0, %v1515
      %1517 = vmatmul.f32.gmra.mxu0 %v1496
      %v1518 = vpop.f32.mrf.mxu0
      %v1519 = vadd.f32 0.0, %v1518
      %1520 = vdwg.mxu0
      %v1521 = vadd.f32 %v1259, %v1516
      %v1522 = vadd.f32 %v1262, %v1519
      %s1523 = scalar_lea.vmem %s644, 384
      %v1524 = vld [vmem:[%s1523] sm:$0xff]
      %v1525 = vld [vmem:[%s1523 + $0x8] sm:$0xff]
      %v1526 = vld [vmem:[%s1523 + $0x10] sm:$0xff]
      %v1527 = vld [vmem:[%s1523 + $0x18] sm:$0xff]
      %v1528 = vld [vmem:[%s1523 + $0x20] sm:$0xff]
      %v1529 = vld [vmem:[%s1523 + $0x28] sm:$0xff]
      %v1530 = vld [vmem:[%s1523 + $0x30] sm:$0xff]
      %v1531 = vld [vmem:[%s1523 + $0x38] sm:$0xff]
      %v1532 = vld [vmem:[%s1523 + $0x40] sm:$0xff]
      %v1533 = vld [vmem:[%s1523 + $0x48] sm:$0xff]
      %v1534 = vld [vmem:[%s1523 + $0x50] sm:$0xff]
      %v1535 = vld [vmem:[%s1523 + $0x58] sm:$0xff]
      %v1536 = vld [vmem:[%s1523 + $0x60] sm:$0xff]
      %v1537 = vld [vmem:[%s1523 + $0x68] sm:$0xff]
      %v1538 = vld [vmem:[%s1523 + $0x70] sm:$0xff]
      %v1539 = vld [vmem:[%s1523 + $0x78] sm:$0xff]
      %s1540 = scalar_lea.vmem %s648, 3
      %v1541 = vld [vmem:[%s1540] sm:$0x1]
      %v1543 = vperm.slane %v1541, 0
      %1545 = vmatpush.msra.mxu0 %v1539
      %1546 = vmatpush.msra.mxu0 %v1538
      %1547 = vmatpush.msra.mxu0 %v1537
      %1548 = vmatpush.msra.mxu0 %v1536
      %1549 = vmatpush.msra.mxu0 %v1535
      %1550 = vmatpush.msra.mxu0 %v1534
      %1551 = vmatpush.msra.mxu0 %v1533
      %1552 = vmatpush.msra.mxu0 %v1532
      %1553 = vmatpush.msra.mxu0 %v1531
      %1554 = vmatpush.msra.mxu0 %v1530
      %1555 = vmatpush.msra.mxu0 %v1529
      %1556 = vmatpush.msra.mxu0 %v1528
      %1557 = vmatpush.msra.mxu0 %v1527
      %1558 = vmatpush.msra.mxu0 %v1526
      %1559 = vmatpush.msra.mxu0 %v1525
      %1560 = vmatpush.msra.mxu0 %v1524
      %1561 = vmatmul.f32.gmra.mxu0 %v746
      %v1562 = vpop.f32.mrf.mxu0
      %v1563 = vadd.f32 %v1543, %v1562
      %1564 = vmatmul.f32.gmra.mxu0 %v747
      %v1565 = vpop.f32.mrf.mxu0
      %v1566 = vadd.f32 %v1543, %v1565
      %1567 = vdwg.mxu0
      %s1568 = scalar_lea.vmem %s644, 896
      %v1569 = vld [vmem:[%s1568] sm:$0xff]
      %v1570 = vld [vmem:[%s1568 + $0x8] sm:$0xff]
      %v1571 = vld [vmem:[%s1568 + $0x10] sm:$0xff]
      %v1572 = vld [vmem:[%s1568 + $0x18] sm:$0xff]
      %v1573 = vld [vmem:[%s1568 + $0x20] sm:$0xff]
      %v1574 = vld [vmem:[%s1568 + $0x28] sm:$0xff]
      %v1575 = vld [vmem:[%s1568 + $0x30] sm:$0xff]
      %v1576 = vld [vmem:[%s1568 + $0x38] sm:$0xff]
      %v1577 = vld [vmem:[%s1568 + $0x40] sm:$0xff]
      %v1578 = vld [vmem:[%s1568 + $0x48] sm:$0xff]
      %v1579 = vld [vmem:[%s1568 + $0x50] sm:$0xff]
      %v1580 = vld [vmem:[%s1568 + $0x58] sm:$0xff]
      %v1581 = vld [vmem:[%s1568 + $0x60] sm:$0xff]
      %v1582 = vld [vmem:[%s1568 + $0x68] sm:$0xff]
      %v1583 = vld [vmem:[%s1568 + $0x70] sm:$0xff]
      %v1584 = vld [vmem:[%s1568 + $0x78] sm:$0xff]
      %s1585 = scalar_lea.vmem %s648, 7
      %v1586 = vld [vmem:[%s1585] sm:$0x1]
      %v1588 = vperm.slane %v1586, 0
      %1590 = vmatpush.msra.mxu0 %v1584
      %1591 = vmatpush.msra.mxu0 %v1583
      %1592 = vmatpush.msra.mxu0 %v1582
      %1593 = vmatpush.msra.mxu0 %v1581
      %1594 = vmatpush.msra.mxu0 %v1580
      %1595 = vmatpush.msra.mxu0 %v1579
      %1596 = vmatpush.msra.mxu0 %v1578
      %1597 = vmatpush.msra.mxu0 %v1577
      %1598 = vmatpush.msra.mxu0 %v1576
      %1599 = vmatpush.msra.mxu0 %v1575
      %1600 = vmatpush.msra.mxu0 %v1574
      %1601 = vmatpush.msra.mxu0 %v1573
      %1602 = vmatpush.msra.mxu0 %v1572
      %1603 = vmatpush.msra.mxu0 %v1571
      %1604 = vmatpush.msra.mxu0 %v1570
      %1605 = vmatpush.msra.mxu0 %v1569
      %1606 = vmatmul.f32.gmra.mxu0 %v746
      %v1607 = vpop.f32.mrf.mxu0
      %v1608 = vadd.f32 %v1588, %v1607
      %1609 = vmatmul.f32.gmra.mxu0 %v747
      %v1610 = vpop.f32.mrf.mxu0
      %v1611 = vadd.f32 %v1588, %v1610
      %1612 = vdwg.mxu0
      %s1613 = scalar_lea.vmem %s644, 1408
      %v1614 = vld [vmem:[%s1613] sm:$0xff]
      %v1615 = vld [vmem:[%s1613 + $0x8] sm:$0xff]
      %v1616 = vld [vmem:[%s1613 + $0x10] sm:$0xff]
      %v1617 = vld [vmem:[%s1613 + $0x18] sm:$0xff]
      %v1618 = vld [vmem:[%s1613 + $0x20] sm:$0xff]
      %v1619 = vld [vmem:[%s1613 + $0x28] sm:$0xff]
      %v1620 = vld [vmem:[%s1613 + $0x30] sm:$0xff]
      %v1621 = vld [vmem:[%s1613 + $0x38] sm:$0xff]
      %v1622 = vld [vmem:[%s1613 + $0x40] sm:$0xff]
      %v1623 = vld [vmem:[%s1613 + $0x48] sm:$0xff]
      %v1624 = vld [vmem:[%s1613 + $0x50] sm:$0xff]
      %v1625 = vld [vmem:[%s1613 + $0x58] sm:$0xff]
      %v1626 = vld [vmem:[%s1613 + $0x60] sm:$0xff]
      %v1627 = vld [vmem:[%s1613 + $0x68] sm:$0xff]
      %v1628 = vld [vmem:[%s1613 + $0x70] sm:$0xff]
      %v1629 = vld [vmem:[%s1613 + $0x78] sm:$0xff]
      %s1630 = scalar_lea.vmem %s648, 11
      %v1631 = vld [vmem:[%s1630] sm:$0x1]
      %v1633 = vperm.slane %v1631, 0
      %1635 = vmatpush.msra.mxu0 %v1629
      %1636 = vmatpush.msra.mxu0 %v1628
      %1637 = vmatpush.msra.mxu0 %v1627
      %1638 = vmatpush.msra.mxu0 %v1626
      %1639 = vmatpush.msra.mxu0 %v1625
      %1640 = vmatpush.msra.mxu0 %v1624
      %1641 = vmatpush.msra.mxu0 %v1623
      %1642 = vmatpush.msra.mxu0 %v1622
      %1643 = vmatpush.msra.mxu0 %v1621
      %1644 = vmatpush.msra.mxu0 %v1620
      %1645 = vmatpush.msra.mxu0 %v1619
      %1646 = vmatpush.msra.mxu0 %v1618
      %1647 = vmatpush.msra.mxu0 %v1617
      %1648 = vmatpush.msra.mxu0 %v1616
      %1649 = vmatpush.msra.mxu0 %v1615
      %1650 = vmatpush.msra.mxu0 %v1614
      %1651 = vmatmul.f32.gmra.mxu0 %v746
      %v1652 = vpop.f32.mrf.mxu0
      %v1653 = vadd.f32 %v1633, %v1652
      %1654 = vmatmul.f32.gmra.mxu0 %v747
      %v1655 = vpop.f32.mrf.mxu0
      %v1656 = vadd.f32 %v1633, %v1655
      %1657 = vdwg.mxu0
      %v1658 = vmul.f32 %v1563, 0.28867513
      %v1659 = vmul.f32 %v1566, 0.28867513
      %v1661 = vsel %vm886, %v1658, 0
      %v1664 = vsel %vm886, %v1659, 0
      %v1667 = vsel %vm886, %v1608, 0
      %v1670 = vsel %vm886, %v1611, 0
      %1672 = vmatpush.xpose.msra.mxu0 0.0
      %1673 = vmatpush.xpose.msra.mxu0 0.0
      %1674 = vmatpush.xpose.msra.mxu0 0.0
      %1675 = vmatpush.xpose.msra.mxu0 0.0
      %1676 = vmatpush.xpose.msra.mxu0 0.0
      %1677 = vmatpush.xpose.msra.mxu0 0.0
      %1678 = vmatpush.xpose.msra.mxu0 0.0
      %1679 = vmatpush.xpose.msra.mxu0 0.0
      %1680 = vmatpush.xpose.msra.mxu0 0.0
      %1681 = vmatpush.xpose.msra.mxu0 0.0
      %1682 = vmatpush.xpose.msra.mxu0 0.0
      %1683 = vmatpush.xpose.msra.mxu0 0.0
      %1684 = vmatpush.xpose.msra.mxu0 0.0
      %1685 = vmatpush.xpose.msra.mxu0 0.0
      %1686 = vmatpush.xpose.msra.mxu0 %v1670
      %1687 = vmatpush.xpose.msra.mxu0 %v1667
      %1688 = vmatmul.f32.gmra.mxu0 %v1661
      %v1689 = vpop.f32.mrf.mxu0
      %v1690 = vadd.f32 %v884, %v1689
      %1691 = vmatmul.f32.gmra.mxu0 %v1664
      %v1692 = vpop.f32.mrf.mxu0
      %v1693 = vadd.f32 %v884, %v1692
      %1694 = vdwg.mxu0
      %v1695 = vsel %vm922, %v1690, -inf
      %1696 = vmax.xlane.f32.xlu0 %v1695
      %v1697 = vpop.xlane.xlu0 %1696
      %v1698 = vsel %vm922, %v1693, -inf
      %1699 = vmax.xlane.f32.xlu0 %v1698
      %v1700 = vpop.xlane.xlu0 %1699
      %v1701 = vsub.f32 %v1690, %v1697
      %v1702 = vsub.f32 %v1693, %v1700
      %v1703 = vmul.f32 %v1701, 1.442695
      %v1704 = vpow.pop %v1703
      %v1705 = vmul.f32 %v1702, 1.442695
      %v1706 = vpow.pop %v1705
      %v1707 = vsel %vm922, %v1704, 0.0
      %1708 = vadd.xlane.f32.xlu0 %v1707
      %v1709 = vpop.xlane.xlu0 %1708
      %v1710 = vsel %vm922, %v1706, 0.0
      %1711 = vadd.xlane.f32.xlu0 %v1710
      %v1712 = vpop.xlane.xlu0 %1711
      %v1713 = vrcp.pop %v1709
      %v1714 = vrcp.pop %v1712
      %v1715 = vmul.f32 %v1704, %v1713
      %v1716 = vmul.f32 %v1706, %v1714
      %v1718 = vsel %vm922, %v1715, 0
      %v1721 = vsel %vm922, %v1716, 0
      %1723 = vmatpush.msra.mxu0 0.0
      %1724 = vmatpush.msra.mxu0 0.0
      %1725 = vmatpush.msra.mxu0 0.0
      %1726 = vmatpush.msra.mxu0 0.0
      %1727 = vmatpush.msra.mxu0 0.0
      %1728 = vmatpush.msra.mxu0 0.0
      %1729 = vmatpush.msra.mxu0 0.0
      %1730 = vmatpush.msra.mxu0 0.0
      %1731 = vmatpush.msra.mxu0 0.0
      %1732 = vmatpush.msra.mxu0 0.0
      %1733 = vmatpush.msra.mxu0 0.0
      %1734 = vmatpush.msra.mxu0 0.0
      %1735 = vmatpush.msra.mxu0 0.0
      %1736 = vmatpush.msra.mxu0 0.0
      %1737 = vmatpush.msra.mxu0 %v1656
      %1738 = vmatpush.msra.mxu0 %v1653
      %1739 = vmatmul.f32.gmra.mxu0 %v1718
      %v1740 = vpop.f32.mrf.mxu0
      %v1741 = vadd.f32 0.0, %v1740
      %1742 = vmatmul.f32.gmra.mxu0 %v1721
      %v1743 = vpop.f32.mrf.mxu0
      %v1744 = vadd.f32 0.0, %v1743
      %1745 = vdwg.mxu0
      %s1746 = scalar_lea.vmem %s653, 96
      %v1747 = vld [vmem:[%s1746] sm:$0xff]
      %v1748 = vld [vmem:[%s1746 + $0x8] sm:$0xff]
      %v1749 = vld [vmem:[%s1746 + $0x10] sm:$0xff]
      %v1750 = vld [vmem:[%s1746 + $0x18] sm:$0xff]
      %v1752 = vsel %vm886, %v1741, 0
      %v1755 = vsel %vm886, %v1744, 0
      %1757 = vmatpush.msra.mxu0 0.0
      %1758 = vmatpush.msra.mxu0 0.0
      %1759 = vmatpush.msra.mxu0 0.0
      %1760 = vmatpush.msra.mxu0 0.0
      %1761 = vmatpush.msra.mxu0 0.0
      %1762 = vmatpush.msra.mxu0 0.0
      %1763 = vmatpush.msra.mxu0 0.0
      %1764 = vmatpush.msra.mxu0 0.0
      %1765 = vmatpush.msra.mxu0 0.0
      %1766 = vmatpush.msra.mxu0 0.0
      %1767 = vmatpush.msra.mxu0 0.0
      %1768 = vmatpush.msra.mxu0 0.0
      %1769 = vmatpush.msra.mxu0 %v1750
      %1770 = vmatpush.msra.mxu0 %v1749
      %1771 = vmatpush.msra.mxu0 %v1748
      %1772 = vmatpush.msra.mxu0 %v1747
      %1773 = vmatmul.f32.gmra.mxu0 %v1752
      %v1774 = vpop.f32.mrf.mxu0
      %v1775 = vadd.f32 0.0, %v1774
      %1776 = vmatmul.f32.gmra.mxu0 %v1755
      %v1777 = vpop.f32.mrf.mxu0
      %v1778 = vadd.f32 0.0, %v1777
      %1779 = vdwg.mxu0
      %v1780 = vadd.f32 %v1521, %v1775
      %v1781 = vadd.f32 %v1522, %v1778
      %v1782 = vadd.f32 %v691, %v1780
      %v1783 = vadd.f32 %v692, %v1781
      %v1784 = vld [vmem:[%s656] sm:$0x1]
      %v1786 = vperm.slane %v1784, 0
      %v1788 = vadd.f32 %v1782, %v1786
      %v1789 = vadd.f32 %v1783, %v1786
      %v1790 = vld [vmem:[%s660] sm:$0x1]
      %v1791 = vld [vmem:[%s660 + $0x1] sm:$0x1]
      %1792 = vadd.xlane.f32.xlu0 %v1788
      %v1793 = vpop.xlane.xlu0 %1792
      %1794 = vadd.xlane.f32.xlu0 %v1789
      %v1795 = vpop.xlane.xlu0 %1794
      %v1796 = vmul.f32 %v1793, 0.020833334
      %v1797 = vmul.f32 %v1795, 0.020833334
      %v1798 = vmul.f32 %v1788, %v1788
      %v1799 = vmul.f32 %v1789, %v1789
      %1800 = vadd.xlane.f32.xlu0 %v1798
      %v1801 = vpop.xlane.xlu0 %1800
      %1802 = vadd.xlane.f32.xlu0 %v1799
      %v1803 = vpop.xlane.xlu0 %1802
      %v1804 = vmul.f32 %v1801, 0.020833334
      %v1805 = vmul.f32 %v1803, 0.020833334
      %v1806 = vmul.f32 %v1796, %v1796
      %v1807 = vmul.f32 %v1797, %v1797
      %v1808 = vsub.f32 %v1804, %v1806
      %v1809 = vsub.f32 %v1805, %v1807
      %v1810 = vmax.f32 %v1808, 0.0
      %v1811 = vmax.f32 %v1809, 0.0
      %v1812 = vsub.f32 %v1788, %v1796
      %v1813 = vsub.f32 %v1789, %v1797
      %v1814 = vadd.f32 %v1810, 1e-05
      %v1815 = vadd.f32 %v1811, 1e-05
      %v1816 = vrsqrt.pop %v1814
      %v1817 = vmul.f32 %v1816, %v1814
      %v1818 = vmul.f32 %v1817, %v1816
      %v1819 = vmul.f32 0.5, %v1818
      %v1820 = vsub.f32 1.5, %v1819
      %v1821 = vmul.f32 %v1816, %v1820
      %vm1822 = vweird.f32 %v1814
      %vm1823 = vweird.f32 %v1816
      %vm1824 = vmor %vm1822, %vm1823
      %v1825 = vsel %vm1824, %v1816, %v1821
      %v1826 = vrsqrt.pop %v1815
      %v1827 = vmul.f32 %v1826, %v1815
      %v1828 = vmul.f32 %v1827, %v1826
      %v1829 = vmul.f32 0.5, %v1828
      %v1830 = vsub.f32 1.5, %v1829
      %v1831 = vmul.f32 %v1826, %v1830
      %vm1832 = vweird.f32 %v1815
      %vm1833 = vweird.f32 %v1826
      %vm1834 = vmor %vm1832, %vm1833
      %v1835 = vsel %vm1834, %v1826, %v1831
      %v1836 = vmul.f32 %v1812, %v1825
      %v1837 = vmul.f32 %v1813, %v1835
      %v1838 = vperm.slane %v1790, 0
      %v1839 = vmul.f32 %v1836, %v1838
      %v1840 = vmul.f32 %v1837, %v1838
      %v1841 = vperm.slane %v1791, 0
      %v1842 = vadd.f32 %v1839, %v1841
      %v1843 = vadd.f32 %v1840, %v1841
      %v1844 = vld [vmem:[%s665] sm:$0xff]
      %v1845 = vld [vmem:[%s665 + $0x8] sm:$0xff]
      %v1846 = vld [vmem:[%s665 + $0x10] sm:$0xff]
      %v1847 = vld [vmem:[%s665 + $0x18] sm:$0xff]
      %v1848 = vld [vmem:[%s665 + $0x20] sm:$0xff]
      %v1849 = vld [vmem:[%s665 + $0x28] sm:$0xff]
      %v1850 = vld [vmem:[%s665 + $0x30] sm:$0xff]
      %v1851 = vld [vmem:[%s665 + $0x38] sm:$0xff]
      %v1852 = vld [vmem:[%s665 + $0x40] sm:$0xff]
      %v1853 = vld [vmem:[%s665 + $0x48] sm:$0xff]
      %v1854 = vld [vmem:[%s665 + $0x50] sm:$0xff]
      %v1855 = vld [vmem:[%s665 + $0x58] sm:$0xff]
      %v1856 = vld [vmem:[%s665 + $0x60] sm:$0xff]
      %v1857 = vld [vmem:[%s665 + $0x68] sm:$0xff]
      %v1858 = vld [vmem:[%s665 + $0x70] sm:$0xff]
      %v1859 = vld [vmem:[%s665 + $0x78] sm:$0xff]
      %v1860 = vld [vmem:[%s665 + $0x80] sm:$0xff]
      %v1861 = vld [vmem:[%s665 + $0x88] sm:$0xff]
      %v1862 = vld [vmem:[%s665 + $0x90] sm:$0xff]
      %v1863 = vld [vmem:[%s665 + $0x98] sm:$0xff]
      %v1864 = vld [vmem:[%s665 + $0xa0] sm:$0xff]
      %v1865 = vld [vmem:[%s665 + $0xa8] sm:$0xff]
      %v1866 = vld [vmem:[%s665 + $0xb0] sm:$0xff]
      %v1867 = vld [vmem:[%s665 + $0xb8] sm:$0xff]
      %v1868 = vld [vmem:[%s665 + $0xc0] sm:$0xff]
      %v1869 = vld [vmem:[%s665 + $0xc8] sm:$0xff]
      %v1870 = vld [vmem:[%s665 + $0xd0] sm:$0xff]
      %v1871 = vld [vmem:[%s665 + $0xd8] sm:$0xff]
      %v1872 = vld [vmem:[%s665 + $0xe0] sm:$0xff]
      %v1873 = vld [vmem:[%s665 + $0xe8] sm:$0xff]
      %v1874 = vld [vmem:[%s665 + $0xf0] sm:$0xff]
      %v1875 = vld [vmem:[%s665 + $0xf8] sm:$0xff]
      %v1876 = vld [vmem:[%s669] sm:$0x3]
      %v1878 = vperm.slane %v1876, 0
      %v1879 = vperm.slane %v1876, 1
      %1882 = vmatpush.msra.mxu0 %v1874
      %1883 = vmatpush.msra.mxu0 %v1872
      %1884 = vmatpush.msra.mxu0 %v1870
      %1885 = vmatpush.msra.mxu0 %v1868
      %1886 = vmatpush.msra.mxu0 %v1866
      %1887 = vmatpush.msra.mxu0 %v1864
      %1888 = vmatpush.msra.mxu0 %v1862
      %1889 = vmatpush.msra.mxu0 %v1860
      %1890 = vmatpush.msra.mxu0 %v1858
      %1891 = vmatpush.msra.mxu0 %v1856
      %1892 = vmatpush.msra.mxu0 %v1854
      %1893 = vmatpush.msra.mxu0 %v1852
      %1894 = vmatpush.msra.mxu0 %v1850
      %1895 = vmatpush.msra.mxu0 %v1848
      %1896 = vmatpush.msra.mxu0 %v1846
      %1897 = vmatpush.msra.mxu0 %v1844
      %1898 = vmatmul.f32.gmra.mxu0 %v1842
      %v1899 = vpop.f32.mrf.mxu0
      %v1900 = vadd.f32 %v1878, %v1899
      %1901 = vmatmul.f32.gmra.mxu0 %v1843
      %v1902 = vpop.f32.mrf.mxu0
      %v1903 = vadd.f32 %v1878, %v1902
      %1904 = vdwg.mxu0
      %1905 = vmatpush.msra.mxu0 %v1875
      %1906 = vmatpush.msra.mxu0 %v1873
      %1907 = vmatpush.msra.mxu0 %v1871
      %1908 = vmatpush.msra.mxu0 %v1869
      %1909 = vmatpush.msra.mxu0 %v1867
      %1910 = vmatpush.msra.mxu0 %v1865
      %1911 = vmatpush.msra.mxu0 %v1863
      %1912 = vmatpush.msra.mxu0 %v1861
      %1913 = vmatpush.msra.mxu0 %v1859
      %1914 = vmatpush.msra.mxu0 %v1857
      %1915 = vmatpush.msra.mxu0 %v1855
      %1916 = vmatpush.msra.mxu0 %v1853
      %1917 = vmatpush.msra.mxu0 %v1851
      %1918 = vmatpush.msra.mxu0 %v1849
      %1919 = vmatpush.msra.mxu0 %v1847
      %1920 = vmatpush.msra.mxu0 %v1845
      %1921 = vmatmul.f32.gmra.mxu0 %v1842
      %v1922 = vpop.f32.mrf.mxu0
      %v1923 = vadd.f32 %v1879, %v1922
      %1924 = vmatmul.f32.gmra.mxu0 %v1843
      %v1925 = vpop.f32.mrf.mxu0
      %v1926 = vadd.f32 %v1879, %v1925
      %1927 = vdwg.mxu0
      %v1928 = vmul.f32 %v1900, %v1900
      %v1929 = vmul.f32 %v1923, %v1923
      %v1930 = vmul.f32 %v1903, %v1903
      %v1931 = vmul.f32 %v1926, %v1926
      %v1932 = vmul.f32 %v1900, %v1928
      %v1933 = vmul.f32 %v1923, %v1929
      %v1934 = vmul.f32 %v1903, %v1930
      %v1935 = vmul.f32 %v1926, %v1931
      %v1936 = vmul.f32 %v1932, 0.044715
      %v1937 = vmul.f32 %v1933, 0.044715
      %v1938 = vmul.f32 %v1934, 0.044715
      %v1939 = vmul.f32 %v1935, 0.044715
      %v1940 = vadd.f32 %v1900, %v1936
      %v1941 = vadd.f32 %v1923, %v1937
      %v1942 = vadd.f32 %v1903, %v1938
      %v1943 = vadd.f32 %v1926, %v1939
      %v1944 = vmul.f32 %v1940, 0.7978846
      %v1945 = vmul.f32 %v1941, 0.7978846
      %v1946 = vmul.f32 %v1942, 0.7978846
      %v1947 = vmul.f32 %v1943, 0.7978846
      %v1948 = vtanh.pop %v1944
      %v1949 = vtanh.pop %v1945
      %v1950 = vtanh.pop %v1946
      %v1951 = vtanh.pop %v1947
      %v1952 = vadd.f32 %v1948, 1.0
      %v1953 = vadd.f32 %v1949, 1.0
      %v1954 = vadd.f32 %v1950, 1.0
      %v1955 = vadd.f32 %v1951, 1.0
      %v1956 = vmul.f32 %v1952, 0.5
      %v1957 = vmul.f32 %v1953, 0.5
      %v1958 = vmul.f32 %v1954, 0.5
      %v1959 = vmul.f32 %v1955, 0.5
      %v1960 = vmul.f32 %v1900, %v1956
      %v1961 = vmul.f32 %v1923, %v1957
      %v1962 = vmul.f32 %v1903, %v1958
      %v1963 = vmul.f32 %v1926, %v1959
      %v1964 = vld [vmem:[%s674] sm:$0xff]
      %v1965 = vld [vmem:[%s674 + $0x8] sm:$0xff]
      %v1966 = vld [vmem:[%s674 + $0x10] sm:$0xff]
      %v1967 = vld [vmem:[%s674 + $0x18] sm:$0xff]
      %v1968 = vld [vmem:[%s674 + $0x20] sm:$0xff]
      %v1969 = vld [vmem:[%s674 + $0x28] sm:$0xff]
      %v1970 = vld [vmem:[%s674 + $0x30] sm:$0xff]
      %v1971 = vld [vmem:[%s674 + $0x38] sm:$0xff]
      %v1972 = vld [vmem:[%s674 + $0x40] sm:$0xff]
      %v1973 = vld [vmem:[%s674 + $0x48] sm:$0xff]
      %v1974 = vld [vmem:[%s674 + $0x50] sm:$0xff]
      %v1975 = vld [vmem:[%s674 + $0x58] sm:$0xff]
      %v1976 = vld [vmem:[%s674 + $0x60] sm:$0xff]
      %v1977 = vld [vmem:[%s674 + $0x68] sm:$0xff]
      %v1978 = vld [vmem:[%s674 + $0x70] sm:$0xff]
      %v1979 = vld [vmem:[%s674 + $0x78] sm:$0xff]
      %v1980 = vld [vmem:[%s674 + $0x80] sm:$0xff]
      %v1981 = vld [vmem:[%s674 + $0x88] sm:$0xff]
      %v1982 = vld [vmem:[%s674 + $0x90] sm:$0xff]
      %v1983 = vld [vmem:[%s674 + $0x98] sm:$0xff]
      %v1984 = vld [vmem:[%s674 + $0xa0] sm:$0xff]
      %v1985 = vld [vmem:[%s674 + $0xa8] sm:$0xff]
      %v1986 = vld [vmem:[%s674 + $0xb0] sm:$0xff]
      %v1987 = vld [vmem:[%s674 + $0xb8] sm:$0xff]
      %v1988 = vld [vmem:[%s674 + $0xc0] sm:$0xff]
      %v1989 = vld [vmem:[%s674 + $0xc8] sm:$0xff]
      %v1990 = vld [vmem:[%s674 + $0xd0] sm:$0xff]
      %v1991 = vld [vmem:[%s674 + $0xd8] sm:$0xff]
      %v1992 = vld [vmem:[%s674 + $0xe0] sm:$0xff]
      %v1993 = vld [vmem:[%s674 + $0xe8] sm:$0xff]
      %v1994 = vld [vmem:[%s674 + $0xf0] sm:$0xff]
      %v1995 = vld [vmem:[%s674 + $0xf8] sm:$0xff]
      %v1996 = vld [vmem:[%s677] sm:$0x1]
      %v1998 = vperm.slane %v1996, 0
      %2000 = vmatpush.msra.mxu0 %v1979
      %2001 = vmatpush.msra.mxu0 %v1978
      %2002 = vmatpush.msra.mxu0 %v1977
      %2003 = vmatpush.msra.mxu0 %v1976
      %2004 = vmatpush.msra.mxu0 %v1975
      %2005 = vmatpush.msra.mxu0 %v1974
      %2006 = vmatpush.msra.mxu0 %v1973
      %2007 = vmatpush.msra.mxu0 %v1972
      %2008 = vmatpush.msra.mxu0 %v1971
      %2009 = vmatpush.msra.mxu0 %v1970
      %2010 = vmatpush.msra.mxu0 %v1969
      %2011 = vmatpush.msra.mxu0 %v1968
      %2012 = vmatpush.msra.mxu0 %v1967
      %2013 = vmatpush.msra.mxu0 %v1966
      %2014 = vmatpush.msra.mxu0 %v1965
      %2015 = vmatpush.msra.mxu0 %v1964
      %2016 = vmatmul.f32.gmra.mxu0 %v1960
      %v2017 = vpop.f32.mrf.mxu0
      %v2018 = vadd.f32 %v1998, %v2017
      %2019 = vmatmul.f32.gmra.mxu0 %v1962
      %v2020 = vpop.f32.mrf.mxu0
      %v2021 = vadd.f32 %v1998, %v2020
      %2022 = vdwg.mxu0
      %2023 = vmatpush.msra.mxu0 %v1995
      %2024 = vmatpush.msra.mxu0 %v1994
      %2025 = vmatpush.msra.mxu0 %v1993
      %2026 = vmatpush.msra.mxu0 %v1992
      %2027 = vmatpush.msra.mxu0 %v1991
      %2028 = vmatpush.msra.mxu0 %v1990
      %2029 = vmatpush.msra.mxu0 %v1989
      %2030 = vmatpush.msra.mxu0 %v1988
      %2031 = vmatpush.msra.mxu0 %v1987
      %2032 = vmatpush.msra.mxu0 %v1986
      %2033 = vmatpush.msra.mxu0 %v1985
      %2034 = vmatpush.msra.mxu0 %v1984
      %2035 = vmatpush.msra.mxu0 %v1983
      %2036 = vmatpush.msra.mxu0 %v1982
      %2037 = vmatpush.msra.mxu0 %v1981
      %2038 = vmatpush.msra.mxu0 %v1980
      %2039 = vmatmul.f32.gmra.mxu0 %v1961
      %v2040 = vpop.f32.mrf.mxu0
      %v2041 = vadd.f32 %v2018, %v2040
      %2042 = vmatmul.f32.gmra.mxu0 %v1963
      %v2043 = vpop.f32.mrf.mxu0
      %v2044 = vadd.f32 %v2021, %v2043
      %2045 = vdwg.mxu0
      %v2046 = vadd.f32 %v1788, %v2041
      %v2047 = vadd.f32 %v1789, %v2044
      %2048 = vst [vmem:[#allocation2] sm:$0xff] %v2046
      %2049 = vst [vmem:[#allocation2 + $0x8] sm:$0xff] %v2047
      %p2050 = scmp.eq.s32.totalorder %s31, 1
      // Predicated region
      $region85: #{_lambda_.8} parent=79 // pred_check
        %p2051 = pneg %p2050
      $region86: #{_lambda_.8} parent=79 // pred_check_branch
        %2053 = sbr.rel (%p2051) target = $region88
      $region87: #{_lambda_.8} parent=79 // pred_region
        %v2054 = vld [vmem:[%s12] sm:$0x1]
        %v2055 = vld [vmem:[%s12 + $0x1] sm:$0x1]
        %2056 = vadd.xlane.f32.xlu0 %v2046
        %v2057 = vpop.xlane.xlu0 %2056
        %2058 = vadd.xlane.f32.xlu0 %v2047
        %v2059 = vpop.xlane.xlu0 %2058
        %v2060 = vmul.f32 %v2057, 0.020833334
        %v2061 = vmul.f32 %v2059, 0.020833334
        %v2062 = vmul.f32 %v2046, %v2046
        %v2063 = vmul.f32 %v2047, %v2047
        %2064 = vadd.xlane.f32.xlu0 %v2062
        %v2065 = vpop.xlane.xlu0 %2064
        %2066 = vadd.xlane.f32.xlu0 %v2063
        %v2067 = vpop.xlane.xlu0 %2066
        %v2068 = vmul.f32 %v2065, 0.020833334
        %v2069 = vmul.f32 %v2067, 0.020833334
        %v2070 = vmul.f32 %v2060, %v2060
        %v2071 = vmul.f32 %v2061, %v2061
        %v2072 = vsub.f32 %v2068, %v2070
        %v2073 = vsub.f32 %v2069, %v2071
        %v2074 = vmax.f32 %v2072, 0.0
        %v2075 = vmax.f32 %v2073, 0.0
        %v2076 = vsub.f32 %v2046, %v2060
        %v2077 = vsub.f32 %v2047, %v2061
        %v2078 = vadd.f32 %v2074, 1e-05
        %v2079 = vadd.f32 %v2075, 1e-05
        %v2080 = vrsqrt.pop %v2078
        %v2081 = vmul.f32 %v2080, %v2078
        %v2082 = vmul.f32 %v2081, %v2080
        %v2083 = vmul.f32 0.5, %v2082
        %v2084 = vsub.f32 1.5, %v2083
        %v2085 = vmul.f32 %v2080, %v2084
        %vm2086 = vweird.f32 %v2078
        %vm2087 = vweird.f32 %v2080
        %vm2088 = vmor %vm2086, %vm2087
        %v2089 = vsel %vm2088, %v2080, %v2085
        %v2090 = vrsqrt.pop %v2079
        %v2091 = vmul.f32 %v2090, %v2079
        %v2092 = vmul.f32 %v2091, %v2090
        %v2093 = vmul.f32 0.5, %v2092
        %v2094 = vsub.f32 1.5, %v2093
        %v2095 = vmul.f32 %v2090, %v2094
        %vm2096 = vweird.f32 %v2079
        %vm2097 = vweird.f32 %v2090
        %vm2098 = vmor %vm2096, %vm2097
        %v2099 = vsel %vm2098, %v2090, %v2095
        %v2100 = vmul.f32 %v2076, %v2089
        %v2101 = vmul.f32 %v2077, %v2099
        %v2102 = vperm.slane %v2054, 0
        %v2103 = vmul.f32 %v2100, %v2102
        %v2104 = vmul.f32 %v2101, %v2102
        %v2105 = vperm.slane %v2055, 0
        %v2106 = vadd.f32 %v2103, %v2105
        %v2107 = vadd.f32 %v2104, %v2105
        %v2108 = vld [vmem:[%s13] sm:$0xff]
        %v2109 = vld [vmem:[%s13 + $0x8] sm:$0xff]
        %v2110 = vld [vmem:[%s13 + $0x10] sm:$0xff]
        %v2111 = vld [vmem:[%s13 + $0x18] sm:$0xff]
        %v2112 = vld [vmem:[%s13 + $0x20] sm:$0xff]
        %v2113 = vld [vmem:[%s13 + $0x28] sm:$0xff]
        %v2114 = vld [vmem:[%s13 + $0x30] sm:$0xff]
        %v2115 = vld [vmem:[%s13 + $0x38] sm:$0xff]
        %v2116 = vld [vmem:[%s13 + $0x40] sm:$0xff]
        %v2117 = vld [vmem:[%s13 + $0x48] sm:$0xff]
        %v2118 = vld [vmem:[%s13 + $0x50] sm:$0xff]
        %v2119 = vld [vmem:[%s13 + $0x58] sm:$0xff]
        %v2120 = vld [vmem:[%s13 + $0x60] sm:$0xff]
        %v2121 = vld [vmem:[%s13 + $0x68] sm:$0xff]
        %v2122 = vld [vmem:[%s13 + $0x70] sm:$0xff]
        %v2123 = vld [vmem:[%s13 + $0x78] sm:$0xff]
        %v2124 = vld [vmem:[%s14] sm:$0x1]
        %v2126 = vperm.slane %v2124, 0
        %2128 = vmatpush.msra.mxu0 %v2123
        %2129 = vmatpush.msra.mxu0 %v2122
        %2130 = vmatpush.msra.mxu0 %v2121
        %2131 = vmatpush.msra.mxu0 %v2120
        %2132 = vmatpush.msra.mxu0 %v2119
        %2133 = vmatpush.msra.mxu0 %v2118
        %2134 = vmatpush.msra.mxu0 %v2117
        %2135 = vmatpush.msra.mxu0 %v2116
        %2136 = vmatpush.msra.mxu0 %v2115
        %2137 = vmatpush.msra.mxu0 %v2114
        %2138 = vmatpush.msra.mxu0 %v2113
        %2139 = vmatpush.msra.mxu0 %v2112
        %2140 = vmatpush.msra.mxu0 %v2111
        %2141 = vmatpush.msra.mxu0 %v2110
        %2142 = vmatpush.msra.mxu0 %v2109
        %2143 = vmatpush.msra.mxu0 %v2108
        %2144 = vmatmul.f32.gmra.mxu0 %v2106
        %v2145 = vpop.f32.mrf.mxu0
        %v2146 = vadd.f32 %v2126, %v2145
        %2147 = vmatmul.f32.gmra.mxu0 %v2107
        %v2148 = vpop.f32.mrf.mxu0
        %v2149 = vadd.f32 %v2126, %v2148
        %2150 = vdwg.mxu0
        %2151 = vst [vmem:[%s682] sm:$0xff] %v2146
        %2152 = vst [vmem:[%s682 + $0x8] sm:$0xff] %v2149
      $region88: #{_lambda_.8} parent=79 // pred_fallthru
        _
      %p2153 = scmp.lt.s32.totalorder %s30, 1
      %s2154 = scalar_select %p2153, %s30, 1
      %s2155 = smul.addr %s2154, 2
      %s2156 = smul.addr %s2155, 8
      %s2157 = scalar_lea.vmem %s15, %s2156
      // Predicated region
      $region89: #{_lambda_.8} parent=79 // pred_check
        %p2158 = pneg %p426
      $region90: #{_lambda_.8} parent=79 // pred_check_branch
        %2160 = sbr.rel (%p2158) target = $region92
      $region91: #{_lambda_.8} parent=79 // pred_region
        _
      $region92: #{_lambda_.8} parent=79 // pred_fallthru
        _
    $region80: #{_lambda_.8} parent=5 // pred_fallthru
      _
    %p2161 = scmp.le.s32.totalorder 2, %s21
    // Predicated region
    $region93: #{_lambda_.8} parent=5 // pred_check
      %p2162 = pneg %p2161
    $region94: #{_lambda_.8} parent=5 // pred_check_branch
      %2164 = sbr.rel (%p2162) target = $region96
    $region95: #{_lambda_.8} parent=5 // pred_region
      %s2165 = ssub.s32 %s21, 2
      // Predicated region
      $region97: #{_lambda_.8} parent=95 // pred_check
        %p2166 = pneg %p432
      $region98: #{_lambda_.8} parent=95 // pred_check_branch
        %2168 = sbr.rel (%p2166) target = $region100
      $region99: #{_lambda_.8} parent=95 // pred_region
        %p2169 = scmp.lt.s32.totalorder %s32, 1
        %s2170 = scalar_select %p2169, %s32, 1
        %s2171 = smul.addr %s2170, 2
        %s2172 = smul.addr %s2171, 8
        %s2173 = scalar_lea.vmem %s15, %s2172
      $region100: #{_lambda_.8} parent=95 // pred_fallthru
        _
    $region96: #{_lambda_.8} parent=5 // pred_fallthru
      _
  $region6: #{_lambda_.8} parent=0 // loop_footer
    %s25 = sadd.s32 1, %s21
  $region7: #{_lambda_.8} parent=0 // loop_footer_branch
    %20 = sbr.rel target = $region3
  $region8: #{_lambda_.8} parent=0 // loop_exit
    _

// kernel: _lambda_.10
$region0: #{_lambda_.10}
  #allocation0 [shape = 'u32[]', space=smem, size = 0x4, offset = 0x4, fixed_abs, tag = 'smem constant byte address 0x4 - core index']
  #allocation1 [shape = 'u32[72,128]{1,0:T(1,128)}', space=vmem, size = 0x9000, scoped, tag = 'internal scratch']
  %s0 = inlined_call_operand.vmem [shape: f32[32,256], index: 0, kind: input, shape index: {}]
  %s1 = inlined_call_operand.vmem [shape: f32[32,256], index: 1, kind: input, shape index: {}]
  %s2 = inlined_call_operand.vmem [shape: f32[32,1], index: 2, kind: input, shape index: {}]
  %s3 = inlined_call_operand.hbm [shape: f32[1,1], index: 3, kind: output, shape index: {}]
  %s4 = sld [smem:[#allocation0]]
  $region22: #{_lambda_.10} parent=0
    _
  %s6 = ssub.s32 1, %s4
  %s7 = scalar_select 0, %s6, %s4
  $region1: #{_lambda_.10} parent=0
    #allocation2 [shape = 'u8[512]{0}', space=vmem, size = 0x400, scoped, tag = 'output window, operand 0, single buffered']
    #allocation3 [shape = 's32[1]{0}', space=sflag, size = 0x4, scoped, tag = 'scoped memory for _lambda_.10']
    %8 = vsyncpa [#allocation3], 0
    // Predicated region
    $region2: #{_lambda_.10} parent=1 // pred_check
      _
    $region3: #{_lambda_.10} parent=1 // pred_check_branch
      %10 = sbr.rel (0) target = $region5
    $region4: #{_lambda_.10} parent=1 // pred_region
      _
    $region5: #{_lambda_.10} parent=1 // pred_fallthru
      _
    // Predicated region
    $region6: #{_lambda_.10} parent=1 // pred_check
      _
    $region7: #{_lambda_.10} parent=1 // pred_check_branch
      %12 = sbr.rel (0) target = $region9
    $region8: #{_lambda_.10} parent=1 // pred_region
      _
    $region9: #{_lambda_.10} parent=1 // pred_fallthru
      _
    // Predicated region
    $region10: #{_lambda_.10} parent=1 // pred_check
      _
    $region11: #{_lambda_.10} parent=1 // pred_check_branch
      %14 = sbr.rel (0) target = $region13
    $region12: #{_lambda_.10} parent=1 // pred_region
      _
    $region13: #{_lambda_.10} parent=1 // pred_fallthru
      _
    %v15 = vld [vmem:[%s0] sm:$0xff]
    %v16 = vld [vmem:[%s0 + $0x8] sm:$0xff]
    %v17 = vld [vmem:[%s0 + $0x10] sm:$0xff]
    %v18 = vld [vmem:[%s0 + $0x18] sm:$0xff]
    %v19 = vld [vmem:[%s0 + $0x20] sm:$0xff]
    %v20 = vld [vmem:[%s0 + $0x28] sm:$0xff]
    %v21 = vld [vmem:[%s0 + $0x30] sm:$0xff]
    %v22 = vld [vmem:[%s0 + $0x38] sm:$0xff]
    %v23 = vld [vmem:[%s1] sm:$0xff]
    %v24 = vld [vmem:[%s1 + $0x8] sm:$0xff]
    %v25 = vld [vmem:[%s1 + $0x10] sm:$0xff]
    %v26 = vld [vmem:[%s1 + $0x18] sm:$0xff]
    %v27 = vld [vmem:[%s1 + $0x20] sm:$0xff]
    %v28 = vld [vmem:[%s1 + $0x28] sm:$0xff]
    %v29 = vld [vmem:[%s1 + $0x30] sm:$0xff]
    %v30 = vld [vmem:[%s1 + $0x38] sm:$0xff]
    %v31 = vsub.f32 %v15, %v23
    %v32 = vsub.f32 %v16, %v24
    %v33 = vsub.f32 %v17, %v25
    %v34 = vsub.f32 %v18, %v26
    %v35 = vsub.f32 %v19, %v27
    %v36 = vsub.f32 %v20, %v28
    %v37 = vsub.f32 %v21, %v29
    %v38 = vsub.f32 %v22, %v30
    %v39 = vmul.f32 %v31, %v31
    %v40 = vmul.f32 %v32, %v32
    %v41 = vmul.f32 %v33, %v33
    %v42 = vmul.f32 %v34, %v34
    %v43 = vmul.f32 %v35, %v35
    %v44 = vmul.f32 %v36, %v36
    %v45 = vmul.f32 %v37, %v37
    %v46 = vmul.f32 %v38, %v38
    %v47 = vadd.f32 %v39, %v40
    %48 = vadd.xlane.f32.xlu0 %v47
    %v49 = vpop.xlane.xlu0 %48
    %v50 = vadd.f32 %v41, %v42
    %51 = vadd.xlane.f32.xlu0 %v50
    %v52 = vpop.xlane.xlu0 %51
    %v53 = vadd.f32 %v43, %v44
    %54 = vadd.xlane.f32.xlu0 %v53
    %v55 = vpop.xlane.xlu0 %54
    %v56 = vadd.f32 %v45, %v46
    %57 = vadd.xlane.f32.xlu0 %v56
    %v58 = vpop.xlane.xlu0 %57
    %v59 = vrcp.pop 256.0
    %v60 = vmul.f32 256.0, %v59
    %v61 = vsub.f32 1.0, %v60
    %v62 = vmul.f32 %v59, %v61
    %v63 = vadd.f32 %v59, %v62
    %vm64 = vweird.f32 %v59
    %v65 = vsel %vm64, %v59, %v63
    %v66 = vmul.f32 %v49, %v65
    %v67 = vmul.f32 %v52, %v65
    %v68 = vmul.f32 %v55, %v65
    %v69 = vmul.f32 %v58, %v65
    %v70 = vld [vmem:[%s2] sm:$0xff]
    %v71 = vld [vmem:[%s2 + $0x8] sm:$0xff]
    %v72 = vld [vmem:[%s2 + $0x10] sm:$0xff]
    %v73 = vld [vmem:[%s2 + $0x18] sm:$0xff]
    %v74 = vmul.f32 %v66, %v70
    %v75 = vmul.f32 %v67, %v71
    %v76 = vmul.f32 %v68, %v72
    %v77 = vmul.f32 %v69, %v73
    %vm78 = vcmask 7168
    %v79 = vsel %vm78, %v74, 0.0
    %v80 = vsel %vm78, %v75, 0.0
    %v81 = vadd.f32 %v79, %v80
    %v82 = vsel %vm78, %v76, 0.0
    %v83 = vadd.f32 %v81, %v82
    %v84 = vsel %vm78, %v77, 0.0
    %v85 = vadd.f32 %v83, %v84
    %86 = vadd.xlane.f32.xlu0 %v85
    %v87 = vpop.xlane.xlu0 %86
    %v88 = vrot.slane %v87, 4
    %v89 = vadd.f32 %v87, %v88
    %v90 = vrot.slane %v89, 2
    %v91 = vadd.f32 %v89, %v90
    %v92 = vrot.slane %v91, 1
    %v93 = vadd.f32 %v91, %v92
    %s94 = vtos %v93
    %v95 = vsel %vm78, %v70, 0.0
    %v96 = vsel %vm78, %v71, 0.0
    %v97 = vadd.f32 %v95, %v96
    %v98 = vsel %vm78, %v72, 0.0
    %v99 = vadd.f32 %v97, %v98
    %v100 = vsel %vm78, %v73, 0.0
    %v101 = vadd.f32 %v99, %v100
    %102 = vadd.xlane.f32.xlu0 %v101
    %v103 = vpop.xlane.xlu0 %102
    %v104 = vrot.slane %v103, 4
    %v105 = vadd.f32 %v103, %v104
    %v106 = vrot.slane %v105, 2
    %v107 = vadd.f32 %v105, %v106
    %v108 = vrot.slane %v107, 1
    %v109 = vadd.f32 %v107, %v108
    %s110 = vtos %v109
    %s111 = smax.f32 %s110, 1.0
    %v112 = vstv %s111
    %v113 = vrcp.pop %v112
    %v114 = vmul.f32 %v112, %v113
    %v115 = vsub.f32 1.0, %v114
    %v116 = vmul.f32 %v113, %v115
    %v117 = vadd.f32 %v113, %v116
    %vm118 = vweird.f32 %v112
    %vm119 = vweird.f32 %v113
    %vm120 = vmor %vm118, %vm119
    %v121 = vsel %vm120, %v113, %v117
    %v122 = vand.u32 2147483647, %v112
    %vm123 = vcmp.eq.f32.partialorder %v122, 8.507059e+37
    %v124 = vand.u32 %v112, 2147483648
    %v125 = vor.u32 1.1754944e-38, %v124
    %v126 = vsel %vm123, %v125, %v121
    %s127 = vtos %v126
    %s128 = smul.f32 %s94, %s127
    %v129 = vstv %s128
    %vm130 = vcmask 0
    %131 = vst.msk [vmem:[#allocation2] sm:$0x1] %vm130, %v129
    // Predicated region
    $region14: #{_lambda_.10} parent=1 // pred_check
      _
    $region15: #{_lambda_.10} parent=1 // pred_check_branch
      %133 = sbr.rel (0) target = $region17
    $region16: #{_lambda_.10} parent=1 // pred_region
      %135 = vsyncadd [#allocation3], 0
      %s137 = sshll.u32 [#allocation2], 4
      %s138 = int_to_ptr.vmem [resolvable:$true] %s137
      %s139 = sshll.u32 %s3, 4
      %s140 = int_to_ptr.hbm [resolvable:$true] %s139
      %142 = dma.vmem_to_hbm [thread:$0]  %s138, 16, %s140, [#allocation3]
    $region17: #{_lambda_.10} parent=1 // pred_fallthru
      _
    // Predicated region
    $region18: #{_lambda_.10} parent=1 // pred_check
      _
    $region19: #{_lambda_.10} parent=1 // pred_check_branch
      %144 = sbr.rel (0) target = $region21
    $region20: #{_lambda_.10} parent=1 // pred_region
      %146 = dma.done [#allocation3], 16
    $region21: #{_lambda_.10} parent=1 // pred_fallthru
      _
    %147 = vsyncpa [#allocation3], 1

// kernel: _lambda_.11
$region0: #{_lambda_.11}
  #allocation0 [shape = 'u32[]', space=smem, size = 0x4, offset = 0x4, fixed_abs, tag = 'smem constant byte address 0x4 - core index']
  #allocation1 [shape = 'u32[72,128]{1,0:T(1,128)}', space=vmem, size = 0x9000, scoped, tag = 'internal scratch']
  %s0 = inlined_call_operand.vmem [shape: f32[16,64], index: 0, kind: input, shape index: {}]
  %s1 = inlined_call_operand.vmem [shape: f32[16,64], index: 1, kind: input, shape index: {}]
  %s2 = inlined_call_operand.vmem [shape: f32[16,1], index: 2, kind: input, shape index: {}]
  %s3 = inlined_call_operand.hbm [shape: f32[1,1], index: 3, kind: output, shape index: {}]
  %s4 = sld [smem:[#allocation0]]
  $region22: #{_lambda_.11} parent=0
    _
  %s6 = ssub.s32 1, %s4
  %s7 = scalar_select 0, %s6, %s4
  $region1: #{_lambda_.11} parent=0
    #allocation2 [shape = 'u8[512]{0}', space=vmem, size = 0x400, scoped, tag = 'output window, operand 0, single buffered']
    #allocation3 [shape = 's32[1]{0}', space=sflag, size = 0x4, scoped, tag = 'scoped memory for _lambda_.11']
    %8 = vsyncpa [#allocation3], 0
    // Predicated region
    $region2: #{_lambda_.11} parent=1 // pred_check
      _
    $region3: #{_lambda_.11} parent=1 // pred_check_branch
      %10 = sbr.rel (0) target = $region5
    $region4: #{_lambda_.11} parent=1 // pred_region
      _
    $region5: #{_lambda_.11} parent=1 // pred_fallthru
      _
    // Predicated region
    $region6: #{_lambda_.11} parent=1 // pred_check
      _
    $region7: #{_lambda_.11} parent=1 // pred_check_branch
      %12 = sbr.rel (0) target = $region9
    $region8: #{_lambda_.11} parent=1 // pred_region
      _
    $region9: #{_lambda_.11} parent=1 // pred_fallthru
      _
    // Predicated region
    $region10: #{_lambda_.11} parent=1 // pred_check
      _
    $region11: #{_lambda_.11} parent=1 // pred_check_branch
      %14 = sbr.rel (0) target = $region13
    $region12: #{_lambda_.11} parent=1 // pred_region
      _
    $region13: #{_lambda_.11} parent=1 // pred_fallthru
      _
    %v15 = vld [vmem:[%s0] sm:$0xff]
    %v16 = vld [vmem:[%s0 + $0x8] sm:$0xff]
    %v17 = vld [vmem:[%s1] sm:$0xff]
    %v18 = vld [vmem:[%s1 + $0x8] sm:$0xff]
    %v19 = vsub.f32 %v15, %v17
    %v20 = vsub.f32 %v16, %v18
    %v21 = vmul.f32 %v19, %v19
    %v22 = vmul.f32 %v20, %v20
    %vm23 = vcmask 523264
    %v24 = vsel %vm23, %v21, 0.0
    %25 = vadd.xlane.f32.xlu0 %v24
    %v26 = vpop.xlane.xlu0 %25
    %v27 = vsel %vm23, %v22, 0.0
    %28 = vadd.xlane.f32.xlu0 %v27
    %v29 = vpop.xlane.xlu0 %28
    %v30 = vrcp.pop 64.0
    %v31 = vmul.f32 64.0, %v30
    %v32 = vsub.f32 1.0, %v31
    %v33 = vmul.f32 %v30, %v32
    %v34 = vadd.f32 %v30, %v33
    %vm35 = vweird.f32 %v30
    %v36 = vsel %vm35, %v30, %v34
    %v37 = vmul.f32 %v26, %v36
    %v38 = vmul.f32 %v29, %v36
    %v39 = vld [vmem:[%s2] sm:$0xff]
    %v40 = vld [vmem:[%s2 + $0x8] sm:$0xff]
    %v41 = vmul.f32 %v37, %v39
    %v42 = vmul.f32 %v38, %v40
    %vm43 = vcmask 7168
    %v44 = vsel %vm43, %v41, 0.0
    %v45 = vsel %vm43, %v42, 0.0
    %v46 = vadd.f32 %v44, %v45
    %47 = vadd.xlane.f32.xlu0 %v46
    %v48 = vpop.xlane.xlu0 %47
    %v49 = vrot.slane %v48, 4
    %v50 = vadd.f32 %v48, %v49
    %v51 = vrot.slane %v50, 2
    %v52 = vadd.f32 %v50, %v51
    %v53 = vrot.slane %v52, 1
    %v54 = vadd.f32 %v52, %v53
    %s55 = vtos %v54
    %v56 = vsel %vm43, %v39, 0.0
    %v57 = vsel %vm43, %v40, 0.0
    %v58 = vadd.f32 %v56, %v57
    %59 = vadd.xlane.f32.xlu0 %v58
    %v60 = vpop.xlane.xlu0 %59
    %v61 = vrot.slane %v60, 4
    %v62 = vadd.f32 %v60, %v61
    %v63 = vrot.slane %v62, 2
    %v64 = vadd.f32 %v62, %v63
    %v65 = vrot.slane %v64, 1
    %v66 = vadd.f32 %v64, %v65
    %s67 = vtos %v66
    %s68 = smax.f32 %s67, 1.0
    %v69 = vstv %s68
    %v70 = vrcp.pop %v69
    %v71 = vmul.f32 %v69, %v70
    %v72 = vsub.f32 1.0, %v71
    %v73 = vmul.f32 %v70, %v72
    %v74 = vadd.f32 %v70, %v73
    %vm75 = vweird.f32 %v69
    %vm76 = vweird.f32 %v70
    %vm77 = vmor %vm75, %vm76
    %v78 = vsel %vm77, %v70, %v74
    %v79 = vand.u32 2147483647, %v69
    %vm80 = vcmp.eq.f32.partialorder %v79, 8.507059e+37
    %v81 = vand.u32 %v69, 2147483648
    %v82 = vor.u32 1.1754944e-38, %v81
    %v83 = vsel %vm80, %v82, %v78
    %s84 = vtos %v83
    %s85 = smul.f32 %s55, %s84
    %v86 = vstv %s85
    %vm87 = vcmask 0
    %88 = vst.msk [vmem:[#allocation2] sm:$0x1] %vm87, %v86
    // Predicated region
    $region14: #{_lambda_.11} parent=1 // pred_check
      _
    $region15: #{_lambda_.11} parent=1 // pred_check_branch
      %90 = sbr.rel (0) target = $region17
    $region16: #{_lambda_.11} parent=1 // pred_region
      %92 = vsyncadd [#allocation3], 0
      %s94 = sshll.u32 [#allocation2], 4
      %s95 = int_to_ptr.vmem [resolvable:$true] %s94
      %s96 = sshll.u32 %s3, 4
      %s97 = int_to_ptr.hbm [resolvable:$true] %s96
      %99 = dma.vmem_to_hbm [thread:$0]  %s95, 16, %s97, [#allocation3]
    $region17: #{_lambda_.11} parent=1 // pred_fallthru
      _
    // Predicated region
    $region18: #{_lambda_.11} parent=1 // pred_check
      _
    $region19: #{_lambda_.11} parent=1 // pred_check_branch
      %101 = sbr.rel (0) target = $region21
    $region20: #{_lambda_.11} parent=1 // pred_region
      %103 = dma.done [#allocation3], 16
    $region21: #{_lambda_.11} parent=1 // pred_fallthru
      _
    %104 = vsyncpa [#allocation3], 1

// kernel: _lambda_.9
$region0: #{_lambda_.9}
  #allocation0 [shape = 'u32[]', space=smem, size = 0x4, offset = 0x4, fixed_abs, tag = 'smem constant byte address 0x4 - core index']
  #allocation1 [shape = 'u32[72,128]{1,0:T(1,128)}', space=vmem, size = 0x9000, scoped, tag = 'internal scratch']
  #allocation2 [shape = 'f32[32,128]{1,0:T(8,128)}', space=vmem, size = 0x4000, scoped, tag = 'scratch operand']
  %s0 = inlined_call_operand.vmem [shape: f32[2,32,128], index: 0, kind: input, shape index: {}]
  %s1 = inlined_call_operand.vmem [shape: f32[2,2,128], index: 1, kind: input, shape index: {}]
  %s2 = inlined_call_operand.vmem [shape: f32[2,12,128,32], index: 2, kind: input, shape index: {}]
  %s3 = inlined_call_operand.vmem [shape: f32[2,12,1,32], index: 3, kind: input, shape index: {}]
  %s4 = inlined_call_operand.vmem [shape: f32[2,4,32,128], index: 4, kind: input, shape index: {}]
  %s5 = inlined_call_operand.vmem [shape: f32[2,1,128], index: 5, kind: input, shape index: {}]
  %s6 = inlined_call_operand.vmem [shape: f32[2,2,128], index: 6, kind: input, shape index: {}]
  %s7 = inlined_call_operand.vmem [shape: f32[2,128,128], index: 7, kind: input, shape index: {}]
  %s8 = inlined_call_operand.vmem [shape: f32[2,1,128], index: 8, kind: input, shape index: {}]
  %s9 = inlined_call_operand.vmem [shape: f32[2,128,128], index: 9, kind: input, shape index: {}]
  %s10 = inlined_call_operand.vmem [shape: f32[2,1,128], index: 10, kind: input, shape index: {}]
  %s11 = inlined_call_operand.vmem [shape: f32[1,32], index: 11, kind: input, shape index: {}]
  %s12 = inlined_call_operand.vmem [shape: f32[2,128], index: 12, kind: input, shape index: {}]
  %s13 = inlined_call_operand.vmem [shape: f32[128,256], index: 13, kind: input, shape index: {}]
  %s14 = inlined_call_operand.vmem [shape: f32[1,256], index: 14, kind: input, shape index: {}]
  %s15 = inlined_call_operand.vmem [shape: f32[128,64], index: 15, kind: input, shape index: {}]
  %s16 = inlined_call_operand.vmem [shape: f32[1,64], index: 16, kind: input, shape index: {}]
  %s17 = inlined_call_operand.vmem [shape: f32[2,32,256], index: 17, kind: output, shape index: {0}]
  %s18 = inlined_call_operand.vmem [shape: f32[2,32,64], index: 18, kind: output, shape index: {1}]
  %19 = xla_tuple %s17, %s18
  %s20 = sld [smem:[#allocation0]]
  $region117: #{_lambda_.9} parent=0
    _
  %s22 = ssub.s32 1, %s20
  %s23 = scalar_select 0, %s22, %s20
  loop: start=0, step=1, limit=6
  $region2: #{_lambda_.9} parent=0 // loop_pre_header
    _
  $region3: #{_lambda_.9} parent=0 // loop_header
    %s25 = sphi 0, %s29
    %p26 = scmp.ge.s32.totalorder %s25, 6
    %s32 = sphi 0, %s44
    %s33 = sphi 0, %s40
    %s34 = sphi 0, %s32
    %s35 = sphi 0, %s33
    %s36 = sphi 0, %s34
    %s37 = sphi 0, %s35
    %s47 = sphi 0, %s49
    %s50 = sphi 0, %s47
    %s51 = sphi 0, %s50
    %s67 = sphi 0, %s51
    %s73 = sphi 0, %s75
    %s76 = sphi 0, %s73
    %s77 = sphi 0, %s76
    %s93 = sphi 0, %s77
    %s99 = sphi 0, %s101
    %s102 = sphi 0, %s99
    %s103 = sphi 0, %s102
    %s119 = sphi 0, %s103
    %s125 = sphi 0, %s127
    %s128 = sphi 0, %s125
    %s129 = sphi 0, %s128
    %s145 = sphi 0, %s129
    %s151 = sphi 0, %s153
    %s154 = sphi 0, %s151
    %s155 = sphi 0, %s154
    %s171 = sphi 0, %s155
    %s177 = sphi 0, %s179
    %s180 = sphi 0, %s177
    %s181 = sphi 0, %s180
    %s197 = sphi 0, %s181
    %s203 = sphi 0, %s205
    %s206 = sphi 0, %s203
    %s207 = sphi 0, %s206
    %s223 = sphi 0, %s207
    %s229 = sphi 0, %s231
    %s232 = sphi 0, %s229
    %s233 = sphi 0, %s232
    %s249 = sphi 0, %s233
    %s255 = sphi 0, %s257
    %s258 = sphi 0, %s255
    %s259 = sphi 0, %s258
    %s275 = sphi 0, %s259
    %s281 = sphi 0, %s283
    %s284 = sphi 0, %s281
    %s285 = sphi 0, %s284
    %s301 = sphi 0, %s285
    %s307 = sphi 0, %s309
    %s310 = sphi 0, %s307
    %s311 = sphi 0, %s310
    %s327 = sphi 0, %s311
    %s331 = sphi 0, %s331
    %s333 = sphi 0, %s331
    %s334 = sphi 0, %s333
    %s348 = sphi 0, %s334
    %s352 = sphi 0, %s352
    %s354 = sphi 0, %s352
    %s355 = sphi 0, %s354
    %s369 = sphi 0, %s355
    %s373 = sphi 0, %s373
    %s375 = sphi 0, %s373
    %s376 = sphi 0, %s375
    %s390 = sphi 0, %s376
    %s394 = sphi 0, %s394
    %s396 = sphi 0, %s394
    %s397 = sphi 0, %s396
    %s411 = sphi 0, %s397
    %s415 = sphi 0, %s415
    %s417 = sphi 0, %s415
    %s418 = sphi 0, %s417
    %s432 = sphi 0, %s418
    %s436 = sphi 0, %s436
    %s438 = sphi 0, %s436
    %s439 = sphi 0, %s438
    %s453 = sphi 0, %s439
    %s459 = sphi 0, %s461
    %s462 = sphi 0, %s459
    %s463 = sphi 0, %s462
    %s479 = sphi 0, %s463
    %s485 = sphi 0, %s487
    %s488 = sphi 0, %s485
    %s489 = sphi 0, %s488
    %s505 = sphi 0, %s489
  $region4: #{_lambda_.9} parent=0 // loop_header_branch
    %28 = sbr.rel (%p26) target = $region8
  $region5: #{_lambda_.9} parent=0 // loop_body
    %s30 = ssub.s32 %s25, 1
    %s31 = ssub.s32 %s25, 2
    %s38 = sadd.s32 1, %s33
    %p39 = scmp.ge.s32.totalorder %s38, 2
    %s40 = scalar_select %p39, 0, %s38
    %s41 = sadd.s32 1, %s32
    %s42 = scalar_select %p39, %s41, %s32
    %p43 = scmp.ge.s32.totalorder %s42, 2
    %s44 = scalar_select %p43, 0, %s42
    %s45 = ssub.s32 %s32, %s44
    %p46 = scmp.eq.s32.totalorder %s45, 0
    %s48 = sadd.s32 %s47, 1
    %s49 = scalar_select %p46, %s47, %s48
    %p52 = pneg %p46
    %p53 = scmp.eq.s32.totalorder %s25, 3
    %p54 = por %p52, %p53
    %p55 = scmp.ne.s32.totalorder %s47, %s50
    %p56 = scmp.eq.s32.totalorder %s25, 0
    %p57 = por %p55, %p56
    %p58 = scmp.ne.s32.totalorder %s47, %s50
    %p59 = scmp.eq.s32.totalorder %s30, 3
    %p60 = por %p58, %p59
    %p61 = scmp.ne.s32.totalorder %s50, %s51
    %p62 = scmp.eq.s32.totalorder %s30, 0
    %p63 = por %p61, %p62
    %p64 = scmp.ne.s32.totalorder %s50, %s51
    %p65 = scmp.eq.s32.totalorder %s31, 3
    %p66 = por %p64, %p65
    %p68 = scmp.ne.s32.totalorder %s51, %s67
    %p69 = scmp.eq.s32.totalorder %s31, 0
    %p70 = por %p68, %p69
    %s71 = ssub.s32 %s33, %s40
    %p72 = scmp.eq.s32.totalorder %s71, 0
    %s74 = sadd.s32 %s73, 1
    %s75 = scalar_select %p72, %s73, %s74
    %p78 = pneg %p72
    %p79 = scmp.eq.s32.totalorder %s25, 3
    %p80 = por %p78, %p79
    %p81 = scmp.ne.s32.totalorder %s73, %s76
    %p82 = scmp.eq.s32.totalorder %s25, 0
    %p83 = por %p81, %p82
    %p84 = scmp.ne.s32.totalorder %s73, %s76
    %p85 = scmp.eq.s32.totalorder %s30, 3
    %p86 = por %p84, %p85
    %p87 = scmp.ne.s32.totalorder %s76, %s77
    %p88 = scmp.eq.s32.totalorder %s30, 0
    %p89 = por %p87, %p88
    %p90 = scmp.ne.s32.totalorder %s76, %s77
    %p91 = scmp.eq.s32.totalorder %s31, 3
    %p92 = por %p90, %p91
    %p94 = scmp.ne.s32.totalorder %s77, %s93
    %p95 = scmp.eq.s32.totalorder %s31, 0
    %p96 = por %p94, %p95
    %s97 = ssub.s32 %s33, %s40
    %p98 = scmp.eq.s32.totalorder %s97, 0
    %s100 = sadd.s32 %s99, 1
    %s101 = scalar_select %p98, %s99, %s100
    %p104 = pneg %p98
    %p105 = scmp.eq.s32.totalorder %s25, 3
    %p106 = por %p104, %p105
    %p107 = scmp.ne.s32.totalorder %s99, %s102
    %p108 = scmp.eq.s32.totalorder %s25, 0
    %p109 = por %p107, %p108
    %p110 = scmp.ne.s32.totalorder %s99, %s102
    %p111 = scmp.eq.s32.totalorder %s30, 3
    %p112 = por %p110, %p111
    %p113 = scmp.ne.s32.totalorder %s102, %s103
    %p114 = scmp.eq.s32.totalorder %s30, 0
    %p115 = por %p113, %p114
    %p116 = scmp.ne.s32.totalorder %s102, %s103
    %p117 = scmp.eq.s32.totalorder %s31, 3
    %p118 = por %p116, %p117
    %p120 = scmp.ne.s32.totalorder %s103, %s119
    %p121 = scmp.eq.s32.totalorder %s31, 0
    %p122 = por %p120, %p121
    %s123 = ssub.s32 %s33, %s40
    %p124 = scmp.eq.s32.totalorder %s123, 0
    %s126 = sadd.s32 %s125, 1
    %s127 = scalar_select %p124, %s125, %s126
    %p130 = pneg %p124
    %p131 = scmp.eq.s32.totalorder %s25, 3
    %p132 = por %p130, %p131
    %p133 = scmp.ne.s32.totalorder %s125, %s128
    %p134 = scmp.eq.s32.totalorder %s25, 0
    %p135 = por %p133, %p134
    %p136 = scmp.ne.s32.totalorder %s125, %s128
    %p137 = scmp.eq.s32.totalorder %s30, 3
    %p138 = por %p136, %p137
    %p139 = scmp.ne.s32.totalorder %s128, %s129
    %p140 = scmp.eq.s32.totalorder %s30, 0
    %p141 = por %p139, %p140
    %p142 = scmp.ne.s32.totalorder %s128, %s129
    %p143 = scmp.eq.s32.totalorder %s31, 3
    %p144 = por %p142, %p143
    %p146 = scmp.ne.s32.totalorder %s129, %s145
    %p147 = scmp.eq.s32.totalorder %s31, 0
    %p148 = por %p146, %p147
    %s149 = ssub.s32 %s33, %s40
    %p150 = scmp.eq.s32.totalorder %s149, 0
    %s152 = sadd.s32 %s151, 1
    %s153 = scalar_select %p150, %s151, %s152
    %p156 = pneg %p150
    %p157 = scmp.eq.s32.totalorder %s25, 3
    %p158 = por %p156, %p157
    %p159 = scmp.ne.s32.totalorder %s151, %s154
    %p160 = scmp.eq.s32.totalorder %s25, 0
    %p161 = por %p159, %p160
    %p162 = scmp.ne.s32.totalorder %s151, %s154
    %p163 = scmp.eq.s32.totalorder %s30, 3
    %p164 = por %p162, %p163
    %p165 = scmp.ne.s32.totalorder %s154, %s155
    %p166 = scmp.eq.s32.totalorder %s30, 0
    %p167 = por %p165, %p166
    %p168 = scmp.ne.s32.totalorder %s154, %s155
    %p169 = scmp.eq.s32.totalorder %s31, 3
    %p170 = por %p168, %p169
    %p172 = scmp.ne.s32.totalorder %s155, %s171
    %p173 = scmp.eq.s32.totalorder %s31, 0
    %p174 = por %p172, %p173
    %s175 = ssub.s32 %s33, %s40
    %p176 = scmp.eq.s32.totalorder %s175, 0
    %s178 = sadd.s32 %s177, 1
    %s179 = scalar_select %p176, %s177, %s178
    %p182 = pneg %p176
    %p183 = scmp.eq.s32.totalorder %s25, 3
    %p184 = por %p182, %p183
    %p185 = scmp.ne.s32.totalorder %s177, %s180
    %p186 = scmp.eq.s32.totalorder %s25, 0
    %p187 = por %p185, %p186
    %p188 = scmp.ne.s32.totalorder %s177, %s180
    %p189 = scmp.eq.s32.totalorder %s30, 3
    %p190 = por %p188, %p189
    %p191 = scmp.ne.s32.totalorder %s180, %s181
    %p192 = scmp.eq.s32.totalorder %s30, 0
    %p193 = por %p191, %p192
    %p194 = scmp.ne.s32.totalorder %s180, %s181
    %p195 = scmp.eq.s32.totalorder %s31, 3
    %p196 = por %p194, %p195
    %p198 = scmp.ne.s32.totalorder %s181, %s197
    %p199 = scmp.eq.s32.totalorder %s31, 0
    %p200 = por %p198, %p199
    %s201 = ssub.s32 %s33, %s40
    %p202 = scmp.eq.s32.totalorder %s201, 0
    %s204 = sadd.s32 %s203, 1
    %s205 = scalar_select %p202, %s203, %s204
    %p208 = pneg %p202
    %p209 = scmp.eq.s32.totalorder %s25, 3
    %p210 = por %p208, %p209
    %p211 = scmp.ne.s32.totalorder %s203, %s206
    %p212 = scmp.eq.s32.totalorder %s25, 0
    %p213 = por %p211, %p212
    %p214 = scmp.ne.s32.totalorder %s203, %s206
    %p215 = scmp.eq.s32.totalorder %s30, 3
    %p216 = por %p214, %p215
    %p217 = scmp.ne.s32.totalorder %s206, %s207
    %p218 = scmp.eq.s32.totalorder %s30, 0
    %p219 = por %p217, %p218
    %p220 = scmp.ne.s32.totalorder %s206, %s207
    %p221 = scmp.eq.s32.totalorder %s31, 3
    %p222 = por %p220, %p221
    %p224 = scmp.ne.s32.totalorder %s207, %s223
    %p225 = scmp.eq.s32.totalorder %s31, 0
    %p226 = por %p224, %p225
    %s227 = ssub.s32 %s33, %s40
    %p228 = scmp.eq.s32.totalorder %s227, 0
    %s230 = sadd.s32 %s229, 1
    %s231 = scalar_select %p228, %s229, %s230
    %p234 = pneg %p228
    %p235 = scmp.eq.s32.totalorder %s25, 3
    %p236 = por %p234, %p235
    %p237 = scmp.ne.s32.totalorder %s229, %s232
    %p238 = scmp.eq.s32.totalorder %s25, 0
    %p239 = por %p237, %p238
    %p240 = scmp.ne.s32.totalorder %s229, %s232
    %p241 = scmp.eq.s32.totalorder %s30, 3
    %p242 = por %p240, %p241
    %p243 = scmp.ne.s32.totalorder %s232, %s233
    %p244 = scmp.eq.s32.totalorder %s30, 0
    %p245 = por %p243, %p244
    %p246 = scmp.ne.s32.totalorder %s232, %s233
    %p247 = scmp.eq.s32.totalorder %s31, 3
    %p248 = por %p246, %p247
    %p250 = scmp.ne.s32.totalorder %s233, %s249
    %p251 = scmp.eq.s32.totalorder %s31, 0
    %p252 = por %p250, %p251
    %s253 = ssub.s32 %s33, %s40
    %p254 = scmp.eq.s32.totalorder %s253, 0
    %s256 = sadd.s32 %s255, 1
    %s257 = scalar_select %p254, %s255, %s256
    %p260 = pneg %p254
    %p261 = scmp.eq.s32.totalorder %s25, 3
    %p262 = por %p260, %p261
    %p263 = scmp.ne.s32.totalorder %s255, %s258
    %p264 = scmp.eq.s32.totalorder %s25, 0
    %p265 = por %p263, %p264
    %p266 = scmp.ne.s32.totalorder %s255, %s258
    %p267 = scmp.eq.s32.totalorder %s30, 3
    %p268 = por %p266, %p267
    %p269 = scmp.ne.s32.totalorder %s258, %s259
    %p270 = scmp.eq.s32.totalorder %s30, 0
    %p271 = por %p269, %p270
    %p272 = scmp.ne.s32.totalorder %s258, %s259
    %p273 = scmp.eq.s32.totalorder %s31, 3
    %p274 = por %p272, %p273
    %p276 = scmp.ne.s32.totalorder %s259, %s275
    %p277 = scmp.eq.s32.totalorder %s31, 0
    %p278 = por %p276, %p277
    %s279 = ssub.s32 %s33, %s40
    %p280 = scmp.eq.s32.totalorder %s279, 0
    %s282 = sadd.s32 %s281, 1
    %s283 = scalar_select %p280, %s281, %s282
    %p286 = pneg %p280
    %p287 = scmp.eq.s32.totalorder %s25, 3
    %p288 = por %p286, %p287
    %p289 = scmp.ne.s32.totalorder %s281, %s284
    %p290 = scmp.eq.s32.totalorder %s25, 0
    %p291 = por %p289, %p290
    %p292 = scmp.ne.s32.totalorder %s281, %s284
    %p293 = scmp.eq.s32.totalorder %s30, 3
    %p294 = por %p292, %p293
    %p295 = scmp.ne.s32.totalorder %s284, %s285
    %p296 = scmp.eq.s32.totalorder %s30, 0
    %p297 = por %p295, %p296
    %p298 = scmp.ne.s32.totalorder %s284, %s285
    %p299 = scmp.eq.s32.totalorder %s31, 3
    %p300 = por %p298, %p299
    %p302 = scmp.ne.s32.totalorder %s285, %s301
    %p303 = scmp.eq.s32.totalorder %s31, 0
    %p304 = por %p302, %p303
    %s305 = ssub.s32 %s33, %s40
    %p306 = scmp.eq.s32.totalorder %s305, 0
    %s308 = sadd.s32 %s307, 1
    %s309 = scalar_select %p306, %s307, %s308
    %p312 = pneg %p306
    %p313 = scmp.eq.s32.totalorder %s25, 3
    %p314 = por %p312, %p313
    %p315 = scmp.ne.s32.totalorder %s307, %s310
    %p316 = scmp.eq.s32.totalorder %s25, 0
    %p317 = por %p315, %p316
    %p318 = scmp.ne.s32.totalorder %s307, %s310
    %p319 = scmp.eq.s32.totalorder %s30, 3
    %p320 = por %p318, %p319
    %p321 = scmp.ne.s32.totalorder %s310, %s311
    %p322 = scmp.eq.s32.totalorder %s30, 0
    %p323 = por %p321, %p322
    %p324 = scmp.ne.s32.totalorder %s310, %s311
    %p325 = scmp.eq.s32.totalorder %s31, 3
    %p326 = por %p324, %p325
    %p328 = scmp.ne.s32.totalorder %s311, %s327
    %p329 = scmp.eq.s32.totalorder %s31, 0
    %p330 = por %p328, %p329
    %s332 = sadd.s32 %s331, 1
    %p335 = scmp.eq.s32.totalorder %s25, 3
    %p336 = scmp.ne.s32.totalorder %s331, %s333
    %p337 = scmp.eq.s32.totalorder %s25, 0
    %p338 = por %p336, %p337
    %p339 = scmp.ne.s32.totalorder %s331, %s333
    %p340 = scmp.eq.s32.totalorder %s30, 3
    %p341 = por %p339, %p340
    %p342 = scmp.ne.s32.totalorder %s333, %s334
    %p343 = scmp.eq.s32.totalorder %s30, 0
    %p344 = por %p342, %p343
    %p345 = scmp.ne.s32.totalorder %s333, %s334
    %p346 = scmp.eq.s32.totalorder %s31, 3
    %p347 = por %p345, %p346
    %p349 = scmp.ne.s32.totalorder %s334, %s348
    %p350 = scmp.eq.s32.totalorder %s31, 0
    %p351 = por %p349, %p350
    %s353 = sadd.s32 %s352, 1
    %p356 = scmp.eq.s32.totalorder %s25, 3
    %p357 = scmp.ne.s32.totalorder %s352, %s354
    %p358 = scmp.eq.s32.totalorder %s25, 0
    %p359 = por %p357, %p358
    %p360 = scmp.ne.s32.totalorder %s352, %s354
    %p361 = scmp.eq.s32.totalorder %s30, 3
    %p362 = por %p360, %p361
    %p363 = scmp.ne.s32.totalorder %s354, %s355
    %p364 = scmp.eq.s32.totalorder %s30, 0
    %p365 = por %p363, %p364
    %p366 = scmp.ne.s32.totalorder %s354, %s355
    %p367 = scmp.eq.s32.totalorder %s31, 3
    %p368 = por %p366, %p367
    %p370 = scmp.ne.s32.totalorder %s355, %s369
    %p371 = scmp.eq.s32.totalorder %s31, 0
    %p372 = por %p370, %p371
    %s374 = sadd.s32 %s373, 1
    %p377 = scmp.eq.s32.totalorder %s25, 3
    %p378 = scmp.ne.s32.totalorder %s373, %s375
    %p379 = scmp.eq.s32.totalorder %s25, 0
    %p380 = por %p378, %p379
    %p381 = scmp.ne.s32.totalorder %s373, %s375
    %p382 = scmp.eq.s32.totalorder %s30, 3
    %p383 = por %p381, %p382
    %p384 = scmp.ne.s32.totalorder %s375, %s376
    %p385 = scmp.eq.s32.totalorder %s30, 0
    %p386 = por %p384, %p385
    %p387 = scmp.ne.s32.totalorder %s375, %s376
    %p388 = scmp.eq.s32.totalorder %s31, 3
    %p389 = por %p387, %p388
    %p391 = scmp.ne.s32.totalorder %s376, %s390
    %p392 = scmp.eq.s32.totalorder %s31, 0
    %p393 = por %p391, %p392
    %s395 = sadd.s32 %s394, 1
    %p398 = scmp.eq.s32.totalorder %s25, 3
    %p399 = scmp.ne.s32.totalorder %s394, %s396
    %p400 = scmp.eq.s32.totalorder %s25, 0
    %p401 = por %p399, %p400
    %p402 = scmp.ne.s32.totalorder %s394, %s396
    %p403 = scmp.eq.s32.totalorder %s30, 3
    %p404 = por %p402, %p403
    %p405 = scmp.ne.s32.totalorder %s396, %s397
    %p406 = scmp.eq.s32.totalorder %s30, 0
    %p407 = por %p405, %p406
    %p408 = scmp.ne.s32.totalorder %s396, %s397
    %p409 = scmp.eq.s32.totalorder %s31, 3
    %p410 = por %p408, %p409
    %p412 = scmp.ne.s32.totalorder %s397, %s411
    %p413 = scmp.eq.s32.totalorder %s31, 0
    %p414 = por %p412, %p413
    %s416 = sadd.s32 %s415, 1
    %p419 = scmp.eq.s32.totalorder %s25, 3
    %p420 = scmp.ne.s32.totalorder %s415, %s417
    %p421 = scmp.eq.s32.totalorder %s25, 0
    %p422 = por %p420, %p421
    %p423 = scmp.ne.s32.totalorder %s415, %s417
    %p424 = scmp.eq.s32.totalorder %s30, 3
    %p425 = por %p423, %p424
    %p426 = scmp.ne.s32.totalorder %s417, %s418
    %p427 = scmp.eq.s32.totalorder %s30, 0
    %p428 = por %p426, %p427
    %p429 = scmp.ne.s32.totalorder %s417, %s418
    %p430 = scmp.eq.s32.totalorder %s31, 3
    %p431 = por %p429, %p430
    %p433 = scmp.ne.s32.totalorder %s418, %s432
    %p434 = scmp.eq.s32.totalorder %s31, 0
    %p435 = por %p433, %p434
    %s437 = sadd.s32 %s436, 1
    %p440 = scmp.eq.s32.totalorder %s25, 3
    %p441 = scmp.ne.s32.totalorder %s436, %s438
    %p442 = scmp.eq.s32.totalorder %s25, 0
    %p443 = por %p441, %p442
    %p444 = scmp.ne.s32.totalorder %s436, %s438
    %p445 = scmp.eq.s32.totalorder %s30, 3
    %p446 = por %p444, %p445
    %p447 = scmp.ne.s32.totalorder %s438, %s439
    %p448 = scmp.eq.s32.totalorder %s30, 0
    %p449 = por %p447, %p448
    %p450 = scmp.ne.s32.totalorder %s438, %s439
    %p451 = scmp.eq.s32.totalorder %s31, 3
    %p452 = por %p450, %p451
    %p454 = scmp.ne.s32.totalorder %s439, %s453
    %p455 = scmp.eq.s32.totalorder %s31, 0
    %p456 = por %p454, %p455
    %s457 = ssub.s32 %s32, %s44
    %p458 = scmp.eq.s32.totalorder %s457, 0
    %s460 = sadd.s32 %s459, 1
    %s461 = scalar_select %p458, %s459, %s460
    %p464 = pneg %p458
    %p465 = scmp.eq.s32.totalorder %s25, 3
    %p466 = por %p464, %p465
    %p467 = scmp.ne.s32.totalorder %s459, %s462
    %p468 = scmp.eq.s32.totalorder %s25, 0
    %p469 = por %p467, %p468
    %p470 = scmp.ne.s32.totalorder %s459, %s462
    %p471 = scmp.eq.s32.totalorder %s30, 3
    %p472 = por %p470, %p471
    %p473 = scmp.ne.s32.totalorder %s462, %s463
    %p474 = scmp.eq.s32.totalorder %s30, 0
    %p475 = por %p473, %p474
    %p476 = scmp.ne.s32.totalorder %s462, %s463
    %p477 = scmp.eq.s32.totalorder %s31, 3
    %p478 = por %p476, %p477
    %p480 = scmp.ne.s32.totalorder %s463, %s479
    %p481 = scmp.eq.s32.totalorder %s31, 0
    %p482 = por %p480, %p481
    %s483 = ssub.s32 %s32, %s44
    %p484 = scmp.eq.s32.totalorder %s483, 0
    %s486 = sadd.s32 %s485, 1
    %s487 = scalar_select %p484, %s485, %s486
    %p490 = pneg %p484
    %p491 = scmp.eq.s32.totalorder %s25, 3
    %p492 = por %p490, %p491
    %p493 = scmp.ne.s32.totalorder %s485, %s488
    %p494 = scmp.eq.s32.totalorder %s25, 0
    %p495 = por %p493, %p494
    %p496 = scmp.ne.s32.totalorder %s485, %s488
    %p497 = scmp.eq.s32.totalorder %s30, 3
    %p498 = por %p496, %p497
    %p499 = scmp.ne.s32.totalorder %s488, %s489
    %p500 = scmp.eq.s32.totalorder %s30, 0
    %p501 = por %p499, %p500
    %p502 = scmp.ne.s32.totalorder %s488, %s489
    %p503 = scmp.eq.s32.totalorder %s31, 3
    %p504 = por %p502, %p503
    %p506 = scmp.ne.s32.totalorder %s489, %s505
    %p507 = scmp.eq.s32.totalorder %s31, 0
    %p508 = por %p506, %p507
    %p509 = scmp.le.s32.totalorder 1, %s25
    %p510 = scmp.lt.s32.totalorder %s25, 5
    %p511 = pnand %p509, %p510
    %p512 = pneg %p511
    // Predicated region
    $region9: #{_lambda_.9} parent=5 // pred_check
      _
    $region10: #{_lambda_.9} parent=5 // pred_check_branch
      %514 = sbr.rel (%p511) target = $region12
    $region11: #{_lambda_.9} parent=5 // pred_region
      %s515 = ssub.s32 %s25, 1
      // Predicated region
      $region13: #{_lambda_.9} parent=11 // pred_check
        %p516 = pneg %p344
      $region14: #{_lambda_.9} parent=11 // pred_check_branch
        %518 = sbr.rel (%p516) target = $region16
      $region15: #{_lambda_.9} parent=11 // pred_region
        _
      $region16: #{_lambda_.9} parent=11 // pred_fallthru
        _
      // Predicated region
      $region17: #{_lambda_.9} parent=11 // pred_check
        %p519 = pneg %p365
      $region18: #{_lambda_.9} parent=11 // pred_check_branch
        %521 = sbr.rel (%p519) target = $region20
      $region19: #{_lambda_.9} parent=11 // pred_region
        _
      $region20: #{_lambda_.9} parent=11 // pred_fallthru
        _
      // Predicated region
      $region21: #{_lambda_.9} parent=11 // pred_check
        %p522 = pneg %p386
      $region22: #{_lambda_.9} parent=11 // pred_check_branch
        %524 = sbr.rel (%p522) target = $region24
      $region23: #{_lambda_.9} parent=11 // pred_region
        _
      $region24: #{_lambda_.9} parent=11 // pred_fallthru
        _
      // Predicated region
      $region25: #{_lambda_.9} parent=11 // pred_check
        %p525 = pneg %p407
      $region26: #{_lambda_.9} parent=11 // pred_check_branch
        %527 = sbr.rel (%p525) target = $region28
      $region27: #{_lambda_.9} parent=11 // pred_region
        _
      $region28: #{_lambda_.9} parent=11 // pred_fallthru
        _
      // Predicated region
      $region29: #{_lambda_.9} parent=11 // pred_check
        %p528 = pneg %p428
      $region30: #{_lambda_.9} parent=11 // pred_check_branch
        %530 = sbr.rel (%p528) target = $region32
      $region31: #{_lambda_.9} parent=11 // pred_region
        _
      $region32: #{_lambda_.9} parent=11 // pred_fallthru
        _
      // Predicated region
      $region33: #{_lambda_.9} parent=11 // pred_check
        %p531 = pneg %p449
      $region34: #{_lambda_.9} parent=11 // pred_check_branch
        %533 = sbr.rel (%p531) target = $region36
      $region35: #{_lambda_.9} parent=11 // pred_region
        _
      $region36: #{_lambda_.9} parent=11 // pred_fallthru
        _
    $region12: #{_lambda_.9} parent=5 // pred_fallthru
      _
    %p534 = scmp.lt.s32.totalorder %s25, 4
    // Predicated region
    $region37: #{_lambda_.9} parent=5 // pred_check
      %p535 = pneg %p534
    $region38: #{_lambda_.9} parent=5 // pred_check_branch
      %537 = sbr.rel (%p535) target = $region40
    $region39: #{_lambda_.9} parent=5 // pred_region
      // Predicated region
      $region41: #{_lambda_.9} parent=39 // pred_check
        %p538 = pneg %p57
      $region42: #{_lambda_.9} parent=39 // pred_check_branch
        %540 = sbr.rel (%p538) target = $region44
      $region43: #{_lambda_.9} parent=39 // pred_region
        %p541 = scmp.lt.s32.totalorder %s32, 1
        %s542 = scalar_select %p541, %s32, 1
        %s543 = smul.addr %s542, 4
        %s544 = smul.addr %s543, 8
        %s545 = scalar_lea.vmem %s0, %s544
      $region44: #{_lambda_.9} parent=39 // pred_fallthru
        _
      // Predicated region
      $region45: #{_lambda_.9} parent=39 // pred_check
        %p546 = pneg %p83
      $region46: #{_lambda_.9} parent=39 // pred_check_branch
        %548 = sbr.rel (%p546) target = $region48
      $region47: #{_lambda_.9} parent=39 // pred_region
        %p549 = scmp.lt.s32.totalorder %s33, 1
        %s550 = scalar_select %p549, %s33, 1
        %s551 = smul.addr %s550, 2
        %s552 = scalar_lea.vmem %s1, %s551
      $region48: #{_lambda_.9} parent=39 // pred_fallthru
        _
      // Predicated region
      $region49: #{_lambda_.9} parent=39 // pred_check
        %p553 = pneg %p109
      $region50: #{_lambda_.9} parent=39 // pred_check_branch
        %555 = sbr.rel (%p553) target = $region52
      $region51: #{_lambda_.9} parent=39 // pred_region
        %p556 = scmp.lt.s32.totalorder %s33, 1
        %s557 = scalar_select %p556, %s33, 1
        %s558 = smul.addr %s557, 192
        %s559 = smul.addr %s558, 8
        %s560 = scalar_lea.vmem %s2, %s559
      $region52: #{_lambda_.9} parent=39 // pred_fallthru
        _
      // Predicated region
      $region53: #{_lambda_.9} parent=39 // pred_check
        %p561 = pneg %p135
      $region54: #{_lambda_.9} parent=39 // pred_check_branch
        %563 = sbr.rel (%p561) target = $region56
      $region55: #{_lambda_.9} parent=39 // pred_region
        %p564 = scmp.lt.s32.totalorder %s33, 1
        %s565 = scalar_select %p564, %s33, 1
        %s566 = smul.addr %s565, 12
        %s567 = scalar_lea.vmem %s3, %s566
      $region56: #{_lambda_.9} parent=39 // pred_fallthru
        _
      // Predicated region
      $region57: #{_lambda_.9} parent=39 // pred_check
        %p568 = pneg %p161
      $region58: #{_lambda_.9} parent=39 // pred_check_branch
        %570 = sbr.rel (%p568) target = $region60
      $region59: #{_lambda_.9} parent=39 // pred_region
        %p571 = scmp.lt.s32.totalorder %s33, 1
        %s572 = scalar_select %p571, %s33, 1
        %s573 = smul.addr %s572, 16
        %s574 = smul.addr %s573, 8
        %s575 = scalar_lea.vmem %s4, %s574
      $region60: #{_lambda_.9} parent=39 // pred_fallthru
        _
      // Predicated region
      $region61: #{_lambda_.9} parent=39 // pred_check
        %p576 = pneg %p187
      $region62: #{_lambda_.9} parent=39 // pred_check_branch
        %578 = sbr.rel (%p576) target = $region64
      $region63: #{_lambda_.9} parent=39 // pred_region
        %p579 = scmp.lt.s32.totalorder %s33, 1
        %s580 = scalar_select %p579, %s33, 1
        %s581 = scalar_lea.vmem %s5, %s580
      $region64: #{_lambda_.9} parent=39 // pred_fallthru
        _
      // Predicated region
      $region65: #{_lambda_.9} parent=39 // pred_check
        %p582 = pneg %p213
      $region66: #{_lambda_.9} parent=39 // pred_check_branch
        %584 = sbr.rel (%p582) target = $region68
      $region67: #{_lambda_.9} parent=39 // pred_region
        %p585 = scmp.lt.s32.totalorder %s33, 1
        %s586 = scalar_select %p585, %s33, 1
        %s587 = smul.addr %s586, 2
        %s588 = scalar_lea.vmem %s6, %s587
      $region68: #{_lambda_.9} parent=39 // pred_fallthru
        _
      // Predicated region
      $region69: #{_lambda_.9} parent=39 // pred_check
        %p589 = pneg %p239
      $region70: #{_lambda_.9} parent=39 // pred_check_branch
        %591 = sbr.rel (%p589) target = $region72
      $region71: #{_lambda_.9} parent=39 // pred_region
        %p592 = scmp.lt.s32.totalorder %s33, 1
        %s593 = scalar_select %p592, %s33, 1
        %s594 = smul.addr %s593, 16
        %s595 = smul.addr %s594, 8
        %s596 = scalar_lea.vmem %s7, %s595
      $region72: #{_lambda_.9} parent=39 // pred_fallthru
        _
      // Predicated region
      $region73: #{_lambda_.9} parent=39 // pred_check
        %p597 = pneg %p265
      $region74: #{_lambda_.9} parent=39 // pred_check_branch
        %599 = sbr.rel (%p597) target = $region76
      $region75: #{_lambda_.9} parent=39 // pred_region
        %p600 = scmp.lt.s32.totalorder %s33, 1
        %s601 = scalar_select %p600, %s33, 1
        %s602 = scalar_lea.vmem %s8, %s601
      $region76: #{_lambda_.9} parent=39 // pred_fallthru
        _
      // Predicated region
      $region77: #{_lambda_.9} parent=39 // pred_check
        %p603 = pneg %p291
      $region78: #{_lambda_.9} parent=39 // pred_check_branch
        %605 = sbr.rel (%p603) target = $region80
      $region79: #{_lambda_.9} parent=39 // pred_region
        %p606 = scmp.lt.s32.totalorder %s33, 1
        %s607 = scalar_select %p606, %s33, 1
        %s608 = smul.addr %s607, 16
        %s609 = smul.addr %s608, 8
        %s610 = scalar_lea.vmem %s9, %s609
      $region80: #{_lambda_.9} parent=39 // pred_fallthru
        _
      // Predicated region
      $region81: #{_lambda_.9} parent=39 // pred_check
        %p611 = pneg %p317
      $region82: #{_lambda_.9} parent=39 // pred_check_branch
        %613 = sbr.rel (%p611) target = $region84
      $region83: #{_lambda_.9} parent=39 // pred_region
        %p614 = scmp.lt.s32.totalorder %s33, 1
        %s615 = scalar_select %p614, %s33, 1
        %s616 = scalar_lea.vmem %s10, %s615
      $region84: #{_lambda_.9} parent=39 // pred_fallthru
        _
    $region40: #{_lambda_.9} parent=5 // pred_fallthru
      _
    %p617 = scmp.le.s32.totalorder 1, %s25
    %p618 = scmp.lt.s32.totalorder %s25, 5
    %p619 = pnand %p617, %p618
    %p620 = pneg %p619
    // Predicated region
    $region85: #{_lambda_.9} parent=5 // pred_check
      _
    $region86: #{_lambda_.9} parent=5 // pred_check_branch
      %622 = sbr.rel (%p619) target = $region88
    $region87: #{_lambda_.9} parent=5 // pred_region
      %s623 = ssub.s32 %s25, 1
      %p624 = scmp.lt.s32.totalorder %s34, 1
      %s625 = scalar_select %p624, %s34, 1
      %s626 = smul.addr %s625, 4
      %s627 = smul.addr %s626, 8
      %s628 = scalar_lea.vmem %s0, %s627
      %p629 = pneg %p63
      %p630 = pneg %p60
      %p631 = scmp.lt.s32.totalorder %s35, 1
      %s632 = scalar_select %p631, %s35, 1
      %s633 = smul.addr %s632, 2
      %s634 = scalar_lea.vmem %s1, %s633
      %p635 = pneg %p89
      %p636 = pneg %p86
      %p637 = scmp.lt.s32.totalorder %s35, 1
      %s638 = scalar_select %p637, %s35, 1
      %s639 = smul.addr %s638, 192
      %s640 = smul.addr %s639, 8
      %s641 = scalar_lea.vmem %s2, %s640
      %p642 = pneg %p115
      %p643 = pneg %p112
      %p644 = scmp.lt.s32.totalorder %s35, 1
      %s645 = scalar_select %p644, %s35, 1
      %s646 = smul.addr %s645, 12
      %s647 = scalar_lea.vmem %s3, %s646
      %p648 = pneg %p141
      %p649 = pneg %p138
      %p650 = scmp.lt.s32.totalorder %s35, 1
      %s651 = scalar_select %p650, %s35, 1
      %s652 = smul.addr %s651, 16
      %s653 = smul.addr %s652, 8
      %s654 = scalar_lea.vmem %s4, %s653
      %p655 = pneg %p167
      %p656 = pneg %p164
      %p657 = scmp.lt.s32.totalorder %s35, 1
      %s658 = scalar_select %p657, %s35, 1
      %s659 = scalar_lea.vmem %s5, %s658
      %p660 = pneg %p193
      %p661 = pneg %p190
      %p662 = scmp.lt.s32.totalorder %s35, 1
      %s663 = scalar_select %p662, %s35, 1
      %s664 = smul.addr %s663, 2
      %s665 = scalar_lea.vmem %s6, %s664
      %p666 = pneg %p219
      %p667 = pneg %p216
      %p668 = scmp.lt.s32.totalorder %s35, 1
      %s669 = scalar_select %p668, %s35, 1
      %s670 = smul.addr %s669, 16
      %s671 = smul.addr %s670, 8
      %s672 = scalar_lea.vmem %s7, %s671
      %p673 = pneg %p245
      %p674 = pneg %p242
      %p675 = scmp.lt.s32.totalorder %s35, 1
      %s676 = scalar_select %p675, %s35, 1
      %s677 = scalar_lea.vmem %s8, %s676
      %p678 = pneg %p271
      %p679 = pneg %p268
      %p680 = scmp.lt.s32.totalorder %s35, 1
      %s681 = scalar_select %p680, %s35, 1
      %s682 = smul.addr %s681, 16
      %s683 = smul.addr %s682, 8
      %s684 = scalar_lea.vmem %s9, %s683
      %p685 = pneg %p297
      %p686 = pneg %p294
      %p687 = scmp.lt.s32.totalorder %s35, 1
      %s688 = scalar_select %p687, %s35, 1
      %s689 = scalar_lea.vmem %s10, %s688
      %p690 = pneg %p323
      %p691 = pneg %p320
      %p692 = pneg %p344
      %p693 = pneg %p341
      %p694 = pneg %p365
      %p695 = pneg %p362
      %p696 = pneg %p386
      %p697 = pneg %p383
      %p698 = pneg %p407
      %p699 = pneg %p404
      %p700 = pneg %p428
      %p701 = pneg %p425
      %p702 = pneg %p449
      %p703 = pneg %p446
      %p704 = pneg %p475
      %p705 = pneg %p472
      %p706 = scmp.lt.s32.totalorder %s34, 1
      %s707 = scalar_select %p706, %s34, 1
      %s708 = smul.addr %s707, 8
      %s709 = smul.addr %s708, 8
      %s710 = scalar_lea.vmem %s17, %s709
      %p711 = pneg %p501
      %p712 = pneg %p498
      %p713 = scmp.lt.s32.totalorder %s34, 1
      %s714 = scalar_select %p713, %s34, 1
      %s715 = smul.addr %s714, 4
      %s716 = smul.addr %s715, 8
      %s717 = scalar_lea.vmem %s18, %s716
      %p718 = scmp.lt.s32.totalorder %s34, 1
      %s719 = scalar_select %p718, %s34, 1
      %s720 = smul.addr %s719, 4
      %s721 = smul.addr %s720, 8
      %s722 = scalar_lea.vmem %s0, %s721
      %p723 = scmp.lt.s32.totalorder %s35, 1
      %s724 = scalar_select %p723, %s35, 1
      %s725 = smul.addr %s724, 2
      %s726 = scalar_lea.vmem %s1, %s725
      %p727 = scmp.lt.s32.totalorder %s35, 1
      %s728 = scalar_select %p727, %s35, 1
      %s729 = smul.addr %s728, 192
      %s730 = smul.addr %s729, 8
      %s731 = scalar_lea.vmem %s2, %s730
      %p732 = scmp.lt.s32.totalorder %s35, 1
      %s733 = scalar_select %p732, %s35, 1
      %s734 = smul.addr %s733, 12
      %s735 = scalar_lea.vmem %s3, %s734
      %p736 = scmp.lt.s32.totalorder %s35, 1
      %s737 = scalar_select %p736, %s35, 1
      %s738 = smul.addr %s737, 16
      %s739 = smul.addr %s738, 8
      %s740 = scalar_lea.vmem %s4, %s739
      %p741 = scmp.lt.s32.totalorder %s35, 1
      %s742 = scalar_select %p741, %s35, 1
      %s743 = scalar_lea.vmem %s5, %s742
      %p744 = scmp.lt.s32.totalorder %s35, 1
      %s745 = scalar_select %p744, %s35, 1
      %s746 = smul.addr %s745, 2
      %s747 = scalar_lea.vmem %s6, %s746
      %p748 = scmp.lt.s32.totalorder %s35, 1
      %s749 = scalar_select %p748, %s35, 1
      %s750 = smul.addr %s749, 16
      %s751 = smul.addr %s750, 8
      %s752 = scalar_lea.vmem %s7, %s751
      %p753 = scmp.lt.s32.totalorder %s35, 1
      %s754 = scalar_select %p753, %s35, 1
      %s755 = scalar_lea.vmem %s8, %s754
      %p756 = scmp.lt.s32.totalorder %s35, 1
      %s757 = scalar_select %p756, %s35, 1
      %s758 = smul.addr %s757, 16
      %s759 = smul.addr %s758, 8
      %s760 = scalar_lea.vmem %s9, %s759
      %p761 = scmp.lt.s32.totalorder %s35, 1
      %s762 = scalar_select %p761, %s35, 1
      %s763 = scalar_lea.vmem %s10, %s762
      %p764 = scmp.lt.s32.totalorder %s34, 1
      %s765 = scalar_select %p764, %s34, 1
      %s766 = smul.addr %s765, 8
      %s767 = smul.addr %s766, 8
      %s768 = scalar_lea.vmem %s17, %s767
      %p769 = scmp.lt.s32.totalorder %s34, 1
      %s770 = scalar_select %p769, %s34, 1
      %s771 = smul.addr %s770, 4
      %s772 = smul.addr %s771, 8
      %s773 = scalar_lea.vmem %s18, %s772
      %p774 = scmp.eq.s32.totalorder %s35, 0
      // Predicated region
      $region89: #{_lambda_.9} parent=87 // pred_check
        %p775 = pneg %p774
      $region90: #{_lambda_.9} parent=87 // pred_check_branch
        %777 = sbr.rel (%p775) target = $region92
      $region91: #{_lambda_.9} parent=87 // pred_region
        %v778 = vld [vmem:[%s722] sm:$0xff]
        %v779 = vld [vmem:[%s722 + $0x8] sm:$0xff]
        %v780 = vld [vmem:[%s722 + $0x10] sm:$0xff]
        %v781 = vld [vmem:[%s722 + $0x18] sm:$0xff]
        %782 = vst [vmem:[#allocation2] sm:$0xff] %v778
        %783 = vst [vmem:[#allocation2 + $0x8] sm:$0xff] %v779
        %784 = vst [vmem:[#allocation2 + $0x10] sm:$0xff] %v780
        %785 = vst [vmem:[#allocation2 + $0x18] sm:$0xff] %v781
      $region92: #{_lambda_.9} parent=87 // pred_fallthru
        _
      %v786 = vld [vmem:[#allocation2] sm:$0xff]
      %v787 = vld [vmem:[#allocation2 + $0x8] sm:$0xff]
      %v788 = vld [vmem:[#allocation2 + $0x10] sm:$0xff]
      %v789 = vld [vmem:[#allocation2 + $0x18] sm:$0xff]
      %v790 = vld [vmem:[%s11] sm:$0x1]
      %v791 = vld [vmem:[%s726] sm:$0x1]
      %v792 = vld [vmem:[%s726 + $0x1] sm:$0x1]
      %793 = vadd.xlane.f32.xlu0 %v786
      %v794 = vpop.xlane.xlu0 %793
      %795 = vadd.xlane.f32.xlu0 %v787
      %v796 = vpop.xlane.xlu0 %795
      %797 = vadd.xlane.f32.xlu0 %v788
      %v798 = vpop.xlane.xlu0 %797
      %799 = vadd.xlane.f32.xlu0 %v789
      %v800 = vpop.xlane.xlu0 %799
      %v801 = vmul.f32 %v794, 0.041666668
      %v802 = vmul.f32 %v796, 0.041666668
      %v803 = vmul.f32 %v798, 0.041666668
      %v804 = vmul.f32 %v800, 0.041666668
      %v805 = vmul.f32 %v786, %v786
      %v806 = vmul.f32 %v787, %v787
      %v807 = vmul.f32 %v788, %v788
      %v808 = vmul.f32 %v789, %v789
      %809 = vadd.xlane.f32.xlu0 %v805
      %v810 = vpop.xlane.xlu0 %809
      %811 = vadd.xlane.f32.xlu0 %v806
      %v812 = vpop.xlane.xlu0 %811
      %813 = vadd.xlane.f32.xlu0 %v807
      %v814 = vpop.xlane.xlu0 %813
      %815 = vadd.xlane.f32.xlu0 %v808
      %v816 = vpop.xlane.xlu0 %815
      %v817 = vmul.f32 %v810, 0.041666668
      %v818 = vmul.f32 %v812, 0.041666668
      %v819 = vmul.f32 %v814, 0.041666668
      %v820 = vmul.f32 %v816, 0.041666668
      %v821 = vmul.f32 %v801, %v801
      %v822 = vmul.f32 %v802, %v802
      %v823 = vmul.f32 %v803, %v803
      %v824 = vmul.f32 %v804, %v804
      %v825 = vsub.f32 %v817, %v821
      %v826 = vsub.f32 %v818, %v822
      %v827 = vsub.f32 %v819, %v823
      %v828 = vsub.f32 %v820, %v824
      %v829 = vmax.f32 %v825, 0.0
      %v830 = vmax.f32 %v826, 0.0
      %v831 = vmax.f32 %v827, 0.0
      %v832 = vmax.f32 %v828, 0.0
      %v833 = vsub.f32 %v786, %v801
      %v834 = vsub.f32 %v787, %v802
      %v835 = vsub.f32 %v788, %v803
      %v836 = vsub.f32 %v789, %v804
      %v837 = vadd.f32 %v829, 1e-05
      %v838 = vadd.f32 %v830, 1e-05
      %v839 = vadd.f32 %v831, 1e-05
      %v840 = vadd.f32 %v832, 1e-05
      %v841 = vrsqrt.pop %v837
      %v842 = vmul.f32 %v841, %v837
      %v843 = vmul.f32 %v842, %v841
      %v844 = vmul.f32 0.5, %v843
      %v845 = vsub.f32 1.5, %v844
      %v846 = vmul.f32 %v841, %v845
      %vm847 = vweird.f32 %v837
      %vm848 = vweird.f32 %v841
      %vm849 = vmor %vm847, %vm848
      %v850 = vsel %vm849, %v841, %v846
      %v851 = vrsqrt.pop %v838
      %v852 = vmul.f32 %v851, %v838
      %v853 = vmul.f32 %v852, %v851
      %v854 = vmul.f32 0.5, %v853
      %v855 = vsub.f32 1.5, %v854
      %v856 = vmul.f32 %v851, %v855
      %vm857 = vweird.f32 %v838
      %vm858 = vweird.f32 %v851
      %vm859 = vmor %vm857, %vm858
      %v860 = vsel %vm859, %v851, %v856
      %v861 = vrsqrt.pop %v839
      %v862 = vmul.f32 %v861, %v839
      %v863 = vmul.f32 %v862, %v861
      %v864 = vmul.f32 0.5, %v863
      %v865 = vsub.f32 1.5, %v864
      %v866 = vmul.f32 %v861, %v865
      %vm867 = vweird.f32 %v839
      %vm868 = vweird.f32 %v861
      %vm869 = vmor %vm867, %vm868
      %v870 = vsel %vm869, %v861, %v866
      %v871 = vrsqrt.pop %v840
      %v872 = vmul.f32 %v871, %v840
      %v873 = vmul.f32 %v872, %v871
      %v874 = vmul.f32 0.5, %v873
      %v875 = vsub.f32 1.5, %v874
      %v876 = vmul.f32 %v871, %v875
      %vm877 = vweird.f32 %v840
      %vm878 = vweird.f32 %v871
      %vm879 = vmor %vm877, %vm878
      %v880 = vsel %vm879, %v871, %v876
      %v881 = vmul.f32 %v833, %v850
      %v882 = vmul.f32 %v834, %v860
      %v883 = vmul.f32 %v835, %v870
      %v884 = vmul.f32 %v836, %v880
      %v885 = vperm.slane %v791, 0
      %v886 = vmul.f32 %v881, %v885
      %v887 = vmul.f32 %v882, %v885
      %v888 = vmul.f32 %v883, %v885
      %v889 = vmul.f32 %v884, %v885
      %v890 = vperm.slane %v792, 0
      %v891 = vadd.f32 %v886, %v890
      %v892 = vadd.f32 %v887, %v890
      %v893 = vadd.f32 %v888, %v890
      %v894 = vadd.f32 %v889, %v890
      %v895 = vld [vmem:[%s731] sm:$0xff]
      %v896 = vld [vmem:[%s731 + $0x8] sm:$0xff]
      %v897 = vld [vmem:[%s731 + $0x10] sm:$0xff]
      %v898 = vld [vmem:[%s731 + $0x18] sm:$0xff]
      %v899 = vld [vmem:[%s731 + $0x20] sm:$0xff]
      %v900 = vld [vmem:[%s731 + $0x28] sm:$0xff]
      %v901 = vld [vmem:[%s731 + $0x30] sm:$0xff]
      %v902 = vld [vmem:[%s731 + $0x38] sm:$0xff]
      %v903 = vld [vmem:[%s731 + $0x40] sm:$0xff]
      %v904 = vld [vmem:[%s731 + $0x48] sm:$0xff]
      %v905 = vld [vmem:[%s731 + $0x50] sm:$0xff]
      %v906 = vld [vmem:[%s731 + $0x58] sm:$0xff]
      %v907 = vld [vmem:[%s731 + $0x60] sm:$0xff]
      %v908 = vld [vmem:[%s731 + $0x68] sm:$0xff]
      %v909 = vld [vmem:[%s731 + $0x70] sm:$0xff]
      %v910 = vld [vmem:[%s731 + $0x78] sm:$0xff]
      %v911 = vld [vmem:[%s735] sm:$0x1]
      %v913 = vperm.slane %v911, 0
      %915 = vmatpush.msra.mxu0 %v910
      %916 = vmatpush.msra.mxu0 %v909
      %917 = vmatpush.msra.mxu0 %v908
      %918 = vmatpush.msra.mxu0 %v907
      %919 = vmatpush.msra.mxu0 %v906
      %920 = vmatpush.msra.mxu0 %v905
      %921 = vmatpush.msra.mxu0 %v904
      %922 = vmatpush.msra.mxu0 %v903
      %923 = vmatpush.msra.mxu0 %v902
      %924 = vmatpush.msra.mxu0 %v901
      %925 = vmatpush.msra.mxu0 %v900
      %926 = vmatpush.msra.mxu0 %v899
      %927 = vmatpush.msra.mxu0 %v898
      %928 = vmatpush.msra.mxu0 %v897
      %929 = vmatpush.msra.mxu0 %v896
      %930 = vmatpush.msra.mxu0 %v895
      %931 = vmatmul.f32.gmra.mxu0 %v891
      %v932 = vpop.f32.mrf.mxu0
      %v933 = vadd.f32 %v913, %v932
      %934 = vmatmul.f32.gmra.mxu0 %v892
      %v935 = vpop.f32.mrf.mxu0
      %v936 = vadd.f32 %v913, %v935
      %937 = vmatmul.f32.gmra.mxu0 %v893
      %v938 = vpop.f32.mrf.mxu0
      %v939 = vadd.f32 %v913, %v938
      %940 = vmatmul.f32.gmra.mxu0 %v894
      %v941 = vpop.f32.mrf.mxu0
      %v942 = vadd.f32 %v913, %v941
      %943 = vdwg.mxu0
      %s944 = scalar_lea.vmem %s731, 512
      %v945 = vld [vmem:[%s944] sm:$0xff]
      %v946 = vld [vmem:[%s944 + $0x8] sm:$0xff]
      %v947 = vld [vmem:[%s944 + $0x10] sm:$0xff]
      %v948 = vld [vmem:[%s944 + $0x18] sm:$0xff]
      %v949 = vld [vmem:[%s944 + $0x20] sm:$0xff]
      %v950 = vld [vmem:[%s944 + $0x28] sm:$0xff]
      %v951 = vld [vmem:[%s944 + $0x30] sm:$0xff]
      %v952 = vld [vmem:[%s944 + $0x38] sm:$0xff]
      %v953 = vld [vmem:[%s944 + $0x40] sm:$0xff]
      %v954 = vld [vmem:[%s944 + $0x48] sm:$0xff]
      %v955 = vld [vmem:[%s944 + $0x50] sm:$0xff]
      %v956 = vld [vmem:[%s944 + $0x58] sm:$0xff]
      %v957 = vld [vmem:[%s944 + $0x60] sm:$0xff]
      %v958 = vld [vmem:[%s944 + $0x68] sm:$0xff]
      %v959 = vld [vmem:[%s944 + $0x70] sm:$0xff]
      %v960 = vld [vmem:[%s944 + $0x78] sm:$0xff]
      %s961 = scalar_lea.vmem %s735, 4
      %v962 = vld [vmem:[%s961] sm:$0x1]
      %v964 = vperm.slane %v962, 0
      %966 = vmatpush.msra.mxu0 %v960
      %967 = vmatpush.msra.mxu0 %v959
      %968 = vmatpush.msra.mxu0 %v958
      %969 = vmatpush.msra.mxu0 %v957
      %970 = vmatpush.msra.mxu0 %v956
      %971 = vmatpush.msra.mxu0 %v955
      %972 = vmatpush.msra.mxu0 %v954
      %973 = vmatpush.msra.mxu0 %v953
      %974 = vmatpush.msra.mxu0 %v952
      %975 = vmatpush.msra.mxu0 %v951
      %976 = vmatpush.msra.mxu0 %v950
      %977 = vmatpush.msra.mxu0 %v949
      %978 = vmatpush.msra.mxu0 %v948
      %979 = vmatpush.msra.mxu0 %v947
      %980 = vmatpush.msra.mxu0 %v946
      %981 = vmatpush.msra.mxu0 %v945
      %982 = vmatmul.f32.gmra.mxu0 %v891
      %v983 = vpop.f32.mrf.mxu0
      %v984 = vadd.f32 %v964, %v983
      %985 = vmatmul.f32.gmra.mxu0 %v892
      %v986 = vpop.f32.mrf.mxu0
      %v987 = vadd.f32 %v964, %v986
      %988 = vmatmul.f32.gmra.mxu0 %v893
      %v989 = vpop.f32.mrf.mxu0
      %v990 = vadd.f32 %v964, %v989
      %991 = vmatmul.f32.gmra.mxu0 %v894
      %v992 = vpop.f32.mrf.mxu0
      %v993 = vadd.f32 %v964, %v992
      %994 = vdwg.mxu0
      %s995 = scalar_lea.vmem %s731, 1024
      %v996 = vld [vmem:[%s995] sm:$0xff]
      %v997 = vld [vmem:[%s995 + $0x8] sm:$0xff]
      %v998 = vld [vmem:[%s995 + $0x10] sm:$0xff]
      %v999 = vld [vmem:[%s995 + $0x18] sm:$0xff]
      %v1000 = vld [vmem:[%s995 + $0x20] sm:$0xff]
      %v1001 = vld [vmem:[%s995 + $0x28] sm:$0xff]
      %v1002 = vld [vmem:[%s995 + $0x30] sm:$0xff]
      %v1003 = vld [vmem:[%s995 + $0x38] sm:$0xff]
      %v1004 = vld [vmem:[%s995 + $0x40] sm:$0xff]
      %v1005 = vld [vmem:[%s995 + $0x48] sm:$0xff]
      %v1006 = vld [vmem:[%s995 + $0x50] sm:$0xff]
      %v1007 = vld [vmem:[%s995 + $0x58] sm:$0xff]
      %v1008 = vld [vmem:[%s995 + $0x60] sm:$0xff]
      %v1009 = vld [vmem:[%s995 + $0x68] sm:$0xff]
      %v1010 = vld [vmem:[%s995 + $0x70] sm:$0xff]
      %v1011 = vld [vmem:[%s995 + $0x78] sm:$0xff]
      %s1012 = scalar_lea.vmem %s735, 8
      %v1013 = vld [vmem:[%s1012] sm:$0x1]
      %v1015 = vperm.slane %v1013, 0
      %1017 = vmatpush.msra.mxu0 %v1011
      %1018 = vmatpush.msra.mxu0 %v1010
      %1019 = vmatpush.msra.mxu0 %v1009
      %1020 = vmatpush.msra.mxu0 %v1008
      %1021 = vmatpush.msra.mxu0 %v1007
      %1022 = vmatpush.msra.mxu0 %v1006
      %1023 = vmatpush.msra.mxu0 %v1005
      %1024 = vmatpush.msra.mxu0 %v1004
      %1025 = vmatpush.msra.mxu0 %v1003
      %1026 = vmatpush.msra.mxu0 %v1002
      %1027 = vmatpush.msra.mxu0 %v1001
      %1028 = vmatpush.msra.mxu0 %v1000
      %1029 = vmatpush.msra.mxu0 %v999
      %1030 = vmatpush.msra.mxu0 %v998
      %1031 = vmatpush.msra.mxu0 %v997
      %1032 = vmatpush.msra.mxu0 %v996
      %1033 = vmatmul.f32.gmra.mxu0 %v891
      %v1034 = vpop.f32.mrf.mxu0
      %v1035 = vadd.f32 %v1015, %v1034
      %1036 = vmatmul.f32.gmra.mxu0 %v892
      %v1037 = vpop.f32.mrf.mxu0
      %v1038 = vadd.f32 %v1015, %v1037
      %1039 = vmatmul.f32.gmra.mxu0 %v893
      %v1040 = vpop.f32.mrf.mxu0
      %v1041 = vadd.f32 %v1015, %v1040
      %1042 = vmatmul.f32.gmra.mxu0 %v894
      %v1043 = vpop.f32.mrf.mxu0
      %v1044 = vadd.f32 %v1015, %v1043
      %1045 = vdwg.mxu0
      %v1046 = vmul.f32 %v933, 0.4082483
      %v1047 = vmul.f32 %v936, 0.4082483
      %v1048 = vmul.f32 %v939, 0.4082483
      %v1049 = vmul.f32 %v942, 0.4082483
      %v1051 = vperm.slane %v790, 0
      %vm1053 = vcmask 261120
      %v1055 = vsel %vm1053, %v1046, 0
      %v1058 = vsel %vm1053, %v1047, 0
      %v1061 = vsel %vm1053, %v1048, 0
      %v1064 = vsel %vm1053, %v1049, 0
      %v1067 = vsel %vm1053, %v984, 0
      %v1070 = vsel %vm1053, %v987, 0
      %v1073 = vsel %vm1053, %v990, 0
      %v1076 = vsel %vm1053, %v993, 0
      %1078 = vmatpush.xpose.msra.mxu0 0.0
      %1079 = vmatpush.xpose.msra.mxu0 0.0
      %1080 = vmatpush.xpose.msra.mxu0 0.0
      %1081 = vmatpush.xpose.msra.mxu0 0.0
      %1082 = vmatpush.xpose.msra.mxu0 0.0
      %1083 = vmatpush.xpose.msra.mxu0 0.0
      %1084 = vmatpush.xpose.msra.mxu0 0.0
      %1085 = vmatpush.xpose.msra.mxu0 0.0
      %1086 = vmatpush.xpose.msra.mxu0 0.0
      %1087 = vmatpush.xpose.msra.mxu0 0.0
      %1088 = vmatpush.xpose.msra.mxu0 0.0
      %1089 = vmatpush.xpose.msra.mxu0 0.0
      %1090 = vmatpush.xpose.msra.mxu0 %v1076
      %1091 = vmatpush.xpose.msra.mxu0 %v1073
      %1092 = vmatpush.xpose.msra.mxu0 %v1070
      %1093 = vmatpush.xpose.msra.mxu0 %v1067
      %1094 = vmatmul.f32.gmra.mxu0 %v1055
      %v1095 = vpop.f32.mrf.mxu0
      %v1096 = vadd.f32 %v1051, %v1095
      %1097 = vmatmul.f32.gmra.mxu0 %v1058
      %v1098 = vpop.f32.mrf.mxu0
      %v1099 = vadd.f32 %v1051, %v1098
      %1100 = vmatmul.f32.gmra.mxu0 %v1061
      %v1101 = vpop.f32.mrf.mxu0
      %v1102 = vadd.f32 %v1051, %v1101
      %1103 = vmatmul.f32.gmra.mxu0 %v1064
      %v1104 = vpop.f32.mrf.mxu0
      %v1105 = vadd.f32 %v1051, %v1104
      %1106 = vdwg.mxu0
      %v1107 = vsel %vm1053, %v1096, -inf
      %1108 = vmax.xlane.f32.xlu0 %v1107
      %v1109 = vpop.xlane.xlu0 %1108
      %v1110 = vsel %vm1053, %v1099, -inf
      %1111 = vmax.xlane.f32.xlu0 %v1110
      %v1112 = vpop.xlane.xlu0 %1111
      %v1113 = vsel %vm1053, %v1102, -inf
      %1114 = vmax.xlane.f32.xlu0 %v1113
      %v1115 = vpop.xlane.xlu0 %1114
      %v1116 = vsel %vm1053, %v1105, -inf
      %1117 = vmax.xlane.f32.xlu0 %v1116
      %v1118 = vpop.xlane.xlu0 %1117
      %v1119 = vsub.f32 %v1096, %v1109
      %v1120 = vsub.f32 %v1099, %v1112
      %v1121 = vsub.f32 %v1102, %v1115
      %v1122 = vsub.f32 %v1105, %v1118
      %v1123 = vmul.f32 %v1119, 1.442695
      %v1124 = vpow.pop %v1123
      %v1125 = vmul.f32 %v1120, 1.442695
      %v1126 = vpow.pop %v1125
      %v1127 = vmul.f32 %v1121, 1.442695
      %v1128 = vpow.pop %v1127
      %v1129 = vmul.f32 %v1122, 1.442695
      %v1130 = vpow.pop %v1129
      %v1131 = vsel %vm1053, %v1124, 0.0
      %1132 = vadd.xlane.f32.xlu0 %v1131
      %v1133 = vpop.xlane.xlu0 %1132
      %v1134 = vsel %vm1053, %v1126, 0.0
      %1135 = vadd.xlane.f32.xlu0 %v1134
      %v1136 = vpop.xlane.xlu0 %1135
      %v1137 = vsel %vm1053, %v1128, 0.0
      %1138 = vadd.xlane.f32.xlu0 %v1137
      %v1139 = vpop.xlane.xlu0 %1138
      %v1140 = vsel %vm1053, %v1130, 0.0
      %1141 = vadd.xlane.f32.xlu0 %v1140
      %v1142 = vpop.xlane.xlu0 %1141
      %v1143 = vrcp.pop %v1133
      %v1144 = vrcp.pop %v1136
      %v1145 = vrcp.pop %v1139
      %v1146 = vrcp.pop %v1142
      %v1147 = vmul.f32 %v1124, %v1143
      %v1148 = vmul.f32 %v1126, %v1144
      %v1149 = vmul.f32 %v1128, %v1145
      %v1150 = vmul.f32 %v1130, %v1146
      %v1152 = vsel %vm1053, %v1147, 0
      %v1155 = vsel %vm1053, %v1148, 0
      %v1158 = vsel %vm1053, %v1149, 0
      %v1161 = vsel %vm1053, %v1150, 0
      %1163 = vmatpush.msra.mxu0 0.0
      %1164 = vmatpush.msra.mxu0 0.0
      %1165 = vmatpush.msra.mxu0 0.0
      %1166 = vmatpush.msra.mxu0 0.0
      %1167 = vmatpush.msra.mxu0 0.0
      %1168 = vmatpush.msra.mxu0 0.0
      %1169 = vmatpush.msra.mxu0 0.0
      %1170 = vmatpush.msra.mxu0 0.0
      %1171 = vmatpush.msra.mxu0 0.0
      %1172 = vmatpush.msra.mxu0 0.0
      %1173 = vmatpush.msra.mxu0 0.0
      %1174 = vmatpush.msra.mxu0 0.0
      %1175 = vmatpush.msra.mxu0 %v1044
      %1176 = vmatpush.msra.mxu0 %v1041
      %1177 = vmatpush.msra.mxu0 %v1038
      %1178 = vmatpush.msra.mxu0 %v1035
      %1179 = vmatmul.f32.gmra.mxu0 %v1152
      %v1180 = vpop.f32.mrf.mxu0
      %v1181 = vadd.f32 0.0, %v1180
      %1182 = vmatmul.f32.gmra.mxu0 %v1155
      %v1183 = vpop.f32.mrf.mxu0
      %v1184 = vadd.f32 0.0, %v1183
      %1185 = vmatmul.f32.gmra.mxu0 %v1158
      %v1186 = vpop.f32.mrf.mxu0
      %v1187 = vadd.f32 0.0, %v1186
      %1188 = vmatmul.f32.gmra.mxu0 %v1161
      %v1189 = vpop.f32.mrf.mxu0
      %v1190 = vadd.f32 0.0, %v1189
      %1191 = vdwg.mxu0
      %v1192 = vld [vmem:[%s740] sm:$0xff]
      %v1193 = vld [vmem:[%s740 + $0x8] sm:$0xff]
      %v1194 = vld [vmem:[%s740 + $0x10] sm:$0xff]
      %v1195 = vld [vmem:[%s740 + $0x18] sm:$0xff]
      %s1196 = scalar_lea.vmem %s731, 128
      %v1197 = vld [vmem:[%s1196] sm:$0xff]
      %v1198 = vld [vmem:[%s1196 + $0x8] sm:$0xff]
      %v1199 = vld [vmem:[%s1196 + $0x10] sm:$0xff]
      %v1200 = vld [vmem:[%s1196 + $0x18] sm:$0xff]
      %v1201 = vld [vmem:[%s1196 + $0x20] sm:$0xff]
      %v1202 = vld [vmem:[%s1196 + $0x28] sm:$0xff]
      %v1203 = vld [vmem:[%s1196 + $0x30] sm:$0xff]
      %v1204 = vld [vmem:[%s1196 + $0x38] sm:$0xff]
      %v1205 = vld [vmem:[%s1196 + $0x40] sm:$0xff]
      %v1206 = vld [vmem:[%s1196 + $0x48] sm:$0xff]
      %v1207 = vld [vmem:[%s1196 + $0x50] sm:$0xff]
      %v1208 = vld [vmem:[%s1196 + $0x58] sm:$0xff]
      %v1209 = vld [vmem:[%s1196 + $0x60] sm:$0xff]
      %v1210 = vld [vmem:[%s1196 + $0x68] sm:$0xff]
      %v1211 = vld [vmem:[%s1196 + $0x70] sm:$0xff]
      %v1212 = vld [vmem:[%s1196 + $0x78] sm:$0xff]
      %s1213 = scalar_lea.vmem %s735, 1
      %v1214 = vld [vmem:[%s1213] sm:$0x1]
      %v1216 = vperm.slane %v1214, 0
      %1218 = vmatpush.msra.mxu0 %v1212
      %1219 = vmatpush.msra.mxu0 %v1211
      %1220 = vmatpush.msra.mxu0 %v1210
      %1221 = vmatpush.msra.mxu0 %v1209
      %1222 = vmatpush.msra.mxu0 %v1208
      %1223 = vmatpush.msra.mxu0 %v1207
      %1224 = vmatpush.msra.mxu0 %v1206
      %1225 = vmatpush.msra.mxu0 %v1205
      %1226 = vmatpush.msra.mxu0 %v1204
      %1227 = vmatpush.msra.mxu0 %v1203
      %1228 = vmatpush.msra.mxu0 %v1202
      %1229 = vmatpush.msra.mxu0 %v1201
      %1230 = vmatpush.msra.mxu0 %v1200
      %1231 = vmatpush.msra.mxu0 %v1199
      %1232 = vmatpush.msra.mxu0 %v1198
      %1233 = vmatpush.msra.mxu0 %v1197
      %1234 = vmatmul.f32.gmra.mxu0 %v891
      %v1235 = vpop.f32.mrf.mxu0
      %v1236 = vadd.f32 %v1216, %v1235
      %1237 = vmatmul.f32.gmra.mxu0 %v892
      %v1238 = vpop.f32.mrf.mxu0
      %v1239 = vadd.f32 %v1216, %v1238
      %1240 = vmatmul.f32.gmra.mxu0 %v893
      %v1241 = vpop.f32.mrf.mxu0
      %v1242 = vadd.f32 %v1216, %v1241
      %1243 = vmatmul.f32.gmra.mxu0 %v894
      %v1244 = vpop.f32.mrf.mxu0
      %v1245 = vadd.f32 %v1216, %v1244
      %1246 = vdwg.mxu0
      %s1247 = scalar_lea.vmem %s731, 640
      %v1248 = vld [vmem:[%s1247] sm:$0xff]
      %v1249 = vld [vmem:[%s1247 + $0x8] sm:$0xff]
      %v1250 = vld [vmem:[%s1247 + $0x10] sm:$0xff]
      %v1251 = vld [vmem:[%s1247 + $0x18] sm:$0xff]
      %v1252 = vld [vmem:[%s1247 + $0x20] sm:$0xff]
      %v1253 = vld [vmem:[%s1247 + $0x28] sm:$0xff]
      %v1254 = vld [vmem:[%s1247 + $0x30] sm:$0xff]
      %v1255 = vld [vmem:[%s1247 + $0x38] sm:$0xff]
      %v1256 = vld [vmem:[%s1247 + $0x40] sm:$0xff]
      %v1257 = vld [vmem:[%s1247 + $0x48] sm:$0xff]
      %v1258 = vld [vmem:[%s1247 + $0x50] sm:$0xff]
      %v1259 = vld [vmem:[%s1247 + $0x58] sm:$0xff]
      %v1260 = vld [vmem:[%s1247 + $0x60] sm:$0xff]
      %v1261 = vld [vmem:[%s1247 + $0x68] sm:$0xff]
      %v1262 = vld [vmem:[%s1247 + $0x70] sm:$0xff]
      %v1263 = vld [vmem:[%s1247 + $0x78] sm:$0xff]
      %s1264 = scalar_lea.vmem %s735, 5
      %v1265 = vld [vmem:[%s1264] sm:$0x1]
      %v1267 = vperm.slane %v1265, 0
      %1269 = vmatpush.msra.mxu0 %v1263
      %1270 = vmatpush.msra.mxu0 %v1262
      %1271 = vmatpush.msra.mxu0 %v1261
      %1272 = vmatpush.msra.mxu0 %v1260
      %1273 = vmatpush.msra.mxu0 %v1259
      %1274 = vmatpush.msra.mxu0 %v1258
      %1275 = vmatpush.msra.mxu0 %v1257
      %1276 = vmatpush.msra.mxu0 %v1256
      %1277 = vmatpush.msra.mxu0 %v1255
      %1278 = vmatpush.msra.mxu0 %v1254
      %1279 = vmatpush.msra.mxu0 %v1253
      %1280 = vmatpush.msra.mxu0 %v1252
      %1281 = vmatpush.msra.mxu0 %v1251
      %1282 = vmatpush.msra.mxu0 %v1250
      %1283 = vmatpush.msra.mxu0 %v1249
      %1284 = vmatpush.msra.mxu0 %v1248
      %1285 = vmatmul.f32.gmra.mxu0 %v891
      %v1286 = vpop.f32.mrf.mxu0
      %v1287 = vadd.f32 %v1267, %v1286
      %1288 = vmatmul.f32.gmra.mxu0 %v892
      %v1289 = vpop.f32.mrf.mxu0
      %v1290 = vadd.f32 %v1267, %v1289
      %1291 = vmatmul.f32.gmra.mxu0 %v893
      %v1292 = vpop.f32.mrf.mxu0
      %v1293 = vadd.f32 %v1267, %v1292
      %1294 = vmatmul.f32.gmra.mxu0 %v894
      %v1295 = vpop.f32.mrf.mxu0
      %v1296 = vadd.f32 %v1267, %v1295
      %1297 = vdwg.mxu0
      %s1298 = scalar_lea.vmem %s731, 1152
      %v1299 = vld [vmem:[%s1298] sm:$0xff]
      %v1300 = vld [vmem:[%s1298 + $0x8] sm:$0xff]
      %v1301 = vld [vmem:[%s1298 + $0x10] sm:$0xff]
      %v1302 = vld [vmem:[%s1298 + $0x18] sm:$0xff]
      %v1303 = vld [vmem:[%s1298 + $0x20] sm:$0xff]
      %v1304 = vld [vmem:[%s1298 + $0x28] sm:$0xff]
      %v1305 = vld [vmem:[%s1298 + $0x30] sm:$0xff]
      %v1306 = vld [vmem:[%s1298 + $0x38] sm:$0xff]
      %v1307 = vld [vmem:[%s1298 + $0x40] sm:$0xff]
      %v1308 = vld [vmem:[%s1298 + $0x48] sm:$0xff]
      %v1309 = vld [vmem:[%s1298 + $0x50] sm:$0xff]
      %v1310 = vld [vmem:[%s1298 + $0x58] sm:$0xff]
      %v1311 = vld [vmem:[%s1298 + $0x60] sm:$0xff]
      %v1312 = vld [vmem:[%s1298 + $0x68] sm:$0xff]
      %v1313 = vld [vmem:[%s1298 + $0x70] sm:$0xff]
      %v1314 = vld [vmem:[%s1298 + $0x78] sm:$0xff]
      %s1315 = scalar_lea.vmem %s735, 9
      %v1316 = vld [vmem:[%s1315] sm:$0x1]
      %v1318 = vperm.slane %v1316, 0
      %1320 = vmatpush.msra.mxu0 %v1314
      %1321 = vmatpush.msra.mxu0 %v1313
      %1322 = vmatpush.msra.mxu0 %v1312
      %1323 = vmatpush.msra.mxu0 %v1311
      %1324 = vmatpush.msra.mxu0 %v1310
      %1325 = vmatpush.msra.mxu0 %v1309
      %1326 = vmatpush.msra.mxu0 %v1308
      %1327 = vmatpush.msra.mxu0 %v1307
      %1328 = vmatpush.msra.mxu0 %v1306
      %1329 = vmatpush.msra.mxu0 %v1305
      %1330 = vmatpush.msra.mxu0 %v1304
      %1331 = vmatpush.msra.mxu0 %v1303
      %1332 = vmatpush.msra.mxu0 %v1302
      %1333 = vmatpush.msra.mxu0 %v1301
      %1334 = vmatpush.msra.mxu0 %v1300
      %1335 = vmatpush.msra.mxu0 %v1299
      %1336 = vmatmul.f32.gmra.mxu0 %v891
      %v1337 = vpop.f32.mrf.mxu0
      %v1338 = vadd.f32 %v1318, %v1337
      %1339 = vmatmul.f32.gmra.mxu0 %v892
      %v1340 = vpop.f32.mrf.mxu0
      %v1341 = vadd.f32 %v1318, %v1340
      %1342 = vmatmul.f32.gmra.mxu0 %v893
      %v1343 = vpop.f32.mrf.mxu0
      %v1344 = vadd.f32 %v1318, %v1343
      %1345 = vmatmul.f32.gmra.mxu0 %v894
      %v1346 = vpop.f32.mrf.mxu0
      %v1347 = vadd.f32 %v1318, %v1346
      %1348 = vdwg.mxu0
      %v1349 = vmul.f32 %v1236, 0.4082483
      %v1350 = vmul.f32 %v1239, 0.4082483
      %v1351 = vmul.f32 %v1242, 0.4082483
      %v1352 = vmul.f32 %v1245, 0.4082483
      %v1354 = vsel %vm1053, %v1349, 0
      %v1357 = vsel %vm1053, %v1350, 0
      %v1360 = vsel %vm1053, %v1351, 0
      %v1363 = vsel %vm1053, %v1352, 0
      %v1366 = vsel %vm1053, %v1287, 0
      %v1369 = vsel %vm1053, %v1290, 0
      %v1372 = vsel %vm1053, %v1293, 0
      %v1375 = vsel %vm1053, %v1296, 0
      %1377 = vmatpush.xpose.msra.mxu0 0.0
      %1378 = vmatpush.xpose.msra.mxu0 0.0
      %1379 = vmatpush.xpose.msra.mxu0 0.0
      %1380 = vmatpush.xpose.msra.mxu0 0.0
      %1381 = vmatpush.xpose.msra.mxu0 0.0
      %1382 = vmatpush.xpose.msra.mxu0 0.0
      %1383 = vmatpush.xpose.msra.mxu0 0.0
      %1384 = vmatpush.xpose.msra.mxu0 0.0
      %1385 = vmatpush.xpose.msra.mxu0 0.0
      %1386 = vmatpush.xpose.msra.mxu0 0.0
      %1387 = vmatpush.xpose.msra.mxu0 0.0
      %1388 = vmatpush.xpose.msra.mxu0 0.0
      %1389 = vmatpush.xpose.msra.mxu0 %v1375
      %1390 = vmatpush.xpose.msra.mxu0 %v1372
      %1391 = vmatpush.xpose.msra.mxu0 %v1369
      %1392 = vmatpush.xpose.msra.mxu0 %v1366
      %1393 = vmatmul.f32.gmra.mxu0 %v1354
      %v1394 = vpop.f32.mrf.mxu0
      %v1395 = vadd.f32 %v1051, %v1394
      %1396 = vmatmul.f32.gmra.mxu0 %v1357
      %v1397 = vpop.f32.mrf.mxu0
      %v1398 = vadd.f32 %v1051, %v1397
      %1399 = vmatmul.f32.gmra.mxu0 %v1360
      %v1400 = vpop.f32.mrf.mxu0
      %v1401 = vadd.f32 %v1051, %v1400
      %1402 = vmatmul.f32.gmra.mxu0 %v1363
      %v1403 = vpop.f32.mrf.mxu0
      %v1404 = vadd.f32 %v1051, %v1403
      %1405 = vdwg.mxu0
      %v1406 = vsel %vm1053, %v1395, -inf
      %1407 = vmax.xlane.f32.xlu0 %v1406
      %v1408 = vpop.xlane.xlu0 %1407
      %v1409 = vsel %vm1053, %v1398, -inf
      %1410 = vmax.xlane.f32.xlu0 %v1409
      %v1411 = vpop.xlane.xlu0 %1410
      %v1412 = vsel %vm1053, %v1401, -inf
      %1413 = vmax.xlane.f32.xlu0 %v1412
      %v1414 = vpop.xlane.xlu0 %1413
      %v1415 = vsel %vm1053, %v1404, -inf
      %1416 = vmax.xlane.f32.xlu0 %v1415
      %v1417 = vpop.xlane.xlu0 %1416
      %v1418 = vsub.f32 %v1395, %v1408
      %v1419 = vsub.f32 %v1398, %v1411
      %v1420 = vsub.f32 %v1401, %v1414
      %v1421 = vsub.f32 %v1404, %v1417
      %v1422 = vmul.f32 %v1418, 1.442695
      %v1423 = vpow.pop %v1422
      %v1424 = vmul.f32 %v1419, 1.442695
      %v1425 = vpow.pop %v1424
      %v1426 = vmul.f32 %v1420, 1.442695
      %v1427 = vpow.pop %v1426
      %v1428 = vmul.f32 %v1421, 1.442695
      %v1429 = vpow.pop %v1428
      %v1430 = vsel %vm1053, %v1423, 0.0
      %1431 = vadd.xlane.f32.xlu0 %v1430
      %v1432 = vpop.xlane.xlu0 %1431
      %v1433 = vsel %vm1053, %v1425, 0.0
      %1434 = vadd.xlane.f32.xlu0 %v1433
      %v1435 = vpop.xlane.xlu0 %1434
      %v1436 = vsel %vm1053, %v1427, 0.0
      %1437 = vadd.xlane.f32.xlu0 %v1436
      %v1438 = vpop.xlane.xlu0 %1437
      %v1439 = vsel %vm1053, %v1429, 0.0
      %1440 = vadd.xlane.f32.xlu0 %v1439
      %v1441 = vpop.xlane.xlu0 %1440
      %v1442 = vrcp.pop %v1432
      %v1443 = vrcp.pop %v1435
      %v1444 = vrcp.pop %v1438
      %v1445 = vrcp.pop %v1441
      %v1446 = vmul.f32 %v1423, %v1442
      %v1447 = vmul.f32 %v1425, %v1443
      %v1448 = vmul.f32 %v1427, %v1444
      %v1449 = vmul.f32 %v1429, %v1445
      %v1451 = vsel %vm1053, %v1446, 0
      %v1454 = vsel %vm1053, %v1447, 0
      %v1457 = vsel %vm1053, %v1448, 0
      %v1460 = vsel %vm1053, %v1449, 0
      %1462 = vmatpush.msra.mxu0 0.0
      %1463 = vmatpush.msra.mxu0 0.0
      %1464 = vmatpush.msra.mxu0 0.0
      %1465 = vmatpush.msra.mxu0 0.0
      %1466 = vmatpush.msra.mxu0 0.0
      %1467 = vmatpush.msra.mxu0 0.0
      %1468 = vmatpush.msra.mxu0 0.0
      %1469 = vmatpush.msra.mxu0 0.0
      %1470 = vmatpush.msra.mxu0 0.0
      %1471 = vmatpush.msra.mxu0 0.0
      %1472 = vmatpush.msra.mxu0 0.0
      %1473 = vmatpush.msra.mxu0 0.0
      %1474 = vmatpush.msra.mxu0 %v1347
      %1475 = vmatpush.msra.mxu0 %v1344
      %1476 = vmatpush.msra.mxu0 %v1341
      %1477 = vmatpush.msra.mxu0 %v1338
      %1478 = vmatmul.f32.gmra.mxu0 %v1451
      %v1479 = vpop.f32.mrf.mxu0
      %v1480 = vadd.f32 0.0, %v1479
      %1481 = vmatmul.f32.gmra.mxu0 %v1454
      %v1482 = vpop.f32.mrf.mxu0
      %v1483 = vadd.f32 0.0, %v1482
      %1484 = vmatmul.f32.gmra.mxu0 %v1457
      %v1485 = vpop.f32.mrf.mxu0
      %v1486 = vadd.f32 0.0, %v1485
      %1487 = vmatmul.f32.gmra.mxu0 %v1460
      %v1488 = vpop.f32.mrf.mxu0
      %v1489 = vadd.f32 0.0, %v1488
      %1490 = vdwg.mxu0
      %s1491 = scalar_lea.vmem %s740, 32
      %v1492 = vld [vmem:[%s1491] sm:$0xff]
      %v1493 = vld [vmem:[%s1491 + $0x8] sm:$0xff]
      %v1494 = vld [vmem:[%s1491 + $0x10] sm:$0xff]
      %v1495 = vld [vmem:[%s1491 + $0x18] sm:$0xff]
      %v1497 = vsel %vm1053, %v1480, 0
      %v1500 = vsel %vm1053, %v1483, 0
      %v1503 = vsel %vm1053, %v1486, 0
      %v1506 = vsel %vm1053, %v1489, 0
      %1508 = vmatpush.msra.mxu0 0.0
      %1509 = vmatpush.msra.mxu0 0.0
      %1510 = vmatpush.msra.mxu0 0.0
      %1511 = vmatpush.msra.mxu0 0.0
      %1512 = vmatpush.msra.mxu0 0.0
      %1513 = vmatpush.msra.mxu0 0.0
      %1514 = vmatpush.msra.mxu0 0.0
      %1515 = vmatpush.msra.mxu0 0.0
      %1516 = vmatpush.msra.mxu0 0.0
      %1517 = vmatpush.msra.mxu0 0.0
      %1518 = vmatpush.msra.mxu0 0.0
      %1519 = vmatpush.msra.mxu0 0.0
      %1520 = vmatpush.msra.mxu0 %v1495
      %1521 = vmatpush.msra.mxu0 %v1494
      %1522 = vmatpush.msra.mxu0 %v1493
      %1523 = vmatpush.msra.mxu0 %v1492
      %1524 = vmatmul.f32.gmra.mxu0 %v1497
      %v1525 = vpop.f32.mrf.mxu0
      %v1526 = vadd.f32 0.0, %v1525
      %1527 = vmatmul.f32.gmra.mxu0 %v1500
      %v1528 = vpop.f32.mrf.mxu0
      %v1529 = vadd.f32 0.0, %v1528
      %1530 = vmatmul.f32.gmra.mxu0 %v1503
      %v1531 = vpop.f32.mrf.mxu0
      %v1532 = vadd.f32 0.0, %v1531
      %1533 = vmatmul.f32.gmra.mxu0 %v1506
      %v1534 = vpop.f32.mrf.mxu0
      %v1535 = vadd.f32 0.0, %v1534
      %1536 = vdwg.mxu0
      %v1538 = vsel %vm1053, %v1181, 0
      %v1541 = vsel %vm1053, %v1184, 0
      %v1544 = vsel %vm1053, %v1187, 0
      %v1547 = vsel %vm1053, %v1190, 0
      %1549 = vmatpush.msra.mxu0 0.0
      %1550 = vmatpush.msra.mxu0 0.0
      %1551 = vmatpush.msra.mxu0 0.0
      %1552 = vmatpush.msra.mxu0 0.0
      %1553 = vmatpush.msra.mxu0 0.0
      %1554 = vmatpush.msra.mxu0 0.0
      %1555 = vmatpush.msra.mxu0 0.0
      %1556 = vmatpush.msra.mxu0 0.0
      %1557 = vmatpush.msra.mxu0 0.0
      %1558 = vmatpush.msra.mxu0 0.0
      %1559 = vmatpush.msra.mxu0 0.0
      %1560 = vmatpush.msra.mxu0 0.0
      %1561 = vmatpush.msra.mxu0 %v1195
      %1562 = vmatpush.msra.mxu0 %v1194
      %1563 = vmatpush.msra.mxu0 %v1193
      %1564 = vmatpush.msra.mxu0 %v1192
      %1565 = vmatmul.f32.gmra.mxu0 %v1538
      %v1566 = vpop.f32.mrf.mxu0
      %v1567 = vadd.f32 %v1526, %v1566
      %1568 = vmatmul.f32.gmra.mxu0 %v1541
      %v1569 = vpop.f32.mrf.mxu0
      %v1570 = vadd.f32 %v1529, %v1569
      %1571 = vmatmul.f32.gmra.mxu0 %v1544
      %v1572 = vpop.f32.mrf.mxu0
      %v1573 = vadd.f32 %v1532, %v1572
      %1574 = vmatmul.f32.gmra.mxu0 %v1547
      %v1575 = vpop.f32.mrf.mxu0
      %v1576 = vadd.f32 %v1535, %v1575
      %1577 = vdwg.mxu0
      %s1578 = scalar_lea.vmem %s731, 256
      %v1579 = vld [vmem:[%s1578] sm:$0xff]
      %v1580 = vld [vmem:[%s1578 + $0x8] sm:$0xff]
      %v1581 = vld [vmem:[%s1578 + $0x10] sm:$0xff]
      %v1582 = vld [vmem:[%s1578 + $0x18] sm:$0xff]
      %v1583 = vld [vmem:[%s1578 + $0x20] sm:$0xff]
      %v1584 = vld [vmem:[%s1578 + $0x28] sm:$0xff]
      %v1585 = vld [vmem:[%s1578 + $0x30] sm:$0xff]
      %v1586 = vld [vmem:[%s1578 + $0x38] sm:$0xff]
      %v1587 = vld [vmem:[%s1578 + $0x40] sm:$0xff]
      %v1588 = vld [vmem:[%s1578 + $0x48] sm:$0xff]
      %v1589 = vld [vmem:[%s1578 + $0x50] sm:$0xff]
      %v1590 = vld [vmem:[%s1578 + $0x58] sm:$0xff]
      %v1591 = vld [vmem:[%s1578 + $0x60] sm:$0xff]
      %v1592 = vld [vmem:[%s1578 + $0x68] sm:$0xff]
      %v1593 = vld [vmem:[%s1578 + $0x70] sm:$0xff]
      %v1594 = vld [vmem:[%s1578 + $0x78] sm:$0xff]
      %s1595 = scalar_lea.vmem %s735, 2
      %v1596 = vld [vmem:[%s1595] sm:$0x1]
      %v1598 = vperm.slane %v1596, 0
      %1600 = vmatpush.msra.mxu0 %v1594
      %1601 = vmatpush.msra.mxu0 %v1593
      %1602 = vmatpush.msra.mxu0 %v1592
      %1603 = vmatpush.msra.mxu0 %v1591
      %1604 = vmatpush.msra.mxu0 %v1590
      %1605 = vmatpush.msra.mxu0 %v1589
      %1606 = vmatpush.msra.mxu0 %v1588
      %1607 = vmatpush.msra.mxu0 %v1587
      %1608 = vmatpush.msra.mxu0 %v1586
      %1609 = vmatpush.msra.mxu0 %v1585
      %1610 = vmatpush.msra.mxu0 %v1584
      %1611 = vmatpush.msra.mxu0 %v1583
      %1612 = vmatpush.msra.mxu0 %v1582
      %1613 = vmatpush.msra.mxu0 %v1581
      %1614 = vmatpush.msra.mxu0 %v1580
      %1615 = vmatpush.msra.mxu0 %v1579
      %1616 = vmatmul.f32.gmra.mxu0 %v891
      %v1617 = vpop.f32.mrf.mxu0
      %v1618 = vadd.f32 %v1598, %v1617
      %1619 = vmatmul.f32.gmra.mxu0 %v892
      %v1620 = vpop.f32.mrf.mxu0
      %v1621 = vadd.f32 %v1598, %v1620
      %1622 = vmatmul.f32.gmra.mxu0 %v893
      %v1623 = vpop.f32.mrf.mxu0
      %v1624 = vadd.f32 %v1598, %v1623
      %1625 = vmatmul.f32.gmra.mxu0 %v894
      %v1626 = vpop.f32.mrf.mxu0
      %v1627 = vadd.f32 %v1598, %v1626
      %1628 = vdwg.mxu0
      %s1629 = scalar_lea.vmem %s731, 768
      %v1630 = vld [vmem:[%s1629] sm:$0xff]
      %v1631 = vld [vmem:[%s1629 + $0x8] sm:$0xff]
      %v1632 = vld [vmem:[%s1629 + $0x10] sm:$0xff]
      %v1633 = vld [vmem:[%s1629 + $0x18] sm:$0xff]
      %v1634 = vld [vmem:[%s1629 + $0x20] sm:$0xff]
      %v1635 = vld [vmem:[%s1629 + $0x28] sm:$0xff]
      %v1636 = vld [vmem:[%s1629 + $0x30] sm:$0xff]
      %v1637 = vld [vmem:[%s1629 + $0x38] sm:$0xff]
      %v1638 = vld [vmem:[%s1629 + $0x40] sm:$0xff]
      %v1639 = vld [vmem:[%s1629 + $0x48] sm:$0xff]
      %v1640 = vld [vmem:[%s1629 + $0x50] sm:$0xff]
      %v1641 = vld [vmem:[%s1629 + $0x58] sm:$0xff]
      %v1642 = vld [vmem:[%s1629 + $0x60] sm:$0xff]
      %v1643 = vld [vmem:[%s1629 + $0x68] sm:$0xff]
      %v1644 = vld [vmem:[%s1629 + $0x70] sm:$0xff]
      %v1645 = vld [vmem:[%s1629 + $0x78] sm:$0xff]
      %s1646 = scalar_lea.vmem %s735, 6
      %v1647 = vld [vmem:[%s1646] sm:$0x1]
      %v1649 = vperm.slane %v1647, 0
      %1651 = vmatpush.msra.mxu0 %v1645
      %1652 = vmatpush.msra.mxu0 %v1644
      %1653 = vmatpush.msra.mxu0 %v1643
      %1654 = vmatpush.msra.mxu0 %v1642
      %1655 = vmatpush.msra.mxu0 %v1641
      %1656 = vmatpush.msra.mxu0 %v1640
      %1657 = vmatpush.msra.mxu0 %v1639
      %1658 = vmatpush.msra.mxu0 %v1638
      %1659 = vmatpush.msra.mxu0 %v1637
      %1660 = vmatpush.msra.mxu0 %v1636
      %1661 = vmatpush.msra.mxu0 %v1635
      %1662 = vmatpush.msra.mxu0 %v1634
      %1663 = vmatpush.msra.mxu0 %v1633
      %1664 = vmatpush.msra.mxu0 %v1632
      %1665 = vmatpush.msra.mxu0 %v1631
      %1666 = vmatpush.msra.mxu0 %v1630
      %1667 = vmatmul.f32.gmra.mxu0 %v891
      %v1668 = vpop.f32.mrf.mxu0
      %v1669 = vadd.f32 %v1649, %v1668
      %1670 = vmatmul.f32.gmra.mxu0 %v892
      %v1671 = vpop.f32.mrf.mxu0
      %v1672 = vadd.f32 %v1649, %v1671
      %1673 = vmatmul.f32.gmra.mxu0 %v893
      %v1674 = vpop.f32.mrf.mxu0
      %v1675 = vadd.f32 %v1649, %v1674
      %1676 = vmatmul.f32.gmra.mxu0 %v894
      %v1677 = vpop.f32.mrf.mxu0
      %v1678 = vadd.f32 %v1649, %v1677
      %1679 = vdwg.mxu0
      %s1680 = scalar_lea.vmem %s731, 1280
      %v1681 = vld [vmem:[%s1680] sm:$0xff]
      %v1682 = vld [vmem:[%s1680 + $0x8] sm:$0xff]
      %v1683 = vld [vmem:[%s1680 + $0x10] sm:$0xff]
      %v1684 = vld [vmem:[%s1680 + $0x18] sm:$0xff]
      %v1685 = vld [vmem:[%s1680 + $0x20] sm:$0xff]
      %v1686 = vld [vmem:[%s1680 + $0x28] sm:$0xff]
      %v1687 = vld [vmem:[%s1680 + $0x30] sm:$0xff]
      %v1688 = vld [vmem:[%s1680 + $0x38] sm:$0xff]
      %v1689 = vld [vmem:[%s1680 + $0x40] sm:$0xff]
      %v1690 = vld [vmem:[%s1680 + $0x48] sm:$0xff]
      %v1691 = vld [vmem:[%s1680 + $0x50] sm:$0xff]
      %v1692 = vld [vmem:[%s1680 + $0x58] sm:$0xff]
      %v1693 = vld [vmem:[%s1680 + $0x60] sm:$0xff]
      %v1694 = vld [vmem:[%s1680 + $0x68] sm:$0xff]
      %v1695 = vld [vmem:[%s1680 + $0x70] sm:$0xff]
      %v1696 = vld [vmem:[%s1680 + $0x78] sm:$0xff]
      %s1697 = scalar_lea.vmem %s735, 10
      %v1698 = vld [vmem:[%s1697] sm:$0x1]
      %v1700 = vperm.slane %v1698, 0
      %1702 = vmatpush.msra.mxu0 %v1696
      %1703 = vmatpush.msra.mxu0 %v1695
      %1704 = vmatpush.msra.mxu0 %v1694
      %1705 = vmatpush.msra.mxu0 %v1693
      %1706 = vmatpush.msra.mxu0 %v1692
      %1707 = vmatpush.msra.mxu0 %v1691
      %1708 = vmatpush.msra.mxu0 %v1690
      %1709 = vmatpush.msra.mxu0 %v1689
      %1710 = vmatpush.msra.mxu0 %v1688
      %1711 = vmatpush.msra.mxu0 %v1687
      %1712 = vmatpush.msra.mxu0 %v1686
      %1713 = vmatpush.msra.mxu0 %v1685
      %1714 = vmatpush.msra.mxu0 %v1684
      %1715 = vmatpush.msra.mxu0 %v1683
      %1716 = vmatpush.msra.mxu0 %v1682
      %1717 = vmatpush.msra.mxu0 %v1681
      %1718 = vmatmul.f32.gmra.mxu0 %v891
      %v1719 = vpop.f32.mrf.mxu0
      %v1720 = vadd.f32 %v1700, %v1719
      %1721 = vmatmul.f32.gmra.mxu0 %v892
      %v1722 = vpop.f32.mrf.mxu0
      %v1723 = vadd.f32 %v1700, %v1722
      %1724 = vmatmul.f32.gmra.mxu0 %v893
      %v1725 = vpop.f32.mrf.mxu0
      %v1726 = vadd.f32 %v1700, %v1725
      %1727 = vmatmul.f32.gmra.mxu0 %v894
      %v1728 = vpop.f32.mrf.mxu0
      %v1729 = vadd.f32 %v1700, %v1728
      %1730 = vdwg.mxu0
      %v1731 = vmul.f32 %v1618, 0.4082483
      %v1732 = vmul.f32 %v1621, 0.4082483
      %v1733 = vmul.f32 %v1624, 0.4082483
      %v1734 = vmul.f32 %v1627, 0.4082483
      %v1736 = vsel %vm1053, %v1731, 0
      %v1739 = vsel %vm1053, %v1732, 0
      %v1742 = vsel %vm1053, %v1733, 0
      %v1745 = vsel %vm1053, %v1734, 0
      %v1748 = vsel %vm1053, %v1669, 0
      %v1751 = vsel %vm1053, %v1672, 0
      %v1754 = vsel %vm1053, %v1675, 0
      %v1757 = vsel %vm1053, %v1678, 0
      %1759 = vmatpush.xpose.msra.mxu0 0.0
      %1760 = vmatpush.xpose.msra.mxu0 0.0
      %1761 = vmatpush.xpose.msra.mxu0 0.0
      %1762 = vmatpush.xpose.msra.mxu0 0.0
      %1763 = vmatpush.xpose.msra.mxu0 0.0
      %1764 = vmatpush.xpose.msra.mxu0 0.0
      %1765 = vmatpush.xpose.msra.mxu0 0.0
      %1766 = vmatpush.xpose.msra.mxu0 0.0
      %1767 = vmatpush.xpose.msra.mxu0 0.0
      %1768 = vmatpush.xpose.msra.mxu0 0.0
      %1769 = vmatpush.xpose.msra.mxu0 0.0
      %1770 = vmatpush.xpose.msra.mxu0 0.0
      %1771 = vmatpush.xpose.msra.mxu0 %v1757
      %1772 = vmatpush.xpose.msra.mxu0 %v1754
      %1773 = vmatpush.xpose.msra.mxu0 %v1751
      %1774 = vmatpush.xpose.msra.mxu0 %v1748
      %1775 = vmatmul.f32.gmra.mxu0 %v1736
      %v1776 = vpop.f32.mrf.mxu0
      %v1777 = vadd.f32 %v1051, %v1776
      %1778 = vmatmul.f32.gmra.mxu0 %v1739
      %v1779 = vpop.f32.mrf.mxu0
      %v1780 = vadd.f32 %v1051, %v1779
      %1781 = vmatmul.f32.gmra.mxu0 %v1742
      %v1782 = vpop.f32.mrf.mxu0
      %v1783 = vadd.f32 %v1051, %v1782
      %1784 = vmatmul.f32.gmra.mxu0 %v1745
      %v1785 = vpop.f32.mrf.mxu0
      %v1786 = vadd.f32 %v1051, %v1785
      %1787 = vdwg.mxu0
      %v1788 = vsel %vm1053, %v1777, -inf
      %1789 = vmax.xlane.f32.xlu0 %v1788
      %v1790 = vpop.xlane.xlu0 %1789
      %v1791 = vsel %vm1053, %v1780, -inf
      %1792 = vmax.xlane.f32.xlu0 %v1791
      %v1793 = vpop.xlane.xlu0 %1792
      %v1794 = vsel %vm1053, %v1783, -inf
      %1795 = vmax.xlane.f32.xlu0 %v1794
      %v1796 = vpop.xlane.xlu0 %1795
      %v1797 = vsel %vm1053, %v1786, -inf
      %1798 = vmax.xlane.f32.xlu0 %v1797
      %v1799 = vpop.xlane.xlu0 %1798
      %v1800 = vsub.f32 %v1777, %v1790
      %v1801 = vsub.f32 %v1780, %v1793
      %v1802 = vsub.f32 %v1783, %v1796
      %v1803 = vsub.f32 %v1786, %v1799
      %v1804 = vmul.f32 %v1800, 1.442695
      %v1805 = vpow.pop %v1804
      %v1806 = vmul.f32 %v1801, 1.442695
      %v1807 = vpow.pop %v1806
      %v1808 = vmul.f32 %v1802, 1.442695
      %v1809 = vpow.pop %v1808
      %v1810 = vmul.f32 %v1803, 1.442695
      %v1811 = vpow.pop %v1810
      %v1812 = vsel %vm1053, %v1805, 0.0
      %1813 = vadd.xlane.f32.xlu0 %v1812
      %v1814 = vpop.xlane.xlu0 %1813
      %v1815 = vsel %vm1053, %v1807, 0.0
      %1816 = vadd.xlane.f32.xlu0 %v1815
      %v1817 = vpop.xlane.xlu0 %1816
      %v1818 = vsel %vm1053, %v1809, 0.0
      %1819 = vadd.xlane.f32.xlu0 %v1818
      %v1820 = vpop.xlane.xlu0 %1819
      %v1821 = vsel %vm1053, %v1811, 0.0
      %1822 = vadd.xlane.f32.xlu0 %v1821
      %v1823 = vpop.xlane.xlu0 %1822
      %v1824 = vrcp.pop %v1814
      %v1825 = vrcp.pop %v1817
      %v1826 = vrcp.pop %v1820
      %v1827 = vrcp.pop %v1823
      %v1828 = vmul.f32 %v1805, %v1824
      %v1829 = vmul.f32 %v1807, %v1825
      %v1830 = vmul.f32 %v1809, %v1826
      %v1831 = vmul.f32 %v1811, %v1827
      %v1833 = vsel %vm1053, %v1828, 0
      %v1836 = vsel %vm1053, %v1829, 0
      %v1839 = vsel %vm1053, %v1830, 0
      %v1842 = vsel %vm1053, %v1831, 0
      %1844 = vmatpush.msra.mxu0 0.0
      %1845 = vmatpush.msra.mxu0 0.0
      %1846 = vmatpush.msra.mxu0 0.0
      %1847 = vmatpush.msra.mxu0 0.0
      %1848 = vmatpush.msra.mxu0 0.0
      %1849 = vmatpush.msra.mxu0 0.0
      %1850 = vmatpush.msra.mxu0 0.0
      %1851 = vmatpush.msra.mxu0 0.0
      %1852 = vmatpush.msra.mxu0 0.0
      %1853 = vmatpush.msra.mxu0 0.0
      %1854 = vmatpush.msra.mxu0 0.0
      %1855 = vmatpush.msra.mxu0 0.0
      %1856 = vmatpush.msra.mxu0 %v1729
      %1857 = vmatpush.msra.mxu0 %v1726
      %1858 = vmatpush.msra.mxu0 %v1723
      %1859 = vmatpush.msra.mxu0 %v1720
      %1860 = vmatmul.f32.gmra.mxu0 %v1833
      %v1861 = vpop.f32.mrf.mxu0
      %v1862 = vadd.f32 0.0, %v1861
      %1863 = vmatmul.f32.gmra.mxu0 %v1836
      %v1864 = vpop.f32.mrf.mxu0
      %v1865 = vadd.f32 0.0, %v1864
      %1866 = vmatmul.f32.gmra.mxu0 %v1839
      %v1867 = vpop.f32.mrf.mxu0
      %v1868 = vadd.f32 0.0, %v1867
      %1869 = vmatmul.f32.gmra.mxu0 %v1842
      %v1870 = vpop.f32.mrf.mxu0
      %v1871 = vadd.f32 0.0, %v1870
      %1872 = vdwg.mxu0
      %s1873 = scalar_lea.vmem %s740, 64
      %v1874 = vld [vmem:[%s1873] sm:$0xff]
      %v1875 = vld [vmem:[%s1873 + $0x8] sm:$0xff]
      %v1876 = vld [vmem:[%s1873 + $0x10] sm:$0xff]
      %v1877 = vld [vmem:[%s1873 + $0x18] sm:$0xff]
      %v1879 = vsel %vm1053, %v1862, 0
      %v1882 = vsel %vm1053, %v1865, 0
      %v1885 = vsel %vm1053, %v1868, 0
      %v1888 = vsel %vm1053, %v1871, 0
      %1890 = vmatpush.msra.mxu0 0.0
      %1891 = vmatpush.msra.mxu0 0.0
      %1892 = vmatpush.msra.mxu0 0.0
      %1893 = vmatpush.msra.mxu0 0.0
      %1894 = vmatpush.msra.mxu0 0.0
      %1895 = vmatpush.msra.mxu0 0.0
      %1896 = vmatpush.msra.mxu0 0.0
      %1897 = vmatpush.msra.mxu0 0.0
      %1898 = vmatpush.msra.mxu0 0.0
      %1899 = vmatpush.msra.mxu0 0.0
      %1900 = vmatpush.msra.mxu0 0.0
      %1901 = vmatpush.msra.mxu0 0.0
      %1902 = vmatpush.msra.mxu0 %v1877
      %1903 = vmatpush.msra.mxu0 %v1876
      %1904 = vmatpush.msra.mxu0 %v1875
      %1905 = vmatpush.msra.mxu0 %v1874
      %1906 = vmatmul.f32.gmra.mxu0 %v1879
      %v1907 = vpop.f32.mrf.mxu0
      %v1908 = vadd.f32 0.0, %v1907
      %1909 = vmatmul.f32.gmra.mxu0 %v1882
      %v1910 = vpop.f32.mrf.mxu0
      %v1911 = vadd.f32 0.0, %v1910
      %1912 = vmatmul.f32.gmra.mxu0 %v1885
      %v1913 = vpop.f32.mrf.mxu0
      %v1914 = vadd.f32 0.0, %v1913
      %1915 = vmatmul.f32.gmra.mxu0 %v1888
      %v1916 = vpop.f32.mrf.mxu0
      %v1917 = vadd.f32 0.0, %v1916
      %1918 = vdwg.mxu0
      %v1919 = vadd.f32 %v1567, %v1908
      %v1920 = vadd.f32 %v1570, %v1911
      %v1921 = vadd.f32 %v1573, %v1914
      %v1922 = vadd.f32 %v1576, %v1917
      %s1923 = scalar_lea.vmem %s731, 384
      %v1924 = vld [vmem:[%s1923] sm:$0xff]
      %v1925 = vld [vmem:[%s1923 + $0x8] sm:$0xff]
      %v1926 = vld [vmem:[%s1923 + $0x10] sm:$0xff]
      %v1927 = vld [vmem:[%s1923 + $0x18] sm:$0xff]
      %v1928 = vld [vmem:[%s1923 + $0x20] sm:$0xff]
      %v1929 = vld [vmem:[%s1923 + $0x28] sm:$0xff]
      %v1930 = vld [vmem:[%s1923 + $0x30] sm:$0xff]
      %v1931 = vld [vmem:[%s1923 + $0x38] sm:$0xff]
      %v1932 = vld [vmem:[%s1923 + $0x40] sm:$0xff]
      %v1933 = vld [vmem:[%s1923 + $0x48] sm:$0xff]
      %v1934 = vld [vmem:[%s1923 + $0x50] sm:$0xff]
      %v1935 = vld [vmem:[%s1923 + $0x58] sm:$0xff]
      %v1936 = vld [vmem:[%s1923 + $0x60] sm:$0xff]
      %v1937 = vld [vmem:[%s1923 + $0x68] sm:$0xff]
      %v1938 = vld [vmem:[%s1923 + $0x70] sm:$0xff]
      %v1939 = vld [vmem:[%s1923 + $0x78] sm:$0xff]
      %s1940 = scalar_lea.vmem %s735, 3
      %v1941 = vld [vmem:[%s1940] sm:$0x1]
      %v1943 = vperm.slane %v1941, 0
      %1945 = vmatpush.msra.mxu0 %v1939
      %1946 = vmatpush.msra.mxu0 %v1938
      %1947 = vmatpush.msra.mxu0 %v1937
      %1948 = vmatpush.msra.mxu0 %v1936
      %1949 = vmatpush.msra.mxu0 %v1935
      %1950 = vmatpush.msra.mxu0 %v1934
      %1951 = vmatpush.msra.mxu0 %v1933
      %1952 = vmatpush.msra.mxu0 %v1932
      %1953 = vmatpush.msra.mxu0 %v1931
      %1954 = vmatpush.msra.mxu0 %v1930
      %1955 = vmatpush.msra.mxu0 %v1929
      %1956 = vmatpush.msra.mxu0 %v1928
      %1957 = vmatpush.msra.mxu0 %v1927
      %1958 = vmatpush.msra.mxu0 %v1926
      %1959 = vmatpush.msra.mxu0 %v1925
      %1960 = vmatpush.msra.mxu0 %v1924
      %1961 = vmatmul.f32.gmra.mxu0 %v891
      %v1962 = vpop.f32.mrf.mxu0
      %v1963 = vadd.f32 %v1943, %v1962
      %1964 = vmatmul.f32.gmra.mxu0 %v892
      %v1965 = vpop.f32.mrf.mxu0
      %v1966 = vadd.f32 %v1943, %v1965
      %1967 = vmatmul.f32.gmra.mxu0 %v893
      %v1968 = vpop.f32.mrf.mxu0
      %v1969 = vadd.f32 %v1943, %v1968
      %1970 = vmatmul.f32.gmra.mxu0 %v894
      %v1971 = vpop.f32.mrf.mxu0
      %v1972 = vadd.f32 %v1943, %v1971
      %1973 = vdwg.mxu0
      %s1974 = scalar_lea.vmem %s731, 896
      %v1975 = vld [vmem:[%s1974] sm:$0xff]
      %v1976 = vld [vmem:[%s1974 + $0x8] sm:$0xff]
      %v1977 = vld [vmem:[%s1974 + $0x10] sm:$0xff]
      %v1978 = vld [vmem:[%s1974 + $0x18] sm:$0xff]
      %v1979 = vld [vmem:[%s1974 + $0x20] sm:$0xff]
      %v1980 = vld [vmem:[%s1974 + $0x28] sm:$0xff]
      %v1981 = vld [vmem:[%s1974 + $0x30] sm:$0xff]
      %v1982 = vld [vmem:[%s1974 + $0x38] sm:$0xff]
      %v1983 = vld [vmem:[%s1974 + $0x40] sm:$0xff]
      %v1984 = vld [vmem:[%s1974 + $0x48] sm:$0xff]
      %v1985 = vld [vmem:[%s1974 + $0x50] sm:$0xff]
      %v1986 = vld [vmem:[%s1974 + $0x58] sm:$0xff]
      %v1987 = vld [vmem:[%s1974 + $0x60] sm:$0xff]
      %v1988 = vld [vmem:[%s1974 + $0x68] sm:$0xff]
      %v1989 = vld [vmem:[%s1974 + $0x70] sm:$0xff]
      %v1990 = vld [vmem:[%s1974 + $0x78] sm:$0xff]
      %s1991 = scalar_lea.vmem %s735, 7
      %v1992 = vld [vmem:[%s1991] sm:$0x1]
      %v1994 = vperm.slane %v1992, 0
      %1996 = vmatpush.msra.mxu0 %v1990
      %1997 = vmatpush.msra.mxu0 %v1989
      %1998 = vmatpush.msra.mxu0 %v1988
      %1999 = vmatpush.msra.mxu0 %v1987
      %2000 = vmatpush.msra.mxu0 %v1986
      %2001 = vmatpush.msra.mxu0 %v1985
      %2002 = vmatpush.msra.mxu0 %v1984
      %2003 = vmatpush.msra.mxu0 %v1983
      %2004 = vmatpush.msra.mxu0 %v1982
      %2005 = vmatpush.msra.mxu0 %v1981
      %2006 = vmatpush.msra.mxu0 %v1980
      %2007 = vmatpush.msra.mxu0 %v1979
      %2008 = vmatpush.msra.mxu0 %v1978
      %2009 = vmatpush.msra.mxu0 %v1977
      %2010 = vmatpush.msra.mxu0 %v1976
      %2011 = vmatpush.msra.mxu0 %v1975
      %2012 = vmatmul.f32.gmra.mxu0 %v891
      %v2013 = vpop.f32.mrf.mxu0
      %v2014 = vadd.f32 %v1994, %v2013
      %2015 = vmatmul.f32.gmra.mxu0 %v892
      %v2016 = vpop.f32.mrf.mxu0
      %v2017 = vadd.f32 %v1994, %v2016
      %2018 = vmatmul.f32.gmra.mxu0 %v893
      %v2019 = vpop.f32.mrf.mxu0
      %v2020 = vadd.f32 %v1994, %v2019
      %2021 = vmatmul.f32.gmra.mxu0 %v894
      %v2022 = vpop.f32.mrf.mxu0
      %v2023 = vadd.f32 %v1994, %v2022
      %2024 = vdwg.mxu0
      %s2025 = scalar_lea.vmem %s731, 1408
      %v2026 = vld [vmem:[%s2025] sm:$0xff]
      %v2027 = vld [vmem:[%s2025 + $0x8] sm:$0xff]
      %v2028 = vld [vmem:[%s2025 + $0x10] sm:$0xff]
      %v2029 = vld [vmem:[%s2025 + $0x18] sm:$0xff]
      %v2030 = vld [vmem:[%s2025 + $0x20] sm:$0xff]
      %v2031 = vld [vmem:[%s2025 + $0x28] sm:$0xff]
      %v2032 = vld [vmem:[%s2025 + $0x30] sm:$0xff]
      %v2033 = vld [vmem:[%s2025 + $0x38] sm:$0xff]
      %v2034 = vld [vmem:[%s2025 + $0x40] sm:$0xff]
      %v2035 = vld [vmem:[%s2025 + $0x48] sm:$0xff]
      %v2036 = vld [vmem:[%s2025 + $0x50] sm:$0xff]
      %v2037 = vld [vmem:[%s2025 + $0x58] sm:$0xff]
      %v2038 = vld [vmem:[%s2025 + $0x60] sm:$0xff]
      %v2039 = vld [vmem:[%s2025 + $0x68] sm:$0xff]
      %v2040 = vld [vmem:[%s2025 + $0x70] sm:$0xff]
      %v2041 = vld [vmem:[%s2025 + $0x78] sm:$0xff]
      %s2042 = scalar_lea.vmem %s735, 11
      %v2043 = vld [vmem:[%s2042] sm:$0x1]
      %v2045 = vperm.slane %v2043, 0
      %2047 = vmatpush.msra.mxu0 %v2041
      %2048 = vmatpush.msra.mxu0 %v2040
      %2049 = vmatpush.msra.mxu0 %v2039
      %2050 = vmatpush.msra.mxu0 %v2038
      %2051 = vmatpush.msra.mxu0 %v2037
      %2052 = vmatpush.msra.mxu0 %v2036
      %2053 = vmatpush.msra.mxu0 %v2035
      %2054 = vmatpush.msra.mxu0 %v2034
      %2055 = vmatpush.msra.mxu0 %v2033
      %2056 = vmatpush.msra.mxu0 %v2032
      %2057 = vmatpush.msra.mxu0 %v2031
      %2058 = vmatpush.msra.mxu0 %v2030
      %2059 = vmatpush.msra.mxu0 %v2029
      %2060 = vmatpush.msra.mxu0 %v2028
      %2061 = vmatpush.msra.mxu0 %v2027
      %2062 = vmatpush.msra.mxu0 %v2026
      %2063 = vmatmul.f32.gmra.mxu0 %v891
      %v2064 = vpop.f32.mrf.mxu0
      %v2065 = vadd.f32 %v2045, %v2064
      %2066 = vmatmul.f32.gmra.mxu0 %v892
      %v2067 = vpop.f32.mrf.mxu0
      %v2068 = vadd.f32 %v2045, %v2067
      %2069 = vmatmul.f32.gmra.mxu0 %v893
      %v2070 = vpop.f32.mrf.mxu0
      %v2071 = vadd.f32 %v2045, %v2070
      %2072 = vmatmul.f32.gmra.mxu0 %v894
      %v2073 = vpop.f32.mrf.mxu0
      %v2074 = vadd.f32 %v2045, %v2073
      %2075 = vdwg.mxu0
      %v2076 = vmul.f32 %v1963, 0.4082483
      %v2077 = vmul.f32 %v1966, 0.4082483
      %v2078 = vmul.f32 %v1969, 0.4082483
      %v2079 = vmul.f32 %v1972, 0.4082483
      %v2081 = vsel %vm1053, %v2076, 0
      %v2084 = vsel %vm1053, %v2077, 0
      %v2087 = vsel %vm1053, %v2078, 0
      %v2090 = vsel %vm1053, %v2079, 0
      %v2093 = vsel %vm1053, %v2014, 0
      %v2096 = vsel %vm1053, %v2017, 0
      %v2099 = vsel %vm1053, %v2020, 0
      %v2102 = vsel %vm1053, %v2023, 0
      %2104 = vmatpush.xpose.msra.mxu0 0.0
      %2105 = vmatpush.xpose.msra.mxu0 0.0
      %2106 = vmatpush.xpose.msra.mxu0 0.0
      %2107 = vmatpush.xpose.msra.mxu0 0.0
      %2108 = vmatpush.xpose.msra.mxu0 0.0
      %2109 = vmatpush.xpose.msra.mxu0 0.0
      %2110 = vmatpush.xpose.msra.mxu0 0.0
      %2111 = vmatpush.xpose.msra.mxu0 0.0
      %2112 = vmatpush.xpose.msra.mxu0 0.0
      %2113 = vmatpush.xpose.msra.mxu0 0.0
      %2114 = vmatpush.xpose.msra.mxu0 0.0
      %2115 = vmatpush.xpose.msra.mxu0 0.0
      %2116 = vmatpush.xpose.msra.mxu0 %v2102
      %2117 = vmatpush.xpose.msra.mxu0 %v2099
      %2118 = vmatpush.xpose.msra.mxu0 %v2096
      %2119 = vmatpush.xpose.msra.mxu0 %v2093
      %2120 = vmatmul.f32.gmra.mxu0 %v2081
      %v2121 = vpop.f32.mrf.mxu0
      %v2122 = vadd.f32 %v1051, %v2121
      %2123 = vmatmul.f32.gmra.mxu0 %v2084
      %v2124 = vpop.f32.mrf.mxu0
      %v2125 = vadd.f32 %v1051, %v2124
      %2126 = vmatmul.f32.gmra.mxu0 %v2087
      %v2127 = vpop.f32.mrf.mxu0
      %v2128 = vadd.f32 %v1051, %v2127
      %2129 = vmatmul.f32.gmra.mxu0 %v2090
      %v2130 = vpop.f32.mrf.mxu0
      %v2131 = vadd.f32 %v1051, %v2130
      %2132 = vdwg.mxu0
      %v2133 = vsel %vm1053, %v2122, -inf
      %2134 = vmax.xlane.f32.xlu0 %v2133
      %v2135 = vpop.xlane.xlu0 %2134
      %v2136 = vsel %vm1053, %v2125, -inf
      %2137 = vmax.xlane.f32.xlu0 %v2136
      %v2138 = vpop.xlane.xlu0 %2137
      %v2139 = vsel %vm1053, %v2128, -inf
      %2140 = vmax.xlane.f32.xlu0 %v2139
      %v2141 = vpop.xlane.xlu0 %2140
      %v2142 = vsel %vm1053, %v2131, -inf
      %2143 = vmax.xlane.f32.xlu0 %v2142
      %v2144 = vpop.xlane.xlu0 %2143
      %v2145 = vsub.f32 %v2122, %v2135
      %v2146 = vsub.f32 %v2125, %v2138
      %v2147 = vsub.f32 %v2128, %v2141
      %v2148 = vsub.f32 %v2131, %v2144
      %v2149 = vmul.f32 %v2145, 1.442695
      %v2150 = vpow.pop %v2149
      %v2151 = vmul.f32 %v2146, 1.442695
      %v2152 = vpow.pop %v2151
      %v2153 = vmul.f32 %v2147, 1.442695
      %v2154 = vpow.pop %v2153
      %v2155 = vmul.f32 %v2148, 1.442695
      %v2156 = vpow.pop %v2155
      %v2157 = vsel %vm1053, %v2150, 0.0
      %2158 = vadd.xlane.f32.xlu0 %v2157
      %v2159 = vpop.xlane.xlu0 %2158
      %v2160 = vsel %vm1053, %v2152, 0.0
      %2161 = vadd.xlane.f32.xlu0 %v2160
      %v2162 = vpop.xlane.xlu0 %2161
      %v2163 = vsel %vm1053, %v2154, 0.0
      %2164 = vadd.xlane.f32.xlu0 %v2163
      %v2165 = vpop.xlane.xlu0 %2164
      %v2166 = vsel %vm1053, %v2156, 0.0
      %2167 = vadd.xlane.f32.xlu0 %v2166
      %v2168 = vpop.xlane.xlu0 %2167
      %v2169 = vrcp.pop %v2159
      %v2170 = vrcp.pop %v2162
      %v2171 = vrcp.pop %v2165
      %v2172 = vrcp.pop %v2168
      %v2173 = vmul.f32 %v2150, %v2169
      %v2174 = vmul.f32 %v2152, %v2170
      %v2175 = vmul.f32 %v2154, %v2171
      %v2176 = vmul.f32 %v2156, %v2172
      %v2178 = vsel %vm1053, %v2173, 0
      %v2181 = vsel %vm1053, %v2174, 0
      %v2184 = vsel %vm1053, %v2175, 0
      %v2187 = vsel %vm1053, %v2176, 0
      %2189 = vmatpush.msra.mxu0 0.0
      %2190 = vmatpush.msra.mxu0 0.0
      %2191 = vmatpush.msra.mxu0 0.0
      %2192 = vmatpush.msra.mxu0 0.0
      %2193 = vmatpush.msra.mxu0 0.0
      %2194 = vmatpush.msra.mxu0 0.0
      %2195 = vmatpush.msra.mxu0 0.0
      %2196 = vmatpush.msra.mxu0 0.0
      %2197 = vmatpush.msra.mxu0 0.0
      %2198 = vmatpush.msra.mxu0 0.0
      %2199 = vmatpush.msra.mxu0 0.0
      %2200 = vmatpush.msra.mxu0 0.0
      %2201 = vmatpush.msra.mxu0 %v2074
      %2202 = vmatpush.msra.mxu0 %v2071
      %2203 = vmatpush.msra.mxu0 %v2068
      %2204 = vmatpush.msra.mxu0 %v2065
      %2205 = vmatmul.f32.gmra.mxu0 %v2178
      %v2206 = vpop.f32.mrf.mxu0
      %v2207 = vadd.f32 0.0, %v2206
      %2208 = vmatmul.f32.gmra.mxu0 %v2181
      %v2209 = vpop.f32.mrf.mxu0
      %v2210 = vadd.f32 0.0, %v2209
      %2211 = vmatmul.f32.gmra.mxu0 %v2184
      %v2212 = vpop.f32.mrf.mxu0
      %v2213 = vadd.f32 0.0, %v2212
      %2214 = vmatmul.f32.gmra.mxu0 %v2187
      %v2215 = vpop.f32.mrf.mxu0
      %v2216 = vadd.f32 0.0, %v2215
      %2217 = vdwg.mxu0
      %s2218 = scalar_lea.vmem %s740, 96
      %v2219 = vld [vmem:[%s2218] sm:$0xff]
      %v2220 = vld [vmem:[%s2218 + $0x8] sm:$0xff]
      %v2221 = vld [vmem:[%s2218 + $0x10] sm:$0xff]
      %v2222 = vld [vmem:[%s2218 + $0x18] sm:$0xff]
      %v2224 = vsel %vm1053, %v2207, 0
      %v2227 = vsel %vm1053, %v2210, 0
      %v2230 = vsel %vm1053, %v2213, 0
      %v2233 = vsel %vm1053, %v2216, 0
      %2235 = vmatpush.msra.mxu0 0.0
      %2236 = vmatpush.msra.mxu0 0.0
      %2237 = vmatpush.msra.mxu0 0.0
      %2238 = vmatpush.msra.mxu0 0.0
      %2239 = vmatpush.msra.mxu0 0.0
      %2240 = vmatpush.msra.mxu0 0.0
      %2241 = vmatpush.msra.mxu0 0.0
      %2242 = vmatpush.msra.mxu0 0.0
      %2243 = vmatpush.msra.mxu0 0.0
      %2244 = vmatpush.msra.mxu0 0.0
      %2245 = vmatpush.msra.mxu0 0.0
      %2246 = vmatpush.msra.mxu0 0.0
      %2247 = vmatpush.msra.mxu0 %v2222
      %2248 = vmatpush.msra.mxu0 %v2221
      %2249 = vmatpush.msra.mxu0 %v2220
      %2250 = vmatpush.msra.mxu0 %v2219
      %2251 = vmatmul.f32.gmra.mxu0 %v2224
      %v2252 = vpop.f32.mrf.mxu0
      %v2253 = vadd.f32 0.0, %v2252
      %2254 = vmatmul.f32.gmra.mxu0 %v2227
      %v2255 = vpop.f32.mrf.mxu0
      %v2256 = vadd.f32 0.0, %v2255
      %2257 = vmatmul.f32.gmra.mxu0 %v2230
      %v2258 = vpop.f32.mrf.mxu0
      %v2259 = vadd.f32 0.0, %v2258
      %2260 = vmatmul.f32.gmra.mxu0 %v2233
      %v2261 = vpop.f32.mrf.mxu0
      %v2262 = vadd.f32 0.0, %v2261
      %2263 = vdwg.mxu0
      %v2264 = vadd.f32 %v1919, %v2253
      %v2265 = vadd.f32 %v1920, %v2256
      %v2266 = vadd.f32 %v1921, %v2259
      %v2267 = vadd.f32 %v1922, %v2262
      %v2268 = vadd.f32 %v786, %v2264
      %v2269 = vadd.f32 %v787, %v2265
      %v2270 = vadd.f32 %v788, %v2266
      %v2271 = vadd.f32 %v789, %v2267
      %v2272 = vld [vmem:[%s743] sm:$0x1]
      %v2274 = vperm.slane %v2272, 0
      %v2276 = vadd.f32 %v2268, %v2274
      %v2277 = vadd.f32 %v2269, %v2274
      %v2278 = vadd.f32 %v2270, %v2274
      %v2279 = vadd.f32 %v2271, %v2274
      %v2280 = vld [vmem:[%s747] sm:$0x1]
      %v2281 = vld [vmem:[%s747 + $0x1] sm:$0x1]
      %2282 = vadd.xlane.f32.xlu0 %v2276
      %v2283 = vpop.xlane.xlu0 %2282
      %2284 = vadd.xlane.f32.xlu0 %v2277
      %v2285 = vpop.xlane.xlu0 %2284
      %2286 = vadd.xlane.f32.xlu0 %v2278
      %v2287 = vpop.xlane.xlu0 %2286
      %2288 = vadd.xlane.f32.xlu0 %v2279
      %v2289 = vpop.xlane.xlu0 %2288
      %v2290 = vmul.f32 %v2283, 0.041666668
      %v2291 = vmul.f32 %v2285, 0.041666668
      %v2292 = vmul.f32 %v2287, 0.041666668
      %v2293 = vmul.f32 %v2289, 0.041666668
      %v2294 = vmul.f32 %v2276, %v2276
      %v2295 = vmul.f32 %v2277, %v2277
      %v2296 = vmul.f32 %v2278, %v2278
      %v2297 = vmul.f32 %v2279, %v2279
      %2298 = vadd.xlane.f32.xlu0 %v2294
      %v2299 = vpop.xlane.xlu0 %2298
      %2300 = vadd.xlane.f32.xlu0 %v2295
      %v2301 = vpop.xlane.xlu0 %2300
      %2302 = vadd.xlane.f32.xlu0 %v2296
      %v2303 = vpop.xlane.xlu0 %2302
      %2304 = vadd.xlane.f32.xlu0 %v2297
      %v2305 = vpop.xlane.xlu0 %2304
      %v2306 = vmul.f32 %v2299, 0.041666668
      %v2307 = vmul.f32 %v2301, 0.041666668
      %v2308 = vmul.f32 %v2303, 0.041666668
      %v2309 = vmul.f32 %v2305, 0.041666668
      %v2310 = vmul.f32 %v2290, %v2290
      %v2311 = vmul.f32 %v2291, %v2291
      %v2312 = vmul.f32 %v2292, %v2292
      %v2313 = vmul.f32 %v2293, %v2293
      %v2314 = vsub.f32 %v2306, %v2310
      %v2315 = vsub.f32 %v2307, %v2311
      %v2316 = vsub.f32 %v2308, %v2312
      %v2317 = vsub.f32 %v2309, %v2313
      %v2318 = vmax.f32 %v2314, 0.0
      %v2319 = vmax.f32 %v2315, 0.0
      %v2320 = vmax.f32 %v2316, 0.0
      %v2321 = vmax.f32 %v2317, 0.0
      %v2322 = vsub.f32 %v2276, %v2290
      %v2323 = vsub.f32 %v2277, %v2291
      %v2324 = vsub.f32 %v2278, %v2292
      %v2325 = vsub.f32 %v2279, %v2293
      %v2326 = vadd.f32 %v2318, 1e-05
      %v2327 = vadd.f32 %v2319, 1e-05
      %v2328 = vadd.f32 %v2320, 1e-05
      %v2329 = vadd.f32 %v2321, 1e-05
      %v2330 = vrsqrt.pop %v2326
      %v2331 = vmul.f32 %v2330, %v2326
      %v2332 = vmul.f32 %v2331, %v2330
      %v2333 = vmul.f32 0.5, %v2332
      %v2334 = vsub.f32 1.5, %v2333
      %v2335 = vmul.f32 %v2330, %v2334
      %vm2336 = vweird.f32 %v2326
      %vm2337 = vweird.f32 %v2330
      %vm2338 = vmor %vm2336, %vm2337
      %v2339 = vsel %vm2338, %v2330, %v2335
      %v2340 = vrsqrt.pop %v2327
      %v2341 = vmul.f32 %v2340, %v2327
      %v2342 = vmul.f32 %v2341, %v2340
      %v2343 = vmul.f32 0.5, %v2342
      %v2344 = vsub.f32 1.5, %v2343
      %v2345 = vmul.f32 %v2340, %v2344
      %vm2346 = vweird.f32 %v2327
      %vm2347 = vweird.f32 %v2340
      %vm2348 = vmor %vm2346, %vm2347
      %v2349 = vsel %vm2348, %v2340, %v2345
      %v2350 = vrsqrt.pop %v2328
      %v2351 = vmul.f32 %v2350, %v2328
      %v2352 = vmul.f32 %v2351, %v2350
      %v2353 = vmul.f32 0.5, %v2352
      %v2354 = vsub.f32 1.5, %v2353
      %v2355 = vmul.f32 %v2350, %v2354
      %vm2356 = vweird.f32 %v2328
      %vm2357 = vweird.f32 %v2350
      %vm2358 = vmor %vm2356, %vm2357
      %v2359 = vsel %vm2358, %v2350, %v2355
      %v2360 = vrsqrt.pop %v2329
      %v2361 = vmul.f32 %v2360, %v2329
      %v2362 = vmul.f32 %v2361, %v2360
      %v2363 = vmul.f32 0.5, %v2362
      %v2364 = vsub.f32 1.5, %v2363
      %v2365 = vmul.f32 %v2360, %v2364
      %vm2366 = vweird.f32 %v2329
      %vm2367 = vweird.f32 %v2360
      %vm2368 = vmor %vm2366, %vm2367
      %v2369 = vsel %vm2368, %v2360, %v2365
      %v2370 = vmul.f32 %v2322, %v2339
      %v2371 = vmul.f32 %v2323, %v2349
      %v2372 = vmul.f32 %v2324, %v2359
      %v2373 = vmul.f32 %v2325, %v2369
      %v2374 = vperm.slane %v2280, 0
      %v2375 = vmul.f32 %v2370, %v2374
      %v2376 = vmul.f32 %v2371, %v2374
      %v2377 = vmul.f32 %v2372, %v2374
      %v2378 = vmul.f32 %v2373, %v2374
      %v2379 = vperm.slane %v2281, 0
      %v2380 = vadd.f32 %v2375, %v2379
      %v2381 = vadd.f32 %v2376, %v2379
      %v2382 = vadd.f32 %v2377, %v2379
      %v2383 = vadd.f32 %v2378, %v2379
      %v2384 = vld [vmem:[%s752] sm:$0xff]
      %v2385 = vld [vmem:[%s752 + $0x8] sm:$0xff]
      %v2386 = vld [vmem:[%s752 + $0x10] sm:$0xff]
      %v2387 = vld [vmem:[%s752 + $0x18] sm:$0xff]
      %v2388 = vld [vmem:[%s752 + $0x20] sm:$0xff]
      %v2389 = vld [vmem:[%s752 + $0x28] sm:$0xff]
      %v2390 = vld [vmem:[%s752 + $0x30] sm:$0xff]
      %v2391 = vld [vmem:[%s752 + $0x38] sm:$0xff]
      %v2392 = vld [vmem:[%s752 + $0x40] sm:$0xff]
      %v2393 = vld [vmem:[%s752 + $0x48] sm:$0xff]
      %v2394 = vld [vmem:[%s752 + $0x50] sm:$0xff]
      %v2395 = vld [vmem:[%s752 + $0x58] sm:$0xff]
      %v2396 = vld [vmem:[%s752 + $0x60] sm:$0xff]
      %v2397 = vld [vmem:[%s752 + $0x68] sm:$0xff]
      %v2398 = vld [vmem:[%s752 + $0x70] sm:$0xff]
      %v2399 = vld [vmem:[%s752 + $0x78] sm:$0xff]
      %v2400 = vld [vmem:[%s755] sm:$0x1]
      %v2402 = vperm.slane %v2400, 0
      %2404 = vmatpush.msra.mxu0 %v2399
      %2405 = vmatpush.msra.mxu0 %v2398
      %2406 = vmatpush.msra.mxu0 %v2397
      %2407 = vmatpush.msra.mxu0 %v2396
      %2408 = vmatpush.msra.mxu0 %v2395
      %2409 = vmatpush.msra.mxu0 %v2394
      %2410 = vmatpush.msra.mxu0 %v2393
      %2411 = vmatpush.msra.mxu0 %v2392
      %2412 = vmatpush.msra.mxu0 %v2391
      %2413 = vmatpush.msra.mxu0 %v2390
      %2414 = vmatpush.msra.mxu0 %v2389
      %2415 = vmatpush.msra.mxu0 %v2388
      %2416 = vmatpush.msra.mxu0 %v2387
      %2417 = vmatpush.msra.mxu0 %v2386
      %2418 = vmatpush.msra.mxu0 %v2385
      %2419 = vmatpush.msra.mxu0 %v2384
      %2420 = vmatmul.f32.gmra.mxu0 %v2380
      %v2421 = vpop.f32.mrf.mxu0
      %v2422 = vadd.f32 %v2402, %v2421
      %2423 = vmatmul.f32.gmra.mxu0 %v2381
      %v2424 = vpop.f32.mrf.mxu0
      %v2425 = vadd.f32 %v2402, %v2424
      %2426 = vmatmul.f32.gmra.mxu0 %v2382
      %v2427 = vpop.f32.mrf.mxu0
      %v2428 = vadd.f32 %v2402, %v2427
      %2429 = vmatmul.f32.gmra.mxu0 %v2383
      %v2430 = vpop.f32.mrf.mxu0
      %v2431 = vadd.f32 %v2402, %v2430
      %2432 = vdwg.mxu0
      %v2433 = vmul.f32 %v2422, %v2422
      %v2434 = vmul.f32 %v2425, %v2425
      %v2435 = vmul.f32 %v2428, %v2428
      %v2436 = vmul.f32 %v2431, %v2431
      %v2437 = vmul.f32 %v2422, %v2433
      %v2438 = vmul.f32 %v2425, %v2434
      %v2439 = vmul.f32 %v2428, %v2435
      %v2440 = vmul.f32 %v2431, %v2436
      %v2441 = vmul.f32 %v2437, 0.044715
      %v2442 = vmul.f32 %v2438, 0.044715
      %v2443 = vmul.f32 %v2439, 0.044715
      %v2444 = vmul.f32 %v2440, 0.044715
      %v2445 = vadd.f32 %v2422, %v2441
      %v2446 = vadd.f32 %v2425, %v2442
      %v2447 = vadd.f32 %v2428, %v2443
      %v2448 = vadd.f32 %v2431, %v2444
      %v2449 = vmul.f32 %v2445, 0.7978846
      %v2450 = vmul.f32 %v2446, 0.7978846
      %v2451 = vmul.f32 %v2447, 0.7978846
      %v2452 = vmul.f32 %v2448, 0.7978846
      %v2453 = vtanh.pop %v2449
      %v2454 = vtanh.pop %v2450
      %v2455 = vtanh.pop %v2451
      %v2456 = vtanh.pop %v2452
      %v2457 = vadd.f32 %v2453, 1.0
      %v2458 = vadd.f32 %v2454, 1.0
      %v2459 = vadd.f32 %v2455, 1.0
      %v2460 = vadd.f32 %v2456, 1.0
      %v2461 = vmul.f32 %v2457, 0.5
      %v2462 = vmul.f32 %v2458, 0.5
      %v2463 = vmul.f32 %v2459, 0.5
      %v2464 = vmul.f32 %v2460, 0.5
      %v2465 = vmul.f32 %v2422, %v2461
      %v2466 = vmul.f32 %v2425, %v2462
      %v2467 = vmul.f32 %v2428, %v2463
      %v2468 = vmul.f32 %v2431, %v2464
      %v2469 = vld [vmem:[%s760] sm:$0xff]
      %v2470 = vld [vmem:[%s760 + $0x8] sm:$0xff]
      %v2471 = vld [vmem:[%s760 + $0x10] sm:$0xff]
      %v2472 = vld [vmem:[%s760 + $0x18] sm:$0xff]
      %v2473 = vld [vmem:[%s760 + $0x20] sm:$0xff]
      %v2474 = vld [vmem:[%s760 + $0x28] sm:$0xff]
      %v2475 = vld [vmem:[%s760 + $0x30] sm:$0xff]
      %v2476 = vld [vmem:[%s760 + $0x38] sm:$0xff]
      %v2477 = vld [vmem:[%s760 + $0x40] sm:$0xff]
      %v2478 = vld [vmem:[%s760 + $0x48] sm:$0xff]
      %v2479 = vld [vmem:[%s760 + $0x50] sm:$0xff]
      %v2480 = vld [vmem:[%s760 + $0x58] sm:$0xff]
      %v2481 = vld [vmem:[%s760 + $0x60] sm:$0xff]
      %v2482 = vld [vmem:[%s760 + $0x68] sm:$0xff]
      %v2483 = vld [vmem:[%s760 + $0x70] sm:$0xff]
      %v2484 = vld [vmem:[%s760 + $0x78] sm:$0xff]
      %v2485 = vld [vmem:[%s763] sm:$0x1]
      %v2487 = vperm.slane %v2485, 0
      %2489 = vmatpush.msra.mxu0 %v2484
      %2490 = vmatpush.msra.mxu0 %v2483
      %2491 = vmatpush.msra.mxu0 %v2482
      %2492 = vmatpush.msra.mxu0 %v2481
      %2493 = vmatpush.msra.mxu0 %v2480
      %2494 = vmatpush.msra.mxu0 %v2479
      %2495 = vmatpush.msra.mxu0 %v2478
      %2496 = vmatpush.msra.mxu0 %v2477
      %2497 = vmatpush.msra.mxu0 %v2476
      %2498 = vmatpush.msra.mxu0 %v2475
      %2499 = vmatpush.msra.mxu0 %v2474
      %2500 = vmatpush.msra.mxu0 %v2473
      %2501 = vmatpush.msra.mxu0 %v2472
      %2502 = vmatpush.msra.mxu0 %v2471
      %2503 = vmatpush.msra.mxu0 %v2470
      %2504 = vmatpush.msra.mxu0 %v2469
      %2505 = vmatmul.f32.gmra.mxu0 %v2465
      %v2506 = vpop.f32.mrf.mxu0
      %v2507 = vadd.f32 %v2487, %v2506
      %2508 = vmatmul.f32.gmra.mxu0 %v2466
      %v2509 = vpop.f32.mrf.mxu0
      %v2510 = vadd.f32 %v2487, %v2509
      %2511 = vmatmul.f32.gmra.mxu0 %v2467
      %v2512 = vpop.f32.mrf.mxu0
      %v2513 = vadd.f32 %v2487, %v2512
      %2514 = vmatmul.f32.gmra.mxu0 %v2468
      %v2515 = vpop.f32.mrf.mxu0
      %v2516 = vadd.f32 %v2487, %v2515
      %2517 = vdwg.mxu0
      %v2518 = vadd.f32 %v2276, %v2507
      %v2519 = vadd.f32 %v2277, %v2510
      %v2520 = vadd.f32 %v2278, %v2513
      %v2521 = vadd.f32 %v2279, %v2516
      %2522 = vst [vmem:[#allocation2] sm:$0xff] %v2518
      %2523 = vst [vmem:[#allocation2 + $0x8] sm:$0xff] %v2519
      %2524 = vst [vmem:[#allocation2 + $0x10] sm:$0xff] %v2520
      %2525 = vst [vmem:[#allocation2 + $0x18] sm:$0xff] %v2521
      %p2526 = scmp.eq.s32.totalorder %s35, 1
      // Predicated region
      $region93: #{_lambda_.9} parent=87 // pred_check
        %p2527 = pneg %p2526
      $region94: #{_lambda_.9} parent=87 // pred_check_branch
        %2529 = sbr.rel (%p2527) target = $region96
      $region95: #{_lambda_.9} parent=87 // pred_region
        %v2530 = vld [vmem:[%s12] sm:$0x1]
        %v2531 = vld [vmem:[%s12 + $0x1] sm:$0x1]
        %2532 = vadd.xlane.f32.xlu0 %v2518
        %v2533 = vpop.xlane.xlu0 %2532
        %2534 = vadd.xlane.f32.xlu0 %v2519
        %v2535 = vpop.xlane.xlu0 %2534
        %2536 = vadd.xlane.f32.xlu0 %v2520
        %v2537 = vpop.xlane.xlu0 %2536
        %2538 = vadd.xlane.f32.xlu0 %v2521
        %v2539 = vpop.xlane.xlu0 %2538
        %v2540 = vmul.f32 %v2533, 0.041666668
        %v2541 = vmul.f32 %v2535, 0.041666668
        %v2542 = vmul.f32 %v2537, 0.041666668
        %v2543 = vmul.f32 %v2539, 0.041666668
        %v2544 = vmul.f32 %v2518, %v2518
        %v2545 = vmul.f32 %v2519, %v2519
        %v2546 = vmul.f32 %v2520, %v2520
        %v2547 = vmul.f32 %v2521, %v2521
        %2548 = vadd.xlane.f32.xlu0 %v2544
        %v2549 = vpop.xlane.xlu0 %2548
        %2550 = vadd.xlane.f32.xlu0 %v2545
        %v2551 = vpop.xlane.xlu0 %2550
        %2552 = vadd.xlane.f32.xlu0 %v2546
        %v2553 = vpop.xlane.xlu0 %2552
        %2554 = vadd.xlane.f32.xlu0 %v2547
        %v2555 = vpop.xlane.xlu0 %2554
        %v2556 = vmul.f32 %v2549, 0.041666668
        %v2557 = vmul.f32 %v2551, 0.041666668
        %v2558 = vmul.f32 %v2553, 0.041666668
        %v2559 = vmul.f32 %v2555, 0.041666668
        %v2560 = vmul.f32 %v2540, %v2540
        %v2561 = vmul.f32 %v2541, %v2541
        %v2562 = vmul.f32 %v2542, %v2542
        %v2563 = vmul.f32 %v2543, %v2543
        %v2564 = vsub.f32 %v2556, %v2560
        %v2565 = vsub.f32 %v2557, %v2561
        %v2566 = vsub.f32 %v2558, %v2562
        %v2567 = vsub.f32 %v2559, %v2563
        %v2568 = vmax.f32 %v2564, 0.0
        %v2569 = vmax.f32 %v2565, 0.0
        %v2570 = vmax.f32 %v2566, 0.0
        %v2571 = vmax.f32 %v2567, 0.0
        %v2572 = vsub.f32 %v2518, %v2540
        %v2573 = vsub.f32 %v2519, %v2541
        %v2574 = vsub.f32 %v2520, %v2542
        %v2575 = vsub.f32 %v2521, %v2543
        %v2576 = vadd.f32 %v2568, 1e-05
        %v2577 = vadd.f32 %v2569, 1e-05
        %v2578 = vadd.f32 %v2570, 1e-05
        %v2579 = vadd.f32 %v2571, 1e-05
        %v2580 = vrsqrt.pop %v2576
        %v2581 = vmul.f32 %v2580, %v2576
        %v2582 = vmul.f32 %v2581, %v2580
        %v2583 = vmul.f32 0.5, %v2582
        %v2584 = vsub.f32 1.5, %v2583
        %v2585 = vmul.f32 %v2580, %v2584
        %vm2586 = vweird.f32 %v2576
        %vm2587 = vweird.f32 %v2580
        %vm2588 = vmor %vm2586, %vm2587
        %v2589 = vsel %vm2588, %v2580, %v2585
        %v2590 = vrsqrt.pop %v2577
        %v2591 = vmul.f32 %v2590, %v2577
        %v2592 = vmul.f32 %v2591, %v2590
        %v2593 = vmul.f32 0.5, %v2592
        %v2594 = vsub.f32 1.5, %v2593
        %v2595 = vmul.f32 %v2590, %v2594
        %vm2596 = vweird.f32 %v2577
        %vm2597 = vweird.f32 %v2590
        %vm2598 = vmor %vm2596, %vm2597
        %v2599 = vsel %vm2598, %v2590, %v2595
        %v2600 = vrsqrt.pop %v2578
        %v2601 = vmul.f32 %v2600, %v2578
        %v2602 = vmul.f32 %v2601, %v2600
        %v2603 = vmul.f32 0.5, %v2602
        %v2604 = vsub.f32 1.5, %v2603
        %v2605 = vmul.f32 %v2600, %v2604
        %vm2606 = vweird.f32 %v2578
        %vm2607 = vweird.f32 %v2600
        %vm2608 = vmor %vm2606, %vm2607
        %v2609 = vsel %vm2608, %v2600, %v2605
        %v2610 = vrsqrt.pop %v2579
        %v2611 = vmul.f32 %v2610, %v2579
        %v2612 = vmul.f32 %v2611, %v2610
        %v2613 = vmul.f32 0.5, %v2612
        %v2614 = vsub.f32 1.5, %v2613
        %v2615 = vmul.f32 %v2610, %v2614
        %vm2616 = vweird.f32 %v2579
        %vm2617 = vweird.f32 %v2610
        %vm2618 = vmor %vm2616, %vm2617
        %v2619 = vsel %vm2618, %v2610, %v2615
        %v2620 = vmul.f32 %v2572, %v2589
        %v2621 = vmul.f32 %v2573, %v2599
        %v2622 = vmul.f32 %v2574, %v2609
        %v2623 = vmul.f32 %v2575, %v2619
        %v2624 = vperm.slane %v2530, 0
        %v2625 = vmul.f32 %v2620, %v2624
        %v2626 = vmul.f32 %v2621, %v2624
        %v2627 = vmul.f32 %v2622, %v2624
        %v2628 = vmul.f32 %v2623, %v2624
        %v2629 = vperm.slane %v2531, 0
        %v2630 = vadd.f32 %v2625, %v2629
        %v2631 = vadd.f32 %v2626, %v2629
        %v2632 = vadd.f32 %v2627, %v2629
        %v2633 = vadd.f32 %v2628, %v2629
        %v2634 = vld [vmem:[%s13] sm:$0xff]
        %v2635 = vld [vmem:[%s13 + $0x8] sm:$0xff]
        %v2636 = vld [vmem:[%s13 + $0x10] sm:$0xff]
        %v2637 = vld [vmem:[%s13 + $0x18] sm:$0xff]
        %v2638 = vld [vmem:[%s13 + $0x20] sm:$0xff]
        %v2639 = vld [vmem:[%s13 + $0x28] sm:$0xff]
        %v2640 = vld [vmem:[%s13 + $0x30] sm:$0xff]
        %v2641 = vld [vmem:[%s13 + $0x38] sm:$0xff]
        %v2642 = vld [vmem:[%s13 + $0x40] sm:$0xff]
        %v2643 = vld [vmem:[%s13 + $0x48] sm:$0xff]
        %v2644 = vld [vmem:[%s13 + $0x50] sm:$0xff]
        %v2645 = vld [vmem:[%s13 + $0x58] sm:$0xff]
        %v2646 = vld [vmem:[%s13 + $0x60] sm:$0xff]
        %v2647 = vld [vmem:[%s13 + $0x68] sm:$0xff]
        %v2648 = vld [vmem:[%s13 + $0x70] sm:$0xff]
        %v2649 = vld [vmem:[%s13 + $0x78] sm:$0xff]
        %v2650 = vld [vmem:[%s13 + $0x80] sm:$0xff]
        %v2651 = vld [vmem:[%s13 + $0x88] sm:$0xff]
        %v2652 = vld [vmem:[%s13 + $0x90] sm:$0xff]
        %v2653 = vld [vmem:[%s13 + $0x98] sm:$0xff]
        %v2654 = vld [vmem:[%s13 + $0xa0] sm:$0xff]
        %v2655 = vld [vmem:[%s13 + $0xa8] sm:$0xff]
        %v2656 = vld [vmem:[%s13 + $0xb0] sm:$0xff]
        %v2657 = vld [vmem:[%s13 + $0xb8] sm:$0xff]
        %v2658 = vld [vmem:[%s13 + $0xc0] sm:$0xff]
        %v2659 = vld [vmem:[%s13 + $0xc8] sm:$0xff]
        %v2660 = vld [vmem:[%s13 + $0xd0] sm:$0xff]
        %v2661 = vld [vmem:[%s13 + $0xd8] sm:$0xff]
        %v2662 = vld [vmem:[%s13 + $0xe0] sm:$0xff]
        %v2663 = vld [vmem:[%s13 + $0xe8] sm:$0xff]
        %v2664 = vld [vmem:[%s13 + $0xf0] sm:$0xff]
        %v2665 = vld [vmem:[%s13 + $0xf8] sm:$0xff]
        %v2666 = vld [vmem:[%s14] sm:$0x3]
        %v2668 = vperm.slane %v2666, 0
        %v2669 = vperm.slane %v2666, 1
        %2672 = vmatpush.msra.mxu0 %v2664
        %2673 = vmatpush.msra.mxu0 %v2662
        %2674 = vmatpush.msra.mxu0 %v2660
        %2675 = vmatpush.msra.mxu0 %v2658
        %2676 = vmatpush.msra.mxu0 %v2656
        %2677 = vmatpush.msra.mxu0 %v2654
        %2678 = vmatpush.msra.mxu0 %v2652
        %2679 = vmatpush.msra.mxu0 %v2650
        %2680 = vmatpush.msra.mxu0 %v2648
        %2681 = vmatpush.msra.mxu0 %v2646
        %2682 = vmatpush.msra.mxu0 %v2644
        %2683 = vmatpush.msra.mxu0 %v2642
        %2684 = vmatpush.msra.mxu0 %v2640
        %2685 = vmatpush.msra.mxu0 %v2638
        %2686 = vmatpush.msra.mxu0 %v2636
        %2687 = vmatpush.msra.mxu0 %v2634
        %2688 = vmatmul.f32.gmra.mxu0 %v2630
        %v2689 = vpop.f32.mrf.mxu0
        %v2690 = vadd.f32 %v2668, %v2689
        %2691 = vmatmul.f32.gmra.mxu0 %v2631
        %v2692 = vpop.f32.mrf.mxu0
        %v2693 = vadd.f32 %v2668, %v2692
        %2694 = vmatmul.f32.gmra.mxu0 %v2632
        %v2695 = vpop.f32.mrf.mxu0
        %v2696 = vadd.f32 %v2668, %v2695
        %2697 = vmatmul.f32.gmra.mxu0 %v2633
        %v2698 = vpop.f32.mrf.mxu0
        %v2699 = vadd.f32 %v2668, %v2698
        %2700 = vdwg.mxu0
        %2701 = vmatpush.msra.mxu0 %v2665
        %2702 = vmatpush.msra.mxu0 %v2663
        %2703 = vmatpush.msra.mxu0 %v2661
        %2704 = vmatpush.msra.mxu0 %v2659
        %2705 = vmatpush.msra.mxu0 %v2657
        %2706 = vmatpush.msra.mxu0 %v2655
        %2707 = vmatpush.msra.mxu0 %v2653
        %2708 = vmatpush.msra.mxu0 %v2651
        %2709 = vmatpush.msra.mxu0 %v2649
        %2710 = vmatpush.msra.mxu0 %v2647
        %2711 = vmatpush.msra.mxu0 %v2645
        %2712 = vmatpush.msra.mxu0 %v2643
        %2713 = vmatpush.msra.mxu0 %v2641
        %2714 = vmatpush.msra.mxu0 %v2639
        %2715 = vmatpush.msra.mxu0 %v2637
        %2716 = vmatpush.msra.mxu0 %v2635
        %2717 = vmatmul.f32.gmra.mxu0 %v2630
        %v2718 = vpop.f32.mrf.mxu0
        %v2719 = vadd.f32 %v2669, %v2718
        %2720 = vmatmul.f32.gmra.mxu0 %v2631
        %v2721 = vpop.f32.mrf.mxu0
        %v2722 = vadd.f32 %v2669, %v2721
        %2723 = vmatmul.f32.gmra.mxu0 %v2632
        %v2724 = vpop.f32.mrf.mxu0
        %v2725 = vadd.f32 %v2669, %v2724
        %2726 = vmatmul.f32.gmra.mxu0 %v2633
        %v2727 = vpop.f32.mrf.mxu0
        %v2728 = vadd.f32 %v2669, %v2727
        %2729 = vdwg.mxu0
        %2730 = vst [vmem:[%s768] sm:$0xff] %v2690
        %2731 = vst [vmem:[%s768 + $0x8] sm:$0xff] %v2719
        %2732 = vst [vmem:[%s768 + $0x10] sm:$0xff] %v2693
        %2733 = vst [vmem:[%s768 + $0x18] sm:$0xff] %v2722
        %2734 = vst [vmem:[%s768 + $0x20] sm:$0xff] %v2696
        %2735 = vst [vmem:[%s768 + $0x28] sm:$0xff] %v2725
        %2736 = vst [vmem:[%s768 + $0x30] sm:$0xff] %v2699
        %2737 = vst [vmem:[%s768 + $0x38] sm:$0xff] %v2728
        %v2738 = vld [vmem:[%s15] sm:$0xff]
        %v2739 = vld [vmem:[%s15 + $0x8] sm:$0xff]
        %v2740 = vld [vmem:[%s15 + $0x10] sm:$0xff]
        %v2741 = vld [vmem:[%s15 + $0x18] sm:$0xff]
        %v2742 = vld [vmem:[%s15 + $0x20] sm:$0xff]
        %v2743 = vld [vmem:[%s15 + $0x28] sm:$0xff]
        %v2744 = vld [vmem:[%s15 + $0x30] sm:$0xff]
        %v2745 = vld [vmem:[%s15 + $0x38] sm:$0xff]
        %v2746 = vld [vmem:[%s15 + $0x40] sm:$0xff]
        %v2747 = vld [vmem:[%s15 + $0x48] sm:$0xff]
        %v2748 = vld [vmem:[%s15 + $0x50] sm:$0xff]
        %v2749 = vld [vmem:[%s15 + $0x58] sm:$0xff]
        %v2750 = vld [vmem:[%s15 + $0x60] sm:$0xff]
        %v2751 = vld [vmem:[%s15 + $0x68] sm:$0xff]
        %v2752 = vld [vmem:[%s15 + $0x70] sm:$0xff]
        %v2753 = vld [vmem:[%s15 + $0x78] sm:$0xff]
        %v2754 = vld [vmem:[%s16] sm:$0x1]
        %v2756 = vperm.slane %v2754, 0
        %2758 = vmatpush.msra.mxu0 %v2753
        %2759 = vmatpush.msra.mxu0 %v2752
        %2760 = vmatpush.msra.mxu0 %v2751
        %2761 = vmatpush.msra.mxu0 %v2750
        %2762 = vmatpush.msra.mxu0 %v2749
        %2763 = vmatpush.msra.mxu0 %v2748
        %2764 = vmatpush.msra.mxu0 %v2747
        %2765 = vmatpush.msra.mxu0 %v2746
        %2766 = vmatpush.msra.mxu0 %v2745
        %2767 = vmatpush.msra.mxu0 %v2744
        %2768 = vmatpush.msra.mxu0 %v2743
        %2769 = vmatpush.msra.mxu0 %v2742
        %2770 = vmatpush.msra.mxu0 %v2741
        %2771 = vmatpush.msra.mxu0 %v2740
        %2772 = vmatpush.msra.mxu0 %v2739
        %2773 = vmatpush.msra.mxu0 %v2738
        %2774 = vmatmul.f32.gmra.mxu0 %v2630
        %v2775 = vpop.f32.mrf.mxu0
        %v2776 = vadd.f32 %v2756, %v2775
        %2777 = vmatmul.f32.gmra.mxu0 %v2631
        %v2778 = vpop.f32.mrf.mxu0
        %v2779 = vadd.f32 %v2756, %v2778
        %2780 = vmatmul.f32.gmra.mxu0 %v2632
        %v2781 = vpop.f32.mrf.mxu0
        %v2782 = vadd.f32 %v2756, %v2781
        %2783 = vmatmul.f32.gmra.mxu0 %v2633
        %v2784 = vpop.f32.mrf.mxu0
        %v2785 = vadd.f32 %v2756, %v2784
        %2786 = vdwg.mxu0
        %vm2787 = vcmask 523264
        %2788 = vst.msk [vmem:[%s773] sm:$0xff] %vm2787, %v2776
        %2789 = vst.msk [vmem:[%s773 + $0x8] sm:$0xff] %vm2787, %v2779
        %2790 = vst.msk [vmem:[%s773 + $0x10] sm:$0xff] %vm2787, %v2782
        %2791 = vst.msk [vmem:[%s773 + $0x18] sm:$0xff] %vm2787, %v2785
      $region96: #{_lambda_.9} parent=87 // pred_fallthru
        _
      %p2792 = scmp.lt.s32.totalorder %s34, 1
      %s2793 = scalar_select %p2792, %s34, 1
      %s2794 = smul.addr %s2793, 8
      %s2795 = smul.addr %s2794, 8
      %s2796 = scalar_lea.vmem %s17, %s2795
      %p2797 = scmp.lt.s32.totalorder %s34, 1
      %s2798 = scalar_select %p2797, %s34, 1
      %s2799 = smul.addr %s2798, 4
      %s2800 = smul.addr %s2799, 8
      %s2801 = scalar_lea.vmem %s18, %s2800
      // Predicated region
      $region97: #{_lambda_.9} parent=87 // pred_check
        %p2802 = pneg %p472
      $region98: #{_lambda_.9} parent=87 // pred_check_branch
        %2804 = sbr.rel (%p2802) target = $region100
      $region99: #{_lambda_.9} parent=87 // pred_region
        _
      $region100: #{_lambda_.9} parent=87 // pred_fallthru
        _
      // Predicated region
      $region101: #{_lambda_.9} parent=87 // pred_check
        %p2805 = pneg %p498
      $region102: #{_lambda_.9} parent=87 // pred_check_branch
        %2807 = sbr.rel (%p2805) target = $region104
      $region103: #{_lambda_.9} parent=87 // pred_region
        _
      $region104: #{_lambda_.9} parent=87 // pred_fallthru
        _
    $region88: #{_lambda_.9} parent=5 // pred_fallthru
      _
    %p2808 = scmp.le.s32.totalorder 2, %s25
    // Predicated region
    $region105: #{_lambda_.9} parent=5 // pred_check
      %p2809 = pneg %p2808
    $region106: #{_lambda_.9} parent=5 // pred_check_branch
      %2811 = sbr.rel (%p2809) target = $region108
    $region107: #{_lambda_.9} parent=5 // pred_region
      %s2812 = ssub.s32 %s25, 2
      // Predicated region
      $region109: #{_lambda_.9} parent=107 // pred_check
        %p2813 = pneg %p478
      $region110: #{_lambda_.9} parent=107 // pred_check_branch
        %2815 = sbr.rel (%p2813) target = $region112
      $region111: #{_lambda_.9} parent=107 // pred_region
        %p2816 = scmp.lt.s32.totalorder %s36, 1
        %s2817 = scalar_select %p2816, %s36, 1
        %s2818 = smul.addr %s2817, 8
        %s2819 = smul.addr %s2818, 8
        %s2820 = scalar_lea.vmem %s17, %s2819
      $region112: #{_lambda_.9} parent=107 // pred_fallthru
        _
      // Predicated region
      $region113: #{_lambda_.9} parent=107 // pred_check
        %p2821 = pneg %p504
      $region114: #{_lambda_.9} parent=107 // pred_check_branch
        %2823 = sbr.rel (%p2821) target = $region116
      $region115: #{_lambda_.9} parent=107 // pred_region
        %p2824 = scmp.lt.s32.totalorder %s36, 1
        %s2825 = scalar_select %p2824, %s36, 1
        %s2826 = smul.addr %s2825, 4
        %s2827 = smul.addr %s2826, 8
        %s2828 = scalar_lea.vmem %s18, %s2827
      $region116: #{_lambda_.9} parent=107 // pred_fallthru
        _
    $region108: #{_lambda_.9} parent=5 // pred_fallthru
      _
  $region6: #{_lambda_.9} parent=0 // loop_footer
    %s29 = sadd.s32 1, %s25
  $region7: #{_lambda_.9} parent=0 // loop_footer_branch
    %24 = sbr.rel target = $region3
  $region8: #{_lambda_.9} parent=0 // loop_exit
    _

</llo_original>
